<compile_context>
chip_gen: v7x
topology: tpu7x:2x2x1
jax: 0.10.0
libtpu: 0.0.40
codegen_flags: <defaults>
</compile_context>

<pallas_src>
import jax
import jax.numpy as jnp
from jax.experimental import pallas as pl
from jax.experimental.pallas import tpu as pltpu

EPS = 1e-5  # nn.BatchNorm2d default eps


# ============================== Pallas kernels ===============================

def conv1_sc_kernel(x_ref, w1_ref, wsc_ref, z1_ref, zsc_ref, st1_ref, stsc_ref):
    """conv1 (1x1) and shortcut (1x1) as two dots over the same bf16 LHS,
    bf16 outputs + per-block per-channel sum / sum-of-squares (f32)."""
    _, hs, W, Cin = x_ref.shape
    GW = z1_ref.shape[-1]
    OUT = zsc_ref.shape[-1]
    M = hs * W
    x2d = x_ref[...].reshape(M, Cin).astype(jnp.bfloat16)

    z1 = jnp.dot(x2d, w1_ref[...], preferred_element_type=jnp.float32).astype(jnp.bfloat16)
    zsc = jnp.dot(x2d, wsc_ref[...], preferred_element_type=jnp.float32).astype(jnp.bfloat16)
    z1_ref[...] = z1.reshape(1, hs, W, GW)
    zsc_ref[...] = zsc.reshape(1, hs, W, OUT)

    # Stats from the bf16-quantized values (what the next pass will consume),
    # accumulated in f32, single lane-dense store per block.
    z1f = z1.astype(jnp.float32)
    zscf = zsc.astype(jnp.float32)
    st1_ref[...] = jnp.concatenate(
        [jnp.sum(z1f, axis=0, keepdims=True),
         jnp.sum(z1f * z1f, axis=0, keepdims=True)], axis=0).reshape(1, 1, 2, GW)
    stsc_ref[...] = jnp.concatenate(
        [jnp.sum(zscf, axis=0, keepdims=True),
         jnp.sum(zscf * zscf, axis=0, keepdims=True)], axis=0).reshape(1, 1, 2, OUT)


def conv2_kernel(z1_ref, s1_ref, b1_ref, w2_ref, z2_ref, st_ref, pad_ref):
    """bn1+relu folded in; grouped 3x3 conv as 9 accumulating block-diagonal
    MXU dots over a halo-zeroed bf16 padded scratch (no im2col slab)."""
    _, H, W, GW = z1_ref.shape
    HW = H * W

    # bn1 folded to one FMA, fused with relu (f32 math).
    a1 = jnp.maximum(
        z1_ref[...].reshape(HW, GW).astype(jnp.float32) * s1_ref[...] + b1_ref[...], 0.0)

    # Zero only the 1-pixel halo every step (scratch persists across grid
    # steps), then overwrite the interior once with the bf16 activation.
    pad_ref[0:1, :, :] = jnp.zeros((1, W + 2, GW), jnp.bfloat16)
    pad_ref[H + 1:H + 2, :, :] = jnp.zeros((1, W + 2, GW), jnp.bfloat16)
    pad_ref[:, 0:1, :] = jnp.zeros((H + 2, 1, GW), jnp.bfloat16)
    pad_ref[:, W + 1:W + 2, :] = jnp.zeros((H + 2, 1, GW), jnp.bfloat16)
    pad_ref[1:H + 1, 1:W + 1, :] = a1.astype(jnp.bfloat16).reshape(H, W, GW)

    # 9 accumulating K=GW dots against the per-tap block-diagonal weight.
    z2 = None
    for t in range(9):
        ky, kx = t // 3, t % 3
        tap = pad_ref[ky:ky + H, kx:kx + W, :].reshape(HW, GW)
        part = jnp.dot(tap, w2_ref[t], preferred_element_type=jnp.float32)
        z2 = part if z2 is None else z2 + part

    z2q = z2.astype(jnp.bfloat16)
    z2_ref[...] = z2q.reshape(1, H, W, GW)
    z2f = z2q.astype(jnp.float32)
    st_ref[...] = jnp.concatenate(
        [jnp.sum(z2f, axis=0, keepdims=True),
         jnp.sum(z2f * z2f, axis=0, keepdims=True)], axis=0).reshape(1, 2, GW)


def conv3_kernel(z2_ref, s2_ref, b2_ref, w3_ref, z3_ref, st_ref):
    """bn2+relu folded in; conv3 (1x1) matmul; bf16 output + partial stats."""
    _, hs, W, GW = z2_ref.shape
    OUT = z3_ref.shape[-1]
    M = hs * W
    a2 = jnp.maximum(
        z2_ref[...].reshape(M, GW).astype(jnp.float32) * s2_ref[...] + b2_ref[...], 0.0)
    z3 = jnp.dot(a2.astype(jnp.bfloat16), w3_ref[...],
                 preferred_element_type=jnp.float32).astype(jnp.bfloat16)
    z3_ref[...] = z3.reshape(1, hs, W, OUT)
    z3f = z3.astype(jnp.float32)
    st_ref[...] = jnp.concatenate(
        [jnp.sum(z3f, axis=0, keepdims=True),
         jnp.sum(z3f * z3f, axis=0, keepdims=True)], axis=0).reshape(1, 1, 2, OUT)


def finalize_kernel(z3_ref, zsc_ref, s3_ref, b3_ref, ssc_ref, bsc_ref, out_ref):
    """bn3(z3) + bn_sc(zsc) + residual add + relu epilogue (pure VPU)."""
    _, hs, W, OUT = z3_ref.shape
    M = hs * W
    o = (z3_ref[...].reshape(M, OUT).astype(jnp.float32) * s3_ref[...] + b3_ref[...]
         + zsc_ref[...].reshape(M, OUT).astype(jnp.float32) * ssc_ref[...] + bsc_ref[...])
    out_ref[...] = jnp.maximum(o, 0.0).reshape(1, hs, W, OUT).astype(out_ref.dtype)


# ================================ wrapper ====================================

def _fold_bn(s, ss, gamma, beta, count):
    """Fold batch sum/sumsq into one per-channel scale/bias FMA (tiny, JAX)."""
    # TODO(synk): E[x^2]-E[x]^2 in f32 cancels badly when |mean| >> std; use a
    #             shifted-moments accumulation for non-centered activations.
    mean = s / count
    var = jnp.maximum(ss / count - mean * mean, 0.0)
    scale = gamma * jax.lax.rsqrt(var + EPS)
    bias = beta - mean * scale
    return scale.reshape(1, -1), bias.reshape(1, -1)


def _conv2_vmem_limit(default_bytes=48 * 1024 * 1024):
    """Raised scoped-VMEM limit for pass 2 (v5e default 16 MiB is too small at
    wide configs), capped at 3/4 of physical VMEM so it stays valid on v7x."""
    try:
        cap = int(pltpu.get_tpu_info().vmem_capacity_bytes)
        return min(default_bytes, (3 * cap) // 4)
    except Exception:
        return None


def block_forward(x_nhwc, p):
    N, H, W, Cin = x_nhwc.shape
    GW = p["g1"].shape[0]
    OUT = p["g3"].shape[0]
    count = float(N * H * W)

    # H row-strips for the halo-free passes (1, 3, 4): more / smaller grid
    # steps for v7x megacore balance and per-step VMEM.  Pass 2 keeps full
    # images (halo-zero trick requires the whole interior per step).
    hs = H // 2 if (H % 2 == 0 and H * W >= 256) else H
    S = H // hs

    cp_strip = pltpu.CompilerParams(dimension_semantics=("parallel", "parallel"))
    c2_kwargs = dict(dimension_semantics=("parallel",))
    limit = _conv2_vmem_limit()
    if limit is not None:
        c2_kwargs["vmem_limit_bytes"] = limit
    cp2 = pltpu.CompilerParams(**c2_kwargs)

    def strip_spec(C):
        return pl.BlockSpec((1, hs, W, C), lambda n, s: (n, s, 0, 0))

    def strip_stat_spec(C):
        return pl.BlockSpec((1, 1, 2, C), lambda n, s: (n, s, 0, 0))

    def img_spec(C):
        return pl.BlockSpec((1, H, W, C), lambda n: (n, 0, 0, 0))

    def rep2(a):  # full array, resident across a 2-axis grid
        return pl.BlockSpec(a.shape, lambda n, s: (0,) * a.ndim)

    def rep1(a):  # full array, resident across a 1-axis grid
        return pl.BlockSpec(a.shape, lambda n: (0,) * a.ndim)

    # ---- pass 1: conv1 + shortcut 1x1 dots, bf16 outputs, partial BN stats --
    z1, zsc, st1, stsc = pl.pallas_call(
        conv1_sc_kernel,
        grid=(N, S),
        in_specs=[strip_spec(Cin), rep2(p["w1"]), rep2(p["wsc"])],
        out_specs=(strip_spec(GW), strip_spec(OUT),
                   strip_stat_spec(GW), strip_stat_spec(OUT)),
        out_shape=(jax.ShapeDtypeStruct((N, H, W, GW), jnp.bfloat16),
                   jax.ShapeDtypeStruct((N, H, W, OUT), jnp.bfloat16),
                   jax.ShapeDtypeStruct((N, S, 2, GW), jnp.float32),
                   jax.ShapeDtypeStruct((N, S, 2, OUT), jnp.float32)),
        compiler_params=cp_strip,
    )(x_nhwc, p["w1"], p["wsc"])

    s1 = jnp.sum(st1, axis=(0, 1))
    sc1, bi1 = _fold_bn(s1[0], s1[1], p["g1"], p["b1"], count)
    ssum = jnp.sum(stsc, axis=(0, 1))
    scsc, bisc = _fold_bn(ssum[0], ssum[1], p["gsc"], p["bsc"], count)

    # ---- pass 2: bn1+relu folded into grouped 3x3 (9 accumulating dots) -----
    z2, st2 = pl.pallas_call(
        conv2_kernel,
        grid=(N,),
        in_specs=[img_spec(GW), rep1(sc1), rep1(bi1), rep1(p["w2tap"])],
        out_specs=(img_spec(GW), pl.BlockSpec((1, 2, GW), lambda n: (n, 0, 0))),
        out_shape=(jax.ShapeDtypeStruct((N, H, W, GW), jnp.bfloat16),
                   jax.ShapeDtypeStruct((N, 2, GW), jnp.float32)),
        scratch_shapes=[pltpu.VMEM((H + 2, W + 2, GW), jnp.bfloat16)],
        compiler_params=cp2,
    )(z1, sc1, bi1, p["w2tap"])

    s2 = jnp.sum(st2, axis=0)
    sc2, bi2 = _fold_bn(s2[0], s2[1], p["g2"], p["b2"], count)

    # ---- pass 3: bn2+relu folded into conv3 1x1 matmul -----------------------
    z3, st3 = pl.pallas_call(
        conv3_kernel,
        grid=(N, S),
        in_specs=[strip_spec(GW), rep2(sc2), rep2(bi2), rep2(p["w3"])],
        out_specs=(strip_spec(OUT), strip_stat_spec(OUT)),
        out_shape=(jax.ShapeDtypeStruct((N, H, W, OUT), jnp.bfloat16),
                   jax.ShapeDtypeStruct((N, S, 2, OUT), jnp.float32)),
        compiler_params=cp_strip,
    )(z2, sc2, bi2, p["w3"])

    s3 = jnp.sum(st3, axis=(0, 1))
    sc3, bi3 = _fold_bn(s3[0], s3[1], p["g3"], p["b3"], count)

    # ---- pass 4: bn3 + bn_sc + residual add + relu ---------------------------
    out = pl.pallas_call(
        finalize_kernel,
        grid=(N, S),
        in_specs=[strip_spec(OUT), strip_spec(OUT),
                  rep2(sc3), rep2(bi3), rep2(scsc), rep2(bisc)],
        out_specs=strip_spec(OUT),
        out_shape=jax.ShapeDtypeStruct((N, H, W, OUT), jnp.float32),
        compiler_params=cp_strip,
    )(z3, zsc, sc3, bi3, scsc, bisc)
    return out


# ----------------------------- parameter setup -------------------------------

def make_params(key, in_planes, cardinality, bottleneck_width):
    GW = cardinality * bottleneck_width
    OUT = 2 * GW                      # expansion = 2
    bw = bottleneck_width             # per-group input width of conv2
    ks = jax.random.split(key, 12)

    # PyTorch-layout (OIHW) weights, deterministic init.
    w1_t = 0.1 * jax.random.normal(ks[0], (GW, in_planes, 1, 1), jnp.float32)
    w2_t = 0.1 * jax.random.normal(ks[1], (GW, bw, 3, 3), jnp.float32)
    w3_t = 0.1 * jax.random.normal(ks[2], (OUT, GW, 1, 1), jnp.float32)
    wsc_t = 0.1 * jax.random.normal(ks[3], (OUT, in_planes, 1, 1), jnp.float32)

    def bn(kg, kb, c):
        return (1.0 + 0.1 * jax.random.normal(kg, (c,), jnp.float32),
                0.1 * jax.random.normal(kb, (c,), jnp.float32))

    g1, b1 = bn(ks[4], ks[5], GW)
    g2, b2 = bn(ks[6], ks[7], GW)
    g3, b3 = bn(ks[8], ks[9], OUT)
    gsc, bsc = bn(ks[10], ks[11], OUT)

    torch_p = dict(w1=w1_t, w2=w2_t, w3=w3_t, wsc=wsc_t,
                   g1=g1, b1=b1, g2=g2, b2=b2, g3=g3, b3=b3, gsc=gsc, bsc=bsc)

    # Pallas layouts: (in, out) matmul weights, pre-cast once to bf16.
    w1 = jnp.transpose(w1_t[:, :, 0, 0]).astype(jnp.bfloat16)     # (Cin, GW)
    wsc = jnp.transpose(wsc_t[:, :, 0, 0]).astype(jnp.bfloat16)   # (Cin, OUT)
    w3 = jnp.transpose(w3_t[:, :, 0, 0]).astype(jnp.bfloat16)     # (GW, OUT)

    # Grouped 3x3 -> per-tap block-diagonal weights w2tap[t, cin, cout].
    w2tap = jnp.zeros((9, GW, GW), jnp.float32)
    for t in range(9):
        ky, kx = t // 3, t % 3
        for g in range(cardinality):
            blk = jnp.transpose(w2_t[g * bw:(g + 1) * bw, :, ky, kx])  # (in, out)
            w2tap = w2tap.at[t, g * bw:(g + 1) * bw, g * bw:(g + 1) * bw].set(blk)
    w2tap = w2tap.astype(jnp.bfloat16)

    pallas_p = dict(w1=w1, wsc=wsc, w2tap=w2tap, w3=w3,
                    g1=g1, b1=b1, g2=g2, b2=b2, g3=g3, b3=b3, gsc=gsc, bsc=bsc)
    return torch_p, pallas_p


# ----------------------------- plain-JAX reference ---------------------------

def ref_forward(x_nhwc, tp, cardinality):
    """Reference with the same quantization points as the Pallas kernels
    (bf16 conv inputs/weights, f32 accumulation, bf16 inter-stage storage)."""
    q = lambda t: t.astype(jnp.bfloat16).astype(jnp.float32)

    def conv(x, w_oihw, padding=0, groups=1):
        return jax.lax.conv_general_dilated(
            x.astype(jnp.bfloat16),
            jnp.transpose(w_oihw, (2, 3, 1, 0)).astype(jnp.bfloat16),
            window_strides=(1, 1),
            padding=[(padding, padding), (padding, padding)],
            dimension_numbers=("NHWC", "HWIO", "NHWC"),
            feature_group_count=groups,
            preferred_element_type=jnp.float32)

    def bn(x, gamma, beta):
        mean = jnp.mean(x, axis=(0, 1, 2), keepdims=True)
        var = jnp.maximum(jnp.mean(x * x, axis=(0, 1, 2), keepdims=True) - mean * mean, 0.0)
        return (x - mean) * jax.lax.rsqrt(var + EPS) * gamma + beta

    z1 = q(conv(x_nhwc, tp["w1"]))
    o = jnp.maximum(bn(z1, tp["g1"], tp["b1"]), 0.0)
    z2 = q(conv(o, tp["w2"], padding=1, groups=cardinality))
    o = jnp.maximum(bn(z2, tp["g2"], tp["b2"]), 0.0)
    z3 = q(conv(o, tp["w3"]))
    o = bn(z3, tp["g3"], tp["b3"])
    zsc = q(conv(x_nhwc, tp["wsc"]))
    sc = bn(zsc, tp["gsc"], tp["bsc"])
    return jnp.maximum(o + sc, 0.0)


if __name__ == "__main__":
    # Correctness-only config: batch=2, in_planes=8, 16x16, cardinality=4, width=4.
    N, Cin, H, W = 2, 8, 16, 16
    cardinality, bottleneck_width = 4, 4

    key = jax.random.PRNGKey(0)
    kx, kp = jax.random.split(key)
    x_nchw = jax.random.normal(kx, (N, Cin, H, W), jnp.float32)   # PyTorch layout
    x_nhwc = jnp.transpose(x_nchw, (0, 2, 3, 1))                  # kernel layout

    torch_p, pallas_p = make_params(kp, Cin, cardinality, bottleneck_width)

    fwd = jax.jit(lambda x: block_forward(x, pallas_p))
    out = jax.block_until_ready(fwd(x_nhwc))

    ref = ref_forward(x_nhwc, torch_p, cardinality)
    max_err = float(jnp.max(jnp.abs(out - ref)))
    mean_err = float(jnp.mean(jnp.abs(out - ref)))
    # bf16 inter-stage storage => bf16-level tolerance (rare rounding flips of
    # the quantized intermediates bound the max error; real bugs are O(1)).
    if max_err > 8e-2 or mean_err > 4e-3:
        raise AssertionError(f"mismatch vs reference: max={max_err}, mean={mean_err}")

    print("KERNEL_OK")
</pallas_src>

<mosaic_0001>
module attributes {stable_mosaic.version = 11 : i64} {
  func.func @conv1_sc_kernel(%arg0: i32, %arg1: i32, %arg2: memref<1x8x16x8xf32, #tpu.memory_space<vmem>>, %arg3: memref<8x16xbf16, #tpu.memory_space<vmem>>, %arg4: memref<8x32xbf16, #tpu.memory_space<vmem>>, %arg5: memref<1x8x16x16xbf16, #tpu.memory_space<vmem>>, %arg6: memref<1x8x16x32xbf16, #tpu.memory_space<vmem>>, %arg7: memref<1x1x2x16xf32, #tpu.memory_space<vmem>>, %arg8: memref<1x1x2x32xf32, #tpu.memory_space<vmem>>) attributes {dimension_semantics = [#tpu.dimension_semantics<parallel>, #tpu.dimension_semantics<parallel>], iteration_bounds = array<i64: 2, 2>, scalar_prefetch = 0 : i64, scratch_operands = 0 : i64, tpu.core_type = #tpu.core_type<tc>, window_params = [{transform_indices = @transform_0, window_bounds = array<i64: 1, 8, 16, 8>}, {pipeline_mode = #tpu.pipeline_mode<synchronous>, transform_indices = @transform_1, window_bounds = array<i64: 8, 16>}, {pipeline_mode = #tpu.pipeline_mode<synchronous>, transform_indices = @transform_2, window_bounds = array<i64: 8, 32>}, {transform_indices = @transform_3, window_bounds = array<i64: 1, 8, 16, 16>}, {transform_indices = @transform_4, window_bounds = array<i64: 1, 8, 16, 32>}, {transform_indices = @transform_5, window_bounds = array<i64: 1, 1, 2, 16>}, {transform_indices = @transform_6, window_bounds = array<i64: 1, 1, 2, 32>}]} {
    %c0 = arith.constant 0 : index
    %c0_0 = arith.constant 0 : index
    %c0_1 = arith.constant 0 : index
    %c0_2 = arith.constant 0 : index
    %0 = vector.load %arg2[%c0, %c0_0, %c0_1, %c0_2] : memref<1x8x16x8xf32, #tpu.memory_space<vmem>>, vector<1x8x16x8xf32>
    %1 = vector.shape_cast %0 : vector<1x8x16x8xf32> to vector<128x8xf32>
    %2 = arith.truncf %1 : vector<128x8xf32> to vector<128x8xbf16>
    %c0_3 = arith.constant 0 : index
    %c0_4 = arith.constant 0 : index
    %3 = vector.load %arg3[%c0_3, %c0_4] : memref<8x16xbf16, #tpu.memory_space<vmem>>, vector<8x16xbf16>
    %cst = arith.constant dense<0.000000e+00> : vector<128x16xf32>
    %4 = tpu.matmul %2, %3, %cst {dimension_numbers = #tpu.dot_dimension_numbers<[1], [0], [0], [1], [0, 0, 1, 1], [], []>} : vector<128x8xbf16>, vector<8x16xbf16>, vector<128x16xf32> -> vector<128x16xf32>
    %5 = arith.truncf %4 : vector<128x16xf32> to vector<128x16xbf16>
    %c0_5 = arith.constant 0 : index
    %c0_6 = arith.constant 0 : index
    %6 = vector.load %arg4[%c0_5, %c0_6] : memref<8x32xbf16, #tpu.memory_space<vmem>>, vector<8x32xbf16>
    %cst_7 = arith.constant dense<0.000000e+00> : vector<128x32xf32>
    %7 = tpu.matmul %2, %6, %cst_7 {dimension_numbers = #tpu.dot_dimension_numbers<[1], [0], [0], [1], [0, 0, 1, 1], [], []>} : vector<128x8xbf16>, vector<8x32xbf16>, vector<128x32xf32> -> vector<128x32xf32>
    %8 = arith.truncf %7 : vector<128x32xf32> to vector<128x32xbf16>
    %9 = vector.shape_cast %5 : vector<128x16xbf16> to vector<1x8x16x16xbf16>
    %c0_8 = arith.constant 0 : index
    %c0_9 = arith.constant 0 : index
    %c0_10 = arith.constant 0 : index
    %c0_11 = arith.constant 0 : index
    %10 = vector.load %arg5[%c0_8, %c0_9, %c0_10, %c0_11] : memref<1x8x16x16xbf16, #tpu.memory_space<vmem>>, vector<1x8x16x16xbf16>
    tpu.vector_store %arg5[%c0_8, %c0_9, %c0_10, %c0_11], %9 {strides = array<i32>} : memref<1x8x16x16xbf16, #tpu.memory_space<vmem>>, vector<1x8x16x16xbf16>,
    %11 = vector.shape_cast %8 : vector<128x32xbf16> to vector<1x8x16x32xbf16>
    %c0_12 = arith.constant 0 : index
    %c0_13 = arith.constant 0 : index
    %c0_14 = arith.constant 0 : index
    %c0_15 = arith.constant 0 : index
    %12 = vector.load %arg6[%c0_12, %c0_13, %c0_14, %c0_15] : memref<1x8x16x32xbf16, #tpu.memory_space<vmem>>, vector<1x8x16x32xbf16>
    tpu.vector_store %arg6[%c0_12, %c0_13, %c0_14, %c0_15], %11 {strides = array<i32>} : memref<1x8x16x32xbf16, #tpu.memory_space<vmem>>, vector<1x8x16x32xbf16>,
    %13 = arith.extf %5 : vector<128x16xbf16> to vector<128x16xf32>
    %14 = arith.extf %8 : vector<128x32xbf16> to vector<128x32xf32>
    %cst_16 = arith.constant dense<0.000000e+00> : vector<16xf32>
    %15 = vector.multi_reduction <add>, %13, %cst_16 [0] : vector<128x16xf32> to vector<16xf32>
    %16 = vector.shape_cast %15 : vector<16xf32> to vector<1x16xf32>
    %17 = arith.mulf %13, %13 : vector<128x16xf32>
    %cst_17 = arith.constant dense<0.000000e+00> : vector<16xf32>
    %18 = vector.multi_reduction <add>, %17, %cst_17 [0] : vector<128x16xf32> to vector<16xf32>
    %19 = vector.shape_cast %18 : vector<16xf32> to vector<1x16xf32>
    %20 = tpu.concatenate %16, %19 in 0 : vector<1x16xf32>, vector<1x16xf32> -> vector<2x16xf32>
    %21 = vector.shape_cast %20 : vector<2x16xf32> to vector<1x1x2x16xf32>
    %c0_18 = arith.constant 0 : index
    %c0_19 = arith.constant 0 : index
    %c0_20 = arith.constant 0 : index
    %c0_21 = arith.constant 0 : index
    %22 = vector.load %arg7[%c0_18, %c0_19, %c0_20, %c0_21] : memref<1x1x2x16xf32, #tpu.memory_space<vmem>>, vector<1x1x2x16xf32>
    tpu.vector_store %arg7[%c0_18, %c0_19, %c0_20, %c0_21], %21 {strides = array<i32>} : memref<1x1x2x16xf32, #tpu.memory_space<vmem>>, vector<1x1x2x16xf32>,
    %cst_22 = arith.constant dense<0.000000e+00> : vector<32xf32>
    %23 = vector.multi_reduction <add>, %14, %cst_22 [0] : vector<128x32xf32> to vector<32xf32>
    %24 = vector.shape_cast %23 : vector<32xf32> to vector<1x32xf32>
    %25 = arith.mulf %14, %14 : vector<128x32xf32>
    %cst_23 = arith.constant dense<0.000000e+00> : vector<32xf32>
    %26 = vector.multi_reduction <add>, %25, %cst_23 [0] : vector<128x32xf32> to vector<32xf32>
    %27 = vector.shape_cast %26 : vector<32xf32> to vector<1x32xf32>
    %28 = tpu.concatenate %24, %27 in 0 : vector<1x32xf32>, vector<1x32xf32> -> vector<2x32xf32>
    %29 = vector.shape_cast %28 : vector<2x32xf32> to vector<1x1x2x32xf32>
    %c0_24 = arith.constant 0 : index
    %c0_25 = arith.constant 0 : index
    %c0_26 = arith.constant 0 : index
    %c0_27 = arith.constant 0 : index
    %30 = vector.load %arg8[%c0_24, %c0_25, %c0_26, %c0_27] : memref<1x1x2x32xf32, #tpu.memory_space<vmem>>, vector<1x1x2x32xf32>
    tpu.vector_store %arg8[%c0_24, %c0_25, %c0_26, %c0_27], %29 {strides = array<i32>} : memref<1x1x2x32xf32, #tpu.memory_space<vmem>>, vector<1x1x2x32xf32>,
    return
  }
  func.func @transform_0(%arg0: i32, %arg1: i32) -> (i32, i32, i32, i32) {
    %c0_i32 = arith.constant 0 : i32
    %c0_i32_0 = arith.constant 0 : i32
    %c0_i32_1 = arith.constant 0 : i32
    return %arg0, %arg1, %c0_i32, %c0_i32_0 : i32, i32, i32, i32
  }
  func.func @transform_1(%arg0: i32, %arg1: i32) -> (i32, i32) {
    %c0_i32 = arith.constant 0 : i32
    %c0_i32_0 = arith.constant 0 : i32
    %c0_i32_1 = arith.constant 0 : i32
    return %c0_i32, %c0_i32_0 : i32, i32
  }
  func.func @transform_2(%arg0: i32, %arg1: i32) -> (i32, i32) {
    %c0_i32 = arith.constant 0 : i32
    %c0_i32_0 = arith.constant 0 : i32
    %c0_i32_1 = arith.constant 0 : i32
    return %c0_i32, %c0_i32_0 : i32, i32
  }
  func.func @transform_3(%arg0: i32, %arg1: i32) -> (i32, i32, i32, i32) {
    %c0_i32 = arith.constant 0 : i32
    %c0_i32_0 = arith.constant 0 : i32
    %c0_i32_1 = arith.constant 0 : i32
    return %arg0, %arg1, %c0_i32, %c0_i32_0 : i32, i32, i32, i32
  }
  func.func @transform_4(%arg0: i32, %arg1: i32) -> (i32, i32, i32, i32) {
    %c0_i32 = arith.constant 0 : i32
    %c0_i32_0 = arith.constant 0 : i32
    %c0_i32_1 = arith.constant 0 : i32
    return %arg0, %arg1, %c0_i32, %c0_i32_0 : i32, i32, i32, i32
  }
  func.func @transform_5(%arg0: i32, %arg1: i32) -> (i32, i32, i32, i32) {
    %c0_i32 = arith.constant 0 : i32
    %c0_i32_0 = arith.constant 0 : i32
    %c0_i32_1 = arith.constant 0 : i32
    return %arg0, %arg1, %c0_i32, %c0_i32_0 : i32, i32, i32, i32
  }
  func.func @transform_6(%arg0: i32, %arg1: i32) -> (i32, i32, i32, i32) {
    %c0_i32 = arith.constant 0 : i32
    %c0_i32_0 = arith.constant 0 : i32
    %c0_i32_1 = arith.constant 0 : i32
    return %arg0, %arg1, %c0_i32, %c0_i32_0 : i32, i32, i32, i32
  }
}

module attributes {stable_mosaic.version = 11 : i64} {
  func.func @conv3_kernel(%arg0: i32, %arg1: i32, %arg2: memref<1x8x16x16xbf16, #tpu.memory_space<vmem>>, %arg3: memref<1x16xf32, #tpu.memory_space<vmem>>, %arg4: memref<1x16xf32, #tpu.memory_space<vmem>>, %arg5: memref<16x32xbf16, #tpu.memory_space<vmem>>, %arg6: memref<1x8x16x32xbf16, #tpu.memory_space<vmem>>, %arg7: memref<1x1x2x32xf32, #tpu.memory_space<vmem>>) attributes {dimension_semantics = [#tpu.dimension_semantics<parallel>, #tpu.dimension_semantics<parallel>], iteration_bounds = array<i64: 2, 2>, scalar_prefetch = 0 : i64, scratch_operands = 0 : i64, tpu.core_type = #tpu.core_type<tc>, window_params = [{transform_indices = @transform_0, window_bounds = array<i64: 1, 8, 16, 16>}, {pipeline_mode = #tpu.pipeline_mode<synchronous>, transform_indices = @transform_1, window_bounds = array<i64: 1, 16>}, {pipeline_mode = #tpu.pipeline_mode<synchronous>, transform_indices = @transform_2, window_bounds = array<i64: 1, 16>}, {pipeline_mode = #tpu.pipeline_mode<synchronous>, transform_indices = @transform_3, window_bounds = array<i64: 16, 32>}, {transform_indices = @transform_4, window_bounds = array<i64: 1, 8, 16, 32>}, {transform_indices = @transform_5, window_bounds = array<i64: 1, 1, 2, 32>}]} {
    %c0 = arith.constant 0 : index
    %c0_0 = arith.constant 0 : index
    %c0_1 = arith.constant 0 : index
    %c0_2 = arith.constant 0 : index
    %0 = vector.load %arg2[%c0, %c0_0, %c0_1, %c0_2] : memref<1x8x16x16xbf16, #tpu.memory_space<vmem>>, vector<1x8x16x16xbf16>
    %1 = vector.shape_cast %0 : vector<1x8x16x16xbf16> to vector<128x16xbf16>
    %2 = arith.extf %1 : vector<128x16xbf16> to vector<128x16xf32>
    %c0_3 = arith.constant 0 : index
    %c0_4 = arith.constant 0 : index
    %3 = vector.load %arg3[%c0_3, %c0_4] : memref<1x16xf32, #tpu.memory_space<vmem>>, vector<1x16xf32>
    %4 = vector.broadcast %3 : vector<1x16xf32> to vector<128x16xf32>
    %5 = arith.mulf %2, %4 : vector<128x16xf32>
    %c0_5 = arith.constant 0 : index
    %c0_6 = arith.constant 0 : index
    %6 = vector.load %arg4[%c0_5, %c0_6] : memref<1x16xf32, #tpu.memory_space<vmem>>, vector<1x16xf32>
    %7 = vector.broadcast %6 : vector<1x16xf32> to vector<128x16xf32>
    %8 = arith.addf %5, %7 : vector<128x16xf32>
    %cst = arith.constant 0.000000e+00 : f32
    %9 = vector.broadcast %cst : f32 to vector<128x16xf32>
    %10 = arith.maximumf %8, %9 : vector<128x16xf32>
    %11 = arith.truncf %10 : vector<128x16xf32> to vector<128x16xbf16>
    %c0_7 = arith.constant 0 : index
    %c0_8 = arith.constant 0 : index
    %12 = vector.load %arg5[%c0_7, %c0_8] : memref<16x32xbf16, #tpu.memory_space<vmem>>, vector<16x32xbf16>
    %cst_9 = arith.constant dense<0.000000e+00> : vector<128x32xf32>
    %13 = tpu.matmul %11, %12, %cst_9 {dimension_numbers = #tpu.dot_dimension_numbers<[1], [0], [0], [1], [0, 0, 1, 1], [], []>} : vector<128x16xbf16>, vector<16x32xbf16>, vector<128x32xf32> -> vector<128x32xf32>
    %14 = arith.truncf %13 : vector<128x32xf32> to vector<128x32xbf16>
    %15 = vector.shape_cast %14 : vector<128x32xbf16> to vector<1x8x16x32xbf16>
    %c0_10 = arith.constant 0 : index
    %c0_11 = arith.constant 0 : index
    %c0_12 = arith.constant 0 : index
    %c0_13 = arith.constant 0 : index
    %16 = vector.load %arg6[%c0_10, %c0_11, %c0_12, %c0_13] : memref<1x8x16x32xbf16, #tpu.memory_space<vmem>>, vector<1x8x16x32xbf16>
    tpu.vector_store %arg6[%c0_10, %c0_11, %c0_12, %c0_13], %15 {strides = array<i32>} : memref<1x8x16x32xbf16, #tpu.memory_space<vmem>>, vector<1x8x16x32xbf16>,
    %17 = arith.extf %14 : vector<128x32xbf16> to vector<128x32xf32>
    %cst_14 = arith.constant dense<0.000000e+00> : vector<32xf32>
    %18 = vector.multi_reduction <add>, %17, %cst_14 [0] : vector<128x32xf32> to vector<32xf32>
    %19 = vector.shape_cast %18 : vector<32xf32> to vector<1x32xf32>
    %20 = arith.mulf %17, %17 : vector<128x32xf32>
    %cst_15 = arith.constant dense<0.000000e+00> : vector<32xf32>
    %21 = vector.multi_reduction <add>, %20, %cst_15 [0] : vector<128x32xf32> to vector<32xf32>
    %22 = vector.shape_cast %21 : vector<32xf32> to vector<1x32xf32>
    %23 = tpu.concatenate %19, %22 in 0 : vector<1x32xf32>, vector<1x32xf32> -> vector<2x32xf32>
    %24 = vector.shape_cast %23 : vector<2x32xf32> to vector<1x1x2x32xf32>
    %c0_16 = arith.constant 0 : index
    %c0_17 = arith.constant 0 : index
    %c0_18 = arith.constant 0 : index
    %c0_19 = arith.constant 0 : index
    %25 = vector.load %arg7[%c0_16, %c0_17, %c0_18, %c0_19] : memref<1x1x2x32xf32, #tpu.memory_space<vmem>>, vector<1x1x2x32xf32>
    tpu.vector_store %arg7[%c0_16, %c0_17, %c0_18, %c0_19], %24 {strides = array<i32>} : memref<1x1x2x32xf32, #tpu.memory_space<vmem>>, vector<1x1x2x32xf32>,
    return
  }
  func.func @transform_0(%arg0: i32, %arg1: i32) -> (i32, i32, i32, i32) {
    %c0_i32 = arith.constant 0 : i32
    %c0_i32_0 = arith.constant 0 : i32
    %c0_i32_1 = arith.constant 0 : i32
    return %arg0, %arg1, %c0_i32, %c0_i32_0 : i32, i32, i32, i32
  }
  func.func @transform_1(%arg0: i32, %arg1: i32) -> (i32, i32) {
    %c0_i32 = arith.constant 0 : i32
    %c0_i32_0 = arith.constant 0 : i32
    %c0_i32_1 = arith.constant 0 : i32
    return %c0_i32, %c0_i32_0 : i32, i32
  }
  func.func @transform_2(%arg0: i32, %arg1: i32) -> (i32, i32) {
    %c0_i32 = arith.constant 0 : i32
    %c0_i32_0 = arith.constant 0 : i32
    %c0_i32_1 = arith.constant 0 : i32
    return %c0_i32, %c0_i32_0 : i32, i32
  }
  func.func @transform_3(%arg0: i32, %arg1: i32) -> (i32, i32) {
    %c0_i32 = arith.constant 0 : i32
    %c0_i32_0 = arith.constant 0 : i32
    %c0_i32_1 = arith.constant 0 : i32
    return %c0_i32, %c0_i32_0 : i32, i32
  }
  func.func @transform_4(%arg0: i32, %arg1: i32) -> (i32, i32, i32, i32) {
    %c0_i32 = arith.constant 0 : i32
    %c0_i32_0 = arith.constant 0 : i32
    %c0_i32_1 = arith.constant 0 : i32
    return %arg0, %arg1, %c0_i32, %c0_i32_0 : i32, i32, i32, i32
  }
  func.func @transform_5(%arg0: i32, %arg1: i32) -> (i32, i32, i32, i32) {
    %c0_i32 = arith.constant 0 : i32
    %c0_i32_0 = arith.constant 0 : i32
    %c0_i32_1 = arith.constant 0 : i32
    return %arg0, %arg1, %c0_i32, %c0_i32_0 : i32, i32, i32, i32
  }
}

module attributes {stable_mosaic.version = 11 : i64} {
  func.func @conv2_kernel(%arg0: i32, %arg1: memref<1x16x16x16xbf16, #tpu.memory_space<vmem>>, %arg2: memref<1x16xf32, #tpu.memory_space<vmem>>, %arg3: memref<1x16xf32, #tpu.memory_space<vmem>>, %arg4: memref<9x16x16xbf16, #tpu.memory_space<vmem>>, %arg5: memref<1x16x16x16xbf16, #tpu.memory_space<vmem>>, %arg6: memref<1x2x16xf32, #tpu.memory_space<vmem>>, %arg7: memref<18x18x16xbf16, #tpu.memory_space<vmem>>) attributes {dimension_semantics = [#tpu.dimension_semantics<parallel>], iteration_bounds = array<i64: 2>, scalar_prefetch = 0 : i64, scratch_operands = 1 : i64, tpu.core_type = #tpu.core_type<tc>, window_params = [{transform_indices = @transform_0, window_bounds = array<i64: 1, 16, 16, 16>}, {pipeline_mode = #tpu.pipeline_mode<synchronous>, transform_indices = @transform_1, window_bounds = array<i64: 1, 16>}, {pipeline_mode = #tpu.pipeline_mode<synchronous>, transform_indices = @transform_2, window_bounds = array<i64: 1, 16>}, {pipeline_mode = #tpu.pipeline_mode<synchronous>, transform_indices = @transform_3, window_bounds = array<i64: 9, 16, 16>}, {transform_indices = @transform_4, window_bounds = array<i64: 1, 16, 16, 16>}, {transform_indices = @transform_5, window_bounds = array<i64: 1, 2, 16>}]} {
    %c0 = arith.constant 0 : index
    %c0_0 = arith.constant 0 : index
    %c0_1 = arith.constant 0 : index
    %c0_2 = arith.constant 0 : index
    %0 = vector.load %arg1[%c0, %c0_0, %c0_1, %c0_2] : memref<1x16x16x16xbf16, #tpu.memory_space<vmem>>, vector<1x16x16x16xbf16>
    %1 = vector.shape_cast %0 : vector<1x16x16x16xbf16> to vector<256x16xbf16>
    %2 = arith.extf %1 : vector<256x16xbf16> to vector<256x16xf32>
    %c0_3 = arith.constant 0 : index
    %c0_4 = arith.constant 0 : index
    %3 = vector.load %arg2[%c0_3, %c0_4] : memref<1x16xf32, #tpu.memory_space<vmem>>, vector<1x16xf32>
    %4 = vector.broadcast %3 : vector<1x16xf32> to vector<256x16xf32>
    %5 = arith.mulf %2, %4 : vector<256x16xf32>
    %c0_5 = arith.constant 0 : index
    %c0_6 = arith.constant 0 : index
    %6 = vector.load %arg3[%c0_5, %c0_6] : memref<1x16xf32, #tpu.memory_space<vmem>>, vector<1x16xf32>
    %7 = vector.broadcast %6 : vector<1x16xf32> to vector<256x16xf32>
    %8 = arith.addf %5, %7 : vector<256x16xf32>
    %cst = arith.constant 0.000000e+00 : f32
    %9 = vector.broadcast %cst : f32 to vector<256x16xf32>
    %10 = arith.maximumf %8, %9 : vector<256x16xf32>
    %cst_7 = arith.constant 0.000000e+00 : bf16
    %11 = vector.broadcast %cst_7 : bf16 to vector<1x18x16xbf16>
    %c0_8 = arith.constant 0 : index
    %c0_9 = arith.constant 0 : index
    %c0_10 = arith.constant 0 : index
    %12 = vector.load %arg7[%c0_8, %c0_9, %c0_10] : memref<18x18x16xbf16, #tpu.memory_space<vmem>>, vector<1x18x16xbf16>
    tpu.vector_store %arg7[%c0_8, %c0_9, %c0_10], %11 {strides = array<i32>} : memref<18x18x16xbf16, #tpu.memory_space<vmem>>, vector<1x18x16xbf16>,
    %cst_11 = arith.constant 0.000000e+00 : bf16
    %13 = vector.broadcast %cst_11 : bf16 to vector<1x18x16xbf16>
    %c17 = arith.constant 17 : index
    %c0_12 = arith.constant 0 : index
    %c0_13 = arith.constant 0 : index
    %14 = vector.load %arg7[%c17, %c0_12, %c0_13] : memref<18x18x16xbf16, #tpu.memory_space<vmem>>, vector<1x18x16xbf16>
    tpu.vector_store %arg7[%c17, %c0_12, %c0_13], %13 {strides = array<i32>} : memref<18x18x16xbf16, #tpu.memory_space<vmem>>, vector<1x18x16xbf16>,
    %cst_14 = arith.constant 0.000000e+00 : bf16
    %15 = vector.broadcast %cst_14 : bf16 to vector<18x1x16xbf16>
    %c0_15 = arith.constant 0 : index
    %c0_16 = arith.constant 0 : index
    %c0_17 = arith.constant 0 : index
    %16 = vector.load %arg7[%c0_15, %c0_16, %c0_17] : memref<18x18x16xbf16, #tpu.memory_space<vmem>>, vector<18x1x16xbf16>
    tpu.vector_store %arg7[%c0_15, %c0_16, %c0_17], %15 {strides = array<i32>} : memref<18x18x16xbf16, #tpu.memory_space<vmem>>, vector<18x1x16xbf16>,
    %cst_18 = arith.constant 0.000000e+00 : bf16
    %17 = vector.broadcast %cst_18 : bf16 to vector<18x1x16xbf16>
    %c0_19 = arith.constant 0 : index
    %c17_20 = arith.constant 17 : index
    %c0_21 = arith.constant 0 : index
    %18 = vector.load %arg7[%c0_19, %c17_20, %c0_21] : memref<18x18x16xbf16, #tpu.memory_space<vmem>>, vector<18x1x16xbf16>
    tpu.vector_store %arg7[%c0_19, %c17_20, %c0_21], %17 {strides = array<i32>} : memref<18x18x16xbf16, #tpu.memory_space<vmem>>, vector<18x1x16xbf16>,
    %19 = arith.truncf %10 : vector<256x16xf32> to vector<256x16xbf16>
    %20 = vector.shape_cast %19 : vector<256x16xbf16> to vector<16x16x16xbf16>
    %c1 = arith.constant 1 : index
    %c1_22 = arith.constant 1 : index
    %c0_23 = arith.constant 0 : index
    %21 = vector.load %arg7[%c1, %c1_22, %c0_23] : memref<18x18x16xbf16, #tpu.memory_space<vmem>>, vector<16x16x16xbf16>
    tpu.vector_store %arg7[%c1, %c1_22, %c0_23], %20 {strides = array<i32>} : memref<18x18x16xbf16, #tpu.memory_space<vmem>>, vector<16x16x16xbf16>,
    %c0_24 = arith.constant 0 : index
    %c0_25 = arith.constant 0 : index
    %c0_26 = arith.constant 0 : index
    %22 = vector.load %arg7[%c0_24, %c0_25, %c0_26] : memref<18x18x16xbf16, #tpu.memory_space<vmem>>, vector<16x16x16xbf16>
    %23 = vector.shape_cast %22 : vector<16x16x16xbf16> to vector<256x16xbf16>
    %c0_27 = arith.constant 0 : index
    %c0_28 = arith.constant 0 : index
    %c0_29 = arith.constant 0 : index
    %24 = vector.load %arg4[%c0_27, %c0_28, %c0_29] : memref<9x16x16xbf16, #tpu.memory_space<vmem>>, vector<1x16x16xbf16>
    %25 = vector.shape_cast %24 : vector<1x16x16xbf16> to vector<16x16xbf16>
    %cst_30 = arith.constant dense<0.000000e+00> : vector<256x16xf32>
    %26 = tpu.matmul %23, %25, %cst_30 {dimension_numbers = #tpu.dot_dimension_numbers<[1], [0], [0], [1], [0, 0, 1, 1], [], []>} : vector<256x16xbf16>, vector<16x16xbf16>, vector<256x16xf32> -> vector<256x16xf32>
    %c0_31 = arith.constant 0 : index
    %c1_32 = arith.constant 1 : index
    %c0_33 = arith.constant 0 : index
    %27 = vector.load %arg7[%c0_31, %c1_32, %c0_33] : memref<18x18x16xbf16, #tpu.memory_space<vmem>>, vector<16x16x16xbf16>
    %28 = vector.shape_cast %27 : vector<16x16x16xbf16> to vector<256x16xbf16>
    %c1_34 = arith.constant 1 : index
    %c0_35 = arith.constant 0 : index
    %c0_36 = arith.constant 0 : index
    %29 = vector.load %arg4[%c1_34, %c0_35, %c0_36] : memref<9x16x16xbf16, #tpu.memory_space<vmem>>, vector<1x16x16xbf16>
    %30 = vector.shape_cast %29 : vector<1x16x16xbf16> to vector<16x16xbf16>
    %cst_37 = arith.constant dense<0.000000e+00> : vector<256x16xf32>
    %31 = tpu.matmul %28, %30, %cst_37 {dimension_numbers = #tpu.dot_dimension_numbers<[1], [0], [0], [1], [0, 0, 1, 1], [], []>} : vector<256x16xbf16>, vector<16x16xbf16>, vector<256x16xf32> -> vector<256x16xf32>
    %32 = arith.addf %26, %31 : vector<256x16xf32>
    %c0_38 = arith.constant 0 : index
    %c2 = arith.constant 2 : index
    %c0_39 = arith.constant 0 : index
    %33 = vector.load %arg7[%c0_38, %c2, %c0_39] : memref<18x18x16xbf16, #tpu.memory_space<vmem>>, vector<16x16x16xbf16>
    %34 = vector.shape_cast %33 : vector<16x16x16xbf16> to vector<256x16xbf16>
    %c2_40 = arith.constant 2 : index
    %c0_41 = arith.constant 0 : index
    %c0_42 = arith.constant 0 : index
    %35 = vector.load %arg4[%c2_40, %c0_41, %c0_42] : memref<9x16x16xbf16, #tpu.memory_space<vmem>>, vector<1x16x16xbf16>
    %36 = vector.shape_cast %35 : vector<1x16x16xbf16> to vector<16x16xbf16>
    %cst_43 = arith.constant dense<0.000000e+00> : vector<256x16xf32>
    %37 = tpu.matmul %34, %36, %cst_43 {dimension_numbers = #tpu.dot_dimension_numbers<[1], [0], [0], [1], [0, 0, 1, 1], [], []>} : vector<256x16xbf16>, vector<16x16xbf16>, vector<256x16xf32> -> vector<256x16xf32>
    %38 = arith.addf %32, %37 : vector<256x16xf32>
    %c1_44 = arith.constant 1 : index
    %c0_45 = arith.constant 0 : index
    %c0_46 = arith.constant 0 : index
    %39 = vector.load %arg7[%c1_44, %c0_45, %c0_46] : memref<18x18x16xbf16, #tpu.memory_space<vmem>>, vector<16x16x16xbf16>
    %40 = vector.shape_cast %39 : vector<16x16x16xbf16> to vector<256x16xbf16>
    %c3 = arith.constant 3 : index
    %c0_47 = arith.constant 0 : index
    %c0_48 = arith.constant 0 : index
    %41 = vector.load %arg4[%c3, %c0_47, %c0_48] : memref<9x16x16xbf16, #tpu.memory_space<vmem>>, vector<1x16x16xbf16>
    %42 = vector.shape_cast %41 : vector<1x16x16xbf16> to vector<16x16xbf16>
    %cst_49 = arith.constant dense<0.000000e+00> : vector<256x16xf32>
    %43 = tpu.matmul %40, %42, %cst_49 {dimension_numbers = #tpu.dot_dimension_numbers<[1], [0], [0], [1], [0, 0, 1, 1], [], []>} : vector<256x16xbf16>, vector<16x16xbf16>, vector<256x16xf32> -> vector<256x16xf32>
    %44 = arith.addf %38, %43 : vector<256x16xf32>
    %c1_50 = arith.constant 1 : index
    %c1_51 = arith.constant 1 : index
    %c0_52 = arith.constant 0 : index
    %45 = vector.load %arg7[%c1_50, %c1_51, %c0_52] : memref<18x18x16xbf16, #tpu.memory_space<vmem>>, vector<16x16x16xbf16>
    %46 = vector.shape_cast %45 : vector<16x16x16xbf16> to vector<256x16xbf16>
    %c4 = arith.constant 4 : index
    %c0_53 = arith.constant 0 : index
    %c0_54 = arith.constant 0 : index
    %47 = vector.load %arg4[%c4, %c0_53, %c0_54] : memref<9x16x16xbf16, #tpu.memory_space<vmem>>, vector<1x16x16xbf16>
    %48 = vector.shape_cast %47 : vector<1x16x16xbf16> to vector<16x16xbf16>
    %cst_55 = arith.constant dense<0.000000e+00> : vector<256x16xf32>
    %49 = tpu.matmul %46, %48, %cst_55 {dimension_numbers = #tpu.dot_dimension_numbers<[1], [0], [0], [1], [0, 0, 1, 1], [], []>} : vector<256x16xbf16>, vector<16x16xbf16>, vector<256x16xf32> -> vector<256x16xf32>
    %50 = arith.addf %44, %49 : vector<256x16xf32>
    %c1_56 = arith.constant 1 : index
    %c2_57 = arith.constant 2 : index
    %c0_58 = arith.constant 0 : index
    %51 = vector.load %arg7[%c1_56, %c2_57, %c0_58] : memref<18x18x16xbf16, #tpu.memory_space<vmem>>, vector<16x16x16xbf16>
    %52 = vector.shape_cast %51 : vector<16x16x16xbf16> to vector<256x16xbf16>
    %c5 = arith.constant 5 : index
    %c0_59 = arith.constant 0 : index
    %c0_60 = arith.constant 0 : index
    %53 = vector.load %arg4[%c5, %c0_59, %c0_60] : memref<9x16x16xbf16, #tpu.memory_space<vmem>>, vector<1x16x16xbf16>
    %54 = vector.shape_cast %53 : vector<1x16x16xbf16> to vector<16x16xbf16>
    %cst_61 = arith.constant dense<0.000000e+00> : vector<256x16xf32>
    %55 = tpu.matmul %52, %54, %cst_61 {dimension_numbers = #tpu.dot_dimension_numbers<[1], [0], [0], [1], [0, 0, 1, 1], [], []>} : vector<256x16xbf16>, vector<16x16xbf16>, vector<256x16xf32> -> vector<256x16xf32>
    %56 = arith.addf %50, %55 : vector<256x16xf32>
    %c2_62 = arith.constant 2 : index
    %c0_63 = arith.constant 0 : index
    %c0_64 = arith.constant 0 : index
    %57 = vector.load %arg7[%c2_62, %c0_63, %c0_64] : memref<18x18x16xbf16, #tpu.memory_space<vmem>>, vector<16x16x16xbf16>
    %58 = vector.shape_cast %57 : vector<16x16x16xbf16> to vector<256x16xbf16>
    %c6 = arith.constant 6 : index
    %c0_65 = arith.constant 0 : index
    %c0_66 = arith.constant 0 : index
    %59 = vector.load %arg4[%c6, %c0_65, %c0_66] : memref<9x16x16xbf16, #tpu.memory_space<vmem>>, vector<1x16x16xbf16>
    %60 = vector.shape_cast %59 : vector<1x16x16xbf16> to vector<16x16xbf16>
    %cst_67 = arith.constant dense<0.000000e+00> : vector<256x16xf32>
    %61 = tpu.matmul %58, %60, %cst_67 {dimension_numbers = #tpu.dot_dimension_numbers<[1], [0], [0], [1], [0, 0, 1, 1], [], []>} : vector<256x16xbf16>, vector<16x16xbf16>, vector<256x16xf32> -> vector<256x16xf32>
    %62 = arith.addf %56, %61 : vector<256x16xf32>
    %c2_68 = arith.constant 2 : index
    %c1_69 = arith.constant 1 : index
    %c0_70 = arith.constant 0 : index
    %63 = vector.load %arg7[%c2_68, %c1_69, %c0_70] : memref<18x18x16xbf16, #tpu.memory_space<vmem>>, vector<16x16x16xbf16>
    %64 = vector.shape_cast %63 : vector<16x16x16xbf16> to vector<256x16xbf16>
    %c7 = arith.constant 7 : index
    %c0_71 = arith.constant 0 : index
    %c0_72 = arith.constant 0 : index
    %65 = vector.load %arg4[%c7, %c0_71, %c0_72] : memref<9x16x16xbf16, #tpu.memory_space<vmem>>, vector<1x16x16xbf16>
    %66 = vector.shape_cast %65 : vector<1x16x16xbf16> to vector<16x16xbf16>
    %cst_73 = arith.constant dense<0.000000e+00> : vector<256x16xf32>
    %67 = tpu.matmul %64, %66, %cst_73 {dimension_numbers = #tpu.dot_dimension_numbers<[1], [0], [0], [1], [0, 0, 1, 1], [], []>} : vector<256x16xbf16>, vector<16x16xbf16>, vector<256x16xf32> -> vector<256x16xf32>
    %68 = arith.addf %62, %67 : vector<256x16xf32>
    %c2_74 = arith.constant 2 : index
    %c2_75 = arith.constant 2 : index
    %c0_76 = arith.constant 0 : index
    %69 = vector.load %arg7[%c2_74, %c2_75, %c0_76] : memref<18x18x16xbf16, #tpu.memory_space<vmem>>, vector<16x16x16xbf16>
    %70 = vector.shape_cast %69 : vector<16x16x16xbf16> to vector<256x16xbf16>
    %c8 = arith.constant 8 : index
    %c0_77 = arith.constant 0 : index
    %c0_78 = arith.constant 0 : index
    %71 = vector.load %arg4[%c8, %c0_77, %c0_78] : memref<9x16x16xbf16, #tpu.memory_space<vmem>>, vector<1x16x16xbf16>
    %72 = vector.shape_cast %71 : vector<1x16x16xbf16> to vector<16x16xbf16>
    %cst_79 = arith.constant dense<0.000000e+00> : vector<256x16xf32>
    %73 = tpu.matmul %70, %72, %cst_79 {dimension_numbers = #tpu.dot_dimension_numbers<[1], [0], [0], [1], [0, 0, 1, 1], [], []>} : vector<256x16xbf16>, vector<16x16xbf16>, vector<256x16xf32> -> vector<256x16xf32>
    %74 = arith.addf %68, %73 : vector<256x16xf32>
    %75 = arith.truncf %74 : vector<256x16xf32> to vector<256x16xbf16>
    %76 = vector.shape_cast %75 : vector<256x16xbf16> to vector<1x16x16x16xbf16>
    %c0_80 = arith.constant 0 : index
    %c0_81 = arith.constant 0 : index
    %c0_82 = arith.constant 0 : index
    %c0_83 = arith.constant 0 : index
    %77 = vector.load %arg5[%c0_80, %c0_81, %c0_82, %c0_83] : memref<1x16x16x16xbf16, #tpu.memory_space<vmem>>, vector<1x16x16x16xbf16>
    tpu.vector_store %arg5[%c0_80, %c0_81, %c0_82, %c0_83], %76 {strides = array<i32>} : memref<1x16x16x16xbf16, #tpu.memory_space<vmem>>, vector<1x16x16x16xbf16>,
    %78 = arith.extf %75 : vector<256x16xbf16> to vector<256x16xf32>
    %cst_84 = arith.constant dense<0.000000e+00> : vector<16xf32>
    %79 = vector.multi_reduction <add>, %78, %cst_84 [0] : vector<256x16xf32> to vector<16xf32>
    %80 = vector.shape_cast %79 : vector<16xf32> to vector<1x16xf32>
    %81 = arith.mulf %78, %78 : vector<256x16xf32>
    %cst_85 = arith.constant dense<0.000000e+00> : vector<16xf32>
    %82 = vector.multi_reduction <add>, %81, %cst_85 [0] : vector<256x16xf32> to vector<16xf32>
    %83 = vector.shape_cast %82 : vector<16xf32> to vector<1x16xf32>
    %84 = tpu.concatenate %80, %83 in 0 : vector<1x16xf32>, vector<1x16xf32> -> vector<2x16xf32>
    %85 = vector.shape_cast %84 : vector<2x16xf32> to vector<1x2x16xf32>
    %c0_86 = arith.constant 0 : index
    %c0_87 = arith.constant 0 : index
    %c0_88 = arith.constant 0 : index
    %86 = vector.load %arg6[%c0_86, %c0_87, %c0_88] : memref<1x2x16xf32, #tpu.memory_space<vmem>>, vector<1x2x16xf32>
    tpu.vector_store %arg6[%c0_86, %c0_87, %c0_88], %85 {strides = array<i32>} : memref<1x2x16xf32, #tpu.memory_space<vmem>>, vector<1x2x16xf32>,
    return
  }
  func.func @transform_0(%arg0: i32) -> (i32, i32, i32, i32) {
    %c0_i32 = arith.constant 0 : i32
    %c0_i32_0 = arith.constant 0 : i32
    %c0_i32_1 = arith.constant 0 : i32
    %c0_i32_2 = arith.constant 0 : i32
    return %arg0, %c0_i32, %c0_i32_0, %c0_i32_1 : i32, i32, i32, i32
  }
  func.func @transform_1(%arg0: i32) -> (i32, i32) {
    %c0_i32 = arith.constant 0 : i32
    %c0_i32_0 = arith.constant 0 : i32
    %c0_i32_1 = arith.constant 0 : i32
    return %c0_i32, %c0_i32_0 : i32, i32
  }
  func.func @transform_2(%arg0: i32) -> (i32, i32) {
    %c0_i32 = arith.constant 0 : i32
    %c0_i32_0 = arith.constant 0 : i32
    %c0_i32_1 = arith.constant 0 : i32
    return %c0_i32, %c0_i32_0 : i32, i32
  }
  func.func @transform_3(%arg0: i32) -> (i32, i32, i32) {
    %c0_i32 = arith.constant 0 : i32
    %c0_i32_0 = arith.constant 0 : i32
    %c0_i32_1 = arith.constant 0 : i32
    %c0_i32_2 = arith.constant 0 : i32
    return %c0_i32, %c0_i32_0, %c0_i32_1 : i32, i32, i32
  }
  func.func @transform_4(%arg0: i32) -> (i32, i32, i32, i32) {
    %c0_i32 = arith.constant 0 : i32
    %c0_i32_0 = arith.constant 0 : i32
    %c0_i32_1 = arith.constant 0 : i32
    %c0_i32_2 = arith.constant 0 : i32
    return %arg0, %c0_i32, %c0_i32_0, %c0_i32_1 : i32, i32, i32, i32
  }
  func.func @transform_5(%arg0: i32) -> (i32, i32, i32) {
    %c0_i32 = arith.constant 0 : i32
    %c0_i32_0 = arith.constant 0 : i32
    %c0_i32_1 = arith.constant 0 : i32
    return %arg0, %c0_i32, %c0_i32_0 : i32, i32, i32
  }
}

module attributes {stable_mosaic.version = 11 : i64} {
  func.func @finalize_kernel(%arg0: i32, %arg1: i32, %arg2: memref<1x8x16x32xbf16, #tpu.memory_space<vmem>>, %arg3: memref<1x8x16x32xbf16, #tpu.memory_space<vmem>>, %arg4: memref<1x32xf32, #tpu.memory_space<vmem>>, %arg5: memref<1x32xf32, #tpu.memory_space<vmem>>, %arg6: memref<1x32xf32, #tpu.memory_space<vmem>>, %arg7: memref<1x32xf32, #tpu.memory_space<vmem>>, %arg8: memref<1x8x16x32xf32, #tpu.memory_space<vmem>>) attributes {dimension_semantics = [#tpu.dimension_semantics<parallel>, #tpu.dimension_semantics<parallel>], iteration_bounds = array<i64: 2, 2>, scalar_prefetch = 0 : i64, scratch_operands = 0 : i64, tpu.core_type = #tpu.core_type<tc>, window_params = [{transform_indices = @transform_0, window_bounds = array<i64: 1, 8, 16, 32>}, {transform_indices = @transform_1, window_bounds = array<i64: 1, 8, 16, 32>}, {pipeline_mode = #tpu.pipeline_mode<synchronous>, transform_indices = @transform_2, window_bounds = array<i64: 1, 32>}, {pipeline_mode = #tpu.pipeline_mode<synchronous>, transform_indices = @transform_3, window_bounds = array<i64: 1, 32>}, {pipeline_mode = #tpu.pipeline_mode<synchronous>, transform_indices = @transform_4, window_bounds = array<i64: 1, 32>}, {pipeline_mode = #tpu.pipeline_mode<synchronous>, transform_indices = @transform_5, window_bounds = array<i64: 1, 32>}, {transform_indices = @transform_6, window_bounds = array<i64: 1, 8, 16, 32>}]} {
    %c0 = arith.constant 0 : index
    %c0_0 = arith.constant 0 : index
    %c0_1 = arith.constant 0 : index
    %c0_2 = arith.constant 0 : index
    %0 = vector.load %arg2[%c0, %c0_0, %c0_1, %c0_2] : memref<1x8x16x32xbf16, #tpu.memory_space<vmem>>, vector<1x8x16x32xbf16>
    %1 = vector.shape_cast %0 : vector<1x8x16x32xbf16> to vector<128x32xbf16>
    %2 = arith.extf %1 : vector<128x32xbf16> to vector<128x32xf32>
    %c0_3 = arith.constant 0 : index
    %c0_4 = arith.constant 0 : index
    %3 = vector.load %arg4[%c0_3, %c0_4] : memref<1x32xf32, #tpu.memory_space<vmem>>, vector<1x32xf32>
    %4 = vector.broadcast %3 : vector<1x32xf32> to vector<128x32xf32>
    %5 = arith.mulf %2, %4 : vector<128x32xf32>
    %c0_5 = arith.constant 0 : index
    %c0_6 = arith.constant 0 : index
    %6 = vector.load %arg5[%c0_5, %c0_6] : memref<1x32xf32, #tpu.memory_space<vmem>>, vector<1x32xf32>
    %7 = vector.broadcast %6 : vector<1x32xf32> to vector<128x32xf32>
    %8 = arith.addf %5, %7 : vector<128x32xf32>
    %c0_7 = arith.constant 0 : index
    %c0_8 = arith.constant 0 : index
    %c0_9 = arith.constant 0 : index
    %c0_10 = arith.constant 0 : index
    %9 = vector.load %arg3[%c0_7, %c0_8, %c0_9, %c0_10] : memref<1x8x16x32xbf16, #tpu.memory_space<vmem>>, vector<1x8x16x32xbf16>
    %10 = vector.shape_cast %9 : vector<1x8x16x32xbf16> to vector<128x32xbf16>
    %11 = arith.extf %10 : vector<128x32xbf16> to vector<128x32xf32>
    %c0_11 = arith.constant 0 : index
    %c0_12 = arith.constant 0 : index
    %12 = vector.load %arg6[%c0_11, %c0_12] : memref<1x32xf32, #tpu.memory_space<vmem>>, vector<1x32xf32>
    %13 = vector.broadcast %12 : vector<1x32xf32> to vector<128x32xf32>
    %14 = arith.mulf %11, %13 : vector<128x32xf32>
    %15 = arith.addf %8, %14 : vector<128x32xf32>
    %c0_13 = arith.constant 0 : index
    %c0_14 = arith.constant 0 : index
    %16 = vector.load %arg7[%c0_13, %c0_14] : memref<1x32xf32, #tpu.memory_space<vmem>>, vector<1x32xf32>
    %17 = vector.broadcast %16 : vector<1x32xf32> to vector<128x32xf32>
    %18 = arith.addf %15, %17 : vector<128x32xf32>
    %cst = arith.constant 0.000000e+00 : f32
    %19 = vector.broadcast %cst : f32 to vector<128x32xf32>
    %20 = arith.maximumf %18, %19 : vector<128x32xf32>
    %21 = vector.shape_cast %20 : vector<128x32xf32> to vector<1x8x16x32xf32>
    %c0_15 = arith.constant 0 : index
    %c0_16 = arith.constant 0 : index
    %c0_17 = arith.constant 0 : index
    %c0_18 = arith.constant 0 : index
    %22 = vector.load %arg8[%c0_15, %c0_16, %c0_17, %c0_18] : memref<1x8x16x32xf32, #tpu.memory_space<vmem>>, vector<1x8x16x32xf32>
    tpu.vector_store %arg8[%c0_15, %c0_16, %c0_17, %c0_18], %21 {strides = array<i32>} : memref<1x8x16x32xf32, #tpu.memory_space<vmem>>, vector<1x8x16x32xf32>,
    return
  }
  func.func @transform_0(%arg0: i32, %arg1: i32) -> (i32, i32, i32, i32) {
    %c0_i32 = arith.constant 0 : i32
    %c0_i32_0 = arith.constant 0 : i32
    %c0_i32_1 = arith.constant 0 : i32
    return %arg0, %arg1, %c0_i32, %c0_i32_0 : i32, i32, i32, i32
  }
  func.func @transform_1(%arg0: i32, %arg1: i32) -> (i32, i32, i32, i32) {
    %c0_i32 = arith.constant 0 : i32
    %c0_i32_0 = arith.constant 0 : i32
    %c0_i32_1 = arith.constant 0 : i32
    return %arg0, %arg1, %c0_i32, %c0_i32_0 : i32, i32, i32, i32
  }
  func.func @transform_2(%arg0: i32, %arg1: i32) -> (i32, i32) {
    %c0_i32 = arith.constant 0 : i32
    %c0_i32_0 = arith.constant 0 : i32
    %c0_i32_1 = arith.constant 0 : i32
    return %c0_i32, %c0_i32_0 : i32, i32
  }
  func.func @transform_3(%arg0: i32, %arg1: i32) -> (i32, i32) {
    %c0_i32 = arith.constant 0 : i32
    %c0_i32_0 = arith.constant 0 : i32
    %c0_i32_1 = arith.constant 0 : i32
    return %c0_i32, %c0_i32_0 : i32, i32
  }
  func.func @transform_4(%arg0: i32, %arg1: i32) -> (i32, i32) {
    %c0_i32 = arith.constant 0 : i32
    %c0_i32_0 = arith.constant 0 : i32
    %c0_i32_1 = arith.constant 0 : i32
    return %c0_i32, %c0_i32_0 : i32, i32
  }
  func.func @transform_5(%arg0: i32, %arg1: i32) -> (i32, i32) {
    %c0_i32 = arith.constant 0 : i32
    %c0_i32_0 = arith.constant 0 : i32
    %c0_i32_1 = arith.constant 0 : i32
    return %c0_i32, %c0_i32_0 : i32, i32
  }
  func.func @transform_6(%arg0: i32, %arg1: i32) -> (i32, i32, i32, i32) {
    %c0_i32 = arith.constant 0 : i32
    %c0_i32_0 = arith.constant 0 : i32
    %c0_i32_1 = arith.constant 0 : i32
    return %arg0, %arg1, %c0_i32, %c0_i32_0 : i32, i32, i32, i32
  }
}

</mosaic_0001>

<llo_original>
// kernel: _lambda_.6
$region0: #{_lambda_.6}
  #allocation0 [shape = 'u32[]', space=smem, size = 0x4, offset = 0x4, fixed_abs, tag = 'smem constant byte address 0x4 - core index']
  #allocation1 [shape = 'u32[144,128]{1,0:T(1,128)}', space=vmem, size = 0x12000, scoped, tag = 'internal scratch']
  %s0 = inlined_call_operand.vmem [shape: bf16[2,16,16,16], index: 0, kind: input, shape index: {}]
  %s1 = inlined_call_operand.vmem [shape: f32[1,16], index: 1, kind: input, shape index: {}]
  %s2 = inlined_call_operand.vmem [shape: f32[1,16], index: 2, kind: input, shape index: {}]
  %s3 = inlined_call_operand.vmem [shape: bf16[16,32], index: 3, kind: input, shape index: {}]
  %s4 = inlined_call_operand.vmem [shape: bf16[2,16,16,32], index: 4, kind: output, shape index: {0}]
  %s5 = inlined_call_operand.vmem [shape: f32[2,2,2,32], index: 5, kind: output, shape index: {1}]
  %6 = xla_tuple %s4, %s5
  %s7 = sld [smem:[#allocation0]]
  $region57: #{_lambda_.6} parent=0
    _
  %s9 = ssub.s32 1, %s7
  %s10 = scalar_select 0, %s9, %s7
  loop: start=0, step=1, limit=6
  $region2: #{_lambda_.6} parent=0 // loop_pre_header
    _
  $region3: #{_lambda_.6} parent=0 // loop_header
    %s12 = sphi 0, %s16
    %p13 = scmp.ge.s32.totalorder %s12, 6
    %s19 = sphi 0, %s31
    %s20 = sphi 0, %s27
    %s21 = sphi 0, %s19
    %s22 = sphi 0, %s20
    %s23 = sphi 0, %s21
    %s24 = sphi 0, %s22
    %s36 = sphi 0, %s38
    %s39 = sphi 0, %s36
    %s40 = sphi 0, %s39
    %s56 = sphi 0, %s40
    %s60 = sphi 0, %s60
    %s62 = sphi 0, %s60
    %s63 = sphi 0, %s62
    %s77 = sphi 0, %s63
    %s81 = sphi 0, %s81
    %s83 = sphi 0, %s81
    %s84 = sphi 0, %s83
    %s98 = sphi 0, %s84
    %s102 = sphi 0, %s102
    %s104 = sphi 0, %s102
    %s105 = sphi 0, %s104
    %s119 = sphi 0, %s105
    %s127 = sphi 0, %s129
    %s130 = sphi 0, %s127
    %s131 = sphi 0, %s130
    %s147 = sphi 0, %s131
    %s155 = sphi 0, %s157
    %s158 = sphi 0, %s155
    %s159 = sphi 0, %s158
    %s175 = sphi 0, %s159
  $region4: #{_lambda_.6} parent=0 // loop_header_branch
    %15 = sbr.rel (%p13) target = $region8
  $region5: #{_lambda_.6} parent=0 // loop_body
    %s17 = ssub.s32 %s12, 1
    %s18 = ssub.s32 %s12, 2
    %s25 = sadd.s32 1, %s20
    %p26 = scmp.ge.s32.totalorder %s25, 2
    %s27 = scalar_select %p26, 0, %s25
    %s28 = sadd.s32 1, %s19
    %s29 = scalar_select %p26, %s28, %s19
    %p30 = scmp.ge.s32.totalorder %s29, 2
    %s31 = scalar_select %p30, 0, %s29
    %s32 = ssub.s32 %s19, %s31
    %s33 = ssub.s32 %s20, %s27
    %s34 = sor.u32 %s32, %s33
    %p35 = scmp.eq.s32.totalorder %s34, 0
    %s37 = sadd.s32 %s36, 1
    %s38 = scalar_select %p35, %s36, %s37
    %p41 = pneg %p35
    %p42 = scmp.eq.s32.totalorder %s12, 3
    %p43 = por %p41, %p42
    %p44 = scmp.ne.s32.totalorder %s36, %s39
    %p45 = scmp.eq.s32.totalorder %s12, 0
    %p46 = por %p44, %p45
    %p47 = scmp.ne.s32.totalorder %s36, %s39
    %p48 = scmp.eq.s32.totalorder %s17, 3
    %p49 = por %p47, %p48
    %p50 = scmp.ne.s32.totalorder %s39, %s40
    %p51 = scmp.eq.s32.totalorder %s17, 0
    %p52 = por %p50, %p51
    %p53 = scmp.ne.s32.totalorder %s39, %s40
    %p54 = scmp.eq.s32.totalorder %s18, 3
    %p55 = por %p53, %p54
    %p57 = scmp.ne.s32.totalorder %s40, %s56
    %p58 = scmp.eq.s32.totalorder %s18, 0
    %p59 = por %p57, %p58
    %s61 = sadd.s32 %s60, 1
    %p64 = scmp.eq.s32.totalorder %s12, 3
    %p65 = scmp.ne.s32.totalorder %s60, %s62
    %p66 = scmp.eq.s32.totalorder %s12, 0
    %p67 = por %p65, %p66
    %p68 = scmp.ne.s32.totalorder %s60, %s62
    %p69 = scmp.eq.s32.totalorder %s17, 3
    %p70 = por %p68, %p69
    %p71 = scmp.ne.s32.totalorder %s62, %s63
    %p72 = scmp.eq.s32.totalorder %s17, 0
    %p73 = por %p71, %p72
    %p74 = scmp.ne.s32.totalorder %s62, %s63
    %p75 = scmp.eq.s32.totalorder %s18, 3
    %p76 = por %p74, %p75
    %p78 = scmp.ne.s32.totalorder %s63, %s77
    %p79 = scmp.eq.s32.totalorder %s18, 0
    %p80 = por %p78, %p79
    %s82 = sadd.s32 %s81, 1
    %p85 = scmp.eq.s32.totalorder %s12, 3
    %p86 = scmp.ne.s32.totalorder %s81, %s83
    %p87 = scmp.eq.s32.totalorder %s12, 0
    %p88 = por %p86, %p87
    %p89 = scmp.ne.s32.totalorder %s81, %s83
    %p90 = scmp.eq.s32.totalorder %s17, 3
    %p91 = por %p89, %p90
    %p92 = scmp.ne.s32.totalorder %s83, %s84
    %p93 = scmp.eq.s32.totalorder %s17, 0
    %p94 = por %p92, %p93
    %p95 = scmp.ne.s32.totalorder %s83, %s84
    %p96 = scmp.eq.s32.totalorder %s18, 3
    %p97 = por %p95, %p96
    %p99 = scmp.ne.s32.totalorder %s84, %s98
    %p100 = scmp.eq.s32.totalorder %s18, 0
    %p101 = por %p99, %p100
    %s103 = sadd.s32 %s102, 1
    %p106 = scmp.eq.s32.totalorder %s12, 3
    %p107 = scmp.ne.s32.totalorder %s102, %s104
    %p108 = scmp.eq.s32.totalorder %s12, 0
    %p109 = por %p107, %p108
    %p110 = scmp.ne.s32.totalorder %s102, %s104
    %p111 = scmp.eq.s32.totalorder %s17, 3
    %p112 = por %p110, %p111
    %p113 = scmp.ne.s32.totalorder %s104, %s105
    %p114 = scmp.eq.s32.totalorder %s17, 0
    %p115 = por %p113, %p114
    %p116 = scmp.ne.s32.totalorder %s104, %s105
    %p117 = scmp.eq.s32.totalorder %s18, 3
    %p118 = por %p116, %p117
    %p120 = scmp.ne.s32.totalorder %s105, %s119
    %p121 = scmp.eq.s32.totalorder %s18, 0
    %p122 = por %p120, %p121
    %s123 = ssub.s32 %s19, %s31
    %s124 = ssub.s32 %s20, %s27
    %s125 = sor.u32 %s123, %s124
    %p126 = scmp.eq.s32.totalorder %s125, 0
    %s128 = sadd.s32 %s127, 1
    %s129 = scalar_select %p126, %s127, %s128
    %p132 = pneg %p126
    %p133 = scmp.eq.s32.totalorder %s12, 3
    %p134 = por %p132, %p133
    %p135 = scmp.ne.s32.totalorder %s127, %s130
    %p136 = scmp.eq.s32.totalorder %s12, 0
    %p137 = por %p135, %p136
    %p138 = scmp.ne.s32.totalorder %s127, %s130
    %p139 = scmp.eq.s32.totalorder %s17, 3
    %p140 = por %p138, %p139
    %p141 = scmp.ne.s32.totalorder %s130, %s131
    %p142 = scmp.eq.s32.totalorder %s17, 0
    %p143 = por %p141, %p142
    %p144 = scmp.ne.s32.totalorder %s130, %s131
    %p145 = scmp.eq.s32.totalorder %s18, 3
    %p146 = por %p144, %p145
    %p148 = scmp.ne.s32.totalorder %s131, %s147
    %p149 = scmp.eq.s32.totalorder %s18, 0
    %p150 = por %p148, %p149
    %s151 = ssub.s32 %s19, %s31
    %s152 = ssub.s32 %s20, %s27
    %s153 = sor.u32 %s151, %s152
    %p154 = scmp.eq.s32.totalorder %s153, 0
    %s156 = sadd.s32 %s155, 1
    %s157 = scalar_select %p154, %s155, %s156
    %p160 = pneg %p154
    %p161 = scmp.eq.s32.totalorder %s12, 3
    %p162 = por %p160, %p161
    %p163 = scmp.ne.s32.totalorder %s155, %s158
    %p164 = scmp.eq.s32.totalorder %s12, 0
    %p165 = por %p163, %p164
    %p166 = scmp.ne.s32.totalorder %s155, %s158
    %p167 = scmp.eq.s32.totalorder %s17, 3
    %p168 = por %p166, %p167
    %p169 = scmp.ne.s32.totalorder %s158, %s159
    %p170 = scmp.eq.s32.totalorder %s17, 0
    %p171 = por %p169, %p170
    %p172 = scmp.ne.s32.totalorder %s158, %s159
    %p173 = scmp.eq.s32.totalorder %s18, 3
    %p174 = por %p172, %p173
    %p176 = scmp.ne.s32.totalorder %s159, %s175
    %p177 = scmp.eq.s32.totalorder %s18, 0
    %p178 = por %p176, %p177
    %p179 = scmp.le.s32.totalorder 1, %s12
    %p180 = scmp.lt.s32.totalorder %s12, 5
    %p181 = pnand %p179, %p180
    %p182 = pneg %p181
    // Predicated region
    $region9: #{_lambda_.6} parent=5 // pred_check
      _
    $region10: #{_lambda_.6} parent=5 // pred_check_branch
      %184 = sbr.rel (%p181) target = $region12
    $region11: #{_lambda_.6} parent=5 // pred_region
      %s185 = ssub.s32 %s12, 1
      // Predicated region
      $region13: #{_lambda_.6} parent=11 // pred_check
        %p186 = pneg %p73
      $region14: #{_lambda_.6} parent=11 // pred_check_branch
        %188 = sbr.rel (%p186) target = $region16
      $region15: #{_lambda_.6} parent=11 // pred_region
        _
      $region16: #{_lambda_.6} parent=11 // pred_fallthru
        _
      // Predicated region
      $region17: #{_lambda_.6} parent=11 // pred_check
        %p189 = pneg %p94
      $region18: #{_lambda_.6} parent=11 // pred_check_branch
        %191 = sbr.rel (%p189) target = $region20
      $region19: #{_lambda_.6} parent=11 // pred_region
        _
      $region20: #{_lambda_.6} parent=11 // pred_fallthru
        _
      // Predicated region
      $region21: #{_lambda_.6} parent=11 // pred_check
        %p192 = pneg %p115
      $region22: #{_lambda_.6} parent=11 // pred_check_branch
        %194 = sbr.rel (%p192) target = $region24
      $region23: #{_lambda_.6} parent=11 // pred_region
        _
      $region24: #{_lambda_.6} parent=11 // pred_fallthru
        _
    $region12: #{_lambda_.6} parent=5 // pred_fallthru
      _
    %p195 = scmp.lt.s32.totalorder %s12, 4
    // Predicated region
    $region25: #{_lambda_.6} parent=5 // pred_check
      %p196 = pneg %p195
    $region26: #{_lambda_.6} parent=5 // pred_check_branch
      %198 = sbr.rel (%p196) target = $region28
    $region27: #{_lambda_.6} parent=5 // pred_region
      // Predicated region
      $region29: #{_lambda_.6} parent=27 // pred_check
        %p199 = pneg %p46
      $region30: #{_lambda_.6} parent=27 // pred_check_branch
        %201 = sbr.rel (%p199) target = $region32
      $region31: #{_lambda_.6} parent=27 // pred_region
        %s202 = smul.u32 8, %s20
        %p203 = scmp.lt.s32.totalorder %s19, 1
        %s204 = scalar_select %p203, %s19, 1
        %p205 = scmp.lt.s32.totalorder %s202, 15
        %s206 = scalar_select %p205, %s202, 15
        %s207 = smul.addr %s206, 2
        %s208 = smul.addr %s204, 32
        %s209 = sadd.s32 %s207, %s208
        %s210 = smul.addr %s209, 4
        %s211 = scalar_lea.vmem %s0, %s210
        %s212 = smul.u32 8, %s20
      $region32: #{_lambda_.6} parent=27 // pred_fallthru
        _
    $region28: #{_lambda_.6} parent=5 // pred_fallthru
      _
    %p213 = scmp.le.s32.totalorder 1, %s12
    %p214 = scmp.lt.s32.totalorder %s12, 5
    %p215 = pnand %p213, %p214
    %p216 = pneg %p215
    // Predicated region
    $region33: #{_lambda_.6} parent=5 // pred_check
      _
    $region34: #{_lambda_.6} parent=5 // pred_check_branch
      %218 = sbr.rel (%p215) target = $region36
    $region35: #{_lambda_.6} parent=5 // pred_region
      %s219 = ssub.s32 %s12, 1
      %s220 = smul.u32 8, %s22
      %p221 = scmp.lt.s32.totalorder %s21, 1
      %s222 = scalar_select %p221, %s21, 1
      %p223 = scmp.lt.s32.totalorder %s220, 15
      %s224 = scalar_select %p223, %s220, 15
      %s225 = smul.addr %s224, 2
      %s226 = smul.addr %s222, 32
      %s227 = sadd.s32 %s225, %s226
      %s228 = smul.addr %s227, 4
      %s229 = scalar_lea.vmem %s0, %s228
      %p230 = pneg %p52
      %p231 = pneg %p49
      %p232 = pneg %p73
      %p233 = pneg %p70
      %p234 = pneg %p94
      %p235 = pneg %p91
      %p236 = pneg %p115
      %p237 = pneg %p112
      %p238 = pneg %p143
      %p239 = pneg %p140
      %s240 = smul.u32 8, %s22
      %p241 = scmp.lt.s32.totalorder %s21, 1
      %s242 = scalar_select %p241, %s21, 1
      %p243 = scmp.lt.s32.totalorder %s240, 15
      %s244 = scalar_select %p243, %s240, 15
      %s245 = smul.addr %s244, 2
      %s246 = smul.addr %s242, 32
      %s247 = sadd.s32 %s245, %s246
      %s248 = smul.addr %s247, 4
      %s249 = scalar_lea.vmem %s4, %s248
      %p250 = pneg %p171
      %p251 = pneg %p168
      %p252 = scmp.lt.s32.totalorder %s21, 1
      %s253 = scalar_select %p252, %s21, 1
      %p254 = scmp.lt.s32.totalorder %s22, 1
      %s255 = scalar_select %p254, %s22, 1
      %s256 = smul.addr %s253, 2
      %s257 = sadd.s32 %s255, %s256
      %s258 = smul.addr %s257, 2
      %s259 = scalar_lea.vmem %s5, %s258
      %s260 = smul.u32 8, %s22
      %p261 = scmp.lt.s32.totalorder %s21, 1
      %s262 = scalar_select %p261, %s21, 1
      %p263 = scmp.lt.s32.totalorder %s260, 15
      %s264 = scalar_select %p263, %s260, 15
      %s265 = smul.addr %s264, 2
      %s266 = smul.addr %s262, 32
      %s267 = sadd.s32 %s265, %s266
      %s268 = smul.addr %s267, 4
      %s269 = scalar_lea.vmem %s0, %s268
      %s270 = smul.u32 8, %s22
      %s271 = smul.u32 8, %s22
      %p272 = scmp.lt.s32.totalorder %s21, 1
      %s273 = scalar_select %p272, %s21, 1
      %p274 = scmp.lt.s32.totalorder %s271, 15
      %s275 = scalar_select %p274, %s271, 15
      %s276 = smul.addr %s275, 2
      %s277 = smul.addr %s273, 32
      %s278 = sadd.s32 %s276, %s277
      %s279 = smul.addr %s278, 4
      %s280 = scalar_lea.vmem %s4, %s279
      %s281 = smul.u32 8, %s22
      %p282 = scmp.lt.s32.totalorder %s21, 1
      %s283 = scalar_select %p282, %s21, 1
      %p284 = scmp.lt.s32.totalorder %s22, 1
      %s285 = scalar_select %p284, %s22, 1
      %s286 = smul.addr %s283, 2
      %s287 = sadd.s32 %s285, %s286
      %s288 = smul.addr %s287, 2
      %s289 = scalar_lea.vmem %s5, %s288
      %v291 = vld [vmem:[%s269] sm:$0xf]
      %v292 = vld [vmem:[%s269 + $0x4] sm:$0xf]
      %v293 = vld [vmem:[%s269 + $0x8] sm:$0xf]
      %v294 = vld [vmem:[%s269 + $0xc] sm:$0xf]
      %v295 = vld [vmem:[%s269 + $0x10] sm:$0xf]
      %v296 = vld [vmem:[%s269 + $0x14] sm:$0xf]
      %v297 = vld [vmem:[%s269 + $0x18] sm:$0xf]
      %v298 = vld [vmem:[%s269 + $0x1c] sm:$0xf]
      %v299 = vld [vmem:[%s269 + $0x20] sm:$0xf]
      %v300 = vld [vmem:[%s269 + $0x24] sm:$0xf]
      %v301 = vld [vmem:[%s269 + $0x28] sm:$0xf]
      %v302 = vld [vmem:[%s269 + $0x2c] sm:$0xf]
      %v303 = vld [vmem:[%s269 + $0x30] sm:$0xf]
      %v304 = vld [vmem:[%s269 + $0x34] sm:$0xf]
      %v305 = vld [vmem:[%s269 + $0x38] sm:$0xf]
      %v306 = vld [vmem:[%s269 + $0x3c] sm:$0xf]
      %v307 = vunpack.c.l.bf16 %v291
      %v308 = vunpack.c.l.bf16 %v292
      %v309 = vunpack.c.l.bf16 %v293
      %v310 = vunpack.c.l.bf16 %v294
      %v311 = vunpack.c.l.bf16 %v295
      %v312 = vunpack.c.l.bf16 %v296
      %v313 = vunpack.c.l.bf16 %v297
      %v314 = vunpack.c.l.bf16 %v298
      %v315 = vunpack.c.l.bf16 %v299
      %v316 = vunpack.c.l.bf16 %v300
      %v317 = vunpack.c.l.bf16 %v301
      %v318 = vunpack.c.l.bf16 %v302
      %v319 = vunpack.c.l.bf16 %v303
      %v320 = vunpack.c.l.bf16 %v304
      %v321 = vunpack.c.l.bf16 %v305
      %v322 = vunpack.c.l.bf16 %v306
      %v323 = vld [vmem:[%s1] sm:$0x1]
      %v325 = vlaneseq
      %v326 = vshrl.u32 %v325, 7
      %v327 = vsub.s32 0, %v326
      %v328 = vrot.slane %v323, %v327
      %v330 = vmul.f32 %v307, %v328
      %v331 = vmul.f32 %v308, %v328
      %v332 = vmul.f32 %v309, %v328
      %v333 = vmul.f32 %v310, %v328
      %v334 = vmul.f32 %v311, %v328
      %v335 = vmul.f32 %v312, %v328
      %v336 = vmul.f32 %v313, %v328
      %v337 = vmul.f32 %v314, %v328
      %v338 = vmul.f32 %v315, %v328
      %v339 = vmul.f32 %v316, %v328
      %v340 = vmul.f32 %v317, %v328
      %v341 = vmul.f32 %v318, %v328
      %v342 = vmul.f32 %v319, %v328
      %v343 = vmul.f32 %v320, %v328
      %v344 = vmul.f32 %v321, %v328
      %v345 = vmul.f32 %v322, %v328
      %v346 = vld [vmem:[%s2] sm:$0x1]
      %v348 = vlaneseq
      %v349 = vshrl.u32 %v348, 7
      %v350 = vsub.s32 0, %v349
      %v351 = vrot.slane %v346, %v350
      %v353 = vadd.f32 %v330, %v351
      %v354 = vadd.f32 %v331, %v351
      %v355 = vadd.f32 %v332, %v351
      %v356 = vadd.f32 %v333, %v351
      %v357 = vadd.f32 %v334, %v351
      %v358 = vadd.f32 %v335, %v351
      %v359 = vadd.f32 %v336, %v351
      %v360 = vadd.f32 %v337, %v351
      %v361 = vadd.f32 %v338, %v351
      %v362 = vadd.f32 %v339, %v351
      %v363 = vadd.f32 %v340, %v351
      %v364 = vadd.f32 %v341, %v351
      %v365 = vadd.f32 %v342, %v351
      %v366 = vadd.f32 %v343, %v351
      %v367 = vadd.f32 %v344, %v351
      %v368 = vadd.f32 %v345, %v351
      %v369 = vmax.f32 %v353, 0.0
      %v370 = vmax.f32 %v354, 0.0
      %v371 = vmax.f32 %v355, 0.0
      %v372 = vmax.f32 %v356, 0.0
      %v373 = vmax.f32 %v357, 0.0
      %v374 = vmax.f32 %v358, 0.0
      %v375 = vmax.f32 %v359, 0.0
      %v376 = vmax.f32 %v360, 0.0
      %v377 = vmax.f32 %v361, 0.0
      %v378 = vmax.f32 %v362, 0.0
      %v379 = vmax.f32 %v363, 0.0
      %v380 = vmax.f32 %v364, 0.0
      %v381 = vmax.f32 %v365, 0.0
      %v382 = vmax.f32 %v366, 0.0
      %v383 = vmax.f32 %v367, 0.0
      %v384 = vmax.f32 %v368, 0.0
      %v385 = vpack.c.bf16 %v370, %v369
      %v386 = vpack.c.bf16 %v372, %v371
      %v387 = vpack.c.bf16 %v374, %v373
      %v388 = vpack.c.bf16 %v376, %v375
      %v389 = vpack.c.bf16 %v378, %v377
      %v390 = vpack.c.bf16 %v380, %v379
      %v391 = vpack.c.bf16 %v382, %v381
      %v392 = vpack.c.bf16 %v384, %v383
      %v393 = vld [vmem:[%s3] sm:$0xf]
      %v394 = vld [vmem:[%s3 + $0x4] sm:$0xf]
      %v397 = vunpack.c.l.b16 %v393
      %v398 = vunpack.c.l.b16 %v394
      %v399 = vpack.c.b16 %v398, %v397
      %vm401 = vcmask 130048
      %v403 = vsel %vm401, %v385, 0
      %v406 = vsel %vm401, %v386, 0
      %v409 = vsel %vm401, %v387, 0
      %v412 = vsel %vm401, %v388, 0
      %v415 = vsel %vm401, %v389, 0
      %v418 = vsel %vm401, %v390, 0
      %v421 = vsel %vm401, %v391, 0
      %v424 = vsel %vm401, %v392, 0
      %426 = vmatprep.subr.bf16.mxu0 0
      %427 = vmatpush1.bf16.msra.mxu0 %v399
      %428 = vmatprep.subr.bf16.mxu0 0
      %429 = vmatpush1.bf16.msra.mxu0 0
      %430 = vmatprep.subr.bf16.mxu0 0
      %431 = vmatpush1.bf16.msra.mxu0 0
      %432 = vmatprep.subr.bf16.mxu0 0
      %433 = vmatpush1.bf16.msra.mxu0 0
      %434 = vmatprep.subr.bf16.mxu0 0
      %435 = vmatpush1.bf16.msra.mxu0 0
      %436 = vmatprep.subr.bf16.mxu0 0
      %437 = vmatpush1.bf16.msra.mxu0 0
      %438 = vmatprep.subr.bf16.mxu0 0
      %439 = vmatpush1.bf16.msra.mxu0 0
      %440 = vmatprep.subr.bf16.mxu0 0
      %441 = vmatpush1.bf16.msra.mxu0 0
      %442 = vmatprep.subr.bf16.mxu0 0
      %443 = vmatpush1.bf16.msra.mxu0 0
      %444 = vmatprep.subr.bf16.mxu0 0
      %445 = vmatpush1.bf16.msra.mxu0 0
      %446 = vmatprep.subr.bf16.mxu0 0
      %447 = vmatpush1.bf16.msra.mxu0 0
      %448 = vmatprep.subr.bf16.mxu0 0
      %449 = vmatpush1.bf16.msra.mxu0 0
      %450 = vmatprep.subr.bf16.mxu0 0
      %451 = vmatpush1.bf16.msra.mxu0 0
      %452 = vmatprep.subr.bf16.mxu0 0
      %453 = vmatpush1.bf16.msra.mxu0 0
      %454 = vmatprep.subr.bf16.mxu0 0
      %455 = vmatpush1.bf16.msra.mxu0 0
      %456 = vmatprep.subr.bf16.mxu0 0
      %457 = vmatpush1.bf16.msra.mxu0 0
      %458 = vmatprep.mubr.bf16.mxu0 0
      %459 = vmatmul.mubr.bf16.gmra.mrb[0].mxu0 %v403
      %v460 = vpop.f32.mrb[0].mxu0
      %v461 = vadd.f32 0.0, %v460
      %v462 = vpop.f32.mrb[0].mxu0
      %v463 = vpop.f32.mrb[0].mxu0
      %v464 = vadd.f32 0.0, %v463
      %v465 = vpop.f32.mrb[0].mxu0
      %466 = vmatprep.mubr.bf16.mxu0 0
      %467 = vmatmul.mubr.bf16.gmra.mrb[0].mxu0 %v406
      %v468 = vpop.f32.mrb[0].mxu0
      %v469 = vadd.f32 0.0, %v468
      %v470 = vpop.f32.mrb[0].mxu0
      %v471 = vpop.f32.mrb[0].mxu0
      %v472 = vadd.f32 0.0, %v471
      %v473 = vpop.f32.mrb[0].mxu0
      %474 = vmatprep.mubr.bf16.mxu0 0
      %475 = vmatmul.mubr.bf16.gmra.mrb[0].mxu0 %v409
      %v476 = vpop.f32.mrb[0].mxu0
      %v477 = vadd.f32 0.0, %v476
      %v478 = vpop.f32.mrb[0].mxu0
      %v479 = vpop.f32.mrb[0].mxu0
      %v480 = vadd.f32 0.0, %v479
      %v481 = vpop.f32.mrb[0].mxu0
      %482 = vmatprep.mubr.bf16.mxu0 0
      %483 = vmatmul.mubr.bf16.gmra.mrb[0].mxu0 %v412
      %v484 = vpop.f32.mrb[0].mxu0
      %v485 = vadd.f32 0.0, %v484
      %v486 = vpop.f32.mrb[0].mxu0
      %v487 = vpop.f32.mrb[0].mxu0
      %v488 = vadd.f32 0.0, %v487
      %v489 = vpop.f32.mrb[0].mxu0
      %490 = vmatprep.mubr.bf16.mxu0 0
      %491 = vmatmul.mubr.bf16.gmra.mrb[0].mxu0 %v415
      %v492 = vpop.f32.mrb[0].mxu0
      %v493 = vadd.f32 0.0, %v492
      %v494 = vpop.f32.mrb[0].mxu0
      %v495 = vpop.f32.mrb[0].mxu0
      %v496 = vadd.f32 0.0, %v495
      %v497 = vpop.f32.mrb[0].mxu0
      %498 = vmatprep.mubr.bf16.mxu0 0
      %499 = vmatmul.mubr.bf16.gmra.mrb[0].mxu0 %v418
      %v500 = vpop.f32.mrb[0].mxu0
      %v501 = vadd.f32 0.0, %v500
      %v502 = vpop.f32.mrb[0].mxu0
      %v503 = vpop.f32.mrb[0].mxu0
      %v504 = vadd.f32 0.0, %v503
      %v505 = vpop.f32.mrb[0].mxu0
      %506 = vmatprep.mubr.bf16.mxu0 0
      %507 = vmatmul.mubr.bf16.gmra.mrb[0].mxu0 %v421
      %v508 = vpop.f32.mrb[0].mxu0
      %v509 = vadd.f32 0.0, %v508
      %v510 = vpop.f32.mrb[0].mxu0
      %v511 = vpop.f32.mrb[0].mxu0
      %v512 = vadd.f32 0.0, %v511
      %v513 = vpop.f32.mrb[0].mxu0
      %514 = vmatprep.mubr.bf16.mxu0 0
      %515 = vmatmul.mubr.bf16.gmra.mrb[0].mxu0 %v424
      %v516 = vpop.f32.mrb[0].mxu0
      %v517 = vadd.f32 0.0, %v516
      %v518 = vpop.f32.mrb[0].mxu0
      %v519 = vpop.f32.mrb[0].mxu0
      %v520 = vadd.f32 0.0, %v519
      %v521 = vpop.f32.mrb[0].mxu0
      %522 = vdwg.mxu0
      %v523 = vpack.c.bf16 %v464, %v461
      %v524 = vpack.c.bf16 %v472, %v469
      %v525 = vpack.c.bf16 %v480, %v477
      %v526 = vpack.c.bf16 %v488, %v485
      %v527 = vpack.c.bf16 %v496, %v493
      %v528 = vpack.c.bf16 %v504, %v501
      %v529 = vpack.c.bf16 %v512, %v509
      %v530 = vpack.c.bf16 %v520, %v517
      %v539 = vunpack.c.l.b16 %v523
      %v540 = vunpack.c.h.b16 %v523
      %v541 = vunpack.c.l.b16 %v524
      %v542 = vunpack.c.h.b16 %v524
      %v543 = vunpack.c.l.b16 %v525
      %v544 = vunpack.c.h.b16 %v525
      %v545 = vunpack.c.l.b16 %v526
      %v546 = vunpack.c.h.b16 %v526
      %v547 = vunpack.c.l.b16 %v527
      %v548 = vunpack.c.h.b16 %v527
      %v549 = vunpack.c.l.b16 %v528
      %v550 = vunpack.c.h.b16 %v528
      %v551 = vunpack.c.l.b16 %v529
      %v552 = vunpack.c.h.b16 %v529
      %v553 = vunpack.c.l.b16 %v530
      %v554 = vunpack.c.h.b16 %v530
      %v555 = vpack.c.b16 %v539, %v539
      %v556 = vpack.c.b16 %v540, %v540
      %v557 = vpack.c.b16 %v541, %v541
      %v558 = vpack.c.b16 %v542, %v542
      %v559 = vpack.c.b16 %v543, %v543
      %v560 = vpack.c.b16 %v544, %v544
      %v561 = vpack.c.b16 %v545, %v545
      %v562 = vpack.c.b16 %v546, %v546
      %v563 = vpack.c.b16 %v547, %v547
      %v564 = vpack.c.b16 %v548, %v548
      %v565 = vpack.c.b16 %v549, %v549
      %v566 = vpack.c.b16 %v550, %v550
      %v567 = vpack.c.b16 %v551, %v551
      %v568 = vpack.c.b16 %v552, %v552
      %v569 = vpack.c.b16 %v553, %v553
      %v570 = vpack.c.b16 %v554, %v554
      %vm587 = vcmask 257024
      %588 = vst.msk [vmem:[%s280] sm:$0xf] %vm587, %v555
      %589 = vst.msk [vmem:[%s280 + $0x4] sm:$0xf] %vm587, %v556
      %590 = vst.msk [vmem:[%s280 + $0x8] sm:$0xf] %vm587, %v557
      %591 = vst.msk [vmem:[%s280 + $0xc] sm:$0xf] %vm587, %v558
      %592 = vst.msk [vmem:[%s280 + $0x10] sm:$0xf] %vm587, %v559
      %593 = vst.msk [vmem:[%s280 + $0x14] sm:$0xf] %vm587, %v560
      %594 = vst.msk [vmem:[%s280 + $0x18] sm:$0xf] %vm587, %v561
      %595 = vst.msk [vmem:[%s280 + $0x1c] sm:$0xf] %vm587, %v562
      %596 = vst.msk [vmem:[%s280 + $0x20] sm:$0xf] %vm587, %v563
      %597 = vst.msk [vmem:[%s280 + $0x24] sm:$0xf] %vm587, %v564
      %598 = vst.msk [vmem:[%s280 + $0x28] sm:$0xf] %vm587, %v565
      %599 = vst.msk [vmem:[%s280 + $0x2c] sm:$0xf] %vm587, %v566
      %600 = vst.msk [vmem:[%s280 + $0x30] sm:$0xf] %vm587, %v567
      %601 = vst.msk [vmem:[%s280 + $0x34] sm:$0xf] %vm587, %v568
      %602 = vst.msk [vmem:[%s280 + $0x38] sm:$0xf] %vm587, %v569
      %603 = vst.msk [vmem:[%s280 + $0x3c] sm:$0xf] %vm587, %v570
      %v604 = vunpack.c.l.bf16 %v523
      %v605 = vunpack.c.h.bf16 %v523
      %v606 = vunpack.c.l.bf16 %v524
      %v607 = vunpack.c.h.bf16 %v524
      %v608 = vunpack.c.l.bf16 %v525
      %v609 = vunpack.c.h.bf16 %v525
      %v610 = vunpack.c.l.bf16 %v526
      %v611 = vunpack.c.h.bf16 %v526
      %v612 = vunpack.c.l.bf16 %v527
      %v613 = vunpack.c.h.bf16 %v527
      %v614 = vunpack.c.l.bf16 %v528
      %v615 = vunpack.c.h.bf16 %v528
      %v616 = vunpack.c.l.bf16 %v529
      %v617 = vunpack.c.h.bf16 %v529
      %v618 = vunpack.c.l.bf16 %v530
      %v619 = vunpack.c.h.bf16 %v530
      %vm620 = vcmask 261120
      %v621 = vsel %vm620, %v604, 0.0
      %v622 = vsel %vm620, %v605, 0.0
      %v623 = vadd.f32 %v621, %v622
      %v624 = vsel %vm620, %v606, 0.0
      %v625 = vadd.f32 %v623, %v624
      %v626 = vsel %vm620, %v607, 0.0
      %v627 = vadd.f32 %v625, %v626
      %v628 = vsel %vm620, %v608, 0.0
      %v629 = vadd.f32 %v627, %v628
      %v630 = vsel %vm620, %v609, 0.0
      %v631 = vadd.f32 %v629, %v630
      %v632 = vsel %vm620, %v610, 0.0
      %v633 = vadd.f32 %v631, %v632
      %v634 = vsel %vm620, %v611, 0.0
      %v635 = vadd.f32 %v633, %v634
      %v636 = vsel %vm620, %v612, 0.0
      %v637 = vadd.f32 %v635, %v636
      %v638 = vsel %vm620, %v613, 0.0
      %v639 = vadd.f32 %v637, %v638
      %v640 = vsel %vm620, %v614, 0.0
      %v641 = vadd.f32 %v639, %v640
      %v642 = vsel %vm620, %v615, 0.0
      %v643 = vadd.f32 %v641, %v642
      %v644 = vsel %vm620, %v616, 0.0
      %v645 = vadd.f32 %v643, %v644
      %v646 = vsel %vm620, %v617, 0.0
      %v647 = vadd.f32 %v645, %v646
      %v648 = vsel %vm620, %v618, 0.0
      %v649 = vadd.f32 %v647, %v648
      %v650 = vsel %vm620, %v619, 0.0
      %v651 = vadd.f32 %v649, %v650
      %v652 = vrot.slane %v651, 4
      %v653 = vadd.f32 %v651, %v652
      %v654 = vrot.slane %v653, 2
      %v655 = vadd.f32 %v653, %v654
      %v656 = vrot.slane %v655, 1
      %v657 = vadd.f32 %v655, %v656
      %v658 = vmul.f32 %v604, %v604
      %v659 = vmul.f32 %v605, %v605
      %v660 = vmul.f32 %v606, %v606
      %v661 = vmul.f32 %v607, %v607
      %v662 = vmul.f32 %v608, %v608
      %v663 = vmul.f32 %v609, %v609
      %v664 = vmul.f32 %v610, %v610
      %v665 = vmul.f32 %v611, %v611
      %v666 = vmul.f32 %v612, %v612
      %v667 = vmul.f32 %v613, %v613
      %v668 = vmul.f32 %v614, %v614
      %v669 = vmul.f32 %v615, %v615
      %v670 = vmul.f32 %v616, %v616
      %v671 = vmul.f32 %v617, %v617
      %v672 = vmul.f32 %v618, %v618
      %v673 = vmul.f32 %v619, %v619
      %v674 = vsel %vm620, %v658, 0.0
      %v675 = vsel %vm620, %v659, 0.0
      %v676 = vadd.f32 %v674, %v675
      %v677 = vsel %vm620, %v660, 0.0
      %v678 = vadd.f32 %v676, %v677
      %v679 = vsel %vm620, %v661, 0.0
      %v680 = vadd.f32 %v678, %v679
      %v681 = vsel %vm620, %v662, 0.0
      %v682 = vadd.f32 %v680, %v681
      %v683 = vsel %vm620, %v663, 0.0
      %v684 = vadd.f32 %v682, %v683
      %v685 = vsel %vm620, %v664, 0.0
      %v686 = vadd.f32 %v684, %v685
      %v687 = vsel %vm620, %v665, 0.0
      %v688 = vadd.f32 %v686, %v687
      %v689 = vsel %vm620, %v666, 0.0
      %v690 = vadd.f32 %v688, %v689
      %v691 = vsel %vm620, %v667, 0.0
      %v692 = vadd.f32 %v690, %v691
      %v693 = vsel %vm620, %v668, 0.0
      %v694 = vadd.f32 %v692, %v693
      %v695 = vsel %vm620, %v669, 0.0
      %v696 = vadd.f32 %v694, %v695
      %v697 = vsel %vm620, %v670, 0.0
      %v698 = vadd.f32 %v696, %v697
      %v699 = vsel %vm620, %v671, 0.0
      %v700 = vadd.f32 %v698, %v699
      %v701 = vsel %vm620, %v672, 0.0
      %v702 = vadd.f32 %v700, %v701
      %v703 = vsel %vm620, %v673, 0.0
      %v704 = vadd.f32 %v702, %v703
      %v705 = vrot.slane %v704, 4
      %v706 = vadd.f32 %v704, %v705
      %v707 = vrot.slane %v706, 2
      %v708 = vadd.f32 %v706, %v707
      %v709 = vrot.slane %v708, 1
      %v710 = vadd.f32 %v708, %v709
      %vm711 = vcmask 1040384
      %v712 = vsel %vm711, %v657, %v710
      %vm713 = vcmask 254976
      %714 = vst.msk [vmem:[%s289] sm:$0x3] %vm713, %v712
      %s715 = smul.u32 8, %s22
      %p716 = scmp.lt.s32.totalorder %s21, 1
      %s717 = scalar_select %p716, %s21, 1
      %p718 = scmp.lt.s32.totalorder %s715, 15
      %s719 = scalar_select %p718, %s715, 15
      %s720 = smul.addr %s719, 2
      %s721 = smul.addr %s717, 32
      %s722 = sadd.s32 %s720, %s721
      %s723 = smul.addr %s722, 4
      %s724 = scalar_lea.vmem %s4, %s723
      %p725 = scmp.lt.s32.totalorder %s21, 1
      %s726 = scalar_select %p725, %s21, 1
      %p727 = scmp.lt.s32.totalorder %s22, 1
      %s728 = scalar_select %p727, %s22, 1
      %s729 = smul.addr %s726, 2
      %s730 = sadd.s32 %s728, %s729
      %s731 = smul.addr %s730, 2
      %s732 = scalar_lea.vmem %s5, %s731
      // Predicated region
      $region37: #{_lambda_.6} parent=35 // pred_check
        %p733 = pneg %p140
      $region38: #{_lambda_.6} parent=35 // pred_check_branch
        %735 = sbr.rel (%p733) target = $region40
      $region39: #{_lambda_.6} parent=35 // pred_region
        %s736 = smul.u32 8, %s22
      $region40: #{_lambda_.6} parent=35 // pred_fallthru
        _
      // Predicated region
      $region41: #{_lambda_.6} parent=35 // pred_check
        %p737 = pneg %p168
      $region42: #{_lambda_.6} parent=35 // pred_check_branch
        %739 = sbr.rel (%p737) target = $region44
      $region43: #{_lambda_.6} parent=35 // pred_region
        _
      $region44: #{_lambda_.6} parent=35 // pred_fallthru
        _
    $region36: #{_lambda_.6} parent=5 // pred_fallthru
      _
    %p740 = scmp.le.s32.totalorder 2, %s12
    // Predicated region
    $region45: #{_lambda_.6} parent=5 // pred_check
      %p741 = pneg %p740
    $region46: #{_lambda_.6} parent=5 // pred_check_branch
      %743 = sbr.rel (%p741) target = $region48
    $region47: #{_lambda_.6} parent=5 // pred_region
      %s744 = ssub.s32 %s12, 2
      // Predicated region
      $region49: #{_lambda_.6} parent=47 // pred_check
        %p745 = pneg %p146
      $region50: #{_lambda_.6} parent=47 // pred_check_branch
        %747 = sbr.rel (%p745) target = $region52
      $region51: #{_lambda_.6} parent=47 // pred_region
        %s748 = smul.u32 8, %s24
        %p749 = scmp.lt.s32.totalorder %s23, 1
        %s750 = scalar_select %p749, %s23, 1
        %p751 = scmp.lt.s32.totalorder %s748, 15
        %s752 = scalar_select %p751, %s748, 15
        %s753 = smul.addr %s752, 2
        %s754 = smul.addr %s750, 32
        %s755 = sadd.s32 %s753, %s754
        %s756 = smul.addr %s755, 4
        %s757 = scalar_lea.vmem %s4, %s756
      $region52: #{_lambda_.6} parent=47 // pred_fallthru
        _
      // Predicated region
      $region53: #{_lambda_.6} parent=47 // pred_check
        %p758 = pneg %p174
      $region54: #{_lambda_.6} parent=47 // pred_check_branch
        %760 = sbr.rel (%p758) target = $region56
      $region55: #{_lambda_.6} parent=47 // pred_region
        %p761 = scmp.lt.s32.totalorder %s23, 1
        %s762 = scalar_select %p761, %s23, 1
        %p763 = scmp.lt.s32.totalorder %s24, 1
        %s764 = scalar_select %p763, %s24, 1
        %s765 = smul.addr %s762, 2
        %s766 = sadd.s32 %s764, %s765
        %s767 = smul.addr %s766, 2
        %s768 = scalar_lea.vmem %s5, %s767
      $region56: #{_lambda_.6} parent=47 // pred_fallthru
        _
    $region48: #{_lambda_.6} parent=5 // pred_fallthru
      _
  $region6: #{_lambda_.6} parent=0 // loop_footer
    %s16 = sadd.s32 1, %s12
  $region7: #{_lambda_.6} parent=0 // loop_footer_branch
    %11 = sbr.rel target = $region3
  $region8: #{_lambda_.6} parent=0 // loop_exit
    _

// kernel: _lambda_.4
$region0: #{_lambda_.4}
  #allocation0 [shape = 'u32[]', space=smem, size = 0x4, offset = 0x4, fixed_abs, tag = 'smem constant byte address 0x4 - core index']
  #allocation1 [shape = 'u32[144,128]{1,0:T(1,128)}', space=vmem, size = 0x12000, scoped, tag = 'internal scratch']
  %s0 = inlined_call_operand.vmem [shape: f32[2,16,16,8], index: 0, kind: input, shape index: {}]
  %s1 = inlined_call_operand.vmem [shape: bf16[8,16], index: 1, kind: input, shape index: {}]
  %s2 = inlined_call_operand.vmem [shape: bf16[8,32], index: 2, kind: input, shape index: {}]
  %s3 = inlined_call_operand.vmem [shape: bf16[2,16,16,16], index: 3, kind: output, shape index: {0}]
  %s4 = inlined_call_operand.vmem [shape: bf16[2,16,16,32], index: 4, kind: output, shape index: {1}]
  %s5 = inlined_call_operand.vmem [shape: f32[2,2,2,16], index: 5, kind: output, shape index: {2}]
  %s6 = inlined_call_operand.vmem [shape: f32[2,2,2,32], index: 6, kind: output, shape index: {3}]
  %7 = xla_tuple %s3, %s4, %s5, %s6
  %s8 = sld [smem:[#allocation0]]
  $region69: #{_lambda_.4} parent=0
    _
  %s10 = ssub.s32 1, %s8
  %s11 = scalar_select 0, %s10, %s8
  loop: start=0, step=1, limit=6
  $region2: #{_lambda_.4} parent=0 // loop_pre_header
    _
  $region3: #{_lambda_.4} parent=0 // loop_header
    %s13 = sphi 0, %s17
    %p14 = scmp.ge.s32.totalorder %s13, 6
    %s20 = sphi 0, %s32
    %s21 = sphi 0, %s28
    %s22 = sphi 0, %s20
    %s23 = sphi 0, %s21
    %s24 = sphi 0, %s22
    %s25 = sphi 0, %s23
    %s37 = sphi 0, %s39
    %s40 = sphi 0, %s37
    %s41 = sphi 0, %s40
    %s57 = sphi 0, %s41
    %s61 = sphi 0, %s61
    %s63 = sphi 0, %s61
    %s64 = sphi 0, %s63
    %s78 = sphi 0, %s64
    %s82 = sphi 0, %s82
    %s84 = sphi 0, %s82
    %s85 = sphi 0, %s84
    %s99 = sphi 0, %s85
    %s107 = sphi 0, %s109
    %s110 = sphi 0, %s107
    %s111 = sphi 0, %s110
    %s127 = sphi 0, %s111
    %s135 = sphi 0, %s137
    %s138 = sphi 0, %s135
    %s139 = sphi 0, %s138
    %s155 = sphi 0, %s139
    %s163 = sphi 0, %s165
    %s166 = sphi 0, %s163
    %s167 = sphi 0, %s166
    %s183 = sphi 0, %s167
    %s191 = sphi 0, %s193
    %s194 = sphi 0, %s191
    %s195 = sphi 0, %s194
    %s211 = sphi 0, %s195
  $region4: #{_lambda_.4} parent=0 // loop_header_branch
    %16 = sbr.rel (%p14) target = $region8
  $region5: #{_lambda_.4} parent=0 // loop_body
    %s18 = ssub.s32 %s13, 1
    %s19 = ssub.s32 %s13, 2
    %s26 = sadd.s32 1, %s21
    %p27 = scmp.ge.s32.totalorder %s26, 2
    %s28 = scalar_select %p27, 0, %s26
    %s29 = sadd.s32 1, %s20
    %s30 = scalar_select %p27, %s29, %s20
    %p31 = scmp.ge.s32.totalorder %s30, 2
    %s32 = scalar_select %p31, 0, %s30
    %s33 = ssub.s32 %s20, %s32
    %s34 = ssub.s32 %s21, %s28
    %s35 = sor.u32 %s33, %s34
    %p36 = scmp.eq.s32.totalorder %s35, 0
    %s38 = sadd.s32 %s37, 1
    %s39 = scalar_select %p36, %s37, %s38
    %p42 = pneg %p36
    %p43 = scmp.eq.s32.totalorder %s13, 3
    %p44 = por %p42, %p43
    %p45 = scmp.ne.s32.totalorder %s37, %s40
    %p46 = scmp.eq.s32.totalorder %s13, 0
    %p47 = por %p45, %p46
    %p48 = scmp.ne.s32.totalorder %s37, %s40
    %p49 = scmp.eq.s32.totalorder %s18, 3
    %p50 = por %p48, %p49
    %p51 = scmp.ne.s32.totalorder %s40, %s41
    %p52 = scmp.eq.s32.totalorder %s18, 0
    %p53 = por %p51, %p52
    %p54 = scmp.ne.s32.totalorder %s40, %s41
    %p55 = scmp.eq.s32.totalorder %s19, 3
    %p56 = por %p54, %p55
    %p58 = scmp.ne.s32.totalorder %s41, %s57
    %p59 = scmp.eq.s32.totalorder %s19, 0
    %p60 = por %p58, %p59
    %s62 = sadd.s32 %s61, 1
    %p65 = scmp.eq.s32.totalorder %s13, 3
    %p66 = scmp.ne.s32.totalorder %s61, %s63
    %p67 = scmp.eq.s32.totalorder %s13, 0
    %p68 = por %p66, %p67
    %p69 = scmp.ne.s32.totalorder %s61, %s63
    %p70 = scmp.eq.s32.totalorder %s18, 3
    %p71 = por %p69, %p70
    %p72 = scmp.ne.s32.totalorder %s63, %s64
    %p73 = scmp.eq.s32.totalorder %s18, 0
    %p74 = por %p72, %p73
    %p75 = scmp.ne.s32.totalorder %s63, %s64
    %p76 = scmp.eq.s32.totalorder %s19, 3
    %p77 = por %p75, %p76
    %p79 = scmp.ne.s32.totalorder %s64, %s78
    %p80 = scmp.eq.s32.totalorder %s19, 0
    %p81 = por %p79, %p80
    %s83 = sadd.s32 %s82, 1
    %p86 = scmp.eq.s32.totalorder %s13, 3
    %p87 = scmp.ne.s32.totalorder %s82, %s84
    %p88 = scmp.eq.s32.totalorder %s13, 0
    %p89 = por %p87, %p88
    %p90 = scmp.ne.s32.totalorder %s82, %s84
    %p91 = scmp.eq.s32.totalorder %s18, 3
    %p92 = por %p90, %p91
    %p93 = scmp.ne.s32.totalorder %s84, %s85
    %p94 = scmp.eq.s32.totalorder %s18, 0
    %p95 = por %p93, %p94
    %p96 = scmp.ne.s32.totalorder %s84, %s85
    %p97 = scmp.eq.s32.totalorder %s19, 3
    %p98 = por %p96, %p97
    %p100 = scmp.ne.s32.totalorder %s85, %s99
    %p101 = scmp.eq.s32.totalorder %s19, 0
    %p102 = por %p100, %p101
    %s103 = ssub.s32 %s20, %s32
    %s104 = ssub.s32 %s21, %s28
    %s105 = sor.u32 %s103, %s104
    %p106 = scmp.eq.s32.totalorder %s105, 0
    %s108 = sadd.s32 %s107, 1
    %s109 = scalar_select %p106, %s107, %s108
    %p112 = pneg %p106
    %p113 = scmp.eq.s32.totalorder %s13, 3
    %p114 = por %p112, %p113
    %p115 = scmp.ne.s32.totalorder %s107, %s110
    %p116 = scmp.eq.s32.totalorder %s13, 0
    %p117 = por %p115, %p116
    %p118 = scmp.ne.s32.totalorder %s107, %s110
    %p119 = scmp.eq.s32.totalorder %s18, 3
    %p120 = por %p118, %p119
    %p121 = scmp.ne.s32.totalorder %s110, %s111
    %p122 = scmp.eq.s32.totalorder %s18, 0
    %p123 = por %p121, %p122
    %p124 = scmp.ne.s32.totalorder %s110, %s111
    %p125 = scmp.eq.s32.totalorder %s19, 3
    %p126 = por %p124, %p125
    %p128 = scmp.ne.s32.totalorder %s111, %s127
    %p129 = scmp.eq.s32.totalorder %s19, 0
    %p130 = por %p128, %p129
    %s131 = ssub.s32 %s20, %s32
    %s132 = ssub.s32 %s21, %s28
    %s133 = sor.u32 %s131, %s132
    %p134 = scmp.eq.s32.totalorder %s133, 0
    %s136 = sadd.s32 %s135, 1
    %s137 = scalar_select %p134, %s135, %s136
    %p140 = pneg %p134
    %p141 = scmp.eq.s32.totalorder %s13, 3
    %p142 = por %p140, %p141
    %p143 = scmp.ne.s32.totalorder %s135, %s138
    %p144 = scmp.eq.s32.totalorder %s13, 0
    %p145 = por %p143, %p144
    %p146 = scmp.ne.s32.totalorder %s135, %s138
    %p147 = scmp.eq.s32.totalorder %s18, 3
    %p148 = por %p146, %p147
    %p149 = scmp.ne.s32.totalorder %s138, %s139
    %p150 = scmp.eq.s32.totalorder %s18, 0
    %p151 = por %p149, %p150
    %p152 = scmp.ne.s32.totalorder %s138, %s139
    %p153 = scmp.eq.s32.totalorder %s19, 3
    %p154 = por %p152, %p153
    %p156 = scmp.ne.s32.totalorder %s139, %s155
    %p157 = scmp.eq.s32.totalorder %s19, 0
    %p158 = por %p156, %p157
    %s159 = ssub.s32 %s20, %s32
    %s160 = ssub.s32 %s21, %s28
    %s161 = sor.u32 %s159, %s160
    %p162 = scmp.eq.s32.totalorder %s161, 0
    %s164 = sadd.s32 %s163, 1
    %s165 = scalar_select %p162, %s163, %s164
    %p168 = pneg %p162
    %p169 = scmp.eq.s32.totalorder %s13, 3
    %p170 = por %p168, %p169
    %p171 = scmp.ne.s32.totalorder %s163, %s166
    %p172 = scmp.eq.s32.totalorder %s13, 0
    %p173 = por %p171, %p172
    %p174 = scmp.ne.s32.totalorder %s163, %s166
    %p175 = scmp.eq.s32.totalorder %s18, 3
    %p176 = por %p174, %p175
    %p177 = scmp.ne.s32.totalorder %s166, %s167
    %p178 = scmp.eq.s32.totalorder %s18, 0
    %p179 = por %p177, %p178
    %p180 = scmp.ne.s32.totalorder %s166, %s167
    %p181 = scmp.eq.s32.totalorder %s19, 3
    %p182 = por %p180, %p181
    %p184 = scmp.ne.s32.totalorder %s167, %s183
    %p185 = scmp.eq.s32.totalorder %s19, 0
    %p186 = por %p184, %p185
    %s187 = ssub.s32 %s20, %s32
    %s188 = ssub.s32 %s21, %s28
    %s189 = sor.u32 %s187, %s188
    %p190 = scmp.eq.s32.totalorder %s189, 0
    %s192 = sadd.s32 %s191, 1
    %s193 = scalar_select %p190, %s191, %s192
    %p196 = pneg %p190
    %p197 = scmp.eq.s32.totalorder %s13, 3
    %p198 = por %p196, %p197
    %p199 = scmp.ne.s32.totalorder %s191, %s194
    %p200 = scmp.eq.s32.totalorder %s13, 0
    %p201 = por %p199, %p200
    %p202 = scmp.ne.s32.totalorder %s191, %s194
    %p203 = scmp.eq.s32.totalorder %s18, 3
    %p204 = por %p202, %p203
    %p205 = scmp.ne.s32.totalorder %s194, %s195
    %p206 = scmp.eq.s32.totalorder %s18, 0
    %p207 = por %p205, %p206
    %p208 = scmp.ne.s32.totalorder %s194, %s195
    %p209 = scmp.eq.s32.totalorder %s19, 3
    %p210 = por %p208, %p209
    %p212 = scmp.ne.s32.totalorder %s195, %s211
    %p213 = scmp.eq.s32.totalorder %s19, 0
    %p214 = por %p212, %p213
    %p215 = scmp.le.s32.totalorder 1, %s13
    %p216 = scmp.lt.s32.totalorder %s13, 5
    %p217 = pnand %p215, %p216
    %p218 = pneg %p217
    // Predicated region
    $region9: #{_lambda_.4} parent=5 // pred_check
      _
    $region10: #{_lambda_.4} parent=5 // pred_check_branch
      %220 = sbr.rel (%p217) target = $region12
    $region11: #{_lambda_.4} parent=5 // pred_region
      %s221 = ssub.s32 %s13, 1
      // Predicated region
      $region13: #{_lambda_.4} parent=11 // pred_check
        %p222 = pneg %p74
      $region14: #{_lambda_.4} parent=11 // pred_check_branch
        %224 = sbr.rel (%p222) target = $region16
      $region15: #{_lambda_.4} parent=11 // pred_region
        _
      $region16: #{_lambda_.4} parent=11 // pred_fallthru
        _
      // Predicated region
      $region17: #{_lambda_.4} parent=11 // pred_check
        %p225 = pneg %p95
      $region18: #{_lambda_.4} parent=11 // pred_check_branch
        %227 = sbr.rel (%p225) target = $region20
      $region19: #{_lambda_.4} parent=11 // pred_region
        _
      $region20: #{_lambda_.4} parent=11 // pred_fallthru
        _
    $region12: #{_lambda_.4} parent=5 // pred_fallthru
      _
    %p228 = scmp.lt.s32.totalorder %s13, 4
    // Predicated region
    $region21: #{_lambda_.4} parent=5 // pred_check
      %p229 = pneg %p228
    $region22: #{_lambda_.4} parent=5 // pred_check_branch
      %231 = sbr.rel (%p229) target = $region24
    $region23: #{_lambda_.4} parent=5 // pred_region
      // Predicated region
      $region25: #{_lambda_.4} parent=23 // pred_check
        %p232 = pneg %p47
      $region26: #{_lambda_.4} parent=23 // pred_check_branch
        %234 = sbr.rel (%p232) target = $region28
      $region27: #{_lambda_.4} parent=23 // pred_region
        %s235 = smul.u32 8, %s21
        %p236 = scmp.lt.s32.totalorder %s20, 1
        %s237 = scalar_select %p236, %s20, 1
        %p238 = scmp.lt.s32.totalorder %s235, 15
        %s239 = scalar_select %p238, %s235, 15
        %s240 = smul.addr %s239, 2
        %s241 = smul.addr %s237, 32
        %s242 = sadd.s32 %s240, %s241
        %s243 = smul.addr %s242, 8
        %s244 = scalar_lea.vmem %s0, %s243
        %s245 = smul.u32 8, %s21
      $region28: #{_lambda_.4} parent=23 // pred_fallthru
        _
    $region24: #{_lambda_.4} parent=5 // pred_fallthru
      _
    %p246 = scmp.le.s32.totalorder 1, %s13
    %p247 = scmp.lt.s32.totalorder %s13, 5
    %p248 = pnand %p246, %p247
    %p249 = pneg %p248
    // Predicated region
    $region29: #{_lambda_.4} parent=5 // pred_check
      _
    $region30: #{_lambda_.4} parent=5 // pred_check_branch
      %251 = sbr.rel (%p248) target = $region32
    $region31: #{_lambda_.4} parent=5 // pred_region
      %s252 = ssub.s32 %s13, 1
      %s253 = smul.u32 8, %s23
      %p254 = scmp.lt.s32.totalorder %s22, 1
      %s255 = scalar_select %p254, %s22, 1
      %p256 = scmp.lt.s32.totalorder %s253, 15
      %s257 = scalar_select %p256, %s253, 15
      %s258 = smul.addr %s257, 2
      %s259 = smul.addr %s255, 32
      %s260 = sadd.s32 %s258, %s259
      %s261 = smul.addr %s260, 8
      %s262 = scalar_lea.vmem %s0, %s261
      %p263 = pneg %p53
      %p264 = pneg %p50
      %p265 = pneg %p74
      %p266 = pneg %p71
      %p267 = pneg %p95
      %p268 = pneg %p92
      %p269 = pneg %p123
      %p270 = pneg %p120
      %s271 = smul.u32 8, %s23
      %p272 = scmp.lt.s32.totalorder %s22, 1
      %s273 = scalar_select %p272, %s22, 1
      %p274 = scmp.lt.s32.totalorder %s271, 15
      %s275 = scalar_select %p274, %s271, 15
      %s276 = smul.addr %s275, 2
      %s277 = smul.addr %s273, 32
      %s278 = sadd.s32 %s276, %s277
      %s279 = smul.addr %s278, 4
      %s280 = scalar_lea.vmem %s3, %s279
      %p281 = pneg %p151
      %p282 = pneg %p148
      %s283 = smul.u32 8, %s23
      %p284 = scmp.lt.s32.totalorder %s22, 1
      %s285 = scalar_select %p284, %s22, 1
      %p286 = scmp.lt.s32.totalorder %s283, 15
      %s287 = scalar_select %p286, %s283, 15
      %s288 = smul.addr %s287, 2
      %s289 = smul.addr %s285, 32
      %s290 = sadd.s32 %s288, %s289
      %s291 = smul.addr %s290, 4
      %s292 = scalar_lea.vmem %s4, %s291
      %p293 = pneg %p179
      %p294 = pneg %p176
      %p295 = scmp.lt.s32.totalorder %s22, 1
      %s296 = scalar_select %p295, %s22, 1
      %p297 = scmp.lt.s32.totalorder %s23, 1
      %s298 = scalar_select %p297, %s23, 1
      %s299 = smul.addr %s296, 2
      %s300 = sadd.s32 %s298, %s299
      %s301 = smul.addr %s300, 2
      %s302 = scalar_lea.vmem %s5, %s301
      %p303 = pneg %p207
      %p304 = pneg %p204
      %p305 = scmp.lt.s32.totalorder %s22, 1
      %s306 = scalar_select %p305, %s22, 1
      %p307 = scmp.lt.s32.totalorder %s23, 1
      %s308 = scalar_select %p307, %s23, 1
      %s309 = smul.addr %s306, 2
      %s310 = sadd.s32 %s308, %s309
      %s311 = smul.addr %s310, 2
      %s312 = scalar_lea.vmem %s6, %s311
      %s313 = smul.u32 8, %s23
      %p314 = scmp.lt.s32.totalorder %s22, 1
      %s315 = scalar_select %p314, %s22, 1
      %p316 = scmp.lt.s32.totalorder %s313, 15
      %s317 = scalar_select %p316, %s313, 15
      %s318 = smul.addr %s317, 2
      %s319 = smul.addr %s315, 32
      %s320 = sadd.s32 %s318, %s319
      %s321 = smul.addr %s320, 8
      %s322 = scalar_lea.vmem %s0, %s321
      %s323 = smul.u32 8, %s23
      %s324 = smul.u32 8, %s23
      %p325 = scmp.lt.s32.totalorder %s22, 1
      %s326 = scalar_select %p325, %s22, 1
      %p327 = scmp.lt.s32.totalorder %s324, 15
      %s328 = scalar_select %p327, %s324, 15
      %s329 = smul.addr %s328, 2
      %s330 = smul.addr %s326, 32
      %s331 = sadd.s32 %s329, %s330
      %s332 = smul.addr %s331, 4
      %s333 = scalar_lea.vmem %s3, %s332
      %s334 = smul.u32 8, %s23
      %s335 = smul.u32 8, %s23
      %p336 = scmp.lt.s32.totalorder %s22, 1
      %s337 = scalar_select %p336, %s22, 1
      %p338 = scmp.lt.s32.totalorder %s335, 15
      %s339 = scalar_select %p338, %s335, 15
      %s340 = smul.addr %s339, 2
      %s341 = smul.addr %s337, 32
      %s342 = sadd.s32 %s340, %s341
      %s343 = smul.addr %s342, 4
      %s344 = scalar_lea.vmem %s4, %s343
      %s345 = smul.u32 8, %s23
      %p346 = scmp.lt.s32.totalorder %s22, 1
      %s347 = scalar_select %p346, %s22, 1
      %p348 = scmp.lt.s32.totalorder %s23, 1
      %s349 = scalar_select %p348, %s23, 1
      %s350 = smul.addr %s347, 2
      %s351 = sadd.s32 %s349, %s350
      %s352 = smul.addr %s351, 2
      %s353 = scalar_lea.vmem %s5, %s352
      %p354 = scmp.lt.s32.totalorder %s22, 1
      %s355 = scalar_select %p354, %s22, 1
      %p356 = scmp.lt.s32.totalorder %s23, 1
      %s357 = scalar_select %p356, %s23, 1
      %s358 = smul.addr %s355, 2
      %s359 = sadd.s32 %s357, %s358
      %s360 = smul.addr %s359, 2
      %s361 = scalar_lea.vmem %s6, %s360
      %v363 = vld [vmem:[%s322] sm:$0xff]
      %v364 = vld [vmem:[%s322 + $0x8] sm:$0xff]
      %v365 = vld [vmem:[%s322 + $0x10] sm:$0xff]
      %v366 = vld [vmem:[%s322 + $0x18] sm:$0xff]
      %v367 = vld [vmem:[%s322 + $0x20] sm:$0xff]
      %v368 = vld [vmem:[%s322 + $0x28] sm:$0xff]
      %v369 = vld [vmem:[%s322 + $0x30] sm:$0xff]
      %v370 = vld [vmem:[%s322 + $0x38] sm:$0xff]
      %v371 = vld [vmem:[%s322 + $0x40] sm:$0xff]
      %v372 = vld [vmem:[%s322 + $0x48] sm:$0xff]
      %v373 = vld [vmem:[%s322 + $0x50] sm:$0xff]
      %v374 = vld [vmem:[%s322 + $0x58] sm:$0xff]
      %v375 = vld [vmem:[%s322 + $0x60] sm:$0xff]
      %v376 = vld [vmem:[%s322 + $0x68] sm:$0xff]
      %v377 = vld [vmem:[%s322 + $0x70] sm:$0xff]
      %v378 = vld [vmem:[%s322 + $0x78] sm:$0xff]
      %v379 = vpack.c.bf16 %v364, %v363
      %v380 = vpack.c.bf16 %v366, %v365
      %v381 = vpack.c.bf16 %v368, %v367
      %v382 = vpack.c.bf16 %v370, %v369
      %v383 = vpack.c.bf16 %v372, %v371
      %v384 = vpack.c.bf16 %v374, %v373
      %v385 = vpack.c.bf16 %v376, %v375
      %v386 = vpack.c.bf16 %v378, %v377
      %v387 = vld [vmem:[%s1] sm:$0xf]
      %vm388 = vcmask 64512
      %v390 = vsel %vm388, %v379, 0
      %v393 = vsel %vm388, %v380, 0
      %v396 = vsel %vm388, %v381, 0
      %v399 = vsel %vm388, %v382, 0
      %v402 = vsel %vm388, %v383, 0
      %v405 = vsel %vm388, %v384, 0
      %v408 = vsel %vm388, %v385, 0
      %v411 = vsel %vm388, %v386, 0
      %vm413 = vcmask 1043456
      %v415 = vsel %vm413, %v387, 0
      %417 = vmatprep.subr.bf16.mxu0 0
      %418 = vmatpush1.bf16.msra.mxu0 %v415
      %419 = vmatprep.subr.bf16.mxu0 0
      %420 = vmatpush1.bf16.msra.mxu0 0
      %421 = vmatprep.subr.bf16.mxu0 0
      %422 = vmatpush1.bf16.msra.mxu0 0
      %423 = vmatprep.subr.bf16.mxu0 0
      %424 = vmatpush1.bf16.msra.mxu0 0
      %425 = vmatprep.subr.bf16.mxu0 0
      %426 = vmatpush1.bf16.msra.mxu0 0
      %427 = vmatprep.subr.bf16.mxu0 0
      %428 = vmatpush1.bf16.msra.mxu0 0
      %429 = vmatprep.subr.bf16.mxu0 0
      %430 = vmatpush1.bf16.msra.mxu0 0
      %431 = vmatprep.subr.bf16.mxu0 0
      %432 = vmatpush1.bf16.msra.mxu0 0
      %433 = vmatprep.subr.bf16.mxu0 0
      %434 = vmatpush1.bf16.msra.mxu0 0
      %435 = vmatprep.subr.bf16.mxu0 0
      %436 = vmatpush1.bf16.msra.mxu0 0
      %437 = vmatprep.subr.bf16.mxu0 0
      %438 = vmatpush1.bf16.msra.mxu0 0
      %439 = vmatprep.subr.bf16.mxu0 0
      %440 = vmatpush1.bf16.msra.mxu0 0
      %441 = vmatprep.subr.bf16.mxu0 0
      %442 = vmatpush1.bf16.msra.mxu0 0
      %443 = vmatprep.subr.bf16.mxu0 0
      %444 = vmatpush1.bf16.msra.mxu0 0
      %445 = vmatprep.subr.bf16.mxu0 0
      %446 = vmatpush1.bf16.msra.mxu0 0
      %447 = vmatprep.subr.bf16.mxu0 0
      %448 = vmatpush1.bf16.msra.mxu0 0
      %449 = vmatprep.mubr.bf16.mxu0 0
      %450 = vmatmul.mubr.bf16.gmra.mrb[0].mxu0 %v390
      %v451 = vpop.f32.mrb[0].mxu0
      %v452 = vadd.f32 0.0, %v451
      %v453 = vpop.f32.mrb[0].mxu0
      %v454 = vpop.f32.mrb[0].mxu0
      %v455 = vadd.f32 0.0, %v454
      %v456 = vpop.f32.mrb[0].mxu0
      %457 = vmatprep.mubr.bf16.mxu0 0
      %458 = vmatmul.mubr.bf16.gmra.mrb[0].mxu0 %v393
      %v459 = vpop.f32.mrb[0].mxu0
      %v460 = vadd.f32 0.0, %v459
      %v461 = vpop.f32.mrb[0].mxu0
      %v462 = vpop.f32.mrb[0].mxu0
      %v463 = vadd.f32 0.0, %v462
      %v464 = vpop.f32.mrb[0].mxu0
      %465 = vmatprep.mubr.bf16.mxu0 0
      %466 = vmatmul.mubr.bf16.gmra.mrb[0].mxu0 %v396
      %v467 = vpop.f32.mrb[0].mxu0
      %v468 = vadd.f32 0.0, %v467
      %v469 = vpop.f32.mrb[0].mxu0
      %v470 = vpop.f32.mrb[0].mxu0
      %v471 = vadd.f32 0.0, %v470
      %v472 = vpop.f32.mrb[0].mxu0
      %473 = vmatprep.mubr.bf16.mxu0 0
      %474 = vmatmul.mubr.bf16.gmra.mrb[0].mxu0 %v399
      %v475 = vpop.f32.mrb[0].mxu0
      %v476 = vadd.f32 0.0, %v475
      %v477 = vpop.f32.mrb[0].mxu0
      %v478 = vpop.f32.mrb[0].mxu0
      %v479 = vadd.f32 0.0, %v478
      %v480 = vpop.f32.mrb[0].mxu0
      %481 = vmatprep.mubr.bf16.mxu0 0
      %482 = vmatmul.mubr.bf16.gmra.mrb[0].mxu0 %v402
      %v483 = vpop.f32.mrb[0].mxu0
      %v484 = vadd.f32 0.0, %v483
      %v485 = vpop.f32.mrb[0].mxu0
      %v486 = vpop.f32.mrb[0].mxu0
      %v487 = vadd.f32 0.0, %v486
      %v488 = vpop.f32.mrb[0].mxu0
      %489 = vmatprep.mubr.bf16.mxu0 0
      %490 = vmatmul.mubr.bf16.gmra.mrb[0].mxu0 %v405
      %v491 = vpop.f32.mrb[0].mxu0
      %v492 = vadd.f32 0.0, %v491
      %v493 = vpop.f32.mrb[0].mxu0
      %v494 = vpop.f32.mrb[0].mxu0
      %v495 = vadd.f32 0.0, %v494
      %v496 = vpop.f32.mrb[0].mxu0
      %497 = vmatprep.mubr.bf16.mxu0 0
      %498 = vmatmul.mubr.bf16.gmra.mrb[0].mxu0 %v408
      %v499 = vpop.f32.mrb[0].mxu0
      %v500 = vadd.f32 0.0, %v499
      %v501 = vpop.f32.mrb[0].mxu0
      %v502 = vpop.f32.mrb[0].mxu0
      %v503 = vadd.f32 0.0, %v502
      %v504 = vpop.f32.mrb[0].mxu0
      %505 = vmatprep.mubr.bf16.mxu0 0
      %506 = vmatmul.mubr.bf16.gmra.mrb[0].mxu0 %v411
      %v507 = vpop.f32.mrb[0].mxu0
      %v508 = vadd.f32 0.0, %v507
      %v509 = vpop.f32.mrb[0].mxu0
      %v510 = vpop.f32.mrb[0].mxu0
      %v511 = vadd.f32 0.0, %v510
      %v512 = vpop.f32.mrb[0].mxu0
      %513 = vdwg.mxu0
      %v514 = vpack.c.bf16 %v455, %v452
      %v515 = vpack.c.bf16 %v463, %v460
      %v516 = vpack.c.bf16 %v471, %v468
      %v517 = vpack.c.bf16 %v479, %v476
      %v518 = vpack.c.bf16 %v487, %v484
      %v519 = vpack.c.bf16 %v495, %v492
      %v520 = vpack.c.bf16 %v503, %v500
      %v521 = vpack.c.bf16 %v511, %v508
      %v522 = vld [vmem:[%s2] sm:$0xf]
      %v524 = vsel %vm413, %v522, 0
      %526 = vmatprep.subr.bf16.mxu0 0
      %527 = vmatpush1.bf16.msra.mxu0 %v524
      %528 = vmatprep.subr.bf16.mxu0 0
      %529 = vmatpush1.bf16.msra.mxu0 0
      %530 = vmatprep.subr.bf16.mxu0 0
      %531 = vmatpush1.bf16.msra.mxu0 0
      %532 = vmatprep.subr.bf16.mxu0 0
      %533 = vmatpush1.bf16.msra.mxu0 0
      %534 = vmatprep.subr.bf16.mxu0 0
      %535 = vmatpush1.bf16.msra.mxu0 0
      %536 = vmatprep.subr.bf16.mxu0 0
      %537 = vmatpush1.bf16.msra.mxu0 0
      %538 = vmatprep.subr.bf16.mxu0 0
      %539 = vmatpush1.bf16.msra.mxu0 0
      %540 = vmatprep.subr.bf16.mxu0 0
      %541 = vmatpush1.bf16.msra.mxu0 0
      %542 = vmatprep.subr.bf16.mxu0 0
      %543 = vmatpush1.bf16.msra.mxu0 0
      %544 = vmatprep.subr.bf16.mxu0 0
      %545 = vmatpush1.bf16.msra.mxu0 0
      %546 = vmatprep.subr.bf16.mxu0 0
      %547 = vmatpush1.bf16.msra.mxu0 0
      %548 = vmatprep.subr.bf16.mxu0 0
      %549 = vmatpush1.bf16.msra.mxu0 0
      %550 = vmatprep.subr.bf16.mxu0 0
      %551 = vmatpush1.bf16.msra.mxu0 0
      %552 = vmatprep.subr.bf16.mxu0 0
      %553 = vmatpush1.bf16.msra.mxu0 0
      %554 = vmatprep.subr.bf16.mxu0 0
      %555 = vmatpush1.bf16.msra.mxu0 0
      %556 = vmatprep.subr.bf16.mxu0 0
      %557 = vmatpush1.bf16.msra.mxu0 0
      %558 = vmatprep.mubr.bf16.mxu0 0
      %559 = vmatmul.mubr.bf16.gmra.mrb[0].mxu0 %v390
      %v560 = vpop.f32.mrb[0].mxu0
      %v561 = vadd.f32 0.0, %v560
      %v562 = vpop.f32.mrb[0].mxu0
      %v563 = vpop.f32.mrb[0].mxu0
      %v564 = vadd.f32 0.0, %v563
      %v565 = vpop.f32.mrb[0].mxu0
      %566 = vmatprep.mubr.bf16.mxu0 0
      %567 = vmatmul.mubr.bf16.gmra.mrb[0].mxu0 %v393
      %v568 = vpop.f32.mrb[0].mxu0
      %v569 = vadd.f32 0.0, %v568
      %v570 = vpop.f32.mrb[0].mxu0
      %v571 = vpop.f32.mrb[0].mxu0
      %v572 = vadd.f32 0.0, %v571
      %v573 = vpop.f32.mrb[0].mxu0
      %574 = vmatprep.mubr.bf16.mxu0 0
      %575 = vmatmul.mubr.bf16.gmra.mrb[0].mxu0 %v396
      %v576 = vpop.f32.mrb[0].mxu0
      %v577 = vadd.f32 0.0, %v576
      %v578 = vpop.f32.mrb[0].mxu0
      %v579 = vpop.f32.mrb[0].mxu0
      %v580 = vadd.f32 0.0, %v579
      %v581 = vpop.f32.mrb[0].mxu0
      %582 = vmatprep.mubr.bf16.mxu0 0
      %583 = vmatmul.mubr.bf16.gmra.mrb[0].mxu0 %v399
      %v584 = vpop.f32.mrb[0].mxu0
      %v585 = vadd.f32 0.0, %v584
      %v586 = vpop.f32.mrb[0].mxu0
      %v587 = vpop.f32.mrb[0].mxu0
      %v588 = vadd.f32 0.0, %v587
      %v589 = vpop.f32.mrb[0].mxu0
      %590 = vmatprep.mubr.bf16.mxu0 0
      %591 = vmatmul.mubr.bf16.gmra.mrb[0].mxu0 %v402
      %v592 = vpop.f32.mrb[0].mxu0
      %v593 = vadd.f32 0.0, %v592
      %v594 = vpop.f32.mrb[0].mxu0
      %v595 = vpop.f32.mrb[0].mxu0
      %v596 = vadd.f32 0.0, %v595
      %v597 = vpop.f32.mrb[0].mxu0
      %598 = vmatprep.mubr.bf16.mxu0 0
      %599 = vmatmul.mubr.bf16.gmra.mrb[0].mxu0 %v405
      %v600 = vpop.f32.mrb[0].mxu0
      %v601 = vadd.f32 0.0, %v600
      %v602 = vpop.f32.mrb[0].mxu0
      %v603 = vpop.f32.mrb[0].mxu0
      %v604 = vadd.f32 0.0, %v603
      %v605 = vpop.f32.mrb[0].mxu0
      %606 = vmatprep.mubr.bf16.mxu0 0
      %607 = vmatmul.mubr.bf16.gmra.mrb[0].mxu0 %v408
      %v608 = vpop.f32.mrb[0].mxu0
      %v609 = vadd.f32 0.0, %v608
      %v610 = vpop.f32.mrb[0].mxu0
      %v611 = vpop.f32.mrb[0].mxu0
      %v612 = vadd.f32 0.0, %v611
      %v613 = vpop.f32.mrb[0].mxu0
      %614 = vmatprep.mubr.bf16.mxu0 0
      %615 = vmatmul.mubr.bf16.gmra.mrb[0].mxu0 %v411
      %v616 = vpop.f32.mrb[0].mxu0
      %v617 = vadd.f32 0.0, %v616
      %v618 = vpop.f32.mrb[0].mxu0
      %v619 = vpop.f32.mrb[0].mxu0
      %v620 = vadd.f32 0.0, %v619
      %v621 = vpop.f32.mrb[0].mxu0
      %622 = vdwg.mxu0
      %v623 = vpack.c.bf16 %v564, %v561
      %v624 = vpack.c.bf16 %v572, %v569
      %v625 = vpack.c.bf16 %v580, %v577
      %v626 = vpack.c.bf16 %v588, %v585
      %v627 = vpack.c.bf16 %v596, %v593
      %v628 = vpack.c.bf16 %v604, %v601
      %v629 = vpack.c.bf16 %v612, %v609
      %v630 = vpack.c.bf16 %v620, %v617
      %v639 = vunpack.c.l.b16 %v514
      %v640 = vunpack.c.h.b16 %v514
      %v641 = vunpack.c.l.b16 %v515
      %v642 = vunpack.c.h.b16 %v515
      %v643 = vunpack.c.l.b16 %v516
      %v644 = vunpack.c.h.b16 %v516
      %v645 = vunpack.c.l.b16 %v517
      %v646 = vunpack.c.h.b16 %v517
      %v647 = vunpack.c.l.b16 %v518
      %v648 = vunpack.c.h.b16 %v518
      %v649 = vunpack.c.l.b16 %v519
      %v650 = vunpack.c.h.b16 %v519
      %v651 = vunpack.c.l.b16 %v520
      %v652 = vunpack.c.h.b16 %v520
      %v653 = vunpack.c.l.b16 %v521
      %v654 = vunpack.c.h.b16 %v521
      %v655 = vpack.c.b16 %v639, %v639
      %v656 = vpack.c.b16 %v640, %v640
      %v657 = vpack.c.b16 %v641, %v641
      %v658 = vpack.c.b16 %v642, %v642
      %v659 = vpack.c.b16 %v643, %v643
      %v660 = vpack.c.b16 %v644, %v644
      %v661 = vpack.c.b16 %v645, %v645
      %v662 = vpack.c.b16 %v646, %v646
      %v663 = vpack.c.b16 %v647, %v647
      %v664 = vpack.c.b16 %v648, %v648
      %v665 = vpack.c.b16 %v649, %v649
      %v666 = vpack.c.b16 %v650, %v650
      %v667 = vpack.c.b16 %v651, %v651
      %v668 = vpack.c.b16 %v652, %v652
      %v669 = vpack.c.b16 %v653, %v653
      %v670 = vpack.c.b16 %v654, %v654
      %vm687 = vcmask 125952
      %688 = vst.msk [vmem:[%s333] sm:$0xf] %vm687, %v655
      %689 = vst.msk [vmem:[%s333 + $0x4] sm:$0xf] %vm687, %v656
      %690 = vst.msk [vmem:[%s333 + $0x8] sm:$0xf] %vm687, %v657
      %691 = vst.msk [vmem:[%s333 + $0xc] sm:$0xf] %vm687, %v658
      %692 = vst.msk [vmem:[%s333 + $0x10] sm:$0xf] %vm687, %v659
      %693 = vst.msk [vmem:[%s333 + $0x14] sm:$0xf] %vm687, %v660
      %694 = vst.msk [vmem:[%s333 + $0x18] sm:$0xf] %vm687, %v661
      %695 = vst.msk [vmem:[%s333 + $0x1c] sm:$0xf] %vm687, %v662
      %696 = vst.msk [vmem:[%s333 + $0x20] sm:$0xf] %vm687, %v663
      %697 = vst.msk [vmem:[%s333 + $0x24] sm:$0xf] %vm687, %v664
      %698 = vst.msk [vmem:[%s333 + $0x28] sm:$0xf] %vm687, %v665
      %699 = vst.msk [vmem:[%s333 + $0x2c] sm:$0xf] %vm687, %v666
      %700 = vst.msk [vmem:[%s333 + $0x30] sm:$0xf] %vm687, %v667
      %701 = vst.msk [vmem:[%s333 + $0x34] sm:$0xf] %vm687, %v668
      %702 = vst.msk [vmem:[%s333 + $0x38] sm:$0xf] %vm687, %v669
      %703 = vst.msk [vmem:[%s333 + $0x3c] sm:$0xf] %vm687, %v670
      %v712 = vunpack.c.l.b16 %v623
      %v713 = vunpack.c.h.b16 %v623
      %v714 = vunpack.c.l.b16 %v624
      %v715 = vunpack.c.h.b16 %v624
      %v716 = vunpack.c.l.b16 %v625
      %v717 = vunpack.c.h.b16 %v625
      %v718 = vunpack.c.l.b16 %v626
      %v719 = vunpack.c.h.b16 %v626
      %v720 = vunpack.c.l.b16 %v627
      %v721 = vunpack.c.h.b16 %v627
      %v722 = vunpack.c.l.b16 %v628
      %v723 = vunpack.c.h.b16 %v628
      %v724 = vunpack.c.l.b16 %v629
      %v725 = vunpack.c.h.b16 %v629
      %v726 = vunpack.c.l.b16 %v630
      %v727 = vunpack.c.h.b16 %v630
      %v728 = vpack.c.b16 %v712, %v712
      %v729 = vpack.c.b16 %v713, %v713
      %v730 = vpack.c.b16 %v714, %v714
      %v731 = vpack.c.b16 %v715, %v715
      %v732 = vpack.c.b16 %v716, %v716
      %v733 = vpack.c.b16 %v717, %v717
      %v734 = vpack.c.b16 %v718, %v718
      %v735 = vpack.c.b16 %v719, %v719
      %v736 = vpack.c.b16 %v720, %v720
      %v737 = vpack.c.b16 %v721, %v721
      %v738 = vpack.c.b16 %v722, %v722
      %v739 = vpack.c.b16 %v723, %v723
      %v740 = vpack.c.b16 %v724, %v724
      %v741 = vpack.c.b16 %v725, %v725
      %v742 = vpack.c.b16 %v726, %v726
      %v743 = vpack.c.b16 %v727, %v727
      %vm760 = vcmask 257024
      %761 = vst.msk [vmem:[%s344] sm:$0xf] %vm760, %v728
      %762 = vst.msk [vmem:[%s344 + $0x4] sm:$0xf] %vm760, %v729
      %763 = vst.msk [vmem:[%s344 + $0x8] sm:$0xf] %vm760, %v730
      %764 = vst.msk [vmem:[%s344 + $0xc] sm:$0xf] %vm760, %v731
      %765 = vst.msk [vmem:[%s344 + $0x10] sm:$0xf] %vm760, %v732
      %766 = vst.msk [vmem:[%s344 + $0x14] sm:$0xf] %vm760, %v733
      %767 = vst.msk [vmem:[%s344 + $0x18] sm:$0xf] %vm760, %v734
      %768 = vst.msk [vmem:[%s344 + $0x1c] sm:$0xf] %vm760, %v735
      %769 = vst.msk [vmem:[%s344 + $0x20] sm:$0xf] %vm760, %v736
      %770 = vst.msk [vmem:[%s344 + $0x24] sm:$0xf] %vm760, %v737
      %771 = vst.msk [vmem:[%s344 + $0x28] sm:$0xf] %vm760, %v738
      %772 = vst.msk [vmem:[%s344 + $0x2c] sm:$0xf] %vm760, %v739
      %773 = vst.msk [vmem:[%s344 + $0x30] sm:$0xf] %vm760, %v740
      %774 = vst.msk [vmem:[%s344 + $0x34] sm:$0xf] %vm760, %v741
      %775 = vst.msk [vmem:[%s344 + $0x38] sm:$0xf] %vm760, %v742
      %776 = vst.msk [vmem:[%s344 + $0x3c] sm:$0xf] %vm760, %v743
      %v777 = vunpack.c.l.bf16 %v514
      %v778 = vunpack.c.h.bf16 %v514
      %v779 = vunpack.c.l.bf16 %v515
      %v780 = vunpack.c.h.bf16 %v515
      %v781 = vunpack.c.l.bf16 %v516
      %v782 = vunpack.c.h.bf16 %v516
      %v783 = vunpack.c.l.bf16 %v517
      %v784 = vunpack.c.h.bf16 %v517
      %v785 = vunpack.c.l.bf16 %v518
      %v786 = vunpack.c.h.bf16 %v518
      %v787 = vunpack.c.l.bf16 %v519
      %v788 = vunpack.c.h.bf16 %v519
      %v789 = vunpack.c.l.bf16 %v520
      %v790 = vunpack.c.h.bf16 %v520
      %v791 = vunpack.c.l.bf16 %v521
      %v792 = vunpack.c.h.bf16 %v521
      %v793 = vunpack.c.l.bf16 %v623
      %v794 = vunpack.c.h.bf16 %v623
      %v795 = vunpack.c.l.bf16 %v624
      %v796 = vunpack.c.h.bf16 %v624
      %v797 = vunpack.c.l.bf16 %v625
      %v798 = vunpack.c.h.bf16 %v625
      %v799 = vunpack.c.l.bf16 %v626
      %v800 = vunpack.c.h.bf16 %v626
      %v801 = vunpack.c.l.bf16 %v627
      %v802 = vunpack.c.h.bf16 %v627
      %v803 = vunpack.c.l.bf16 %v628
      %v804 = vunpack.c.h.bf16 %v628
      %v805 = vunpack.c.l.bf16 %v629
      %v806 = vunpack.c.h.bf16 %v629
      %v807 = vunpack.c.l.bf16 %v630
      %v808 = vunpack.c.h.bf16 %v630
      %vm809 = vcmask 130048
      %v810 = vsel %vm809, %v777, 0.0
      %v811 = vsel %vm809, %v778, 0.0
      %v812 = vadd.f32 %v810, %v811
      %v813 = vsel %vm809, %v779, 0.0
      %v814 = vadd.f32 %v812, %v813
      %v815 = vsel %vm809, %v780, 0.0
      %v816 = vadd.f32 %v814, %v815
      %v817 = vsel %vm809, %v781, 0.0
      %v818 = vadd.f32 %v816, %v817
      %v819 = vsel %vm809, %v782, 0.0
      %v820 = vadd.f32 %v818, %v819
      %v821 = vsel %vm809, %v783, 0.0
      %v822 = vadd.f32 %v820, %v821
      %v823 = vsel %vm809, %v784, 0.0
      %v824 = vadd.f32 %v822, %v823
      %v825 = vsel %vm809, %v785, 0.0
      %v826 = vadd.f32 %v824, %v825
      %v827 = vsel %vm809, %v786, 0.0
      %v828 = vadd.f32 %v826, %v827
      %v829 = vsel %vm809, %v787, 0.0
      %v830 = vadd.f32 %v828, %v829
      %v831 = vsel %vm809, %v788, 0.0
      %v832 = vadd.f32 %v830, %v831
      %v833 = vsel %vm809, %v789, 0.0
      %v834 = vadd.f32 %v832, %v833
      %v835 = vsel %vm809, %v790, 0.0
      %v836 = vadd.f32 %v834, %v835
      %v837 = vsel %vm809, %v791, 0.0
      %v838 = vadd.f32 %v836, %v837
      %v839 = vsel %vm809, %v792, 0.0
      %v840 = vadd.f32 %v838, %v839
      %v841 = vrot.slane %v840, 4
      %v842 = vadd.f32 %v840, %v841
      %v843 = vrot.slane %v842, 2
      %v844 = vadd.f32 %v842, %v843
      %v845 = vrot.slane %v844, 1
      %v846 = vadd.f32 %v844, %v845
      %v847 = vmul.f32 %v777, %v777
      %v848 = vmul.f32 %v778, %v778
      %v849 = vmul.f32 %v779, %v779
      %v850 = vmul.f32 %v780, %v780
      %v851 = vmul.f32 %v781, %v781
      %v852 = vmul.f32 %v782, %v782
      %v853 = vmul.f32 %v783, %v783
      %v854 = vmul.f32 %v784, %v784
      %v855 = vmul.f32 %v785, %v785
      %v856 = vmul.f32 %v786, %v786
      %v857 = vmul.f32 %v787, %v787
      %v858 = vmul.f32 %v788, %v788
      %v859 = vmul.f32 %v789, %v789
      %v860 = vmul.f32 %v790, %v790
      %v861 = vmul.f32 %v791, %v791
      %v862 = vmul.f32 %v792, %v792
      %v863 = vsel %vm809, %v847, 0.0
      %v864 = vsel %vm809, %v848, 0.0
      %v865 = vadd.f32 %v863, %v864
      %v866 = vsel %vm809, %v849, 0.0
      %v867 = vadd.f32 %v865, %v866
      %v868 = vsel %vm809, %v850, 0.0
      %v869 = vadd.f32 %v867, %v868
      %v870 = vsel %vm809, %v851, 0.0
      %v871 = vadd.f32 %v869, %v870
      %v872 = vsel %vm809, %v852, 0.0
      %v873 = vadd.f32 %v871, %v872
      %v874 = vsel %vm809, %v853, 0.0
      %v875 = vadd.f32 %v873, %v874
      %v876 = vsel %vm809, %v854, 0.0
      %v877 = vadd.f32 %v875, %v876
      %v878 = vsel %vm809, %v855, 0.0
      %v879 = vadd.f32 %v877, %v878
      %v880 = vsel %vm809, %v856, 0.0
      %v881 = vadd.f32 %v879, %v880
      %v882 = vsel %vm809, %v857, 0.0
      %v883 = vadd.f32 %v881, %v882
      %v884 = vsel %vm809, %v858, 0.0
      %v885 = vadd.f32 %v883, %v884
      %v886 = vsel %vm809, %v859, 0.0
      %v887 = vadd.f32 %v885, %v886
      %v888 = vsel %vm809, %v860, 0.0
      %v889 = vadd.f32 %v887, %v888
      %v890 = vsel %vm809, %v861, 0.0
      %v891 = vadd.f32 %v889, %v890
      %v892 = vsel %vm809, %v862, 0.0
      %v893 = vadd.f32 %v891, %v892
      %v894 = vrot.slane %v893, 4
      %v895 = vadd.f32 %v893, %v894
      %v896 = vrot.slane %v895, 2
      %v897 = vadd.f32 %v895, %v896
      %v898 = vrot.slane %v897, 1
      %v899 = vadd.f32 %v897, %v898
      %vm900 = vcmask 1040384
      %v901 = vsel %vm900, %v846, %v899
      %vm902 = vcmask 123904
      %903 = vst.msk [vmem:[%s353] sm:$0x3] %vm902, %v901
      %vm904 = vcmask 261120
      %v905 = vsel %vm904, %v793, 0.0
      %v906 = vsel %vm904, %v794, 0.0
      %v907 = vadd.f32 %v905, %v906
      %v908 = vsel %vm904, %v795, 0.0
      %v909 = vadd.f32 %v907, %v908
      %v910 = vsel %vm904, %v796, 0.0
      %v911 = vadd.f32 %v909, %v910
      %v912 = vsel %vm904, %v797, 0.0
      %v913 = vadd.f32 %v911, %v912
      %v914 = vsel %vm904, %v798, 0.0
      %v915 = vadd.f32 %v913, %v914
      %v916 = vsel %vm904, %v799, 0.0
      %v917 = vadd.f32 %v915, %v916
      %v918 = vsel %vm904, %v800, 0.0
      %v919 = vadd.f32 %v917, %v918
      %v920 = vsel %vm904, %v801, 0.0
      %v921 = vadd.f32 %v919, %v920
      %v922 = vsel %vm904, %v802, 0.0
      %v923 = vadd.f32 %v921, %v922
      %v924 = vsel %vm904, %v803, 0.0
      %v925 = vadd.f32 %v923, %v924
      %v926 = vsel %vm904, %v804, 0.0
      %v927 = vadd.f32 %v925, %v926
      %v928 = vsel %vm904, %v805, 0.0
      %v929 = vadd.f32 %v927, %v928
      %v930 = vsel %vm904, %v806, 0.0
      %v931 = vadd.f32 %v929, %v930
      %v932 = vsel %vm904, %v807, 0.0
      %v933 = vadd.f32 %v931, %v932
      %v934 = vsel %vm904, %v808, 0.0
      %v935 = vadd.f32 %v933, %v934
      %v936 = vrot.slane %v935, 4
      %v937 = vadd.f32 %v935, %v936
      %v938 = vrot.slane %v937, 2
      %v939 = vadd.f32 %v937, %v938
      %v940 = vrot.slane %v939, 1
      %v941 = vadd.f32 %v939, %v940
      %v942 = vmul.f32 %v793, %v793
      %v943 = vmul.f32 %v794, %v794
      %v944 = vmul.f32 %v795, %v795
      %v945 = vmul.f32 %v796, %v796
      %v946 = vmul.f32 %v797, %v797
      %v947 = vmul.f32 %v798, %v798
      %v948 = vmul.f32 %v799, %v799
      %v949 = vmul.f32 %v800, %v800
      %v950 = vmul.f32 %v801, %v801
      %v951 = vmul.f32 %v802, %v802
      %v952 = vmul.f32 %v803, %v803
      %v953 = vmul.f32 %v804, %v804
      %v954 = vmul.f32 %v805, %v805
      %v955 = vmul.f32 %v806, %v806
      %v956 = vmul.f32 %v807, %v807
      %v957 = vmul.f32 %v808, %v808
      %v958 = vsel %vm904, %v942, 0.0
      %v959 = vsel %vm904, %v943, 0.0
      %v960 = vadd.f32 %v958, %v959
      %v961 = vsel %vm904, %v944, 0.0
      %v962 = vadd.f32 %v960, %v961
      %v963 = vsel %vm904, %v945, 0.0
      %v964 = vadd.f32 %v962, %v963
      %v965 = vsel %vm904, %v946, 0.0
      %v966 = vadd.f32 %v964, %v965
      %v967 = vsel %vm904, %v947, 0.0
      %v968 = vadd.f32 %v966, %v967
      %v969 = vsel %vm904, %v948, 0.0
      %v970 = vadd.f32 %v968, %v969
      %v971 = vsel %vm904, %v949, 0.0
      %v972 = vadd.f32 %v970, %v971
      %v973 = vsel %vm904, %v950, 0.0
      %v974 = vadd.f32 %v972, %v973
      %v975 = vsel %vm904, %v951, 0.0
      %v976 = vadd.f32 %v974, %v975
      %v977 = vsel %vm904, %v952, 0.0
      %v978 = vadd.f32 %v976, %v977
      %v979 = vsel %vm904, %v953, 0.0
      %v980 = vadd.f32 %v978, %v979
      %v981 = vsel %vm904, %v954, 0.0
      %v982 = vadd.f32 %v980, %v981
      %v983 = vsel %vm904, %v955, 0.0
      %v984 = vadd.f32 %v982, %v983
      %v985 = vsel %vm904, %v956, 0.0
      %v986 = vadd.f32 %v984, %v985
      %v987 = vsel %vm904, %v957, 0.0
      %v988 = vadd.f32 %v986, %v987
      %v989 = vrot.slane %v988, 4
      %v990 = vadd.f32 %v988, %v989
      %v991 = vrot.slane %v990, 2
      %v992 = vadd.f32 %v990, %v991
      %v993 = vrot.slane %v992, 1
      %v994 = vadd.f32 %v992, %v993
      %v995 = vsel %vm900, %v941, %v994
      %vm996 = vcmask 254976
      %997 = vst.msk [vmem:[%s361] sm:$0x3] %vm996, %v995
      %s998 = smul.u32 8, %s23
      %p999 = scmp.lt.s32.totalorder %s22, 1
      %s1000 = scalar_select %p999, %s22, 1
      %p1001 = scmp.lt.s32.totalorder %s998, 15
      %s1002 = scalar_select %p1001, %s998, 15
      %s1003 = smul.addr %s1002, 2
      %s1004 = smul.addr %s1000, 32
      %s1005 = sadd.s32 %s1003, %s1004
      %s1006 = smul.addr %s1005, 4
      %s1007 = scalar_lea.vmem %s3, %s1006
      %s1008 = smul.u32 8, %s23
      %p1009 = scmp.lt.s32.totalorder %s22, 1
      %s1010 = scalar_select %p1009, %s22, 1
      %p1011 = scmp.lt.s32.totalorder %s1008, 15
      %s1012 = scalar_select %p1011, %s1008, 15
      %s1013 = smul.addr %s1012, 2
      %s1014 = smul.addr %s1010, 32
      %s1015 = sadd.s32 %s1013, %s1014
      %s1016 = smul.addr %s1015, 4
      %s1017 = scalar_lea.vmem %s4, %s1016
      %p1018 = scmp.lt.s32.totalorder %s22, 1
      %s1019 = scalar_select %p1018, %s22, 1
      %p1020 = scmp.lt.s32.totalorder %s23, 1
      %s1021 = scalar_select %p1020, %s23, 1
      %s1022 = smul.addr %s1019, 2
      %s1023 = sadd.s32 %s1021, %s1022
      %s1024 = smul.addr %s1023, 2
      %s1025 = scalar_lea.vmem %s5, %s1024
      %p1026 = scmp.lt.s32.totalorder %s22, 1
      %s1027 = scalar_select %p1026, %s22, 1
      %p1028 = scmp.lt.s32.totalorder %s23, 1
      %s1029 = scalar_select %p1028, %s23, 1
      %s1030 = smul.addr %s1027, 2
      %s1031 = sadd.s32 %s1029, %s1030
      %s1032 = smul.addr %s1031, 2
      %s1033 = scalar_lea.vmem %s6, %s1032
      // Predicated region
      $region33: #{_lambda_.4} parent=31 // pred_check
        %p1034 = pneg %p120
      $region34: #{_lambda_.4} parent=31 // pred_check_branch
        %1036 = sbr.rel (%p1034) target = $region36
      $region35: #{_lambda_.4} parent=31 // pred_region
        %s1037 = smul.u32 8, %s23
      $region36: #{_lambda_.4} parent=31 // pred_fallthru
        _
      // Predicated region
      $region37: #{_lambda_.4} parent=31 // pred_check
        %p1038 = pneg %p148
      $region38: #{_lambda_.4} parent=31 // pred_check_branch
        %1040 = sbr.rel (%p1038) target = $region40
      $region39: #{_lambda_.4} parent=31 // pred_region
        %s1041 = smul.u32 8, %s23
      $region40: #{_lambda_.4} parent=31 // pred_fallthru
        _
      // Predicated region
      $region41: #{_lambda_.4} parent=31 // pred_check
        %p1042 = pneg %p176
      $region42: #{_lambda_.4} parent=31 // pred_check_branch
        %1044 = sbr.rel (%p1042) target = $region44
      $region43: #{_lambda_.4} parent=31 // pred_region
        _
      $region44: #{_lambda_.4} parent=31 // pred_fallthru
        _
      // Predicated region
      $region45: #{_lambda_.4} parent=31 // pred_check
        %p1045 = pneg %p204
      $region46: #{_lambda_.4} parent=31 // pred_check_branch
        %1047 = sbr.rel (%p1045) target = $region48
      $region47: #{_lambda_.4} parent=31 // pred_region
        _
      $region48: #{_lambda_.4} parent=31 // pred_fallthru
        _
    $region32: #{_lambda_.4} parent=5 // pred_fallthru
      _
    %p1048 = scmp.le.s32.totalorder 2, %s13
    // Predicated region
    $region49: #{_lambda_.4} parent=5 // pred_check
      %p1049 = pneg %p1048
    $region50: #{_lambda_.4} parent=5 // pred_check_branch
      %1051 = sbr.rel (%p1049) target = $region52
    $region51: #{_lambda_.4} parent=5 // pred_region
      %s1052 = ssub.s32 %s13, 2
      // Predicated region
      $region53: #{_lambda_.4} parent=51 // pred_check
        %p1053 = pneg %p126
      $region54: #{_lambda_.4} parent=51 // pred_check_branch
        %1055 = sbr.rel (%p1053) target = $region56
      $region55: #{_lambda_.4} parent=51 // pred_region
        %s1056 = smul.u32 8, %s25
        %p1057 = scmp.lt.s32.totalorder %s24, 1
        %s1058 = scalar_select %p1057, %s24, 1
        %p1059 = scmp.lt.s32.totalorder %s1056, 15
        %s1060 = scalar_select %p1059, %s1056, 15
        %s1061 = smul.addr %s1060, 2
        %s1062 = smul.addr %s1058, 32
        %s1063 = sadd.s32 %s1061, %s1062
        %s1064 = smul.addr %s1063, 4
        %s1065 = scalar_lea.vmem %s3, %s1064
      $region56: #{_lambda_.4} parent=51 // pred_fallthru
        _
      // Predicated region
      $region57: #{_lambda_.4} parent=51 // pred_check
        %p1066 = pneg %p154
      $region58: #{_lambda_.4} parent=51 // pred_check_branch
        %1068 = sbr.rel (%p1066) target = $region60
      $region59: #{_lambda_.4} parent=51 // pred_region
        %s1069 = smul.u32 8, %s25
        %p1070 = scmp.lt.s32.totalorder %s24, 1
        %s1071 = scalar_select %p1070, %s24, 1
        %p1072 = scmp.lt.s32.totalorder %s1069, 15
        %s1073 = scalar_select %p1072, %s1069, 15
        %s1074 = smul.addr %s1073, 2
        %s1075 = smul.addr %s1071, 32
        %s1076 = sadd.s32 %s1074, %s1075
        %s1077 = smul.addr %s1076, 4
        %s1078 = scalar_lea.vmem %s4, %s1077
      $region60: #{_lambda_.4} parent=51 // pred_fallthru
        _
      // Predicated region
      $region61: #{_lambda_.4} parent=51 // pred_check
        %p1079 = pneg %p182
      $region62: #{_lambda_.4} parent=51 // pred_check_branch
        %1081 = sbr.rel (%p1079) target = $region64
      $region63: #{_lambda_.4} parent=51 // pred_region
        %p1082 = scmp.lt.s32.totalorder %s24, 1
        %s1083 = scalar_select %p1082, %s24, 1
        %p1084 = scmp.lt.s32.totalorder %s25, 1
        %s1085 = scalar_select %p1084, %s25, 1
        %s1086 = smul.addr %s1083, 2
        %s1087 = sadd.s32 %s1085, %s1086
        %s1088 = smul.addr %s1087, 2
        %s1089 = scalar_lea.vmem %s5, %s1088
      $region64: #{_lambda_.4} parent=51 // pred_fallthru
        _
      // Predicated region
      $region65: #{_lambda_.4} parent=51 // pred_check
        %p1090 = pneg %p210
      $region66: #{_lambda_.4} parent=51 // pred_check_branch
        %1092 = sbr.rel (%p1090) target = $region68
      $region67: #{_lambda_.4} parent=51 // pred_region
        %p1093 = scmp.lt.s32.totalorder %s24, 1
        %s1094 = scalar_select %p1093, %s24, 1
        %p1095 = scmp.lt.s32.totalorder %s25, 1
        %s1096 = scalar_select %p1095, %s25, 1
        %s1097 = smul.addr %s1094, 2
        %s1098 = sadd.s32 %s1096, %s1097
        %s1099 = smul.addr %s1098, 2
        %s1100 = scalar_lea.vmem %s6, %s1099
      $region68: #{_lambda_.4} parent=51 // pred_fallthru
        _
    $region52: #{_lambda_.4} parent=5 // pred_fallthru
      _
  $region6: #{_lambda_.4} parent=0 // loop_footer
    %s17 = sadd.s32 1, %s13
  $region7: #{_lambda_.4} parent=0 // loop_footer_branch
    %12 = sbr.rel target = $region3
  $region8: #{_lambda_.4} parent=0 // loop_exit
    _

// kernel: _lambda_.7
$region0: #{_lambda_.7}
  #allocation0 [shape = 'u32[]', space=smem, size = 0x4, offset = 0x4, fixed_abs, tag = 'smem constant byte address 0x4 - core index']
  #allocation1 [shape = 'u32[144,128]{1,0:T(1,128)}', space=vmem, size = 0x12000, scoped, tag = 'internal scratch']
  %s0 = inlined_call_operand.vmem [shape: bf16[2,16,16,32], index: 0, kind: input, shape index: {}]
  %s1 = inlined_call_operand.vmem [shape: bf16[2,16,16,32], index: 1, kind: input, shape index: {}]
  %s2 = inlined_call_operand.vmem [shape: f32[1,32], index: 2, kind: input, shape index: {}]
  %s3 = inlined_call_operand.vmem [shape: f32[1,32], index: 3, kind: input, shape index: {}]
  %s4 = inlined_call_operand.vmem [shape: f32[1,32], index: 4, kind: input, shape index: {}]
  %s5 = inlined_call_operand.vmem [shape: f32[1,32], index: 5, kind: input, shape index: {}]
  %s6 = inlined_call_operand.hbm [shape: f32[2,16,16,32], index: 6, kind: output, shape index: {}]
  %s7 = sld [smem:[#allocation0]]
  $region57: #{_lambda_.7} parent=0
    _
  %s9 = ssub.s32 1, %s7
  %s10 = scalar_select 0, %s9, %s7
  $region1: #{_lambda_.7} parent=0
    #allocation2 [shape = 'u8[131072]{0}', space=vmem, size = 0x20000, scoped, tag = 'output window, operand 0']
    #allocation3 [shape = 's32[2]{0}', space=sflag, size = 0x8, scoped, tag = 'scoped memory for _lambda_.7']
    %11 = vsyncpa [#allocation3], 0
    %s12 = scalar_lea.sflag [#allocation3], 1
    %13 = vsyncpa %s12, 0
    loop: start=0, step=1, limit=6
    $region2: #{_lambda_.7} parent=1 // loop_pre_header
      _
    $region3: #{_lambda_.7} parent=1 // loop_header
      %s15 = sphi 0, %s19
      %p16 = scmp.ge.s32.totalorder %s15, 6
      %s22 = sphi 0, %s34
      %s23 = sphi 0, %s30
      %s24 = sphi 0, %s22
      %s25 = sphi 0, %s23
      %s26 = sphi 0, %s24
      %s27 = sphi 0, %s25
      %s39 = sphi 0, %s41
      %s42 = sphi 0, %s39
      %s43 = sphi 0, %s42
      %s59 = sphi 0, %s43
      %s67 = sphi 0, %s69
      %s70 = sphi 0, %s67
      %s71 = sphi 0, %s70
      %s87 = sphi 0, %s71
      %s91 = sphi 0, %s91
      %s93 = sphi 0, %s91
      %s94 = sphi 0, %s93
      %s108 = sphi 0, %s94
      %s112 = sphi 0, %s112
      %s114 = sphi 0, %s112
      %s115 = sphi 0, %s114
      %s129 = sphi 0, %s115
      %s133 = sphi 0, %s133
      %s135 = sphi 0, %s133
      %s136 = sphi 0, %s135
      %s150 = sphi 0, %s136
      %s154 = sphi 0, %s154
      %s156 = sphi 0, %s154
      %s157 = sphi 0, %s156
      %s171 = sphi 0, %s157
      %s179 = sphi 0, %s181
      %s182 = sphi 0, %s179
      %s183 = sphi 0, %s182
      %s199 = sphi 0, %s183
    $region4: #{_lambda_.7} parent=1 // loop_header_branch
      %18 = sbr.rel (%p16) target = $region8
    $region5: #{_lambda_.7} parent=1 // loop_body
      %s20 = ssub.s32 %s15, 1
      %s21 = ssub.s32 %s15, 2
      %s28 = sadd.s32 1, %s23
      %p29 = scmp.ge.s32.totalorder %s28, 2
      %s30 = scalar_select %p29, 0, %s28
      %s31 = sadd.s32 1, %s22
      %s32 = scalar_select %p29, %s31, %s22
      %p33 = scmp.ge.s32.totalorder %s32, 2
      %s34 = scalar_select %p33, 0, %s32
      %s35 = ssub.s32 %s22, %s34
      %s36 = ssub.s32 %s23, %s30
      %s37 = sor.u32 %s35, %s36
      %p38 = scmp.eq.s32.totalorder %s37, 0
      %s40 = sadd.s32 %s39, 1
      %s41 = scalar_select %p38, %s39, %s40
      %p44 = pneg %p38
      %p45 = scmp.eq.s32.totalorder %s15, 3
      %p46 = por %p44, %p45
      %p47 = scmp.ne.s32.totalorder %s39, %s42
      %p48 = scmp.eq.s32.totalorder %s15, 0
      %p49 = por %p47, %p48
      %p50 = scmp.ne.s32.totalorder %s39, %s42
      %p51 = scmp.eq.s32.totalorder %s20, 3
      %p52 = por %p50, %p51
      %p53 = scmp.ne.s32.totalorder %s42, %s43
      %p54 = scmp.eq.s32.totalorder %s20, 0
      %p55 = por %p53, %p54
      %p56 = scmp.ne.s32.totalorder %s42, %s43
      %p57 = scmp.eq.s32.totalorder %s21, 3
      %p58 = por %p56, %p57
      %p60 = scmp.ne.s32.totalorder %s43, %s59
      %p61 = scmp.eq.s32.totalorder %s21, 0
      %p62 = por %p60, %p61
      %s63 = ssub.s32 %s22, %s34
      %s64 = ssub.s32 %s23, %s30
      %s65 = sor.u32 %s63, %s64
      %p66 = scmp.eq.s32.totalorder %s65, 0
      %s68 = sadd.s32 %s67, 1
      %s69 = scalar_select %p66, %s67, %s68
      %p72 = pneg %p66
      %p73 = scmp.eq.s32.totalorder %s15, 3
      %p74 = por %p72, %p73
      %p75 = scmp.ne.s32.totalorder %s67, %s70
      %p76 = scmp.eq.s32.totalorder %s15, 0
      %p77 = por %p75, %p76
      %p78 = scmp.ne.s32.totalorder %s67, %s70
      %p79 = scmp.eq.s32.totalorder %s20, 3
      %p80 = por %p78, %p79
      %p81 = scmp.ne.s32.totalorder %s70, %s71
      %p82 = scmp.eq.s32.totalorder %s20, 0
      %p83 = por %p81, %p82
      %p84 = scmp.ne.s32.totalorder %s70, %s71
      %p85 = scmp.eq.s32.totalorder %s21, 3
      %p86 = por %p84, %p85
      %p88 = scmp.ne.s32.totalorder %s71, %s87
      %p89 = scmp.eq.s32.totalorder %s21, 0
      %p90 = por %p88, %p89
      %s92 = sadd.s32 %s91, 1
      %p95 = scmp.eq.s32.totalorder %s15, 3
      %p96 = scmp.ne.s32.totalorder %s91, %s93
      %p97 = scmp.eq.s32.totalorder %s15, 0
      %p98 = por %p96, %p97
      %p99 = scmp.ne.s32.totalorder %s91, %s93
      %p100 = scmp.eq.s32.totalorder %s20, 3
      %p101 = por %p99, %p100
      %p102 = scmp.ne.s32.totalorder %s93, %s94
      %p103 = scmp.eq.s32.totalorder %s20, 0
      %p104 = por %p102, %p103
      %p105 = scmp.ne.s32.totalorder %s93, %s94
      %p106 = scmp.eq.s32.totalorder %s21, 3
      %p107 = por %p105, %p106
      %p109 = scmp.ne.s32.totalorder %s94, %s108
      %p110 = scmp.eq.s32.totalorder %s21, 0
      %p111 = por %p109, %p110
      %s113 = sadd.s32 %s112, 1
      %p116 = scmp.eq.s32.totalorder %s15, 3
      %p117 = scmp.ne.s32.totalorder %s112, %s114
      %p118 = scmp.eq.s32.totalorder %s15, 0
      %p119 = por %p117, %p118
      %p120 = scmp.ne.s32.totalorder %s112, %s114
      %p121 = scmp.eq.s32.totalorder %s20, 3
      %p122 = por %p120, %p121
      %p123 = scmp.ne.s32.totalorder %s114, %s115
      %p124 = scmp.eq.s32.totalorder %s20, 0
      %p125 = por %p123, %p124
      %p126 = scmp.ne.s32.totalorder %s114, %s115
      %p127 = scmp.eq.s32.totalorder %s21, 3
      %p128 = por %p126, %p127
      %p130 = scmp.ne.s32.totalorder %s115, %s129
      %p131 = scmp.eq.s32.totalorder %s21, 0
      %p132 = por %p130, %p131
      %s134 = sadd.s32 %s133, 1
      %p137 = scmp.eq.s32.totalorder %s15, 3
      %p138 = scmp.ne.s32.totalorder %s133, %s135
      %p139 = scmp.eq.s32.totalorder %s15, 0
      %p140 = por %p138, %p139
      %p141 = scmp.ne.s32.totalorder %s133, %s135
      %p142 = scmp.eq.s32.totalorder %s20, 3
      %p143 = por %p141, %p142
      %p144 = scmp.ne.s32.totalorder %s135, %s136
      %p145 = scmp.eq.s32.totalorder %s20, 0
      %p146 = por %p144, %p145
      %p147 = scmp.ne.s32.totalorder %s135, %s136
      %p148 = scmp.eq.s32.totalorder %s21, 3
      %p149 = por %p147, %p148
      %p151 = scmp.ne.s32.totalorder %s136, %s150
      %p152 = scmp.eq.s32.totalorder %s21, 0
      %p153 = por %p151, %p152
      %s155 = sadd.s32 %s154, 1
      %p158 = scmp.eq.s32.totalorder %s15, 3
      %p159 = scmp.ne.s32.totalorder %s154, %s156
      %p160 = scmp.eq.s32.totalorder %s15, 0
      %p161 = por %p159, %p160
      %p162 = scmp.ne.s32.totalorder %s154, %s156
      %p163 = scmp.eq.s32.totalorder %s20, 3
      %p164 = por %p162, %p163
      %p165 = scmp.ne.s32.totalorder %s156, %s157
      %p166 = scmp.eq.s32.totalorder %s20, 0
      %p167 = por %p165, %p166
      %p168 = scmp.ne.s32.totalorder %s156, %s157
      %p169 = scmp.eq.s32.totalorder %s21, 3
      %p170 = por %p168, %p169
      %p172 = scmp.ne.s32.totalorder %s157, %s171
      %p173 = scmp.eq.s32.totalorder %s21, 0
      %p174 = por %p172, %p173
      %s175 = ssub.s32 %s22, %s34
      %s176 = ssub.s32 %s23, %s30
      %s177 = sor.u32 %s175, %s176
      %p178 = scmp.eq.s32.totalorder %s177, 0
      %s180 = sadd.s32 %s179, 1
      %s181 = scalar_select %p178, %s179, %s180
      %p184 = pneg %p178
      %p185 = scmp.eq.s32.totalorder %s15, 3
      %p186 = por %p184, %p185
      %p187 = scmp.ne.s32.totalorder %s179, %s182
      %p188 = scmp.eq.s32.totalorder %s15, 0
      %p189 = por %p187, %p188
      %p190 = scmp.ne.s32.totalorder %s179, %s182
      %p191 = scmp.eq.s32.totalorder %s20, 3
      %p192 = por %p190, %p191
      %p193 = scmp.ne.s32.totalorder %s182, %s183
      %p194 = scmp.eq.s32.totalorder %s20, 0
      %p195 = por %p193, %p194
      %p196 = scmp.ne.s32.totalorder %s182, %s183
      %p197 = scmp.eq.s32.totalorder %s21, 3
      %p198 = por %p196, %p197
      %p200 = scmp.ne.s32.totalorder %s183, %s199
      %p201 = scmp.eq.s32.totalorder %s21, 0
      %p202 = por %p200, %p201
      %p203 = scmp.le.s32.totalorder 1, %s15
      %p204 = scmp.lt.s32.totalorder %s15, 5
      %p205 = pnand %p203, %p204
      %p206 = pneg %p205
      // Predicated region
      $region9: #{_lambda_.7} parent=5 // pred_check
        _
      $region10: #{_lambda_.7} parent=5 // pred_check_branch
        %208 = sbr.rel (%p205) target = $region12
      $region11: #{_lambda_.7} parent=5 // pred_region
        %s209 = ssub.s32 %s15, 1
        // Predicated region
        $region13: #{_lambda_.7} parent=11 // pred_check
          %p210 = pneg %p104
        $region14: #{_lambda_.7} parent=11 // pred_check_branch
          %212 = sbr.rel (%p210) target = $region16
        $region15: #{_lambda_.7} parent=11 // pred_region
          _
        $region16: #{_lambda_.7} parent=11 // pred_fallthru
          _
        // Predicated region
        $region17: #{_lambda_.7} parent=11 // pred_check
          %p213 = pneg %p125
        $region18: #{_lambda_.7} parent=11 // pred_check_branch
          %215 = sbr.rel (%p213) target = $region20
        $region19: #{_lambda_.7} parent=11 // pred_region
          _
        $region20: #{_lambda_.7} parent=11 // pred_fallthru
          _
        // Predicated region
        $region21: #{_lambda_.7} parent=11 // pred_check
          %p216 = pneg %p146
        $region22: #{_lambda_.7} parent=11 // pred_check_branch
          %218 = sbr.rel (%p216) target = $region24
        $region23: #{_lambda_.7} parent=11 // pred_region
          _
        $region24: #{_lambda_.7} parent=11 // pred_fallthru
          _
        // Predicated region
        $region25: #{_lambda_.7} parent=11 // pred_check
          %p219 = pneg %p167
        $region26: #{_lambda_.7} parent=11 // pred_check_branch
          %221 = sbr.rel (%p219) target = $region28
        $region27: #{_lambda_.7} parent=11 // pred_region
          _
        $region28: #{_lambda_.7} parent=11 // pred_fallthru
          _
      $region12: #{_lambda_.7} parent=5 // pred_fallthru
        _
      %p222 = scmp.lt.s32.totalorder %s15, 4
      // Predicated region
      $region29: #{_lambda_.7} parent=5 // pred_check
        %p223 = pneg %p222
      $region30: #{_lambda_.7} parent=5 // pred_check_branch
        %225 = sbr.rel (%p223) target = $region32
      $region31: #{_lambda_.7} parent=5 // pred_region
        // Predicated region
        $region33: #{_lambda_.7} parent=31 // pred_check
          %p226 = pneg %p49
        $region34: #{_lambda_.7} parent=31 // pred_check_branch
          %228 = sbr.rel (%p226) target = $region36
        $region35: #{_lambda_.7} parent=31 // pred_region
          %s229 = smul.u32 8, %s23
          %p230 = scmp.lt.s32.totalorder %s22, 1
          %s231 = scalar_select %p230, %s22, 1
          %p232 = scmp.lt.s32.totalorder %s229, 15
          %s233 = scalar_select %p232, %s229, 15
          %s234 = smul.addr %s233, 2
          %s235 = smul.addr %s231, 32
          %s236 = sadd.s32 %s234, %s235
          %s237 = smul.addr %s236, 4
          %s238 = scalar_lea.vmem %s0, %s237
          %s239 = smul.u32 8, %s23
        $region36: #{_lambda_.7} parent=31 // pred_fallthru
          _
        // Predicated region
        $region37: #{_lambda_.7} parent=31 // pred_check
          %p240 = pneg %p77
        $region38: #{_lambda_.7} parent=31 // pred_check_branch
          %242 = sbr.rel (%p240) target = $region40
        $region39: #{_lambda_.7} parent=31 // pred_region
          %s243 = smul.u32 8, %s23
          %p244 = scmp.lt.s32.totalorder %s22, 1
          %s245 = scalar_select %p244, %s22, 1
          %p246 = scmp.lt.s32.totalorder %s243, 15
          %s247 = scalar_select %p246, %s243, 15
          %s248 = smul.addr %s247, 2
          %s249 = smul.addr %s245, 32
          %s250 = sadd.s32 %s248, %s249
          %s251 = smul.addr %s250, 4
          %s252 = scalar_lea.vmem %s1, %s251
          %s253 = smul.u32 8, %s23
        $region40: #{_lambda_.7} parent=31 // pred_fallthru
          _
      $region32: #{_lambda_.7} parent=5 // pred_fallthru
        _
      %p254 = scmp.le.s32.totalorder 1, %s15
      %p255 = scmp.lt.s32.totalorder %s15, 5
      %p256 = pnand %p254, %p255
      %p257 = pneg %p256
      // Predicated region
      $region41: #{_lambda_.7} parent=5 // pred_check
        _
      $region42: #{_lambda_.7} parent=5 // pred_check_branch
        %259 = sbr.rel (%p256) target = $region44
      $region43: #{_lambda_.7} parent=5 // pred_region
        %s260 = ssub.s32 %s15, 1
        %s261 = smul.u32 8, %s25
        %p262 = scmp.lt.s32.totalorder %s24, 1
        %s263 = scalar_select %p262, %s24, 1
        %p264 = scmp.lt.s32.totalorder %s261, 15
        %s265 = scalar_select %p264, %s261, 15
        %s266 = smul.addr %s265, 2
        %s267 = smul.addr %s263, 32
        %s268 = sadd.s32 %s266, %s267
        %s269 = smul.addr %s268, 4
        %s270 = scalar_lea.vmem %s0, %s269
        %p271 = pneg %p55
        %p272 = pneg %p52
        %s273 = smul.u32 8, %s25
        %p274 = scmp.lt.s32.totalorder %s24, 1
        %s275 = scalar_select %p274, %s24, 1
        %p276 = scmp.lt.s32.totalorder %s273, 15
        %s277 = scalar_select %p276, %s273, 15
        %s278 = smul.addr %s277, 2
        %s279 = smul.addr %s275, 32
        %s280 = sadd.s32 %s278, %s279
        %s281 = smul.addr %s280, 4
        %s282 = scalar_lea.vmem %s1, %s281
        %p283 = pneg %p83
        %p284 = pneg %p80
        %p285 = pneg %p104
        %p286 = pneg %p101
        %p287 = pneg %p125
        %p288 = pneg %p122
        %p289 = pneg %p146
        %p290 = pneg %p143
        %p291 = pneg %p167
        %p292 = pneg %p164
        %p293 = pneg %p195
        %p294 = pneg %p192
        %s295 = sand.u32 %s182, 1
        %s296 = scalar_lea.sflag [#allocation3], %s295
        %s297 = sand.u32 %s182, 1
        %s298 = smul.addr %s297, 128
        %s299 = scalar_lea.vmem [#allocation2], %s298
        %s300 = smul.u32 8, %s25
        %p301 = scmp.lt.s32.totalorder %s24, 1
        %s302 = scalar_select %p301, %s24, 1
        %p303 = scmp.lt.s32.totalorder %s300, 15
        %s304 = scalar_select %p303, %s300, 15
        %s305 = smul.addr %s304, 2
        %s306 = smul.addr %s302, 32
        %s307 = sadd.s32 %s305, %s306
        %s308 = smul.addr %s307, 4
        %s309 = scalar_lea.vmem %s0, %s308
        %s310 = smul.u32 8, %s25
        %s311 = smul.u32 8, %s25
        %p312 = scmp.lt.s32.totalorder %s24, 1
        %s313 = scalar_select %p312, %s24, 1
        %p314 = scmp.lt.s32.totalorder %s311, 15
        %s315 = scalar_select %p314, %s311, 15
        %s316 = smul.addr %s315, 2
        %s317 = smul.addr %s313, 32
        %s318 = sadd.s32 %s316, %s317
        %s319 = smul.addr %s318, 4
        %s320 = scalar_lea.vmem %s1, %s319
        %s321 = smul.u32 8, %s25
        %s322 = smul.u32 8, %s25
        %v323 = vld [vmem:[%s309] sm:$0xf]
        %v324 = vld [vmem:[%s309 + $0x4] sm:$0xf]
        %v325 = vld [vmem:[%s309 + $0x8] sm:$0xf]
        %v326 = vld [vmem:[%s309 + $0xc] sm:$0xf]
        %v327 = vld [vmem:[%s309 + $0x10] sm:$0xf]
        %v328 = vld [vmem:[%s309 + $0x14] sm:$0xf]
        %v329 = vld [vmem:[%s309 + $0x18] sm:$0xf]
        %v330 = vld [vmem:[%s309 + $0x1c] sm:$0xf]
        %v331 = vld [vmem:[%s309 + $0x20] sm:$0xf]
        %v332 = vld [vmem:[%s309 + $0x24] sm:$0xf]
        %v333 = vld [vmem:[%s309 + $0x28] sm:$0xf]
        %v334 = vld [vmem:[%s309 + $0x2c] sm:$0xf]
        %v335 = vld [vmem:[%s309 + $0x30] sm:$0xf]
        %v336 = vld [vmem:[%s309 + $0x34] sm:$0xf]
        %v337 = vld [vmem:[%s309 + $0x38] sm:$0xf]
        %v338 = vld [vmem:[%s309 + $0x3c] sm:$0xf]
        %v339 = vunpack.c.l.bf16 %v323
        %v340 = vunpack.c.l.bf16 %v324
        %v341 = vunpack.c.l.bf16 %v325
        %v342 = vunpack.c.l.bf16 %v326
        %v343 = vunpack.c.l.bf16 %v327
        %v344 = vunpack.c.l.bf16 %v328
        %v345 = vunpack.c.l.bf16 %v329
        %v346 = vunpack.c.l.bf16 %v330
        %v347 = vunpack.c.l.bf16 %v331
        %v348 = vunpack.c.l.bf16 %v332
        %v349 = vunpack.c.l.bf16 %v333
        %v350 = vunpack.c.l.bf16 %v334
        %v351 = vunpack.c.l.bf16 %v335
        %v352 = vunpack.c.l.bf16 %v336
        %v353 = vunpack.c.l.bf16 %v337
        %v354 = vunpack.c.l.bf16 %v338
        %v355 = vld [vmem:[%s2] sm:$0x1]
        %v357 = vlaneseq
        %v358 = vshrl.u32 %v357, 7
        %v359 = vsub.s32 0, %v358
        %v360 = vrot.slane %v355, %v359
        %v362 = vmul.f32 %v339, %v360
        %v363 = vmul.f32 %v340, %v360
        %v364 = vmul.f32 %v341, %v360
        %v365 = vmul.f32 %v342, %v360
        %v366 = vmul.f32 %v343, %v360
        %v367 = vmul.f32 %v344, %v360
        %v368 = vmul.f32 %v345, %v360
        %v369 = vmul.f32 %v346, %v360
        %v370 = vmul.f32 %v347, %v360
        %v371 = vmul.f32 %v348, %v360
        %v372 = vmul.f32 %v349, %v360
        %v373 = vmul.f32 %v350, %v360
        %v374 = vmul.f32 %v351, %v360
        %v375 = vmul.f32 %v352, %v360
        %v376 = vmul.f32 %v353, %v360
        %v377 = vmul.f32 %v354, %v360
        %v378 = vld [vmem:[%s3] sm:$0x1]
        %v380 = vlaneseq
        %v381 = vshrl.u32 %v380, 7
        %v382 = vsub.s32 0, %v381
        %v383 = vrot.slane %v378, %v382
        %v385 = vadd.f32 %v362, %v383
        %v386 = vadd.f32 %v363, %v383
        %v387 = vadd.f32 %v364, %v383
        %v388 = vadd.f32 %v365, %v383
        %v389 = vadd.f32 %v366, %v383
        %v390 = vadd.f32 %v367, %v383
        %v391 = vadd.f32 %v368, %v383
        %v392 = vadd.f32 %v369, %v383
        %v393 = vadd.f32 %v370, %v383
        %v394 = vadd.f32 %v371, %v383
        %v395 = vadd.f32 %v372, %v383
        %v396 = vadd.f32 %v373, %v383
        %v397 = vadd.f32 %v374, %v383
        %v398 = vadd.f32 %v375, %v383
        %v399 = vadd.f32 %v376, %v383
        %v400 = vadd.f32 %v377, %v383
        %v401 = vld [vmem:[%s320] sm:$0xf]
        %v402 = vld [vmem:[%s320 + $0x4] sm:$0xf]
        %v403 = vld [vmem:[%s320 + $0x8] sm:$0xf]
        %v404 = vld [vmem:[%s320 + $0xc] sm:$0xf]
        %v405 = vld [vmem:[%s320 + $0x10] sm:$0xf]
        %v406 = vld [vmem:[%s320 + $0x14] sm:$0xf]
        %v407 = vld [vmem:[%s320 + $0x18] sm:$0xf]
        %v408 = vld [vmem:[%s320 + $0x1c] sm:$0xf]
        %v409 = vld [vmem:[%s320 + $0x20] sm:$0xf]
        %v410 = vld [vmem:[%s320 + $0x24] sm:$0xf]
        %v411 = vld [vmem:[%s320 + $0x28] sm:$0xf]
        %v412 = vld [vmem:[%s320 + $0x2c] sm:$0xf]
        %v413 = vld [vmem:[%s320 + $0x30] sm:$0xf]
        %v414 = vld [vmem:[%s320 + $0x34] sm:$0xf]
        %v415 = vld [vmem:[%s320 + $0x38] sm:$0xf]
        %v416 = vld [vmem:[%s320 + $0x3c] sm:$0xf]
        %v417 = vunpack.c.l.bf16 %v401
        %v418 = vunpack.c.l.bf16 %v402
        %v419 = vunpack.c.l.bf16 %v403
        %v420 = vunpack.c.l.bf16 %v404
        %v421 = vunpack.c.l.bf16 %v405
        %v422 = vunpack.c.l.bf16 %v406
        %v423 = vunpack.c.l.bf16 %v407
        %v424 = vunpack.c.l.bf16 %v408
        %v425 = vunpack.c.l.bf16 %v409
        %v426 = vunpack.c.l.bf16 %v410
        %v427 = vunpack.c.l.bf16 %v411
        %v428 = vunpack.c.l.bf16 %v412
        %v429 = vunpack.c.l.bf16 %v413
        %v430 = vunpack.c.l.bf16 %v414
        %v431 = vunpack.c.l.bf16 %v415
        %v432 = vunpack.c.l.bf16 %v416
        %v433 = vld [vmem:[%s4] sm:$0x1]
        %v435 = vlaneseq
        %v436 = vshrl.u32 %v435, 7
        %v437 = vsub.s32 0, %v436
        %v438 = vrot.slane %v433, %v437
        %v440 = vmul.f32 %v417, %v438
        %v441 = vmul.f32 %v418, %v438
        %v442 = vmul.f32 %v419, %v438
        %v443 = vmul.f32 %v420, %v438
        %v444 = vmul.f32 %v421, %v438
        %v445 = vmul.f32 %v422, %v438
        %v446 = vmul.f32 %v423, %v438
        %v447 = vmul.f32 %v424, %v438
        %v448 = vmul.f32 %v425, %v438
        %v449 = vmul.f32 %v426, %v438
        %v450 = vmul.f32 %v427, %v438
        %v451 = vmul.f32 %v428, %v438
        %v452 = vmul.f32 %v429, %v438
        %v453 = vmul.f32 %v430, %v438
        %v454 = vmul.f32 %v431, %v438
        %v455 = vmul.f32 %v432, %v438
        %v456 = vadd.f32 %v385, %v440
        %v457 = vadd.f32 %v386, %v441
        %v458 = vadd.f32 %v387, %v442
        %v459 = vadd.f32 %v388, %v443
        %v460 = vadd.f32 %v389, %v444
        %v461 = vadd.f32 %v390, %v445
        %v462 = vadd.f32 %v391, %v446
        %v463 = vadd.f32 %v392, %v447
        %v464 = vadd.f32 %v393, %v448
        %v465 = vadd.f32 %v394, %v449
        %v466 = vadd.f32 %v395, %v450
        %v467 = vadd.f32 %v396, %v451
        %v468 = vadd.f32 %v397, %v452
        %v469 = vadd.f32 %v398, %v453
        %v470 = vadd.f32 %v399, %v454
        %v471 = vadd.f32 %v400, %v455
        %v472 = vld [vmem:[%s5] sm:$0x1]
        %v474 = vlaneseq
        %v475 = vshrl.u32 %v474, 7
        %v476 = vsub.s32 0, %v475
        %v477 = vrot.slane %v472, %v476
        %v479 = vadd.f32 %v456, %v477
        %v480 = vadd.f32 %v457, %v477
        %v481 = vadd.f32 %v458, %v477
        %v482 = vadd.f32 %v459, %v477
        %v483 = vadd.f32 %v460, %v477
        %v484 = vadd.f32 %v461, %v477
        %v485 = vadd.f32 %v462, %v477
        %v486 = vadd.f32 %v463, %v477
        %v487 = vadd.f32 %v464, %v477
        %v488 = vadd.f32 %v465, %v477
        %v489 = vadd.f32 %v466, %v477
        %v490 = vadd.f32 %v467, %v477
        %v491 = vadd.f32 %v468, %v477
        %v492 = vadd.f32 %v469, %v477
        %v493 = vadd.f32 %v470, %v477
        %v494 = vadd.f32 %v471, %v477
        %v495 = vmax.f32 %v479, 0.0
        %v496 = vmax.f32 %v480, 0.0
        %v497 = vmax.f32 %v481, 0.0
        %v498 = vmax.f32 %v482, 0.0
        %v499 = vmax.f32 %v483, 0.0
        %v500 = vmax.f32 %v484, 0.0
        %v501 = vmax.f32 %v485, 0.0
        %v502 = vmax.f32 %v486, 0.0
        %v503 = vmax.f32 %v487, 0.0
        %v504 = vmax.f32 %v488, 0.0
        %v505 = vmax.f32 %v489, 0.0
        %v506 = vmax.f32 %v490, 0.0
        %v507 = vmax.f32 %v491, 0.0
        %v508 = vmax.f32 %v492, 0.0
        %v509 = vmax.f32 %v493, 0.0
        %v510 = vmax.f32 %v494, 0.0
        %vm511 = vcmask 261120
        %512 = vst.msk [vmem:[%s299] sm:$0xff] %vm511, %v495
        %513 = vst.msk [vmem:[%s299 + $0x8] sm:$0xff] %vm511, %v496
        %514 = vst.msk [vmem:[%s299 + $0x10] sm:$0xff] %vm511, %v497
        %515 = vst.msk [vmem:[%s299 + $0x18] sm:$0xff] %vm511, %v498
        %516 = vst.msk [vmem:[%s299 + $0x20] sm:$0xff] %vm511, %v499
        %517 = vst.msk [vmem:[%s299 + $0x28] sm:$0xff] %vm511, %v500
        %518 = vst.msk [vmem:[%s299 + $0x30] sm:$0xff] %vm511, %v501
        %519 = vst.msk [vmem:[%s299 + $0x38] sm:$0xff] %vm511, %v502
        %520 = vst.msk [vmem:[%s299 + $0x40] sm:$0xff] %vm511, %v503
        %521 = vst.msk [vmem:[%s299 + $0x48] sm:$0xff] %vm511, %v504
        %522 = vst.msk [vmem:[%s299 + $0x50] sm:$0xff] %vm511, %v505
        %523 = vst.msk [vmem:[%s299 + $0x58] sm:$0xff] %vm511, %v506
        %524 = vst.msk [vmem:[%s299 + $0x60] sm:$0xff] %vm511, %v507
        %525 = vst.msk [vmem:[%s299 + $0x68] sm:$0xff] %vm511, %v508
        %526 = vst.msk [vmem:[%s299 + $0x70] sm:$0xff] %vm511, %v509
        %527 = vst.msk [vmem:[%s299 + $0x78] sm:$0xff] %vm511, %v510
        %s528 = sand.u32 %s182, 1
        %s529 = scalar_lea.sflag [#allocation3], %s528
        %s530 = sand.u32 %s182, 1
        %s531 = smul.addr %s530, 128
        %s532 = scalar_lea.vmem [#allocation2], %s531
        // Predicated region
        $region45: #{_lambda_.7} parent=43 // pred_check
          %p533 = pneg %p192
        $region46: #{_lambda_.7} parent=43 // pred_check_branch
          %535 = sbr.rel (%p533) target = $region48
        $region47: #{_lambda_.7} parent=43 // pred_region
          %s536 = smul.u32 8, %s25
          %s538 = ssub.s32 2048, 2048
          %539 = vsyncadd %s529, %s538
          %s540 = smul.addr %s536, 2
          %s541 = smul.addr %s24, 32
          %s542 = sadd.s32 %s540, %s541
          %s543 = smul.addr %s542, 128
          %s544 = scalar_lea.hbm %s6, %s543
          %s545 = sshll.u32 %s532, 4
          %s546 = int_to_ptr.vmem [resolvable:$true] %s545
          %551 = dma.vmem_to_hbm [thread:$0]  %s546, 2048, %s544, %s529, 128, 128, 8
        $region48: #{_lambda_.7} parent=43 // pred_fallthru
          _
      $region44: #{_lambda_.7} parent=5 // pred_fallthru
        _
      %p552 = scmp.le.s32.totalorder 2, %s15
      // Predicated region
      $region49: #{_lambda_.7} parent=5 // pred_check
        %p553 = pneg %p552
      $region50: #{_lambda_.7} parent=5 // pred_check_branch
        %555 = sbr.rel (%p553) target = $region52
      $region51: #{_lambda_.7} parent=5 // pred_region
        %s556 = ssub.s32 %s15, 2
        // Predicated region
        $region53: #{_lambda_.7} parent=51 // pred_check
          %p557 = pneg %p198
        $region54: #{_lambda_.7} parent=51 // pred_check_branch
          %559 = sbr.rel (%p557) target = $region56
        $region55: #{_lambda_.7} parent=51 // pred_region
          %s560 = sand.u32 %s183, 1
          %s561 = scalar_lea.sflag [#allocation3], %s560
          %s562 = sand.u32 %s183, 1
          %s563 = smul.addr %s562, 128
          %s564 = scalar_lea.vmem [#allocation2], %s563
          %565 = dma.done %s561, 2048
        $region56: #{_lambda_.7} parent=51 // pred_fallthru
          _
      $region52: #{_lambda_.7} parent=5 // pred_fallthru
        _
    $region6: #{_lambda_.7} parent=1 // loop_footer
      %s19 = sadd.s32 1, %s15
    $region7: #{_lambda_.7} parent=1 // loop_footer_branch
      %14 = sbr.rel target = $region3
    $region8: #{_lambda_.7} parent=1 // loop_exit
      _
    %566 = vsyncpa [#allocation3], 1
    %s567 = scalar_lea.sflag [#allocation3], 1
    %568 = vsyncpa %s567, 1

// kernel: _lambda_.5
$region0: #{_lambda_.5}
  #allocation0 [shape = 'u32[]', space=smem, size = 0x4, offset = 0x4, fixed_abs, tag = 'smem constant byte address 0x4 - core index']
  #allocation1 [shape = 'u32[144,128]{1,0:T(1,128)}', space=vmem, size = 0x12000, scoped, tag = 'internal scratch']
  #allocation2 [shape = 'bf16[18,18,16]{2,1,0:T(8,128)(2,1)}', space=vmem, size = 0x1b000, scoped, tag = 'scratch operand']
  %s0 = inlined_call_operand.vmem [shape: bf16[2,16,16,16], index: 0, kind: input, shape index: {}]
  %s1 = inlined_call_operand.vmem [shape: f32[1,16], index: 1, kind: input, shape index: {}]
  %s2 = inlined_call_operand.vmem [shape: f32[1,16], index: 2, kind: input, shape index: {}]
  %s3 = inlined_call_operand.vmem [shape: bf16[9,16,16], index: 3, kind: input, shape index: {}]
  %s4 = inlined_call_operand.vmem [shape: bf16[2,16,16,16], index: 4, kind: output, shape index: {0}]
  %s5 = inlined_call_operand.vmem [shape: f32[2,2,16], index: 5, kind: output, shape index: {1}]
  %6 = xla_tuple %s4, %s5
  %s7 = sld [smem:[#allocation0]]
  $region57: #{_lambda_.5} parent=0
    _
  %s9 = ssub.s32 1, %s7
  %s10 = scalar_select 0, %s9, %s7
  loop: start=0, step=1, limit=4
  $region2: #{_lambda_.5} parent=0 // loop_pre_header
    _
  $region3: #{_lambda_.5} parent=0 // loop_header
    %s12 = sphi 0, %s16
    %p13 = scmp.ge.s32.totalorder %s12, 4
    %s22 = sphi 0, %s24
    %s25 = sphi 0, %s22
    %s26 = sphi 0, %s25
    %s42 = sphi 0, %s26
    %s46 = sphi 0, %s46
    %s48 = sphi 0, %s46
    %s49 = sphi 0, %s48
    %s63 = sphi 0, %s49
    %s67 = sphi 0, %s67
    %s69 = sphi 0, %s67
    %s70 = sphi 0, %s69
    %s84 = sphi 0, %s70
    %s88 = sphi 0, %s88
    %s90 = sphi 0, %s88
    %s91 = sphi 0, %s90
    %s105 = sphi 0, %s91
    %s111 = sphi 0, %s113
    %s114 = sphi 0, %s111
    %s115 = sphi 0, %s114
    %s131 = sphi 0, %s115
    %s137 = sphi 0, %s139
    %s140 = sphi 0, %s137
    %s141 = sphi 0, %s140
    %s157 = sphi 0, %s141
  $region4: #{_lambda_.5} parent=0 // loop_header_branch
    %15 = sbr.rel (%p13) target = $region8
  $region5: #{_lambda_.5} parent=0 // loop_body
    %s17 = ssub.s32 %s12, 1
    %s18 = ssub.s32 %s12, 2
    %s19 = sadd.s32 %s12, 1
    %s20 = ssub.s32 %s12, %s19
    %p21 = scmp.eq.s32.totalorder %s20, 0
    %s23 = sadd.s32 %s22, 1
    %s24 = scalar_select %p21, %s22, %s23
    %p27 = pneg %p21
    %p28 = scmp.eq.s32.totalorder %s12, 1
    %p29 = por %p27, %p28
    %p30 = scmp.ne.s32.totalorder %s22, %s25
    %p31 = scmp.eq.s32.totalorder %s12, 0
    %p32 = por %p30, %p31
    %p33 = scmp.ne.s32.totalorder %s22, %s25
    %p34 = scmp.eq.s32.totalorder %s17, 1
    %p35 = por %p33, %p34
    %p36 = scmp.ne.s32.totalorder %s25, %s26
    %p37 = scmp.eq.s32.totalorder %s17, 0
    %p38 = por %p36, %p37
    %p39 = scmp.ne.s32.totalorder %s25, %s26
    %p40 = scmp.eq.s32.totalorder %s18, 1
    %p41 = por %p39, %p40
    %p43 = scmp.ne.s32.totalorder %s26, %s42
    %p44 = scmp.eq.s32.totalorder %s18, 0
    %p45 = por %p43, %p44
    %s47 = sadd.s32 %s46, 1
    %p50 = scmp.eq.s32.totalorder %s12, 1
    %p51 = scmp.ne.s32.totalorder %s46, %s48
    %p52 = scmp.eq.s32.totalorder %s12, 0
    %p53 = por %p51, %p52
    %p54 = scmp.ne.s32.totalorder %s46, %s48
    %p55 = scmp.eq.s32.totalorder %s17, 1
    %p56 = por %p54, %p55
    %p57 = scmp.ne.s32.totalorder %s48, %s49
    %p58 = scmp.eq.s32.totalorder %s17, 0
    %p59 = por %p57, %p58
    %p60 = scmp.ne.s32.totalorder %s48, %s49
    %p61 = scmp.eq.s32.totalorder %s18, 1
    %p62 = por %p60, %p61
    %p64 = scmp.ne.s32.totalorder %s49, %s63
    %p65 = scmp.eq.s32.totalorder %s18, 0
    %p66 = por %p64, %p65
    %s68 = sadd.s32 %s67, 1
    %p71 = scmp.eq.s32.totalorder %s12, 1
    %p72 = scmp.ne.s32.totalorder %s67, %s69
    %p73 = scmp.eq.s32.totalorder %s12, 0
    %p74 = por %p72, %p73
    %p75 = scmp.ne.s32.totalorder %s67, %s69
    %p76 = scmp.eq.s32.totalorder %s17, 1
    %p77 = por %p75, %p76
    %p78 = scmp.ne.s32.totalorder %s69, %s70
    %p79 = scmp.eq.s32.totalorder %s17, 0
    %p80 = por %p78, %p79
    %p81 = scmp.ne.s32.totalorder %s69, %s70
    %p82 = scmp.eq.s32.totalorder %s18, 1
    %p83 = por %p81, %p82
    %p85 = scmp.ne.s32.totalorder %s70, %s84
    %p86 = scmp.eq.s32.totalorder %s18, 0
    %p87 = por %p85, %p86
    %s89 = sadd.s32 %s88, 1
    %p92 = scmp.eq.s32.totalorder %s12, 1
    %p93 = scmp.ne.s32.totalorder %s88, %s90
    %p94 = scmp.eq.s32.totalorder %s12, 0
    %p95 = por %p93, %p94
    %p96 = scmp.ne.s32.totalorder %s88, %s90
    %p97 = scmp.eq.s32.totalorder %s17, 1
    %p98 = por %p96, %p97
    %p99 = scmp.ne.s32.totalorder %s90, %s91
    %p100 = scmp.eq.s32.totalorder %s17, 0
    %p101 = por %p99, %p100
    %p102 = scmp.ne.s32.totalorder %s90, %s91
    %p103 = scmp.eq.s32.totalorder %s18, 1
    %p104 = por %p102, %p103
    %p106 = scmp.ne.s32.totalorder %s91, %s105
    %p107 = scmp.eq.s32.totalorder %s18, 0
    %p108 = por %p106, %p107
    %s109 = ssub.s32 %s12, %s19
    %p110 = scmp.eq.s32.totalorder %s109, 0
    %s112 = sadd.s32 %s111, 1
    %s113 = scalar_select %p110, %s111, %s112
    %p116 = pneg %p110
    %p117 = scmp.eq.s32.totalorder %s12, 1
    %p118 = por %p116, %p117
    %p119 = scmp.ne.s32.totalorder %s111, %s114
    %p120 = scmp.eq.s32.totalorder %s12, 0
    %p121 = por %p119, %p120
    %p122 = scmp.ne.s32.totalorder %s111, %s114
    %p123 = scmp.eq.s32.totalorder %s17, 1
    %p124 = por %p122, %p123
    %p125 = scmp.ne.s32.totalorder %s114, %s115
    %p126 = scmp.eq.s32.totalorder %s17, 0
    %p127 = por %p125, %p126
    %p128 = scmp.ne.s32.totalorder %s114, %s115
    %p129 = scmp.eq.s32.totalorder %s18, 1
    %p130 = por %p128, %p129
    %p132 = scmp.ne.s32.totalorder %s115, %s131
    %p133 = scmp.eq.s32.totalorder %s18, 0
    %p134 = por %p132, %p133
    %s135 = ssub.s32 %s12, %s19
    %p136 = scmp.eq.s32.totalorder %s135, 0
    %s138 = sadd.s32 %s137, 1
    %s139 = scalar_select %p136, %s137, %s138
    %p142 = pneg %p136
    %p143 = scmp.eq.s32.totalorder %s12, 1
    %p144 = por %p142, %p143
    %p145 = scmp.ne.s32.totalorder %s137, %s140
    %p146 = scmp.eq.s32.totalorder %s12, 0
    %p147 = por %p145, %p146
    %p148 = scmp.ne.s32.totalorder %s137, %s140
    %p149 = scmp.eq.s32.totalorder %s17, 1
    %p150 = por %p148, %p149
    %p151 = scmp.ne.s32.totalorder %s140, %s141
    %p152 = scmp.eq.s32.totalorder %s17, 0
    %p153 = por %p151, %p152
    %p154 = scmp.ne.s32.totalorder %s140, %s141
    %p155 = scmp.eq.s32.totalorder %s18, 1
    %p156 = por %p154, %p155
    %p158 = scmp.ne.s32.totalorder %s141, %s157
    %p159 = scmp.eq.s32.totalorder %s18, 0
    %p160 = por %p158, %p159
    %p161 = scmp.le.s32.totalorder 1, %s12
    %p162 = scmp.lt.s32.totalorder %s12, 3
    %p163 = pnand %p161, %p162
    %p164 = pneg %p163
    // Predicated region
    $region9: #{_lambda_.5} parent=5 // pred_check
      _
    $region10: #{_lambda_.5} parent=5 // pred_check_branch
      %166 = sbr.rel (%p163) target = $region12
    $region11: #{_lambda_.5} parent=5 // pred_region
      %s167 = ssub.s32 %s12, 1
      // Predicated region
      $region13: #{_lambda_.5} parent=11 // pred_check
        %p168 = pneg %p59
      $region14: #{_lambda_.5} parent=11 // pred_check_branch
        %170 = sbr.rel (%p168) target = $region16
      $region15: #{_lambda_.5} parent=11 // pred_region
        _
      $region16: #{_lambda_.5} parent=11 // pred_fallthru
        _
      // Predicated region
      $region17: #{_lambda_.5} parent=11 // pred_check
        %p171 = pneg %p80
      $region18: #{_lambda_.5} parent=11 // pred_check_branch
        %173 = sbr.rel (%p171) target = $region20
      $region19: #{_lambda_.5} parent=11 // pred_region
        _
      $region20: #{_lambda_.5} parent=11 // pred_fallthru
        _
      // Predicated region
      $region21: #{_lambda_.5} parent=11 // pred_check
        %p174 = pneg %p101
      $region22: #{_lambda_.5} parent=11 // pred_check_branch
        %176 = sbr.rel (%p174) target = $region24
      $region23: #{_lambda_.5} parent=11 // pred_region
        _
      $region24: #{_lambda_.5} parent=11 // pred_fallthru
        _
    $region12: #{_lambda_.5} parent=5 // pred_fallthru
      _
    %p177 = scmp.lt.s32.totalorder %s12, 2
    // Predicated region
    $region25: #{_lambda_.5} parent=5 // pred_check
      %p178 = pneg %p177
    $region26: #{_lambda_.5} parent=5 // pred_check_branch
      %180 = sbr.rel (%p178) target = $region28
    $region27: #{_lambda_.5} parent=5 // pred_region
      // Predicated region
      $region29: #{_lambda_.5} parent=27 // pred_check
        %p181 = pneg %p32
      $region30: #{_lambda_.5} parent=27 // pred_check_branch
        %183 = sbr.rel (%p181) target = $region32
      $region31: #{_lambda_.5} parent=27 // pred_region
        %p184 = scmp.lt.s32.totalorder %s12, 1
        %s185 = scalar_select %p184, %s12, 1
        %s186 = smul.addr %s185, 32
        %s187 = smul.addr %s186, 4
        %s188 = scalar_lea.vmem %s0, %s187
      $region32: #{_lambda_.5} parent=27 // pred_fallthru
        _
    $region28: #{_lambda_.5} parent=5 // pred_fallthru
      _
    %p189 = scmp.le.s32.totalorder 1, %s12
    %p190 = scmp.lt.s32.totalorder %s12, 3
    %p191 = pnand %p189, %p190
    %p192 = pneg %p191
    // Predicated region
    $region33: #{_lambda_.5} parent=5 // pred_check
      _
    $region34: #{_lambda_.5} parent=5 // pred_check_branch
      %194 = sbr.rel (%p191) target = $region36
    $region35: #{_lambda_.5} parent=5 // pred_region
      %s195 = ssub.s32 %s12, 1
      %p196 = scmp.lt.s32.totalorder %s17, 1
      %s197 = scalar_select %p196, %s17, 1
      %s198 = smul.addr %s197, 32
      %s199 = smul.addr %s198, 4
      %s200 = scalar_lea.vmem %s0, %s199
      %p201 = pneg %p38
      %p202 = pneg %p35
      %p203 = pneg %p59
      %p204 = pneg %p56
      %p205 = pneg %p80
      %p206 = pneg %p77
      %p207 = pneg %p101
      %p208 = pneg %p98
      %p209 = pneg %p127
      %p210 = pneg %p124
      %p211 = scmp.lt.s32.totalorder %s17, 1
      %s212 = scalar_select %p211, %s17, 1
      %s213 = smul.addr %s212, 32
      %s214 = smul.addr %s213, 4
      %s215 = scalar_lea.vmem %s4, %s214
      %p216 = pneg %p153
      %p217 = pneg %p150
      %p218 = scmp.lt.s32.totalorder %s17, 1
      %s219 = scalar_select %p218, %s17, 1
      %s220 = smul.addr %s219, 2
      %s221 = scalar_lea.vmem %s5, %s220
      %p222 = scmp.lt.s32.totalorder %s17, 1
      %s223 = scalar_select %p222, %s17, 1
      %s224 = smul.addr %s223, 32
      %s225 = smul.addr %s224, 4
      %s226 = scalar_lea.vmem %s0, %s225
      %p227 = scmp.lt.s32.totalorder %s17, 1
      %s228 = scalar_select %p227, %s17, 1
      %s229 = smul.addr %s228, 32
      %s230 = smul.addr %s229, 4
      %s231 = scalar_lea.vmem %s4, %s230
      %p232 = scmp.lt.s32.totalorder %s17, 1
      %s233 = scalar_select %p232, %s17, 1
      %s234 = smul.addr %s233, 2
      %s235 = scalar_lea.vmem %s5, %s234
      %v237 = vld [vmem:[%s226] sm:$0xf]
      %v238 = vld [vmem:[%s226 + $0x4] sm:$0xf]
      %v239 = vld [vmem:[%s226 + $0x8] sm:$0xf]
      %v240 = vld [vmem:[%s226 + $0xc] sm:$0xf]
      %v241 = vld [vmem:[%s226 + $0x10] sm:$0xf]
      %v242 = vld [vmem:[%s226 + $0x14] sm:$0xf]
      %v243 = vld [vmem:[%s226 + $0x18] sm:$0xf]
      %v244 = vld [vmem:[%s226 + $0x1c] sm:$0xf]
      %v245 = vld [vmem:[%s226 + $0x20] sm:$0xf]
      %v246 = vld [vmem:[%s226 + $0x24] sm:$0xf]
      %v247 = vld [vmem:[%s226 + $0x28] sm:$0xf]
      %v248 = vld [vmem:[%s226 + $0x2c] sm:$0xf]
      %v249 = vld [vmem:[%s226 + $0x30] sm:$0xf]
      %v250 = vld [vmem:[%s226 + $0x34] sm:$0xf]
      %v251 = vld [vmem:[%s226 + $0x38] sm:$0xf]
      %v252 = vld [vmem:[%s226 + $0x3c] sm:$0xf]
      %v253 = vld [vmem:[%s226 + $0x40] sm:$0xf]
      %v254 = vld [vmem:[%s226 + $0x44] sm:$0xf]
      %v255 = vld [vmem:[%s226 + $0x48] sm:$0xf]
      %v256 = vld [vmem:[%s226 + $0x4c] sm:$0xf]
      %v257 = vld [vmem:[%s226 + $0x50] sm:$0xf]
      %v258 = vld [vmem:[%s226 + $0x54] sm:$0xf]
      %v259 = vld [vmem:[%s226 + $0x58] sm:$0xf]
      %v260 = vld [vmem:[%s226 + $0x5c] sm:$0xf]
      %v261 = vld [vmem:[%s226 + $0x60] sm:$0xf]
      %v262 = vld [vmem:[%s226 + $0x64] sm:$0xf]
      %v263 = vld [vmem:[%s226 + $0x68] sm:$0xf]
      %v264 = vld [vmem:[%s226 + $0x6c] sm:$0xf]
      %v265 = vld [vmem:[%s226 + $0x70] sm:$0xf]
      %v266 = vld [vmem:[%s226 + $0x74] sm:$0xf]
      %v267 = vld [vmem:[%s226 + $0x78] sm:$0xf]
      %v268 = vld [vmem:[%s226 + $0x7c] sm:$0xf]
      %v269 = vunpack.c.l.bf16 %v237
      %v270 = vunpack.c.l.bf16 %v238
      %v271 = vunpack.c.l.bf16 %v239
      %v272 = vunpack.c.l.bf16 %v240
      %v273 = vunpack.c.l.bf16 %v241
      %v274 = vunpack.c.l.bf16 %v242
      %v275 = vunpack.c.l.bf16 %v243
      %v276 = vunpack.c.l.bf16 %v244
      %v277 = vunpack.c.l.bf16 %v245
      %v278 = vunpack.c.l.bf16 %v246
      %v279 = vunpack.c.l.bf16 %v247
      %v280 = vunpack.c.l.bf16 %v248
      %v281 = vunpack.c.l.bf16 %v249
      %v282 = vunpack.c.l.bf16 %v250
      %v283 = vunpack.c.l.bf16 %v251
      %v284 = vunpack.c.l.bf16 %v252
      %v285 = vunpack.c.l.bf16 %v253
      %v286 = vunpack.c.l.bf16 %v254
      %v287 = vunpack.c.l.bf16 %v255
      %v288 = vunpack.c.l.bf16 %v256
      %v289 = vunpack.c.l.bf16 %v257
      %v290 = vunpack.c.l.bf16 %v258
      %v291 = vunpack.c.l.bf16 %v259
      %v292 = vunpack.c.l.bf16 %v260
      %v293 = vunpack.c.l.bf16 %v261
      %v294 = vunpack.c.l.bf16 %v262
      %v295 = vunpack.c.l.bf16 %v263
      %v296 = vunpack.c.l.bf16 %v264
      %v297 = vunpack.c.l.bf16 %v265
      %v298 = vunpack.c.l.bf16 %v266
      %v299 = vunpack.c.l.bf16 %v267
      %v300 = vunpack.c.l.bf16 %v268
      %v301 = vld [vmem:[%s1] sm:$0x1]
      %v303 = vlaneseq
      %v304 = vshrl.u32 %v303, 7
      %v305 = vsub.s32 0, %v304
      %v306 = vrot.slane %v301, %v305
      %v308 = vmul.f32 %v269, %v306
      %v309 = vmul.f32 %v270, %v306
      %v310 = vmul.f32 %v271, %v306
      %v311 = vmul.f32 %v272, %v306
      %v312 = vmul.f32 %v273, %v306
      %v313 = vmul.f32 %v274, %v306
      %v314 = vmul.f32 %v275, %v306
      %v315 = vmul.f32 %v276, %v306
      %v316 = vmul.f32 %v277, %v306
      %v317 = vmul.f32 %v278, %v306
      %v318 = vmul.f32 %v279, %v306
      %v319 = vmul.f32 %v280, %v306
      %v320 = vmul.f32 %v281, %v306
      %v321 = vmul.f32 %v282, %v306
      %v322 = vmul.f32 %v283, %v306
      %v323 = vmul.f32 %v284, %v306
      %v324 = vmul.f32 %v285, %v306
      %v325 = vmul.f32 %v286, %v306
      %v326 = vmul.f32 %v287, %v306
      %v327 = vmul.f32 %v288, %v306
      %v328 = vmul.f32 %v289, %v306
      %v329 = vmul.f32 %v290, %v306
      %v330 = vmul.f32 %v291, %v306
      %v331 = vmul.f32 %v292, %v306
      %v332 = vmul.f32 %v293, %v306
      %v333 = vmul.f32 %v294, %v306
      %v334 = vmul.f32 %v295, %v306
      %v335 = vmul.f32 %v296, %v306
      %v336 = vmul.f32 %v297, %v306
      %v337 = vmul.f32 %v298, %v306
      %v338 = vmul.f32 %v299, %v306
      %v339 = vmul.f32 %v300, %v306
      %v340 = vld [vmem:[%s2] sm:$0x1]
      %v342 = vlaneseq
      %v343 = vshrl.u32 %v342, 7
      %v344 = vsub.s32 0, %v343
      %v345 = vrot.slane %v340, %v344
      %v347 = vadd.f32 %v308, %v345
      %v348 = vadd.f32 %v309, %v345
      %v349 = vadd.f32 %v310, %v345
      %v350 = vadd.f32 %v311, %v345
      %v351 = vadd.f32 %v312, %v345
      %v352 = vadd.f32 %v313, %v345
      %v353 = vadd.f32 %v314, %v345
      %v354 = vadd.f32 %v315, %v345
      %v355 = vadd.f32 %v316, %v345
      %v356 = vadd.f32 %v317, %v345
      %v357 = vadd.f32 %v318, %v345
      %v358 = vadd.f32 %v319, %v345
      %v359 = vadd.f32 %v320, %v345
      %v360 = vadd.f32 %v321, %v345
      %v361 = vadd.f32 %v322, %v345
      %v362 = vadd.f32 %v323, %v345
      %v363 = vadd.f32 %v324, %v345
      %v364 = vadd.f32 %v325, %v345
      %v365 = vadd.f32 %v326, %v345
      %v366 = vadd.f32 %v327, %v345
      %v367 = vadd.f32 %v328, %v345
      %v368 = vadd.f32 %v329, %v345
      %v369 = vadd.f32 %v330, %v345
      %v370 = vadd.f32 %v331, %v345
      %v371 = vadd.f32 %v332, %v345
      %v372 = vadd.f32 %v333, %v345
      %v373 = vadd.f32 %v334, %v345
      %v374 = vadd.f32 %v335, %v345
      %v375 = vadd.f32 %v336, %v345
      %v376 = vadd.f32 %v337, %v345
      %v377 = vadd.f32 %v338, %v345
      %v378 = vadd.f32 %v339, %v345
      %v379 = vmax.f32 %v347, 0.0
      %v380 = vmax.f32 %v348, 0.0
      %v381 = vmax.f32 %v349, 0.0
      %v382 = vmax.f32 %v350, 0.0
      %v383 = vmax.f32 %v351, 0.0
      %v384 = vmax.f32 %v352, 0.0
      %v385 = vmax.f32 %v353, 0.0
      %v386 = vmax.f32 %v354, 0.0
      %v387 = vmax.f32 %v355, 0.0
      %v388 = vmax.f32 %v356, 0.0
      %v389 = vmax.f32 %v357, 0.0
      %v390 = vmax.f32 %v358, 0.0
      %v391 = vmax.f32 %v359, 0.0
      %v392 = vmax.f32 %v360, 0.0
      %v393 = vmax.f32 %v361, 0.0
      %v394 = vmax.f32 %v362, 0.0
      %v395 = vmax.f32 %v363, 0.0
      %v396 = vmax.f32 %v364, 0.0
      %v397 = vmax.f32 %v365, 0.0
      %v398 = vmax.f32 %v366, 0.0
      %v399 = vmax.f32 %v367, 0.0
      %v400 = vmax.f32 %v368, 0.0
      %v401 = vmax.f32 %v369, 0.0
      %v402 = vmax.f32 %v370, 0.0
      %v403 = vmax.f32 %v371, 0.0
      %v404 = vmax.f32 %v372, 0.0
      %v405 = vmax.f32 %v373, 0.0
      %v406 = vmax.f32 %v374, 0.0
      %v407 = vmax.f32 %v375, 0.0
      %v408 = vmax.f32 %v376, 0.0
      %v409 = vmax.f32 %v377, 0.0
      %v410 = vmax.f32 %v378, 0.0
      %vm411 = vcmask 125952
      %412 = vst.msk [vmem:[#allocation2] sm:$0xf] %vm411, 0
      %413 = vst.msk [vmem:[#allocation2 + $0x4] sm:$0xf] %vm411, 0
      %vm414 = vcmask 122880
      %415 = vst.msk [vmem:[#allocation2 + $0x8] sm:$0x1] %vm414, 0
      %s416 = scalar_lea.vmem [#allocation2], 204
      %417 = vst.msk [vmem:[%s416] sm:$0xf] %vm411, 0
      %418 = vst.msk [vmem:[%s416 + $0x4] sm:$0xf] %vm411, 0
      %419 = vst.msk [vmem:[%s416 + $0x8] sm:$0x1] %vm414, 0
      %vm420 = vcmask 122880
      %vm421 = vsmask.f32 256
      %vm422 = vmand %vm420, %vm421
      %v423 = vld [vmem:[#allocation2] sm:$0x1]
      %v424 = vsel %vm422, 0, %v423
      %425 = vst [vmem:[#allocation2] sm:$0x1] %v424
      %v426 = vld [vmem:[#allocation2 + $0xc] sm:$0x1]
      %v427 = vsel %vm422, 0, %v426
      %428 = vst [vmem:[#allocation2 + $0xc] sm:$0x1] %v427
      %v429 = vld [vmem:[#allocation2 + $0x18] sm:$0x1]
      %v430 = vsel %vm422, 0, %v429
      %431 = vst [vmem:[#allocation2 + $0x18] sm:$0x1] %v430
      %v432 = vld [vmem:[#allocation2 + $0x24] sm:$0x1]
      %v433 = vsel %vm422, 0, %v432
      %434 = vst [vmem:[#allocation2 + $0x24] sm:$0x1] %v433
      %v435 = vld [vmem:[#allocation2 + $0x30] sm:$0x1]
      %v436 = vsel %vm422, 0, %v435
      %437 = vst [vmem:[#allocation2 + $0x30] sm:$0x1] %v436
      %v438 = vld [vmem:[#allocation2 + $0x3c] sm:$0x1]
      %v439 = vsel %vm422, 0, %v438
      %440 = vst [vmem:[#allocation2 + $0x3c] sm:$0x1] %v439
      %v441 = vld [vmem:[#allocation2 + $0x48] sm:$0x1]
      %v442 = vsel %vm422, 0, %v441
      %443 = vst [vmem:[#allocation2 + $0x48] sm:$0x1] %v442
      %v444 = vld [vmem:[#allocation2 + $0x54] sm:$0x1]
      %v445 = vsel %vm422, 0, %v444
      %446 = vst [vmem:[#allocation2 + $0x54] sm:$0x1] %v445
      %v447 = vld [vmem:[#allocation2 + $0x60] sm:$0x1]
      %v448 = vsel %vm422, 0, %v447
      %449 = vst [vmem:[#allocation2 + $0x60] sm:$0x1] %v448
      %v450 = vld [vmem:[#allocation2 + $0x6c] sm:$0x1]
      %v451 = vsel %vm422, 0, %v450
      %452 = vst [vmem:[#allocation2 + $0x6c] sm:$0x1] %v451
      %v453 = vld [vmem:[#allocation2 + $0x78] sm:$0x1]
      %v454 = vsel %vm422, 0, %v453
      %455 = vst [vmem:[#allocation2 + $0x78] sm:$0x1] %v454
      %v456 = vld [vmem:[#allocation2 + $0x84] sm:$0x1]
      %v457 = vsel %vm422, 0, %v456
      %458 = vst [vmem:[#allocation2 + $0x84] sm:$0x1] %v457
      %v459 = vld [vmem:[#allocation2 + $0x90] sm:$0x1]
      %v460 = vsel %vm422, 0, %v459
      %461 = vst [vmem:[#allocation2 + $0x90] sm:$0x1] %v460
      %v462 = vld [vmem:[#allocation2 + $0x9c] sm:$0x1]
      %v463 = vsel %vm422, 0, %v462
      %464 = vst [vmem:[#allocation2 + $0x9c] sm:$0x1] %v463
      %v465 = vld [vmem:[#allocation2 + $0xa8] sm:$0x1]
      %v466 = vsel %vm422, 0, %v465
      %467 = vst [vmem:[#allocation2 + $0xa8] sm:$0x1] %v466
      %v468 = vld [vmem:[#allocation2 + $0xb4] sm:$0x1]
      %v469 = vsel %vm422, 0, %v468
      %470 = vst [vmem:[#allocation2 + $0xb4] sm:$0x1] %v469
      %v471 = vld [vmem:[#allocation2 + $0xc0] sm:$0x1]
      %v472 = vsel %vm422, 0, %v471
      %473 = vst [vmem:[#allocation2 + $0xc0] sm:$0x1] %v472
      %v474 = vld [vmem:[#allocation2 + $0xcc] sm:$0x1]
      %v475 = vsel %vm422, 0, %v474
      %476 = vst [vmem:[#allocation2 + $0xcc] sm:$0x1] %v475
      %vm477 = vsmask.f32 7938
      %vm478 = vmand %vm420, %vm477
      %v479 = vld [vmem:[#allocation2 + $0x8] sm:$0x1]
      %v480 = vsel %vm478, 0, %v479
      %481 = vst [vmem:[#allocation2 + $0x8] sm:$0x1] %v480
      %v482 = vld [vmem:[#allocation2 + $0x14] sm:$0x1]
      %v483 = vsel %vm478, 0, %v482
      %484 = vst [vmem:[#allocation2 + $0x14] sm:$0x1] %v483
      %v485 = vld [vmem:[#allocation2 + $0x20] sm:$0x1]
      %v486 = vsel %vm478, 0, %v485
      %487 = vst [vmem:[#allocation2 + $0x20] sm:$0x1] %v486
      %v488 = vld [vmem:[#allocation2 + $0x2c] sm:$0x1]
      %v489 = vsel %vm478, 0, %v488
      %490 = vst [vmem:[#allocation2 + $0x2c] sm:$0x1] %v489
      %v491 = vld [vmem:[#allocation2 + $0x38] sm:$0x1]
      %v492 = vsel %vm478, 0, %v491
      %493 = vst [vmem:[#allocation2 + $0x38] sm:$0x1] %v492
      %v494 = vld [vmem:[#allocation2 + $0x44] sm:$0x1]
      %v495 = vsel %vm478, 0, %v494
      %496 = vst [vmem:[#allocation2 + $0x44] sm:$0x1] %v495
      %v497 = vld [vmem:[#allocation2 + $0x50] sm:$0x1]
      %v498 = vsel %vm478, 0, %v497
      %499 = vst [vmem:[#allocation2 + $0x50] sm:$0x1] %v498
      %v500 = vld [vmem:[#allocation2 + $0x5c] sm:$0x1]
      %v501 = vsel %vm478, 0, %v500
      %502 = vst [vmem:[#allocation2 + $0x5c] sm:$0x1] %v501
      %v503 = vld [vmem:[#allocation2 + $0x68] sm:$0x1]
      %v504 = vsel %vm478, 0, %v503
      %505 = vst [vmem:[#allocation2 + $0x68] sm:$0x1] %v504
      %v506 = vld [vmem:[#allocation2 + $0x74] sm:$0x1]
      %v507 = vsel %vm478, 0, %v506
      %508 = vst [vmem:[#allocation2 + $0x74] sm:$0x1] %v507
      %v509 = vld [vmem:[#allocation2 + $0x80] sm:$0x1]
      %v510 = vsel %vm478, 0, %v509
      %511 = vst [vmem:[#allocation2 + $0x80] sm:$0x1] %v510
      %v512 = vld [vmem:[#allocation2 + $0x8c] sm:$0x1]
      %v513 = vsel %vm478, 0, %v512
      %514 = vst [vmem:[#allocation2 + $0x8c] sm:$0x1] %v513
      %v515 = vld [vmem:[#allocation2 + $0x98] sm:$0x1]
      %v516 = vsel %vm478, 0, %v515
      %517 = vst [vmem:[#allocation2 + $0x98] sm:$0x1] %v516
      %v518 = vld [vmem:[#allocation2 + $0xa4] sm:$0x1]
      %v519 = vsel %vm478, 0, %v518
      %520 = vst [vmem:[#allocation2 + $0xa4] sm:$0x1] %v519
      %v521 = vld [vmem:[#allocation2 + $0xb0] sm:$0x1]
      %v522 = vsel %vm478, 0, %v521
      %523 = vst [vmem:[#allocation2 + $0xb0] sm:$0x1] %v522
      %v524 = vld [vmem:[#allocation2 + $0xbc] sm:$0x1]
      %v525 = vsel %vm478, 0, %v524
      %526 = vst [vmem:[#allocation2 + $0xbc] sm:$0x1] %v525
      %v527 = vld [vmem:[#allocation2 + $0xc8] sm:$0x1]
      %v528 = vsel %vm478, 0, %v527
      %529 = vst [vmem:[#allocation2 + $0xc8] sm:$0x1] %v528
      %v530 = vld [vmem:[#allocation2 + $0xd4] sm:$0x1]
      %v531 = vsel %vm478, 0, %v530
      %532 = vst [vmem:[#allocation2 + $0xd4] sm:$0x1] %v531
      %v533 = vpack.c.bf16 %v380, %v379
      %v534 = vpack.c.bf16 %v382, %v381
      %v535 = vpack.c.bf16 %v384, %v383
      %v536 = vpack.c.bf16 %v386, %v385
      %v537 = vpack.c.bf16 %v388, %v387
      %v538 = vpack.c.bf16 %v390, %v389
      %v539 = vpack.c.bf16 %v392, %v391
      %v540 = vpack.c.bf16 %v394, %v393
      %v541 = vpack.c.bf16 %v396, %v395
      %v542 = vpack.c.bf16 %v398, %v397
      %v543 = vpack.c.bf16 %v400, %v399
      %v544 = vpack.c.bf16 %v402, %v401
      %v545 = vpack.c.bf16 %v404, %v403
      %v546 = vpack.c.bf16 %v406, %v405
      %v547 = vpack.c.bf16 %v408, %v407
      %v548 = vpack.c.bf16 %v410, %v409
      %v565 = vunpack.c.l.b16 %v533
      %v566 = vunpack.c.h.b16 %v533
      %v567 = vunpack.c.l.b16 %v534
      %v568 = vunpack.c.h.b16 %v534
      %v569 = vunpack.c.l.b16 %v535
      %v570 = vunpack.c.h.b16 %v535
      %v571 = vunpack.c.l.b16 %v536
      %v572 = vunpack.c.h.b16 %v536
      %v573 = vunpack.c.l.b16 %v537
      %v574 = vunpack.c.h.b16 %v537
      %v575 = vunpack.c.l.b16 %v538
      %v576 = vunpack.c.h.b16 %v538
      %v577 = vunpack.c.l.b16 %v539
      %v578 = vunpack.c.h.b16 %v539
      %v579 = vunpack.c.l.b16 %v540
      %v580 = vunpack.c.h.b16 %v540
      %v581 = vunpack.c.l.b16 %v541
      %v582 = vunpack.c.h.b16 %v541
      %v583 = vunpack.c.l.b16 %v542
      %v584 = vunpack.c.h.b16 %v542
      %v585 = vunpack.c.l.b16 %v543
      %v586 = vunpack.c.h.b16 %v543
      %v587 = vunpack.c.l.b16 %v544
      %v588 = vunpack.c.h.b16 %v544
      %v589 = vunpack.c.l.b16 %v545
      %v590 = vunpack.c.h.b16 %v545
      %v591 = vunpack.c.l.b16 %v546
      %v592 = vunpack.c.h.b16 %v546
      %v593 = vunpack.c.l.b16 %v547
      %v594 = vunpack.c.h.b16 %v547
      %v595 = vunpack.c.l.b16 %v548
      %v596 = vunpack.c.h.b16 %v548
      %v597 = vpack.c.b16 %v565, %v565
      %v598 = vpack.c.b16 %v566, %v566
      %v599 = vpack.c.b16 %v567, %v567
      %v600 = vpack.c.b16 %v568, %v568
      %v601 = vpack.c.b16 %v569, %v569
      %v602 = vpack.c.b16 %v570, %v570
      %v603 = vpack.c.b16 %v571, %v571
      %v604 = vpack.c.b16 %v572, %v572
      %v605 = vpack.c.b16 %v573, %v573
      %v606 = vpack.c.b16 %v574, %v574
      %v607 = vpack.c.b16 %v575, %v575
      %v608 = vpack.c.b16 %v576, %v576
      %v609 = vpack.c.b16 %v577, %v577
      %v610 = vpack.c.b16 %v578, %v578
      %v611 = vpack.c.b16 %v579, %v579
      %v612 = vpack.c.b16 %v580, %v580
      %v613 = vpack.c.b16 %v581, %v581
      %v614 = vpack.c.b16 %v582, %v582
      %v615 = vpack.c.b16 %v583, %v583
      %v616 = vpack.c.b16 %v584, %v584
      %v617 = vpack.c.b16 %v585, %v585
      %v618 = vpack.c.b16 %v586, %v586
      %v619 = vpack.c.b16 %v587, %v587
      %v620 = vpack.c.b16 %v588, %v588
      %v621 = vpack.c.b16 %v589, %v589
      %v622 = vpack.c.b16 %v590, %v590
      %v623 = vpack.c.b16 %v591, %v591
      %v624 = vpack.c.b16 %v592, %v592
      %v625 = vpack.c.b16 %v593, %v593
      %v626 = vpack.c.b16 %v594, %v594
      %v627 = vpack.c.b16 %v595, %v595
      %v628 = vpack.c.b16 %v596, %v596
      %vm629 = vsmask.f32 4368
      %vm630 = vmor %vm421, %vm629
      %v632 = vshrl.u32 %v597, 16
      %v634 = vrot.slane %v632, 7
      %v635 = vshll.u32 %v597, 16
      %v637 = vor.u32 %v634, %v635
      %v638 = vrot.slane %v634, 4
      %v640 = vshrl.u32 %v598, 16
      %v642 = vrot.slane %v640, 7
      %v643 = vshll.u32 %v598, 16
      %v645 = vor.u32 %v642, %v643
      %v646 = vsel %vm630, %v638, %v645
      %v647 = vrot.slane %v642, 4
      %v649 = vshrl.u32 %v599, 16
      %v651 = vrot.slane %v649, 7
      %v652 = vshll.u32 %v599, 16
      %v654 = vor.u32 %v651, %v652
      %v655 = vrot.slane %v651, 4
      %v657 = vshrl.u32 %v600, 16
      %v659 = vrot.slane %v657, 7
      %v660 = vshll.u32 %v600, 16
      %v662 = vor.u32 %v659, %v660
      %v663 = vsel %vm630, %v655, %v662
      %v664 = vrot.slane %v659, 4
      %v666 = vshrl.u32 %v601, 16
      %v668 = vrot.slane %v666, 7
      %v669 = vshll.u32 %v601, 16
      %v671 = vor.u32 %v668, %v669
      %v672 = vrot.slane %v668, 4
      %v674 = vshrl.u32 %v602, 16
      %v676 = vrot.slane %v674, 7
      %v677 = vshll.u32 %v602, 16
      %v679 = vor.u32 %v676, %v677
      %v680 = vsel %vm630, %v672, %v679
      %v681 = vrot.slane %v676, 4
      %v683 = vshrl.u32 %v603, 16
      %v685 = vrot.slane %v683, 7
      %v686 = vshll.u32 %v603, 16
      %v688 = vor.u32 %v685, %v686
      %v689 = vrot.slane %v685, 4
      %v691 = vshrl.u32 %v604, 16
      %v693 = vrot.slane %v691, 7
      %v694 = vshll.u32 %v604, 16
      %v696 = vor.u32 %v693, %v694
      %v697 = vsel %vm630, %v689, %v696
      %v698 = vrot.slane %v693, 4
      %v700 = vshrl.u32 %v605, 16
      %v702 = vrot.slane %v700, 7
      %v703 = vshll.u32 %v605, 16
      %v705 = vor.u32 %v702, %v703
      %v706 = vrot.slane %v702, 4
      %v708 = vshrl.u32 %v606, 16
      %v710 = vrot.slane %v708, 7
      %v711 = vshll.u32 %v606, 16
      %v713 = vor.u32 %v710, %v711
      %v714 = vsel %vm630, %v706, %v713
      %v715 = vrot.slane %v710, 4
      %v717 = vshrl.u32 %v607, 16
      %v719 = vrot.slane %v717, 7
      %v720 = vshll.u32 %v607, 16
      %v722 = vor.u32 %v719, %v720
      %v723 = vrot.slane %v719, 4
      %v725 = vshrl.u32 %v608, 16
      %v727 = vrot.slane %v725, 7
      %v728 = vshll.u32 %v608, 16
      %v730 = vor.u32 %v727, %v728
      %v731 = vsel %vm630, %v723, %v730
      %v732 = vrot.slane %v727, 4
      %v734 = vshrl.u32 %v609, 16
      %v736 = vrot.slane %v734, 7
      %v737 = vshll.u32 %v609, 16
      %v739 = vor.u32 %v736, %v737
      %v740 = vrot.slane %v736, 4
      %v742 = vshrl.u32 %v610, 16
      %v744 = vrot.slane %v742, 7
      %v745 = vshll.u32 %v610, 16
      %v747 = vor.u32 %v744, %v745
      %v748 = vsel %vm630, %v740, %v747
      %v749 = vrot.slane %v744, 4
      %v751 = vshrl.u32 %v611, 16
      %v753 = vrot.slane %v751, 7
      %v754 = vshll.u32 %v611, 16
      %v756 = vor.u32 %v753, %v754
      %v757 = vrot.slane %v753, 4
      %v759 = vshrl.u32 %v612, 16
      %v761 = vrot.slane %v759, 7
      %v762 = vshll.u32 %v612, 16
      %v764 = vor.u32 %v761, %v762
      %v765 = vsel %vm630, %v757, %v764
      %v766 = vrot.slane %v761, 4
      %v768 = vshrl.u32 %v613, 16
      %v770 = vrot.slane %v768, 7
      %v771 = vshll.u32 %v613, 16
      %v773 = vor.u32 %v770, %v771
      %v774 = vrot.slane %v770, 4
      %v776 = vshrl.u32 %v614, 16
      %v778 = vrot.slane %v776, 7
      %v779 = vshll.u32 %v614, 16
      %v781 = vor.u32 %v778, %v779
      %v782 = vsel %vm630, %v774, %v781
      %v783 = vrot.slane %v778, 4
      %v785 = vshrl.u32 %v615, 16
      %v787 = vrot.slane %v785, 7
      %v788 = vshll.u32 %v615, 16
      %v790 = vor.u32 %v787, %v788
      %v791 = vrot.slane %v787, 4
      %v793 = vshrl.u32 %v616, 16
      %v795 = vrot.slane %v793, 7
      %v796 = vshll.u32 %v616, 16
      %v798 = vor.u32 %v795, %v796
      %v799 = vsel %vm630, %v791, %v798
      %v800 = vrot.slane %v795, 4
      %v802 = vshrl.u32 %v617, 16
      %v804 = vrot.slane %v802, 7
      %v805 = vshll.u32 %v617, 16
      %v807 = vor.u32 %v804, %v805
      %v808 = vrot.slane %v804, 4
      %v810 = vshrl.u32 %v618, 16
      %v812 = vrot.slane %v810, 7
      %v813 = vshll.u32 %v618, 16
      %v815 = vor.u32 %v812, %v813
      %v816 = vsel %vm630, %v808, %v815
      %v817 = vrot.slane %v812, 4
      %v819 = vshrl.u32 %v619, 16
      %v821 = vrot.slane %v819, 7
      %v822 = vshll.u32 %v619, 16
      %v824 = vor.u32 %v821, %v822
      %v825 = vrot.slane %v821, 4
      %v827 = vshrl.u32 %v620, 16
      %v829 = vrot.slane %v827, 7
      %v830 = vshll.u32 %v620, 16
      %v832 = vor.u32 %v829, %v830
      %v833 = vsel %vm630, %v825, %v832
      %v834 = vrot.slane %v829, 4
      %v836 = vshrl.u32 %v621, 16
      %v838 = vrot.slane %v836, 7
      %v839 = vshll.u32 %v621, 16
      %v841 = vor.u32 %v838, %v839
      %v842 = vrot.slane %v838, 4
      %v844 = vshrl.u32 %v622, 16
      %v846 = vrot.slane %v844, 7
      %v847 = vshll.u32 %v622, 16
      %v849 = vor.u32 %v846, %v847
      %v850 = vsel %vm630, %v842, %v849
      %v851 = vrot.slane %v846, 4
      %v853 = vshrl.u32 %v623, 16
      %v855 = vrot.slane %v853, 7
      %v856 = vshll.u32 %v623, 16
      %v858 = vor.u32 %v855, %v856
      %v859 = vrot.slane %v855, 4
      %v861 = vshrl.u32 %v624, 16
      %v863 = vrot.slane %v861, 7
      %v864 = vshll.u32 %v624, 16
      %v866 = vor.u32 %v863, %v864
      %v867 = vsel %vm630, %v859, %v866
      %v868 = vrot.slane %v863, 4
      %v870 = vshrl.u32 %v625, 16
      %v872 = vrot.slane %v870, 7
      %v873 = vshll.u32 %v625, 16
      %v875 = vor.u32 %v872, %v873
      %v876 = vrot.slane %v872, 4
      %v878 = vshrl.u32 %v626, 16
      %v880 = vrot.slane %v878, 7
      %v881 = vshll.u32 %v626, 16
      %v883 = vor.u32 %v880, %v881
      %v884 = vsel %vm630, %v876, %v883
      %v885 = vrot.slane %v880, 4
      %v887 = vshrl.u32 %v627, 16
      %v889 = vrot.slane %v887, 7
      %v890 = vshll.u32 %v627, 16
      %v892 = vor.u32 %v889, %v890
      %v893 = vrot.slane %v889, 4
      %v895 = vshrl.u32 %v628, 16
      %v897 = vrot.slane %v895, 7
      %v898 = vshll.u32 %v628, 16
      %v900 = vor.u32 %v897, %v898
      %v901 = vsel %vm630, %v893, %v900
      %v902 = vrot.slane %v897, 4
      %s951 = scalar_lea.vmem [#allocation2], 12
      %vm952 = vcmask 125952
      %vm953 = vmand %vm952, %vm477
      %v954 = vld [vmem:[%s951] sm:$0xf]
      %v955 = vsel %vm953, %v637, %v954
      %956 = vst [vmem:[%s951] sm:$0xf] %v955
      %957 = vst.msk [vmem:[%s951 + $0x4] sm:$0xf] %vm411, %v646
      %v958 = vld [vmem:[%s951 + $0x8] sm:$0x1]
      %v959 = vsel %vm422, %v647, %v958
      %960 = vst [vmem:[%s951 + $0x8] sm:$0x1] %v959
      %v961 = vld [vmem:[%s951 + $0xc] sm:$0xf]
      %v962 = vsel %vm953, %v654, %v961
      %963 = vst [vmem:[%s951 + $0xc] sm:$0xf] %v962
      %964 = vst.msk [vmem:[%s951 + $0x10] sm:$0xf] %vm411, %v663
      %v965 = vld [vmem:[%s951 + $0x14] sm:$0x1]
      %v966 = vsel %vm422, %v664, %v965
      %967 = vst [vmem:[%s951 + $0x14] sm:$0x1] %v966
      %v968 = vld [vmem:[%s951 + $0x18] sm:$0xf]
      %v969 = vsel %vm953, %v671, %v968
      %970 = vst [vmem:[%s951 + $0x18] sm:$0xf] %v969
      %971 = vst.msk [vmem:[%s951 + $0x1c] sm:$0xf] %vm411, %v680
      %v972 = vld [vmem:[%s951 + $0x20] sm:$0x1]
      %v973 = vsel %vm422, %v681, %v972
      %974 = vst [vmem:[%s951 + $0x20] sm:$0x1] %v973
      %v975 = vld [vmem:[%s951 + $0x24] sm:$0xf]
      %v976 = vsel %vm953, %v688, %v975
      %977 = vst [vmem:[%s951 + $0x24] sm:$0xf] %v976
      %978 = vst.msk [vmem:[%s951 + $0x28] sm:$0xf] %vm411, %v697
      %v979 = vld [vmem:[%s951 + $0x2c] sm:$0x1]
      %v980 = vsel %vm422, %v698, %v979
      %981 = vst [vmem:[%s951 + $0x2c] sm:$0x1] %v980
      %v982 = vld [vmem:[%s951 + $0x30] sm:$0xf]
      %v983 = vsel %vm953, %v705, %v982
      %984 = vst [vmem:[%s951 + $0x30] sm:$0xf] %v983
      %985 = vst.msk [vmem:[%s951 + $0x34] sm:$0xf] %vm411, %v714
      %v986 = vld [vmem:[%s951 + $0x38] sm:$0x1]
      %v987 = vsel %vm422, %v715, %v986
      %988 = vst [vmem:[%s951 + $0x38] sm:$0x1] %v987
      %v989 = vld [vmem:[%s951 + $0x3c] sm:$0xf]
      %v990 = vsel %vm953, %v722, %v989
      %991 = vst [vmem:[%s951 + $0x3c] sm:$0xf] %v990
      %992 = vst.msk [vmem:[%s951 + $0x40] sm:$0xf] %vm411, %v731
      %v993 = vld [vmem:[%s951 + $0x44] sm:$0x1]
      %v994 = vsel %vm422, %v732, %v993
      %995 = vst [vmem:[%s951 + $0x44] sm:$0x1] %v994
      %v996 = vld [vmem:[%s951 + $0x48] sm:$0xf]
      %v997 = vsel %vm953, %v739, %v996
      %998 = vst [vmem:[%s951 + $0x48] sm:$0xf] %v997
      %999 = vst.msk [vmem:[%s951 + $0x4c] sm:$0xf] %vm411, %v748
      %v1000 = vld [vmem:[%s951 + $0x50] sm:$0x1]
      %v1001 = vsel %vm422, %v749, %v1000
      %1002 = vst [vmem:[%s951 + $0x50] sm:$0x1] %v1001
      %v1003 = vld [vmem:[%s951 + $0x54] sm:$0xf]
      %v1004 = vsel %vm953, %v756, %v1003
      %1005 = vst [vmem:[%s951 + $0x54] sm:$0xf] %v1004
      %1006 = vst.msk [vmem:[%s951 + $0x58] sm:$0xf] %vm411, %v765
      %v1007 = vld [vmem:[%s951 + $0x5c] sm:$0x1]
      %v1008 = vsel %vm422, %v766, %v1007
      %1009 = vst [vmem:[%s951 + $0x5c] sm:$0x1] %v1008
      %v1010 = vld [vmem:[%s951 + $0x60] sm:$0xf]
      %v1011 = vsel %vm953, %v773, %v1010
      %1012 = vst [vmem:[%s951 + $0x60] sm:$0xf] %v1011
      %1013 = vst.msk [vmem:[%s951 + $0x64] sm:$0xf] %vm411, %v782
      %v1014 = vld [vmem:[%s951 + $0x68] sm:$0x1]
      %v1015 = vsel %vm422, %v783, %v1014
      %1016 = vst [vmem:[%s951 + $0x68] sm:$0x1] %v1015
      %v1017 = vld [vmem:[%s951 + $0x6c] sm:$0xf]
      %v1018 = vsel %vm953, %v790, %v1017
      %1019 = vst [vmem:[%s951 + $0x6c] sm:$0xf] %v1018
      %1020 = vst.msk [vmem:[%s951 + $0x70] sm:$0xf] %vm411, %v799
      %v1021 = vld [vmem:[%s951 + $0x74] sm:$0x1]
      %v1022 = vsel %vm422, %v800, %v1021
      %1023 = vst [vmem:[%s951 + $0x74] sm:$0x1] %v1022
      %v1024 = vld [vmem:[%s951 + $0x78] sm:$0xf]
      %v1025 = vsel %vm953, %v807, %v1024
      %1026 = vst [vmem:[%s951 + $0x78] sm:$0xf] %v1025
      %1027 = vst.msk [vmem:[%s951 + $0x7c] sm:$0xf] %vm411, %v816
      %v1028 = vld [vmem:[%s951 + $0x80] sm:$0x1]
      %v1029 = vsel %vm422, %v817, %v1028
      %1030 = vst [vmem:[%s951 + $0x80] sm:$0x1] %v1029
      %v1031 = vld [vmem:[%s951 + $0x84] sm:$0xf]
      %v1032 = vsel %vm953, %v824, %v1031
      %1033 = vst [vmem:[%s951 + $0x84] sm:$0xf] %v1032
      %1034 = vst.msk [vmem:[%s951 + $0x88] sm:$0xf] %vm411, %v833
      %v1035 = vld [vmem:[%s951 + $0x8c] sm:$0x1]
      %v1036 = vsel %vm422, %v834, %v1035
      %1037 = vst [vmem:[%s951 + $0x8c] sm:$0x1] %v1036
      %v1038 = vld [vmem:[%s951 + $0x90] sm:$0xf]
      %v1039 = vsel %vm953, %v841, %v1038
      %1040 = vst [vmem:[%s951 + $0x90] sm:$0xf] %v1039
      %1041 = vst.msk [vmem:[%s951 + $0x94] sm:$0xf] %vm411, %v850
      %v1042 = vld [vmem:[%s951 + $0x98] sm:$0x1]
      %v1043 = vsel %vm422, %v851, %v1042
      %1044 = vst [vmem:[%s951 + $0x98] sm:$0x1] %v1043
      %v1045 = vld [vmem:[%s951 + $0x9c] sm:$0xf]
      %v1046 = vsel %vm953, %v858, %v1045
      %1047 = vst [vmem:[%s951 + $0x9c] sm:$0xf] %v1046
      %1048 = vst.msk [vmem:[%s951 + $0xa0] sm:$0xf] %vm411, %v867
      %v1049 = vld [vmem:[%s951 + $0xa4] sm:$0x1]
      %v1050 = vsel %vm422, %v868, %v1049
      %1051 = vst [vmem:[%s951 + $0xa4] sm:$0x1] %v1050
      %v1052 = vld [vmem:[%s951 + $0xa8] sm:$0xf]
      %v1053 = vsel %vm953, %v875, %v1052
      %1054 = vst [vmem:[%s951 + $0xa8] sm:$0xf] %v1053
      %1055 = vst.msk [vmem:[%s951 + $0xac] sm:$0xf] %vm411, %v884
      %v1056 = vld [vmem:[%s951 + $0xb0] sm:$0x1]
      %v1057 = vsel %vm422, %v885, %v1056
      %1058 = vst [vmem:[%s951 + $0xb0] sm:$0x1] %v1057
      %v1059 = vld [vmem:[%s951 + $0xb4] sm:$0xf]
      %v1060 = vsel %vm953, %v892, %v1059
      %1061 = vst [vmem:[%s951 + $0xb4] sm:$0xf] %v1060
      %1062 = vst.msk [vmem:[%s951 + $0xb8] sm:$0xf] %vm411, %v901
      %v1063 = vld [vmem:[%s951 + $0xbc] sm:$0x1]
      %v1064 = vsel %vm422, %v902, %v1063
      %1065 = vst [vmem:[%s951 + $0xbc] sm:$0x1] %v1064
      %v1066 = vld [vmem:[#allocation2] sm:$0xf]
      %v1067 = vld [vmem:[#allocation2 + $0x4] sm:$0xf]
      %v1068 = vld [vmem:[#allocation2 + $0xc] sm:$0xf]
      %v1069 = vld [vmem:[#allocation2 + $0x10] sm:$0xf]
      %v1070 = vld [vmem:[#allocation2 + $0x18] sm:$0xf]
      %v1071 = vld [vmem:[#allocation2 + $0x1c] sm:$0xf]
      %v1072 = vld [vmem:[#allocation2 + $0x24] sm:$0xf]
      %v1073 = vld [vmem:[#allocation2 + $0x28] sm:$0xf]
      %v1074 = vld [vmem:[#allocation2 + $0x30] sm:$0xf]
      %v1075 = vld [vmem:[#allocation2 + $0x34] sm:$0xf]
      %v1076 = vld [vmem:[#allocation2 + $0x3c] sm:$0xf]
      %v1077 = vld [vmem:[#allocation2 + $0x40] sm:$0xf]
      %v1078 = vld [vmem:[#allocation2 + $0x48] sm:$0xf]
      %v1079 = vld [vmem:[#allocation2 + $0x4c] sm:$0xf]
      %v1080 = vld [vmem:[#allocation2 + $0x54] sm:$0xf]
      %v1081 = vld [vmem:[#allocation2 + $0x58] sm:$0xf]
      %v1082 = vld [vmem:[#allocation2 + $0x60] sm:$0xf]
      %v1083 = vld [vmem:[#allocation2 + $0x64] sm:$0xf]
      %v1084 = vld [vmem:[#allocation2 + $0x6c] sm:$0xf]
      %v1085 = vld [vmem:[#allocation2 + $0x70] sm:$0xf]
      %v1086 = vld [vmem:[#allocation2 + $0x78] sm:$0xf]
      %v1087 = vld [vmem:[#allocation2 + $0x7c] sm:$0xf]
      %v1088 = vld [vmem:[#allocation2 + $0x84] sm:$0xf]
      %v1089 = vld [vmem:[#allocation2 + $0x88] sm:$0xf]
      %v1090 = vld [vmem:[#allocation2 + $0x90] sm:$0xf]
      %v1091 = vld [vmem:[#allocation2 + $0x94] sm:$0xf]
      %v1092 = vld [vmem:[#allocation2 + $0x9c] sm:$0xf]
      %v1093 = vld [vmem:[#allocation2 + $0xa0] sm:$0xf]
      %v1094 = vld [vmem:[#allocation2 + $0xa8] sm:$0xf]
      %v1095 = vld [vmem:[#allocation2 + $0xac] sm:$0xf]
      %v1096 = vld [vmem:[#allocation2 + $0xb4] sm:$0xf]
      %v1097 = vld [vmem:[#allocation2 + $0xb8] sm:$0xf]
      %v1098 = vld [vmem:[%s3] sm:$0xf]
      %v1099 = vld [vmem:[%s3 + $0x4] sm:$0xf]
      %v1100 = vld [vmem:[#allocation2 + $0x8] sm:$0x1]
      %v1101 = vld [vmem:[#allocation2 + $0x14] sm:$0x1]
      %v1102 = vld [vmem:[#allocation2 + $0x20] sm:$0x1]
      %v1103 = vld [vmem:[#allocation2 + $0x2c] sm:$0x1]
      %v1104 = vld [vmem:[#allocation2 + $0x38] sm:$0x1]
      %v1105 = vld [vmem:[#allocation2 + $0x44] sm:$0x1]
      %v1106 = vld [vmem:[#allocation2 + $0x50] sm:$0x1]
      %v1107 = vld [vmem:[#allocation2 + $0x5c] sm:$0x1]
      %v1108 = vld [vmem:[#allocation2 + $0x68] sm:$0x1]
      %v1109 = vld [vmem:[#allocation2 + $0x74] sm:$0x1]
      %v1110 = vld [vmem:[#allocation2 + $0x80] sm:$0x1]
      %v1111 = vld [vmem:[#allocation2 + $0x8c] sm:$0x1]
      %v1112 = vld [vmem:[#allocation2 + $0x98] sm:$0x1]
      %v1113 = vld [vmem:[#allocation2 + $0xa4] sm:$0x1]
      %v1114 = vld [vmem:[#allocation2 + $0xb0] sm:$0x1]
      %v1115 = vld [vmem:[#allocation2 + $0xbc] sm:$0x1]
      %vm1116 = vsmask.f32 3328
      %vm1117 = vsmask.f32 7440
      %vm1118 = vmor %vm1116, %vm1117
      %v1120 = vshrl.u32 %v1066, 16
      %v1122 = vrot.slane %v1120, 4
      %v1123 = vshll.u32 %v1066, 16
      %v1125 = vrot.slane %v1123, 5
      %v1126 = vor.u32 %v1122, %v1125
      %v1127 = vrot.slane %v1126, 4
      %v1129 = vshll.u32 %v1067, 16
      %v1131 = vrot.slane %v1129, 5
      %v1132 = vsel %vm1118, %v1127, %v1131
      %v1133 = vshrl.u32 %v1067, 16
      %v1135 = vrot.slane %v1133, 4
      %v1136 = vor.u32 %v1135, %v1131
      %v1137 = vrot.slane %v1136, 4
      %v1139 = vshll.u32 %v1100, 16
      %v1141 = vrot.slane %v1139, 5
      %v1142 = vsel %vm1118, %v1137, %v1141
      %v1144 = vshrl.u32 %v1068, 16
      %v1146 = vrot.slane %v1144, 4
      %v1147 = vshll.u32 %v1068, 16
      %v1149 = vrot.slane %v1147, 5
      %v1150 = vor.u32 %v1146, %v1149
      %v1151 = vrot.slane %v1150, 4
      %v1153 = vshll.u32 %v1069, 16
      %v1155 = vrot.slane %v1153, 5
      %v1156 = vsel %vm1118, %v1151, %v1155
      %v1157 = vshrl.u32 %v1069, 16
      %v1159 = vrot.slane %v1157, 4
      %v1160 = vor.u32 %v1159, %v1155
      %v1161 = vrot.slane %v1160, 4
      %v1163 = vshll.u32 %v1101, 16
      %v1165 = vrot.slane %v1163, 5
      %v1166 = vsel %vm1118, %v1161, %v1165
      %v1168 = vshrl.u32 %v1070, 16
      %v1170 = vrot.slane %v1168, 4
      %v1171 = vshll.u32 %v1070, 16
      %v1173 = vrot.slane %v1171, 5
      %v1174 = vor.u32 %v1170, %v1173
      %v1175 = vrot.slane %v1174, 4
      %v1177 = vshll.u32 %v1071, 16
      %v1179 = vrot.slane %v1177, 5
      %v1180 = vsel %vm1118, %v1175, %v1179
      %v1181 = vshrl.u32 %v1071, 16
      %v1183 = vrot.slane %v1181, 4
      %v1184 = vor.u32 %v1183, %v1179
      %v1185 = vrot.slane %v1184, 4
      %v1187 = vshll.u32 %v1102, 16
      %v1189 = vrot.slane %v1187, 5
      %v1190 = vsel %vm1118, %v1185, %v1189
      %v1192 = vshrl.u32 %v1072, 16
      %v1194 = vrot.slane %v1192, 4
      %v1195 = vshll.u32 %v1072, 16
      %v1197 = vrot.slane %v1195, 5
      %v1198 = vor.u32 %v1194, %v1197
      %v1199 = vrot.slane %v1198, 4
      %v1201 = vshll.u32 %v1073, 16
      %v1203 = vrot.slane %v1201, 5
      %v1204 = vsel %vm1118, %v1199, %v1203
      %v1205 = vshrl.u32 %v1073, 16
      %v1207 = vrot.slane %v1205, 4
      %v1208 = vor.u32 %v1207, %v1203
      %v1209 = vrot.slane %v1208, 4
      %v1211 = vshll.u32 %v1103, 16
      %v1213 = vrot.slane %v1211, 5
      %v1214 = vsel %vm1118, %v1209, %v1213
      %v1216 = vshrl.u32 %v1074, 16
      %v1218 = vrot.slane %v1216, 4
      %v1219 = vshll.u32 %v1074, 16
      %v1221 = vrot.slane %v1219, 5
      %v1222 = vor.u32 %v1218, %v1221
      %v1223 = vrot.slane %v1222, 4
      %v1225 = vshll.u32 %v1075, 16
      %v1227 = vrot.slane %v1225, 5
      %v1228 = vsel %vm1118, %v1223, %v1227
      %v1229 = vshrl.u32 %v1075, 16
      %v1231 = vrot.slane %v1229, 4
      %v1232 = vor.u32 %v1231, %v1227
      %v1233 = vrot.slane %v1232, 4
      %v1235 = vshll.u32 %v1104, 16
      %v1237 = vrot.slane %v1235, 5
      %v1238 = vsel %vm1118, %v1233, %v1237
      %v1240 = vshrl.u32 %v1076, 16
      %v1242 = vrot.slane %v1240, 4
      %v1243 = vshll.u32 %v1076, 16
      %v1245 = vrot.slane %v1243, 5
      %v1246 = vor.u32 %v1242, %v1245
      %v1247 = vrot.slane %v1246, 4
      %v1249 = vshll.u32 %v1077, 16
      %v1251 = vrot.slane %v1249, 5
      %v1252 = vsel %vm1118, %v1247, %v1251
      %v1253 = vshrl.u32 %v1077, 16
      %v1255 = vrot.slane %v1253, 4
      %v1256 = vor.u32 %v1255, %v1251
      %v1257 = vrot.slane %v1256, 4
      %v1259 = vshll.u32 %v1105, 16
      %v1261 = vrot.slane %v1259, 5
      %v1262 = vsel %vm1118, %v1257, %v1261
      %v1264 = vshrl.u32 %v1078, 16
      %v1266 = vrot.slane %v1264, 4
      %v1267 = vshll.u32 %v1078, 16
      %v1269 = vrot.slane %v1267, 5
      %v1270 = vor.u32 %v1266, %v1269
      %v1271 = vrot.slane %v1270, 4
      %v1273 = vshll.u32 %v1079, 16
      %v1275 = vrot.slane %v1273, 5
      %v1276 = vsel %vm1118, %v1271, %v1275
      %v1277 = vshrl.u32 %v1079, 16
      %v1279 = vrot.slane %v1277, 4
      %v1280 = vor.u32 %v1279, %v1275
      %v1281 = vrot.slane %v1280, 4
      %v1283 = vshll.u32 %v1106, 16
      %v1285 = vrot.slane %v1283, 5
      %v1286 = vsel %vm1118, %v1281, %v1285
      %v1288 = vshrl.u32 %v1080, 16
      %v1290 = vrot.slane %v1288, 4
      %v1291 = vshll.u32 %v1080, 16
      %v1293 = vrot.slane %v1291, 5
      %v1294 = vor.u32 %v1290, %v1293
      %v1295 = vrot.slane %v1294, 4
      %v1297 = vshll.u32 %v1081, 16
      %v1299 = vrot.slane %v1297, 5
      %v1300 = vsel %vm1118, %v1295, %v1299
      %v1301 = vshrl.u32 %v1081, 16
      %v1303 = vrot.slane %v1301, 4
      %v1304 = vor.u32 %v1303, %v1299
      %v1305 = vrot.slane %v1304, 4
      %v1307 = vshll.u32 %v1107, 16
      %v1309 = vrot.slane %v1307, 5
      %v1310 = vsel %vm1118, %v1305, %v1309
      %v1312 = vshrl.u32 %v1082, 16
      %v1314 = vrot.slane %v1312, 4
      %v1315 = vshll.u32 %v1082, 16
      %v1317 = vrot.slane %v1315, 5
      %v1318 = vor.u32 %v1314, %v1317
      %v1319 = vrot.slane %v1318, 4
      %v1321 = vshll.u32 %v1083, 16
      %v1323 = vrot.slane %v1321, 5
      %v1324 = vsel %vm1118, %v1319, %v1323
      %v1325 = vshrl.u32 %v1083, 16
      %v1327 = vrot.slane %v1325, 4
      %v1328 = vor.u32 %v1327, %v1323
      %v1329 = vrot.slane %v1328, 4
      %v1331 = vshll.u32 %v1108, 16
      %v1333 = vrot.slane %v1331, 5
      %v1334 = vsel %vm1118, %v1329, %v1333
      %v1336 = vshrl.u32 %v1084, 16
      %v1338 = vrot.slane %v1336, 4
      %v1339 = vshll.u32 %v1084, 16
      %v1341 = vrot.slane %v1339, 5
      %v1342 = vor.u32 %v1338, %v1341
      %v1343 = vrot.slane %v1342, 4
      %v1345 = vshll.u32 %v1085, 16
      %v1347 = vrot.slane %v1345, 5
      %v1348 = vsel %vm1118, %v1343, %v1347
      %v1349 = vshrl.u32 %v1085, 16
      %v1351 = vrot.slane %v1349, 4
      %v1352 = vor.u32 %v1351, %v1347
      %v1353 = vrot.slane %v1352, 4
      %v1355 = vshll.u32 %v1109, 16
      %v1357 = vrot.slane %v1355, 5
      %v1358 = vsel %vm1118, %v1353, %v1357
      %v1360 = vshrl.u32 %v1086, 16
      %v1362 = vrot.slane %v1360, 4
      %v1363 = vshll.u32 %v1086, 16
      %v1365 = vrot.slane %v1363, 5
      %v1366 = vor.u32 %v1362, %v1365
      %v1367 = vrot.slane %v1366, 4
      %v1369 = vshll.u32 %v1087, 16
      %v1371 = vrot.slane %v1369, 5
      %v1372 = vsel %vm1118, %v1367, %v1371
      %v1373 = vshrl.u32 %v1087, 16
      %v1375 = vrot.slane %v1373, 4
      %v1376 = vor.u32 %v1375, %v1371
      %v1377 = vrot.slane %v1376, 4
      %v1379 = vshll.u32 %v1110, 16
      %v1381 = vrot.slane %v1379, 5
      %v1382 = vsel %vm1118, %v1377, %v1381
      %v1384 = vshrl.u32 %v1088, 16
      %v1386 = vrot.slane %v1384, 4
      %v1387 = vshll.u32 %v1088, 16
      %v1389 = vrot.slane %v1387, 5
      %v1390 = vor.u32 %v1386, %v1389
      %v1391 = vrot.slane %v1390, 4
      %v1393 = vshll.u32 %v1089, 16
      %v1395 = vrot.slane %v1393, 5
      %v1396 = vsel %vm1118, %v1391, %v1395
      %v1397 = vshrl.u32 %v1089, 16
      %v1399 = vrot.slane %v1397, 4
      %v1400 = vor.u32 %v1399, %v1395
      %v1401 = vrot.slane %v1400, 4
      %v1403 = vshll.u32 %v1111, 16
      %v1405 = vrot.slane %v1403, 5
      %v1406 = vsel %vm1118, %v1401, %v1405
      %v1408 = vshrl.u32 %v1090, 16
      %v1410 = vrot.slane %v1408, 4
      %v1411 = vshll.u32 %v1090, 16
      %v1413 = vrot.slane %v1411, 5
      %v1414 = vor.u32 %v1410, %v1413
      %v1415 = vrot.slane %v1414, 4
      %v1417 = vshll.u32 %v1091, 16
      %v1419 = vrot.slane %v1417, 5
      %v1420 = vsel %vm1118, %v1415, %v1419
      %v1421 = vshrl.u32 %v1091, 16
      %v1423 = vrot.slane %v1421, 4
      %v1424 = vor.u32 %v1423, %v1419
      %v1425 = vrot.slane %v1424, 4
      %v1427 = vshll.u32 %v1112, 16
      %v1429 = vrot.slane %v1427, 5
      %v1430 = vsel %vm1118, %v1425, %v1429
      %v1432 = vshrl.u32 %v1092, 16
      %v1434 = vrot.slane %v1432, 4
      %v1435 = vshll.u32 %v1092, 16
      %v1437 = vrot.slane %v1435, 5
      %v1438 = vor.u32 %v1434, %v1437
      %v1439 = vrot.slane %v1438, 4
      %v1441 = vshll.u32 %v1093, 16
      %v1443 = vrot.slane %v1441, 5
      %v1444 = vsel %vm1118, %v1439, %v1443
      %v1445 = vshrl.u32 %v1093, 16
      %v1447 = vrot.slane %v1445, 4
      %v1448 = vor.u32 %v1447, %v1443
      %v1449 = vrot.slane %v1448, 4
      %v1451 = vshll.u32 %v1113, 16
      %v1453 = vrot.slane %v1451, 5
      %v1454 = vsel %vm1118, %v1449, %v1453
      %v1456 = vshrl.u32 %v1094, 16
      %v1458 = vrot.slane %v1456, 4
      %v1459 = vshll.u32 %v1094, 16
      %v1461 = vrot.slane %v1459, 5
      %v1462 = vor.u32 %v1458, %v1461
      %v1463 = vrot.slane %v1462, 4
      %v1465 = vshll.u32 %v1095, 16
      %v1467 = vrot.slane %v1465, 5
      %v1468 = vsel %vm1118, %v1463, %v1467
      %v1469 = vshrl.u32 %v1095, 16
      %v1471 = vrot.slane %v1469, 4
      %v1472 = vor.u32 %v1471, %v1467
      %v1473 = vrot.slane %v1472, 4
      %v1475 = vshll.u32 %v1114, 16
      %v1477 = vrot.slane %v1475, 5
      %v1478 = vsel %vm1118, %v1473, %v1477
      %v1480 = vshrl.u32 %v1096, 16
      %v1482 = vrot.slane %v1480, 4
      %v1483 = vshll.u32 %v1096, 16
      %v1485 = vrot.slane %v1483, 5
      %v1486 = vor.u32 %v1482, %v1485
      %v1487 = vrot.slane %v1486, 4
      %v1489 = vshll.u32 %v1097, 16
      %v1491 = vrot.slane %v1489, 5
      %v1492 = vsel %vm1118, %v1487, %v1491
      %v1493 = vshrl.u32 %v1097, 16
      %v1495 = vrot.slane %v1493, 4
      %v1496 = vor.u32 %v1495, %v1491
      %v1497 = vrot.slane %v1496, 4
      %v1499 = vshll.u32 %v1115, 16
      %v1501 = vrot.slane %v1499, 5
      %v1502 = vsel %vm1118, %v1497, %v1501
      %s1503 = scalar_lea.vmem %s3, 8
      %v1504 = vld [vmem:[%s1503] sm:$0xf]
      %v1505 = vld [vmem:[%s1503 + $0x4] sm:$0xf]
      %v1506 = vunpack.c.l.b16 %v1132
      %v1507 = vunpack.c.l.b16 %v1142
      %v1508 = vunpack.c.l.b16 %v1156
      %v1509 = vunpack.c.l.b16 %v1166
      %v1510 = vunpack.c.l.b16 %v1180
      %v1511 = vunpack.c.l.b16 %v1190
      %v1512 = vunpack.c.l.b16 %v1204
      %v1513 = vunpack.c.l.b16 %v1214
      %v1514 = vunpack.c.l.b16 %v1228
      %v1515 = vunpack.c.l.b16 %v1238
      %v1516 = vunpack.c.l.b16 %v1252
      %v1517 = vunpack.c.l.b16 %v1262
      %v1518 = vunpack.c.l.b16 %v1276
      %v1519 = vunpack.c.l.b16 %v1286
      %v1520 = vunpack.c.l.b16 %v1300
      %v1521 = vunpack.c.l.b16 %v1310
      %v1522 = vunpack.c.l.b16 %v1324
      %v1523 = vunpack.c.l.b16 %v1334
      %v1524 = vunpack.c.l.b16 %v1348
      %v1525 = vunpack.c.l.b16 %v1358
      %v1526 = vunpack.c.l.b16 %v1372
      %v1527 = vunpack.c.l.b16 %v1382
      %v1528 = vunpack.c.l.b16 %v1396
      %v1529 = vunpack.c.l.b16 %v1406
      %v1530 = vunpack.c.l.b16 %v1420
      %v1531 = vunpack.c.l.b16 %v1430
      %v1532 = vunpack.c.l.b16 %v1444
      %v1533 = vunpack.c.l.b16 %v1454
      %v1534 = vunpack.c.l.b16 %v1468
      %v1535 = vunpack.c.l.b16 %v1478
      %v1536 = vunpack.c.l.b16 %v1492
      %v1537 = vunpack.c.l.b16 %v1502
      %v1538 = vpack.c.b16 %v1507, %v1506
      %v1539 = vpack.c.b16 %v1509, %v1508
      %v1540 = vpack.c.b16 %v1511, %v1510
      %v1541 = vpack.c.b16 %v1513, %v1512
      %v1542 = vpack.c.b16 %v1515, %v1514
      %v1543 = vpack.c.b16 %v1517, %v1516
      %v1544 = vpack.c.b16 %v1519, %v1518
      %v1545 = vpack.c.b16 %v1521, %v1520
      %v1546 = vpack.c.b16 %v1523, %v1522
      %v1547 = vpack.c.b16 %v1525, %v1524
      %v1548 = vpack.c.b16 %v1527, %v1526
      %v1549 = vpack.c.b16 %v1529, %v1528
      %v1550 = vpack.c.b16 %v1531, %v1530
      %v1551 = vpack.c.b16 %v1533, %v1532
      %v1552 = vpack.c.b16 %v1535, %v1534
      %v1553 = vpack.c.b16 %v1537, %v1536
      %v1556 = vunpack.c.l.b16 %v1504
      %v1557 = vunpack.c.l.b16 %v1505
      %v1558 = vpack.c.b16 %v1557, %v1556
      %vm1560 = vcmask 130048
      %v1562 = vsel %vm1560, %v1538, 0
      %v1565 = vsel %vm1560, %v1539, 0
      %v1568 = vsel %vm1560, %v1540, 0
      %v1571 = vsel %vm1560, %v1541, 0
      %v1574 = vsel %vm1560, %v1542, 0
      %v1577 = vsel %vm1560, %v1543, 0
      %v1580 = vsel %vm1560, %v1544, 0
      %v1583 = vsel %vm1560, %v1545, 0
      %v1586 = vsel %vm1560, %v1546, 0
      %v1589 = vsel %vm1560, %v1547, 0
      %v1592 = vsel %vm1560, %v1548, 0
      %v1595 = vsel %vm1560, %v1549, 0
      %v1598 = vsel %vm1560, %v1550, 0
      %v1601 = vsel %vm1560, %v1551, 0
      %v1604 = vsel %vm1560, %v1552, 0
      %v1607 = vsel %vm1560, %v1553, 0
      %1609 = vmatprep.subr.bf16.mxu0 0
      %1610 = vmatpush1.bf16.msra.mxu0 %v1558
      %1611 = vmatprep.subr.bf16.mxu0 0
      %1612 = vmatpush1.bf16.msra.mxu0 0
      %1613 = vmatprep.subr.bf16.mxu0 0
      %1614 = vmatpush1.bf16.msra.mxu0 0
      %1615 = vmatprep.subr.bf16.mxu0 0
      %1616 = vmatpush1.bf16.msra.mxu0 0
      %1617 = vmatprep.subr.bf16.mxu0 0
      %1618 = vmatpush1.bf16.msra.mxu0 0
      %1619 = vmatprep.subr.bf16.mxu0 0
      %1620 = vmatpush1.bf16.msra.mxu0 0
      %1621 = vmatprep.subr.bf16.mxu0 0
      %1622 = vmatpush1.bf16.msra.mxu0 0
      %1623 = vmatprep.subr.bf16.mxu0 0
      %1624 = vmatpush1.bf16.msra.mxu0 0
      %1625 = vmatprep.subr.bf16.mxu0 0
      %1626 = vmatpush1.bf16.msra.mxu0 0
      %1627 = vmatprep.subr.bf16.mxu0 0
      %1628 = vmatpush1.bf16.msra.mxu0 0
      %1629 = vmatprep.subr.bf16.mxu0 0
      %1630 = vmatpush1.bf16.msra.mxu0 0
      %1631 = vmatprep.subr.bf16.mxu0 0
      %1632 = vmatpush1.bf16.msra.mxu0 0
      %1633 = vmatprep.subr.bf16.mxu0 0
      %1634 = vmatpush1.bf16.msra.mxu0 0
      %1635 = vmatprep.subr.bf16.mxu0 0
      %1636 = vmatpush1.bf16.msra.mxu0 0
      %1637 = vmatprep.subr.bf16.mxu0 0
      %1638 = vmatpush1.bf16.msra.mxu0 0
      %1639 = vmatprep.subr.bf16.mxu0 0
      %1640 = vmatpush1.bf16.msra.mxu0 0
      %1641 = vmatprep.mubr.bf16.mxu0 0
      %1642 = vmatmul.mubr.bf16.gmra.mrb[0].mxu0 %v1562
      %v1643 = vpop.f32.mrb[0].mxu0
      %v1644 = vadd.f32 0.0, %v1643
      %v1645 = vpop.f32.mrb[0].mxu0
      %v1646 = vpop.f32.mrb[0].mxu0
      %v1647 = vadd.f32 0.0, %v1646
      %v1648 = vpop.f32.mrb[0].mxu0
      %1649 = vmatprep.mubr.bf16.mxu0 0
      %1650 = vmatmul.mubr.bf16.gmra.mrb[0].mxu0 %v1565
      %v1651 = vpop.f32.mrb[0].mxu0
      %v1652 = vadd.f32 0.0, %v1651
      %v1653 = vpop.f32.mrb[0].mxu0
      %v1654 = vpop.f32.mrb[0].mxu0
      %v1655 = vadd.f32 0.0, %v1654
      %v1656 = vpop.f32.mrb[0].mxu0
      %1657 = vmatprep.mubr.bf16.mxu0 0
      %1658 = vmatmul.mubr.bf16.gmra.mrb[0].mxu0 %v1568
      %v1659 = vpop.f32.mrb[0].mxu0
      %v1660 = vadd.f32 0.0, %v1659
      %v1661 = vpop.f32.mrb[0].mxu0
      %v1662 = vpop.f32.mrb[0].mxu0
      %v1663 = vadd.f32 0.0, %v1662
      %v1664 = vpop.f32.mrb[0].mxu0
      %1665 = vmatprep.mubr.bf16.mxu0 0
      %1666 = vmatmul.mubr.bf16.gmra.mrb[0].mxu0 %v1571
      %v1667 = vpop.f32.mrb[0].mxu0
      %v1668 = vadd.f32 0.0, %v1667
      %v1669 = vpop.f32.mrb[0].mxu0
      %v1670 = vpop.f32.mrb[0].mxu0
      %v1671 = vadd.f32 0.0, %v1670
      %v1672 = vpop.f32.mrb[0].mxu0
      %1673 = vmatprep.mubr.bf16.mxu0 0
      %1674 = vmatmul.mubr.bf16.gmra.mrb[0].mxu0 %v1574
      %v1675 = vpop.f32.mrb[0].mxu0
      %v1676 = vadd.f32 0.0, %v1675
      %v1677 = vpop.f32.mrb[0].mxu0
      %v1678 = vpop.f32.mrb[0].mxu0
      %v1679 = vadd.f32 0.0, %v1678
      %v1680 = vpop.f32.mrb[0].mxu0
      %1681 = vmatprep.mubr.bf16.mxu0 0
      %1682 = vmatmul.mubr.bf16.gmra.mrb[0].mxu0 %v1577
      %v1683 = vpop.f32.mrb[0].mxu0
      %v1684 = vadd.f32 0.0, %v1683
      %v1685 = vpop.f32.mrb[0].mxu0
      %v1686 = vpop.f32.mrb[0].mxu0
      %v1687 = vadd.f32 0.0, %v1686
      %v1688 = vpop.f32.mrb[0].mxu0
      %1689 = vmatprep.mubr.bf16.mxu0 0
      %1690 = vmatmul.mubr.bf16.gmra.mrb[0].mxu0 %v1580
      %v1691 = vpop.f32.mrb[0].mxu0
      %v1692 = vadd.f32 0.0, %v1691
      %v1693 = vpop.f32.mrb[0].mxu0
      %v1694 = vpop.f32.mrb[0].mxu0
      %v1695 = vadd.f32 0.0, %v1694
      %v1696 = vpop.f32.mrb[0].mxu0
      %1697 = vmatprep.mubr.bf16.mxu0 0
      %1698 = vmatmul.mubr.bf16.gmra.mrb[0].mxu0 %v1583
      %v1699 = vpop.f32.mrb[0].mxu0
      %v1700 = vadd.f32 0.0, %v1699
      %v1701 = vpop.f32.mrb[0].mxu0
      %v1702 = vpop.f32.mrb[0].mxu0
      %v1703 = vadd.f32 0.0, %v1702
      %v1704 = vpop.f32.mrb[0].mxu0
      %1705 = vmatprep.mubr.bf16.mxu0 0
      %1706 = vmatmul.mubr.bf16.gmra.mrb[0].mxu0 %v1586
      %v1707 = vpop.f32.mrb[0].mxu0
      %v1708 = vadd.f32 0.0, %v1707
      %v1709 = vpop.f32.mrb[0].mxu0
      %v1710 = vpop.f32.mrb[0].mxu0
      %v1711 = vadd.f32 0.0, %v1710
      %v1712 = vpop.f32.mrb[0].mxu0
      %1713 = vmatprep.mubr.bf16.mxu0 0
      %1714 = vmatmul.mubr.bf16.gmra.mrb[0].mxu0 %v1589
      %v1715 = vpop.f32.mrb[0].mxu0
      %v1716 = vadd.f32 0.0, %v1715
      %v1717 = vpop.f32.mrb[0].mxu0
      %v1718 = vpop.f32.mrb[0].mxu0
      %v1719 = vadd.f32 0.0, %v1718
      %v1720 = vpop.f32.mrb[0].mxu0
      %1721 = vmatprep.mubr.bf16.mxu0 0
      %1722 = vmatmul.mubr.bf16.gmra.mrb[0].mxu0 %v1592
      %v1723 = vpop.f32.mrb[0].mxu0
      %v1724 = vadd.f32 0.0, %v1723
      %v1725 = vpop.f32.mrb[0].mxu0
      %v1726 = vpop.f32.mrb[0].mxu0
      %v1727 = vadd.f32 0.0, %v1726
      %v1728 = vpop.f32.mrb[0].mxu0
      %1729 = vmatprep.mubr.bf16.mxu0 0
      %1730 = vmatmul.mubr.bf16.gmra.mrb[0].mxu0 %v1595
      %v1731 = vpop.f32.mrb[0].mxu0
      %v1732 = vadd.f32 0.0, %v1731
      %v1733 = vpop.f32.mrb[0].mxu0
      %v1734 = vpop.f32.mrb[0].mxu0
      %v1735 = vadd.f32 0.0, %v1734
      %v1736 = vpop.f32.mrb[0].mxu0
      %1737 = vmatprep.mubr.bf16.mxu0 0
      %1738 = vmatmul.mubr.bf16.gmra.mrb[0].mxu0 %v1598
      %v1739 = vpop.f32.mrb[0].mxu0
      %v1740 = vadd.f32 0.0, %v1739
      %v1741 = vpop.f32.mrb[0].mxu0
      %v1742 = vpop.f32.mrb[0].mxu0
      %v1743 = vadd.f32 0.0, %v1742
      %v1744 = vpop.f32.mrb[0].mxu0
      %1745 = vmatprep.mubr.bf16.mxu0 0
      %1746 = vmatmul.mubr.bf16.gmra.mrb[0].mxu0 %v1601
      %v1747 = vpop.f32.mrb[0].mxu0
      %v1748 = vadd.f32 0.0, %v1747
      %v1749 = vpop.f32.mrb[0].mxu0
      %v1750 = vpop.f32.mrb[0].mxu0
      %v1751 = vadd.f32 0.0, %v1750
      %v1752 = vpop.f32.mrb[0].mxu0
      %1753 = vmatprep.mubr.bf16.mxu0 0
      %1754 = vmatmul.mubr.bf16.gmra.mrb[0].mxu0 %v1604
      %v1755 = vpop.f32.mrb[0].mxu0
      %v1756 = vadd.f32 0.0, %v1755
      %v1757 = vpop.f32.mrb[0].mxu0
      %v1758 = vpop.f32.mrb[0].mxu0
      %v1759 = vadd.f32 0.0, %v1758
      %v1760 = vpop.f32.mrb[0].mxu0
      %1761 = vmatprep.mubr.bf16.mxu0 0
      %1762 = vmatmul.mubr.bf16.gmra.mrb[0].mxu0 %v1607
      %v1763 = vpop.f32.mrb[0].mxu0
      %v1764 = vadd.f32 0.0, %v1763
      %v1765 = vpop.f32.mrb[0].mxu0
      %v1766 = vpop.f32.mrb[0].mxu0
      %v1767 = vadd.f32 0.0, %v1766
      %v1768 = vpop.f32.mrb[0].mxu0
      %1769 = vdwg.mxu0
      %v1802 = vunpack.c.l.b16 %v1066
      %v1803 = vunpack.c.l.b16 %v1067
      %v1804 = vunpack.c.l.b16 %v1068
      %v1805 = vunpack.c.l.b16 %v1069
      %v1806 = vunpack.c.l.b16 %v1070
      %v1807 = vunpack.c.l.b16 %v1071
      %v1808 = vunpack.c.l.b16 %v1072
      %v1809 = vunpack.c.l.b16 %v1073
      %v1810 = vunpack.c.l.b16 %v1074
      %v1811 = vunpack.c.l.b16 %v1075
      %v1812 = vunpack.c.l.b16 %v1076
      %v1813 = vunpack.c.l.b16 %v1077
      %v1814 = vunpack.c.l.b16 %v1078
      %v1815 = vunpack.c.l.b16 %v1079
      %v1816 = vunpack.c.l.b16 %v1080
      %v1817 = vunpack.c.l.b16 %v1081
      %v1818 = vunpack.c.l.b16 %v1082
      %v1819 = vunpack.c.l.b16 %v1083
      %v1820 = vunpack.c.l.b16 %v1084
      %v1821 = vunpack.c.l.b16 %v1085
      %v1822 = vunpack.c.l.b16 %v1086
      %v1823 = vunpack.c.l.b16 %v1087
      %v1824 = vunpack.c.l.b16 %v1088
      %v1825 = vunpack.c.l.b16 %v1089
      %v1826 = vunpack.c.l.b16 %v1090
      %v1827 = vunpack.c.l.b16 %v1091
      %v1828 = vunpack.c.l.b16 %v1092
      %v1829 = vunpack.c.l.b16 %v1093
      %v1830 = vunpack.c.l.b16 %v1094
      %v1831 = vunpack.c.l.b16 %v1095
      %v1832 = vunpack.c.l.b16 %v1096
      %v1833 = vunpack.c.l.b16 %v1097
      %v1834 = vpack.c.b16 %v1803, %v1802
      %v1835 = vpack.c.b16 %v1805, %v1804
      %v1836 = vpack.c.b16 %v1807, %v1806
      %v1837 = vpack.c.b16 %v1809, %v1808
      %v1838 = vpack.c.b16 %v1811, %v1810
      %v1839 = vpack.c.b16 %v1813, %v1812
      %v1840 = vpack.c.b16 %v1815, %v1814
      %v1841 = vpack.c.b16 %v1817, %v1816
      %v1842 = vpack.c.b16 %v1819, %v1818
      %v1843 = vpack.c.b16 %v1821, %v1820
      %v1844 = vpack.c.b16 %v1823, %v1822
      %v1845 = vpack.c.b16 %v1825, %v1824
      %v1846 = vpack.c.b16 %v1827, %v1826
      %v1847 = vpack.c.b16 %v1829, %v1828
      %v1848 = vpack.c.b16 %v1831, %v1830
      %v1849 = vpack.c.b16 %v1833, %v1832
      %v1852 = vunpack.c.l.b16 %v1098
      %v1853 = vunpack.c.l.b16 %v1099
      %v1854 = vpack.c.b16 %v1853, %v1852
      %v1857 = vsel %vm1560, %v1834, 0
      %v1860 = vsel %vm1560, %v1835, 0
      %v1863 = vsel %vm1560, %v1836, 0
      %v1866 = vsel %vm1560, %v1837, 0
      %v1869 = vsel %vm1560, %v1838, 0
      %v1872 = vsel %vm1560, %v1839, 0
      %v1875 = vsel %vm1560, %v1840, 0
      %v1878 = vsel %vm1560, %v1841, 0
      %v1881 = vsel %vm1560, %v1842, 0
      %v1884 = vsel %vm1560, %v1843, 0
      %v1887 = vsel %vm1560, %v1844, 0
      %v1890 = vsel %vm1560, %v1845, 0
      %v1893 = vsel %vm1560, %v1846, 0
      %v1896 = vsel %vm1560, %v1847, 0
      %v1899 = vsel %vm1560, %v1848, 0
      %v1902 = vsel %vm1560, %v1849, 0
      %1904 = vmatprep.subr.bf16.mxu0 0
      %1905 = vmatpush1.bf16.msra.mxu0 %v1854
      %1906 = vmatprep.subr.bf16.mxu0 0
      %1907 = vmatpush1.bf16.msra.mxu0 0
      %1908 = vmatprep.subr.bf16.mxu0 0
      %1909 = vmatpush1.bf16.msra.mxu0 0
      %1910 = vmatprep.subr.bf16.mxu0 0
      %1911 = vmatpush1.bf16.msra.mxu0 0
      %1912 = vmatprep.subr.bf16.mxu0 0
      %1913 = vmatpush1.bf16.msra.mxu0 0
      %1914 = vmatprep.subr.bf16.mxu0 0
      %1915 = vmatpush1.bf16.msra.mxu0 0
      %1916 = vmatprep.subr.bf16.mxu0 0
      %1917 = vmatpush1.bf16.msra.mxu0 0
      %1918 = vmatprep.subr.bf16.mxu0 0
      %1919 = vmatpush1.bf16.msra.mxu0 0
      %1920 = vmatprep.subr.bf16.mxu0 0
      %1921 = vmatpush1.bf16.msra.mxu0 0
      %1922 = vmatprep.subr.bf16.mxu0 0
      %1923 = vmatpush1.bf16.msra.mxu0 0
      %1924 = vmatprep.subr.bf16.mxu0 0
      %1925 = vmatpush1.bf16.msra.mxu0 0
      %1926 = vmatprep.subr.bf16.mxu0 0
      %1927 = vmatpush1.bf16.msra.mxu0 0
      %1928 = vmatprep.subr.bf16.mxu0 0
      %1929 = vmatpush1.bf16.msra.mxu0 0
      %1930 = vmatprep.subr.bf16.mxu0 0
      %1931 = vmatpush1.bf16.msra.mxu0 0
      %1932 = vmatprep.subr.bf16.mxu0 0
      %1933 = vmatpush1.bf16.msra.mxu0 0
      %1934 = vmatprep.subr.bf16.mxu0 0
      %1935 = vmatpush1.bf16.msra.mxu0 0
      %1936 = vmatprep.mubr.bf16.mxu0 0
      %1937 = vmatmul.mubr.bf16.gmra.mrb[0].mxu0 %v1857
      %v1938 = vpop.f32.mrb[0].mxu0
      %v1939 = vadd.f32 %v1644, %v1938
      %v1940 = vpop.f32.mrb[0].mxu0
      %v1941 = vpop.f32.mrb[0].mxu0
      %v1942 = vadd.f32 %v1647, %v1941
      %v1943 = vpop.f32.mrb[0].mxu0
      %1944 = vmatprep.mubr.bf16.mxu0 0
      %1945 = vmatmul.mubr.bf16.gmra.mrb[0].mxu0 %v1860
      %v1946 = vpop.f32.mrb[0].mxu0
      %v1947 = vadd.f32 %v1652, %v1946
      %v1948 = vpop.f32.mrb[0].mxu0
      %v1949 = vpop.f32.mrb[0].mxu0
      %v1950 = vadd.f32 %v1655, %v1949
      %v1951 = vpop.f32.mrb[0].mxu0
      %1952 = vmatprep.mubr.bf16.mxu0 0
      %1953 = vmatmul.mubr.bf16.gmra.mrb[0].mxu0 %v1863
      %v1954 = vpop.f32.mrb[0].mxu0
      %v1955 = vadd.f32 %v1660, %v1954
      %v1956 = vpop.f32.mrb[0].mxu0
      %v1957 = vpop.f32.mrb[0].mxu0
      %v1958 = vadd.f32 %v1663, %v1957
      %v1959 = vpop.f32.mrb[0].mxu0
      %1960 = vmatprep.mubr.bf16.mxu0 0
      %1961 = vmatmul.mubr.bf16.gmra.mrb[0].mxu0 %v1866
      %v1962 = vpop.f32.mrb[0].mxu0
      %v1963 = vadd.f32 %v1668, %v1962
      %v1964 = vpop.f32.mrb[0].mxu0
      %v1965 = vpop.f32.mrb[0].mxu0
      %v1966 = vadd.f32 %v1671, %v1965
      %v1967 = vpop.f32.mrb[0].mxu0
      %1968 = vmatprep.mubr.bf16.mxu0 0
      %1969 = vmatmul.mubr.bf16.gmra.mrb[0].mxu0 %v1869
      %v1970 = vpop.f32.mrb[0].mxu0
      %v1971 = vadd.f32 %v1676, %v1970
      %v1972 = vpop.f32.mrb[0].mxu0
      %v1973 = vpop.f32.mrb[0].mxu0
      %v1974 = vadd.f32 %v1679, %v1973
      %v1975 = vpop.f32.mrb[0].mxu0
      %1976 = vmatprep.mubr.bf16.mxu0 0
      %1977 = vmatmul.mubr.bf16.gmra.mrb[0].mxu0 %v1872
      %v1978 = vpop.f32.mrb[0].mxu0
      %v1979 = vadd.f32 %v1684, %v1978
      %v1980 = vpop.f32.mrb[0].mxu0
      %v1981 = vpop.f32.mrb[0].mxu0
      %v1982 = vadd.f32 %v1687, %v1981
      %v1983 = vpop.f32.mrb[0].mxu0
      %1984 = vmatprep.mubr.bf16.mxu0 0
      %1985 = vmatmul.mubr.bf16.gmra.mrb[0].mxu0 %v1875
      %v1986 = vpop.f32.mrb[0].mxu0
      %v1987 = vadd.f32 %v1692, %v1986
      %v1988 = vpop.f32.mrb[0].mxu0
      %v1989 = vpop.f32.mrb[0].mxu0
      %v1990 = vadd.f32 %v1695, %v1989
      %v1991 = vpop.f32.mrb[0].mxu0
      %1992 = vmatprep.mubr.bf16.mxu0 0
      %1993 = vmatmul.mubr.bf16.gmra.mrb[0].mxu0 %v1878
      %v1994 = vpop.f32.mrb[0].mxu0
      %v1995 = vadd.f32 %v1700, %v1994
      %v1996 = vpop.f32.mrb[0].mxu0
      %v1997 = vpop.f32.mrb[0].mxu0
      %v1998 = vadd.f32 %v1703, %v1997
      %v1999 = vpop.f32.mrb[0].mxu0
      %2000 = vmatprep.mubr.bf16.mxu0 0
      %2001 = vmatmul.mubr.bf16.gmra.mrb[0].mxu0 %v1881
      %v2002 = vpop.f32.mrb[0].mxu0
      %v2003 = vadd.f32 %v1708, %v2002
      %v2004 = vpop.f32.mrb[0].mxu0
      %v2005 = vpop.f32.mrb[0].mxu0
      %v2006 = vadd.f32 %v1711, %v2005
      %v2007 = vpop.f32.mrb[0].mxu0
      %2008 = vmatprep.mubr.bf16.mxu0 0
      %2009 = vmatmul.mubr.bf16.gmra.mrb[0].mxu0 %v1884
      %v2010 = vpop.f32.mrb[0].mxu0
      %v2011 = vadd.f32 %v1716, %v2010
      %v2012 = vpop.f32.mrb[0].mxu0
      %v2013 = vpop.f32.mrb[0].mxu0
      %v2014 = vadd.f32 %v1719, %v2013
      %v2015 = vpop.f32.mrb[0].mxu0
      %2016 = vmatprep.mubr.bf16.mxu0 0
      %2017 = vmatmul.mubr.bf16.gmra.mrb[0].mxu0 %v1887
      %v2018 = vpop.f32.mrb[0].mxu0
      %v2019 = vadd.f32 %v1724, %v2018
      %v2020 = vpop.f32.mrb[0].mxu0
      %v2021 = vpop.f32.mrb[0].mxu0
      %v2022 = vadd.f32 %v1727, %v2021
      %v2023 = vpop.f32.mrb[0].mxu0
      %2024 = vmatprep.mubr.bf16.mxu0 0
      %2025 = vmatmul.mubr.bf16.gmra.mrb[0].mxu0 %v1890
      %v2026 = vpop.f32.mrb[0].mxu0
      %v2027 = vadd.f32 %v1732, %v2026
      %v2028 = vpop.f32.mrb[0].mxu0
      %v2029 = vpop.f32.mrb[0].mxu0
      %v2030 = vadd.f32 %v1735, %v2029
      %v2031 = vpop.f32.mrb[0].mxu0
      %2032 = vmatprep.mubr.bf16.mxu0 0
      %2033 = vmatmul.mubr.bf16.gmra.mrb[0].mxu0 %v1893
      %v2034 = vpop.f32.mrb[0].mxu0
      %v2035 = vadd.f32 %v1740, %v2034
      %v2036 = vpop.f32.mrb[0].mxu0
      %v2037 = vpop.f32.mrb[0].mxu0
      %v2038 = vadd.f32 %v1743, %v2037
      %v2039 = vpop.f32.mrb[0].mxu0
      %2040 = vmatprep.mubr.bf16.mxu0 0
      %2041 = vmatmul.mubr.bf16.gmra.mrb[0].mxu0 %v1896
      %v2042 = vpop.f32.mrb[0].mxu0
      %v2043 = vadd.f32 %v1748, %v2042
      %v2044 = vpop.f32.mrb[0].mxu0
      %v2045 = vpop.f32.mrb[0].mxu0
      %v2046 = vadd.f32 %v1751, %v2045
      %v2047 = vpop.f32.mrb[0].mxu0
      %2048 = vmatprep.mubr.bf16.mxu0 0
      %2049 = vmatmul.mubr.bf16.gmra.mrb[0].mxu0 %v1899
      %v2050 = vpop.f32.mrb[0].mxu0
      %v2051 = vadd.f32 %v1756, %v2050
      %v2052 = vpop.f32.mrb[0].mxu0
      %v2053 = vpop.f32.mrb[0].mxu0
      %v2054 = vadd.f32 %v1759, %v2053
      %v2055 = vpop.f32.mrb[0].mxu0
      %2056 = vmatprep.mubr.bf16.mxu0 0
      %2057 = vmatmul.mubr.bf16.gmra.mrb[0].mxu0 %v1902
      %v2058 = vpop.f32.mrb[0].mxu0
      %v2059 = vadd.f32 %v1764, %v2058
      %v2060 = vpop.f32.mrb[0].mxu0
      %v2061 = vpop.f32.mrb[0].mxu0
      %v2062 = vadd.f32 %v1767, %v2061
      %v2063 = vpop.f32.mrb[0].mxu0
      %2064 = vdwg.mxu0
      %v2065 = vld [vmem:[#allocation2] sm:$0xe]
      %v2066 = vld [vmem:[#allocation2 + $0xc] sm:$0xe]
      %v2067 = vld [vmem:[#allocation2 + $0x18] sm:$0xe]
      %v2068 = vld [vmem:[#allocation2 + $0x24] sm:$0xe]
      %v2069 = vld [vmem:[#allocation2 + $0x30] sm:$0xe]
      %v2070 = vld [vmem:[#allocation2 + $0x3c] sm:$0xe]
      %v2071 = vld [vmem:[#allocation2 + $0x48] sm:$0xe]
      %v2072 = vld [vmem:[#allocation2 + $0x54] sm:$0xe]
      %v2073 = vld [vmem:[#allocation2 + $0x60] sm:$0xe]
      %v2074 = vld [vmem:[#allocation2 + $0x6c] sm:$0xe]
      %v2075 = vld [vmem:[#allocation2 + $0x78] sm:$0xe]
      %v2076 = vld [vmem:[#allocation2 + $0x84] sm:$0xe]
      %v2077 = vld [vmem:[#allocation2 + $0x90] sm:$0xe]
      %v2078 = vld [vmem:[#allocation2 + $0x9c] sm:$0xe]
      %v2079 = vld [vmem:[#allocation2 + $0xa8] sm:$0xe]
      %v2080 = vld [vmem:[#allocation2 + $0xb4] sm:$0xe]
      %vm2113 = vcmask 1042432
      %vm2114 = vcmask 1046532
      %vm2115 = vmor %vm2113, %vm2114
      %v2116 = vrot.slane %v2065, 5
      %v2117 = vrot.slane %v2116, 4
      %v2118 = vrot.slane %v1067, 5
      %v2119 = vsel %vm2115, %v2117, %v2118
      %v2120 = vrot.slane %v2118, 4
      %v2121 = vrot.slane %v1100, 5
      %v2122 = vsel %vm2115, %v2120, %v2121
      %v2123 = vrot.slane %v2066, 5
      %v2124 = vrot.slane %v2123, 4
      %v2125 = vrot.slane %v1069, 5
      %v2126 = vsel %vm2115, %v2124, %v2125
      %v2127 = vrot.slane %v2125, 4
      %v2128 = vrot.slane %v1101, 5
      %v2129 = vsel %vm2115, %v2127, %v2128
      %v2130 = vrot.slane %v2067, 5
      %v2131 = vrot.slane %v2130, 4
      %v2132 = vrot.slane %v1071, 5
      %v2133 = vsel %vm2115, %v2131, %v2132
      %v2134 = vrot.slane %v2132, 4
      %v2135 = vrot.slane %v1102, 5
      %v2136 = vsel %vm2115, %v2134, %v2135
      %v2137 = vrot.slane %v2068, 5
      %v2138 = vrot.slane %v2137, 4
      %v2139 = vrot.slane %v1073, 5
      %v2140 = vsel %vm2115, %v2138, %v2139
      %v2141 = vrot.slane %v2139, 4
      %v2142 = vrot.slane %v1103, 5
      %v2143 = vsel %vm2115, %v2141, %v2142
      %v2144 = vrot.slane %v2069, 5
      %v2145 = vrot.slane %v2144, 4
      %v2146 = vrot.slane %v1075, 5
      %v2147 = vsel %vm2115, %v2145, %v2146
      %v2148 = vrot.slane %v2146, 4
      %v2149 = vrot.slane %v1104, 5
      %v2150 = vsel %vm2115, %v2148, %v2149
      %v2151 = vrot.slane %v2070, 5
      %v2152 = vrot.slane %v2151, 4
      %v2153 = vrot.slane %v1077, 5
      %v2154 = vsel %vm2115, %v2152, %v2153
      %v2155 = vrot.slane %v2153, 4
      %v2156 = vrot.slane %v1105, 5
      %v2157 = vsel %vm2115, %v2155, %v2156
      %v2158 = vrot.slane %v2071, 5
      %v2159 = vrot.slane %v2158, 4
      %v2160 = vrot.slane %v1079, 5
      %v2161 = vsel %vm2115, %v2159, %v2160
      %v2162 = vrot.slane %v2160, 4
      %v2163 = vrot.slane %v1106, 5
      %v2164 = vsel %vm2115, %v2162, %v2163
      %v2165 = vrot.slane %v2072, 5
      %v2166 = vrot.slane %v2165, 4
      %v2167 = vrot.slane %v1081, 5
      %v2168 = vsel %vm2115, %v2166, %v2167
      %v2169 = vrot.slane %v2167, 4
      %v2170 = vrot.slane %v1107, 5
      %v2171 = vsel %vm2115, %v2169, %v2170
      %v2172 = vrot.slane %v2073, 5
      %v2173 = vrot.slane %v2172, 4
      %v2174 = vrot.slane %v1083, 5
      %v2175 = vsel %vm2115, %v2173, %v2174
      %v2176 = vrot.slane %v2174, 4
      %v2177 = vrot.slane %v1108, 5
      %v2178 = vsel %vm2115, %v2176, %v2177
      %v2179 = vrot.slane %v2074, 5
      %v2180 = vrot.slane %v2179, 4
      %v2181 = vrot.slane %v1085, 5
      %v2182 = vsel %vm2115, %v2180, %v2181
      %v2183 = vrot.slane %v2181, 4
      %v2184 = vrot.slane %v1109, 5
      %v2185 = vsel %vm2115, %v2183, %v2184
      %v2186 = vrot.slane %v2075, 5
      %v2187 = vrot.slane %v2186, 4
      %v2188 = vrot.slane %v1087, 5
      %v2189 = vsel %vm2115, %v2187, %v2188
      %v2190 = vrot.slane %v2188, 4
      %v2191 = vrot.slane %v1110, 5
      %v2192 = vsel %vm2115, %v2190, %v2191
      %v2193 = vrot.slane %v2076, 5
      %v2194 = vrot.slane %v2193, 4
      %v2195 = vrot.slane %v1089, 5
      %v2196 = vsel %vm2115, %v2194, %v2195
      %v2197 = vrot.slane %v2195, 4
      %v2198 = vrot.slane %v1111, 5
      %v2199 = vsel %vm2115, %v2197, %v2198
      %v2200 = vrot.slane %v2077, 5
      %v2201 = vrot.slane %v2200, 4
      %v2202 = vrot.slane %v1091, 5
      %v2203 = vsel %vm2115, %v2201, %v2202
      %v2204 = vrot.slane %v2202, 4
      %v2205 = vrot.slane %v1112, 5
      %v2206 = vsel %vm2115, %v2204, %v2205
      %v2207 = vrot.slane %v2078, 5
      %v2208 = vrot.slane %v2207, 4
      %v2209 = vrot.slane %v1093, 5
      %v2210 = vsel %vm2115, %v2208, %v2209
      %v2211 = vrot.slane %v2209, 4
      %v2212 = vrot.slane %v1113, 5
      %v2213 = vsel %vm2115, %v2211, %v2212
      %v2214 = vrot.slane %v2079, 5
      %v2215 = vrot.slane %v2214, 4
      %v2216 = vrot.slane %v1095, 5
      %v2217 = vsel %vm2115, %v2215, %v2216
      %v2218 = vrot.slane %v2216, 4
      %v2219 = vrot.slane %v1114, 5
      %v2220 = vsel %vm2115, %v2218, %v2219
      %v2221 = vrot.slane %v2080, 5
      %v2222 = vrot.slane %v2221, 4
      %v2223 = vrot.slane %v1097, 5
      %v2224 = vsel %vm2115, %v2222, %v2223
      %v2225 = vrot.slane %v2223, 4
      %v2226 = vrot.slane %v1115, 5
      %v2227 = vsel %vm2115, %v2225, %v2226
      %s2228 = scalar_lea.vmem %s3, 16
      %v2229 = vld [vmem:[%s2228] sm:$0xf]
      %v2230 = vld [vmem:[%s2228 + $0x4] sm:$0xf]
      %v2231 = vunpack.c.l.b16 %v2119
      %v2232 = vunpack.c.l.b16 %v2122
      %v2233 = vunpack.c.l.b16 %v2126
      %v2234 = vunpack.c.l.b16 %v2129
      %v2235 = vunpack.c.l.b16 %v2133
      %v2236 = vunpack.c.l.b16 %v2136
      %v2237 = vunpack.c.l.b16 %v2140
      %v2238 = vunpack.c.l.b16 %v2143
      %v2239 = vunpack.c.l.b16 %v2147
      %v2240 = vunpack.c.l.b16 %v2150
      %v2241 = vunpack.c.l.b16 %v2154
      %v2242 = vunpack.c.l.b16 %v2157
      %v2243 = vunpack.c.l.b16 %v2161
      %v2244 = vunpack.c.l.b16 %v2164
      %v2245 = vunpack.c.l.b16 %v2168
      %v2246 = vunpack.c.l.b16 %v2171
      %v2247 = vunpack.c.l.b16 %v2175
      %v2248 = vunpack.c.l.b16 %v2178
      %v2249 = vunpack.c.l.b16 %v2182
      %v2250 = vunpack.c.l.b16 %v2185
      %v2251 = vunpack.c.l.b16 %v2189
      %v2252 = vunpack.c.l.b16 %v2192
      %v2253 = vunpack.c.l.b16 %v2196
      %v2254 = vunpack.c.l.b16 %v2199
      %v2255 = vunpack.c.l.b16 %v2203
      %v2256 = vunpack.c.l.b16 %v2206
      %v2257 = vunpack.c.l.b16 %v2210
      %v2258 = vunpack.c.l.b16 %v2213
      %v2259 = vunpack.c.l.b16 %v2217
      %v2260 = vunpack.c.l.b16 %v2220
      %v2261 = vunpack.c.l.b16 %v2224
      %v2262 = vunpack.c.l.b16 %v2227
      %v2263 = vpack.c.b16 %v2232, %v2231
      %v2264 = vpack.c.b16 %v2234, %v2233
      %v2265 = vpack.c.b16 %v2236, %v2235
      %v2266 = vpack.c.b16 %v2238, %v2237
      %v2267 = vpack.c.b16 %v2240, %v2239
      %v2268 = vpack.c.b16 %v2242, %v2241
      %v2269 = vpack.c.b16 %v2244, %v2243
      %v2270 = vpack.c.b16 %v2246, %v2245
      %v2271 = vpack.c.b16 %v2248, %v2247
      %v2272 = vpack.c.b16 %v2250, %v2249
      %v2273 = vpack.c.b16 %v2252, %v2251
      %v2274 = vpack.c.b16 %v2254, %v2253
      %v2275 = vpack.c.b16 %v2256, %v2255
      %v2276 = vpack.c.b16 %v2258, %v2257
      %v2277 = vpack.c.b16 %v2260, %v2259
      %v2278 = vpack.c.b16 %v2262, %v2261
      %v2281 = vunpack.c.l.b16 %v2229
      %v2282 = vunpack.c.l.b16 %v2230
      %v2283 = vpack.c.b16 %v2282, %v2281
      %v2286 = vsel %vm1560, %v2263, 0
      %v2289 = vsel %vm1560, %v2264, 0
      %v2292 = vsel %vm1560, %v2265, 0
      %v2295 = vsel %vm1560, %v2266, 0
      %v2298 = vsel %vm1560, %v2267, 0
      %v2301 = vsel %vm1560, %v2268, 0
      %v2304 = vsel %vm1560, %v2269, 0
      %v2307 = vsel %vm1560, %v2270, 0
      %v2310 = vsel %vm1560, %v2271, 0
      %v2313 = vsel %vm1560, %v2272, 0
      %v2316 = vsel %vm1560, %v2273, 0
      %v2319 = vsel %vm1560, %v2274, 0
      %v2322 = vsel %vm1560, %v2275, 0
      %v2325 = vsel %vm1560, %v2276, 0
      %v2328 = vsel %vm1560, %v2277, 0
      %v2331 = vsel %vm1560, %v2278, 0
      %2333 = vmatprep.subr.bf16.mxu0 0
      %2334 = vmatpush1.bf16.msra.mxu0 %v2283
      %2335 = vmatprep.subr.bf16.mxu0 0
      %2336 = vmatpush1.bf16.msra.mxu0 0
      %2337 = vmatprep.subr.bf16.mxu0 0
      %2338 = vmatpush1.bf16.msra.mxu0 0
      %2339 = vmatprep.subr.bf16.mxu0 0
      %2340 = vmatpush1.bf16.msra.mxu0 0
      %2341 = vmatprep.subr.bf16.mxu0 0
      %2342 = vmatpush1.bf16.msra.mxu0 0
      %2343 = vmatprep.subr.bf16.mxu0 0
      %2344 = vmatpush1.bf16.msra.mxu0 0
      %2345 = vmatprep.subr.bf16.mxu0 0
      %2346 = vmatpush1.bf16.msra.mxu0 0
      %2347 = vmatprep.subr.bf16.mxu0 0
      %2348 = vmatpush1.bf16.msra.mxu0 0
      %2349 = vmatprep.subr.bf16.mxu0 0
      %2350 = vmatpush1.bf16.msra.mxu0 0
      %2351 = vmatprep.subr.bf16.mxu0 0
      %2352 = vmatpush1.bf16.msra.mxu0 0
      %2353 = vmatprep.subr.bf16.mxu0 0
      %2354 = vmatpush1.bf16.msra.mxu0 0
      %2355 = vmatprep.subr.bf16.mxu0 0
      %2356 = vmatpush1.bf16.msra.mxu0 0
      %2357 = vmatprep.subr.bf16.mxu0 0
      %2358 = vmatpush1.bf16.msra.mxu0 0
      %2359 = vmatprep.subr.bf16.mxu0 0
      %2360 = vmatpush1.bf16.msra.mxu0 0
      %2361 = vmatprep.subr.bf16.mxu0 0
      %2362 = vmatpush1.bf16.msra.mxu0 0
      %2363 = vmatprep.subr.bf16.mxu0 0
      %2364 = vmatpush1.bf16.msra.mxu0 0
      %2365 = vmatprep.mubr.bf16.mxu0 0
      %2366 = vmatmul.mubr.bf16.gmra.mrb[0].mxu0 %v2286
      %v2367 = vpop.f32.mrb[0].mxu0
      %v2368 = vadd.f32 0.0, %v2367
      %v2369 = vpop.f32.mrb[0].mxu0
      %v2370 = vpop.f32.mrb[0].mxu0
      %v2371 = vadd.f32 0.0, %v2370
      %v2372 = vpop.f32.mrb[0].mxu0
      %2373 = vmatprep.mubr.bf16.mxu0 0
      %2374 = vmatmul.mubr.bf16.gmra.mrb[0].mxu0 %v2289
      %v2375 = vpop.f32.mrb[0].mxu0
      %v2376 = vadd.f32 0.0, %v2375
      %v2377 = vpop.f32.mrb[0].mxu0
      %v2378 = vpop.f32.mrb[0].mxu0
      %v2379 = vadd.f32 0.0, %v2378
      %v2380 = vpop.f32.mrb[0].mxu0
      %2381 = vmatprep.mubr.bf16.mxu0 0
      %2382 = vmatmul.mubr.bf16.gmra.mrb[0].mxu0 %v2292
      %v2383 = vpop.f32.mrb[0].mxu0
      %v2384 = vadd.f32 0.0, %v2383
      %v2385 = vpop.f32.mrb[0].mxu0
      %v2386 = vpop.f32.mrb[0].mxu0
      %v2387 = vadd.f32 0.0, %v2386
      %v2388 = vpop.f32.mrb[0].mxu0
      %2389 = vmatprep.mubr.bf16.mxu0 0
      %2390 = vmatmul.mubr.bf16.gmra.mrb[0].mxu0 %v2295
      %v2391 = vpop.f32.mrb[0].mxu0
      %v2392 = vadd.f32 0.0, %v2391
      %v2393 = vpop.f32.mrb[0].mxu0
      %v2394 = vpop.f32.mrb[0].mxu0
      %v2395 = vadd.f32 0.0, %v2394
      %v2396 = vpop.f32.mrb[0].mxu0
      %2397 = vmatprep.mubr.bf16.mxu0 0
      %2398 = vmatmul.mubr.bf16.gmra.mrb[0].mxu0 %v2298
      %v2399 = vpop.f32.mrb[0].mxu0
      %v2400 = vadd.f32 0.0, %v2399
      %v2401 = vpop.f32.mrb[0].mxu0
      %v2402 = vpop.f32.mrb[0].mxu0
      %v2403 = vadd.f32 0.0, %v2402
      %v2404 = vpop.f32.mrb[0].mxu0
      %2405 = vmatprep.mubr.bf16.mxu0 0
      %2406 = vmatmul.mubr.bf16.gmra.mrb[0].mxu0 %v2301
      %v2407 = vpop.f32.mrb[0].mxu0
      %v2408 = vadd.f32 0.0, %v2407
      %v2409 = vpop.f32.mrb[0].mxu0
      %v2410 = vpop.f32.mrb[0].mxu0
      %v2411 = vadd.f32 0.0, %v2410
      %v2412 = vpop.f32.mrb[0].mxu0
      %2413 = vmatprep.mubr.bf16.mxu0 0
      %2414 = vmatmul.mubr.bf16.gmra.mrb[0].mxu0 %v2304
      %v2415 = vpop.f32.mrb[0].mxu0
      %v2416 = vadd.f32 0.0, %v2415
      %v2417 = vpop.f32.mrb[0].mxu0
      %v2418 = vpop.f32.mrb[0].mxu0
      %v2419 = vadd.f32 0.0, %v2418
      %v2420 = vpop.f32.mrb[0].mxu0
      %2421 = vmatprep.mubr.bf16.mxu0 0
      %2422 = vmatmul.mubr.bf16.gmra.mrb[0].mxu0 %v2307
      %v2423 = vpop.f32.mrb[0].mxu0
      %v2424 = vadd.f32 0.0, %v2423
      %v2425 = vpop.f32.mrb[0].mxu0
      %v2426 = vpop.f32.mrb[0].mxu0
      %v2427 = vadd.f32 0.0, %v2426
      %v2428 = vpop.f32.mrb[0].mxu0
      %2429 = vmatprep.mubr.bf16.mxu0 0
      %2430 = vmatmul.mubr.bf16.gmra.mrb[0].mxu0 %v2310
      %v2431 = vpop.f32.mrb[0].mxu0
      %v2432 = vadd.f32 0.0, %v2431
      %v2433 = vpop.f32.mrb[0].mxu0
      %v2434 = vpop.f32.mrb[0].mxu0
      %v2435 = vadd.f32 0.0, %v2434
      %v2436 = vpop.f32.mrb[0].mxu0
      %2437 = vmatprep.mubr.bf16.mxu0 0
      %2438 = vmatmul.mubr.bf16.gmra.mrb[0].mxu0 %v2313
      %v2439 = vpop.f32.mrb[0].mxu0
      %v2440 = vadd.f32 0.0, %v2439
      %v2441 = vpop.f32.mrb[0].mxu0
      %v2442 = vpop.f32.mrb[0].mxu0
      %v2443 = vadd.f32 0.0, %v2442
      %v2444 = vpop.f32.mrb[0].mxu0
      %2445 = vmatprep.mubr.bf16.mxu0 0
      %2446 = vmatmul.mubr.bf16.gmra.mrb[0].mxu0 %v2316
      %v2447 = vpop.f32.mrb[0].mxu0
      %v2448 = vadd.f32 0.0, %v2447
      %v2449 = vpop.f32.mrb[0].mxu0
      %v2450 = vpop.f32.mrb[0].mxu0
      %v2451 = vadd.f32 0.0, %v2450
      %v2452 = vpop.f32.mrb[0].mxu0
      %2453 = vmatprep.mubr.bf16.mxu0 0
      %2454 = vmatmul.mubr.bf16.gmra.mrb[0].mxu0 %v2319
      %v2455 = vpop.f32.mrb[0].mxu0
      %v2456 = vadd.f32 0.0, %v2455
      %v2457 = vpop.f32.mrb[0].mxu0
      %v2458 = vpop.f32.mrb[0].mxu0
      %v2459 = vadd.f32 0.0, %v2458
      %v2460 = vpop.f32.mrb[0].mxu0
      %2461 = vmatprep.mubr.bf16.mxu0 0
      %2462 = vmatmul.mubr.bf16.gmra.mrb[0].mxu0 %v2322
      %v2463 = vpop.f32.mrb[0].mxu0
      %v2464 = vadd.f32 0.0, %v2463
      %v2465 = vpop.f32.mrb[0].mxu0
      %v2466 = vpop.f32.mrb[0].mxu0
      %v2467 = vadd.f32 0.0, %v2466
      %v2468 = vpop.f32.mrb[0].mxu0
      %2469 = vmatprep.mubr.bf16.mxu0 0
      %2470 = vmatmul.mubr.bf16.gmra.mrb[0].mxu0 %v2325
      %v2471 = vpop.f32.mrb[0].mxu0
      %v2472 = vadd.f32 0.0, %v2471
      %v2473 = vpop.f32.mrb[0].mxu0
      %v2474 = vpop.f32.mrb[0].mxu0
      %v2475 = vadd.f32 0.0, %v2474
      %v2476 = vpop.f32.mrb[0].mxu0
      %2477 = vmatprep.mubr.bf16.mxu0 0
      %2478 = vmatmul.mubr.bf16.gmra.mrb[0].mxu0 %v2328
      %v2479 = vpop.f32.mrb[0].mxu0
      %v2480 = vadd.f32 0.0, %v2479
      %v2481 = vpop.f32.mrb[0].mxu0
      %v2482 = vpop.f32.mrb[0].mxu0
      %v2483 = vadd.f32 0.0, %v2482
      %v2484 = vpop.f32.mrb[0].mxu0
      %2485 = vmatprep.mubr.bf16.mxu0 0
      %2486 = vmatmul.mubr.bf16.gmra.mrb[0].mxu0 %v2331
      %v2487 = vpop.f32.mrb[0].mxu0
      %v2488 = vadd.f32 0.0, %v2487
      %v2489 = vpop.f32.mrb[0].mxu0
      %v2490 = vpop.f32.mrb[0].mxu0
      %v2491 = vadd.f32 0.0, %v2490
      %v2492 = vpop.f32.mrb[0].mxu0
      %2493 = vdwg.mxu0
      %v2494 = vadd.f32 %v1939, %v2368
      %v2495 = vadd.f32 %v1942, %v2371
      %v2496 = vadd.f32 %v1947, %v2376
      %v2497 = vadd.f32 %v1950, %v2379
      %v2498 = vadd.f32 %v1955, %v2384
      %v2499 = vadd.f32 %v1958, %v2387
      %v2500 = vadd.f32 %v1963, %v2392
      %v2501 = vadd.f32 %v1966, %v2395
      %v2502 = vadd.f32 %v1971, %v2400
      %v2503 = vadd.f32 %v1974, %v2403
      %v2504 = vadd.f32 %v1979, %v2408
      %v2505 = vadd.f32 %v1982, %v2411
      %v2506 = vadd.f32 %v1987, %v2416
      %v2507 = vadd.f32 %v1990, %v2419
      %v2508 = vadd.f32 %v1995, %v2424
      %v2509 = vadd.f32 %v1998, %v2427
      %v2510 = vadd.f32 %v2003, %v2432
      %v2511 = vadd.f32 %v2006, %v2435
      %v2512 = vadd.f32 %v2011, %v2440
      %v2513 = vadd.f32 %v2014, %v2443
      %v2514 = vadd.f32 %v2019, %v2448
      %v2515 = vadd.f32 %v2022, %v2451
      %v2516 = vadd.f32 %v2027, %v2456
      %v2517 = vadd.f32 %v2030, %v2459
      %v2518 = vadd.f32 %v2035, %v2464
      %v2519 = vadd.f32 %v2038, %v2467
      %v2520 = vadd.f32 %v2043, %v2472
      %v2521 = vadd.f32 %v2046, %v2475
      %v2522 = vadd.f32 %v2051, %v2480
      %v2523 = vadd.f32 %v2054, %v2483
      %v2524 = vadd.f32 %v2059, %v2488
      %v2525 = vadd.f32 %v2062, %v2491
      %v2526 = vld [vmem:[%s951] sm:$0xf]
      %v2527 = vld [vmem:[%s951 + $0x4] sm:$0xf]
      %v2528 = vld [vmem:[%s951 + $0xc] sm:$0xf]
      %v2529 = vld [vmem:[%s951 + $0x10] sm:$0xf]
      %v2530 = vld [vmem:[%s951 + $0x18] sm:$0xf]
      %v2531 = vld [vmem:[%s951 + $0x1c] sm:$0xf]
      %v2532 = vld [vmem:[%s951 + $0x24] sm:$0xf]
      %v2533 = vld [vmem:[%s951 + $0x28] sm:$0xf]
      %v2534 = vld [vmem:[%s951 + $0x30] sm:$0xf]
      %v2535 = vld [vmem:[%s951 + $0x34] sm:$0xf]
      %v2536 = vld [vmem:[%s951 + $0x3c] sm:$0xf]
      %v2537 = vld [vmem:[%s951 + $0x40] sm:$0xf]
      %v2538 = vld [vmem:[%s951 + $0x48] sm:$0xf]
      %v2539 = vld [vmem:[%s951 + $0x4c] sm:$0xf]
      %v2540 = vld [vmem:[%s951 + $0x54] sm:$0xf]
      %v2541 = vld [vmem:[%s951 + $0x58] sm:$0xf]
      %v2542 = vld [vmem:[%s951 + $0x60] sm:$0xf]
      %v2543 = vld [vmem:[%s951 + $0x64] sm:$0xf]
      %v2544 = vld [vmem:[%s951 + $0x6c] sm:$0xf]
      %v2545 = vld [vmem:[%s951 + $0x70] sm:$0xf]
      %v2546 = vld [vmem:[%s951 + $0x78] sm:$0xf]
      %v2547 = vld [vmem:[%s951 + $0x7c] sm:$0xf]
      %v2548 = vld [vmem:[%s951 + $0x84] sm:$0xf]
      %v2549 = vld [vmem:[%s951 + $0x88] sm:$0xf]
      %v2550 = vld [vmem:[%s951 + $0x90] sm:$0xf]
      %v2551 = vld [vmem:[%s951 + $0x94] sm:$0xf]
      %v2552 = vld [vmem:[%s951 + $0x9c] sm:$0xf]
      %v2553 = vld [vmem:[%s951 + $0xa0] sm:$0xf]
      %v2554 = vld [vmem:[%s951 + $0xa8] sm:$0xf]
      %v2555 = vld [vmem:[%s951 + $0xac] sm:$0xf]
      %v2556 = vld [vmem:[%s951 + $0xb4] sm:$0xf]
      %v2557 = vld [vmem:[%s951 + $0xb8] sm:$0xf]
      %s2558 = scalar_lea.vmem %s3, 24
      %v2559 = vld [vmem:[%s2558] sm:$0xf]
      %v2560 = vld [vmem:[%s2558 + $0x4] sm:$0xf]
      %v2593 = vunpack.c.l.b16 %v2526
      %v2594 = vunpack.c.l.b16 %v2527
      %v2595 = vunpack.c.l.b16 %v2528
      %v2596 = vunpack.c.l.b16 %v2529
      %v2597 = vunpack.c.l.b16 %v2530
      %v2598 = vunpack.c.l.b16 %v2531
      %v2599 = vunpack.c.l.b16 %v2532
      %v2600 = vunpack.c.l.b16 %v2533
      %v2601 = vunpack.c.l.b16 %v2534
      %v2602 = vunpack.c.l.b16 %v2535
      %v2603 = vunpack.c.l.b16 %v2536
      %v2604 = vunpack.c.l.b16 %v2537
      %v2605 = vunpack.c.l.b16 %v2538
      %v2606 = vunpack.c.l.b16 %v2539
      %v2607 = vunpack.c.l.b16 %v2540
      %v2608 = vunpack.c.l.b16 %v2541
      %v2609 = vunpack.c.l.b16 %v2542
      %v2610 = vunpack.c.l.b16 %v2543
      %v2611 = vunpack.c.l.b16 %v2544
      %v2612 = vunpack.c.l.b16 %v2545
      %v2613 = vunpack.c.l.b16 %v2546
      %v2614 = vunpack.c.l.b16 %v2547
      %v2615 = vunpack.c.l.b16 %v2548
      %v2616 = vunpack.c.l.b16 %v2549
      %v2617 = vunpack.c.l.b16 %v2550
      %v2618 = vunpack.c.l.b16 %v2551
      %v2619 = vunpack.c.l.b16 %v2552
      %v2620 = vunpack.c.l.b16 %v2553
      %v2621 = vunpack.c.l.b16 %v2554
      %v2622 = vunpack.c.l.b16 %v2555
      %v2623 = vunpack.c.l.b16 %v2556
      %v2624 = vunpack.c.l.b16 %v2557
      %v2625 = vpack.c.b16 %v2594, %v2593
      %v2626 = vpack.c.b16 %v2596, %v2595
      %v2627 = vpack.c.b16 %v2598, %v2597
      %v2628 = vpack.c.b16 %v2600, %v2599
      %v2629 = vpack.c.b16 %v2602, %v2601
      %v2630 = vpack.c.b16 %v2604, %v2603
      %v2631 = vpack.c.b16 %v2606, %v2605
      %v2632 = vpack.c.b16 %v2608, %v2607
      %v2633 = vpack.c.b16 %v2610, %v2609
      %v2634 = vpack.c.b16 %v2612, %v2611
      %v2635 = vpack.c.b16 %v2614, %v2613
      %v2636 = vpack.c.b16 %v2616, %v2615
      %v2637 = vpack.c.b16 %v2618, %v2617
      %v2638 = vpack.c.b16 %v2620, %v2619
      %v2639 = vpack.c.b16 %v2622, %v2621
      %v2640 = vpack.c.b16 %v2624, %v2623
      %v2643 = vunpack.c.l.b16 %v2559
      %v2644 = vunpack.c.l.b16 %v2560
      %v2645 = vpack.c.b16 %v2644, %v2643
      %v2648 = vsel %vm1560, %v2625, 0
      %v2651 = vsel %vm1560, %v2626, 0
      %v2654 = vsel %vm1560, %v2627, 0
      %v2657 = vsel %vm1560, %v2628, 0
      %v2660 = vsel %vm1560, %v2629, 0
      %v2663 = vsel %vm1560, %v2630, 0
      %v2666 = vsel %vm1560, %v2631, 0
      %v2669 = vsel %vm1560, %v2632, 0
      %v2672 = vsel %vm1560, %v2633, 0
      %v2675 = vsel %vm1560, %v2634, 0
      %v2678 = vsel %vm1560, %v2635, 0
      %v2681 = vsel %vm1560, %v2636, 0
      %v2684 = vsel %vm1560, %v2637, 0
      %v2687 = vsel %vm1560, %v2638, 0
      %v2690 = vsel %vm1560, %v2639, 0
      %v2693 = vsel %vm1560, %v2640, 0
      %2695 = vmatprep.subr.bf16.mxu0 0
      %2696 = vmatpush1.bf16.msra.mxu0 %v2645
      %2697 = vmatprep.subr.bf16.mxu0 0
      %2698 = vmatpush1.bf16.msra.mxu0 0
      %2699 = vmatprep.subr.bf16.mxu0 0
      %2700 = vmatpush1.bf16.msra.mxu0 0
      %2701 = vmatprep.subr.bf16.mxu0 0
      %2702 = vmatpush1.bf16.msra.mxu0 0
      %2703 = vmatprep.subr.bf16.mxu0 0
      %2704 = vmatpush1.bf16.msra.mxu0 0
      %2705 = vmatprep.subr.bf16.mxu0 0
      %2706 = vmatpush1.bf16.msra.mxu0 0
      %2707 = vmatprep.subr.bf16.mxu0 0
      %2708 = vmatpush1.bf16.msra.mxu0 0
      %2709 = vmatprep.subr.bf16.mxu0 0
      %2710 = vmatpush1.bf16.msra.mxu0 0
      %2711 = vmatprep.subr.bf16.mxu0 0
      %2712 = vmatpush1.bf16.msra.mxu0 0
      %2713 = vmatprep.subr.bf16.mxu0 0
      %2714 = vmatpush1.bf16.msra.mxu0 0
      %2715 = vmatprep.subr.bf16.mxu0 0
      %2716 = vmatpush1.bf16.msra.mxu0 0
      %2717 = vmatprep.subr.bf16.mxu0 0
      %2718 = vmatpush1.bf16.msra.mxu0 0
      %2719 = vmatprep.subr.bf16.mxu0 0
      %2720 = vmatpush1.bf16.msra.mxu0 0
      %2721 = vmatprep.subr.bf16.mxu0 0
      %2722 = vmatpush1.bf16.msra.mxu0 0
      %2723 = vmatprep.subr.bf16.mxu0 0
      %2724 = vmatpush1.bf16.msra.mxu0 0
      %2725 = vmatprep.subr.bf16.mxu0 0
      %2726 = vmatpush1.bf16.msra.mxu0 0
      %2727 = vmatprep.mubr.bf16.mxu0 0
      %2728 = vmatmul.mubr.bf16.gmra.mrb[0].mxu0 %v2648
      %v2729 = vpop.f32.mrb[0].mxu0
      %v2730 = vadd.f32 0.0, %v2729
      %v2731 = vpop.f32.mrb[0].mxu0
      %v2732 = vpop.f32.mrb[0].mxu0
      %v2733 = vadd.f32 0.0, %v2732
      %v2734 = vpop.f32.mrb[0].mxu0
      %2735 = vmatprep.mubr.bf16.mxu0 0
      %2736 = vmatmul.mubr.bf16.gmra.mrb[0].mxu0 %v2651
      %v2737 = vpop.f32.mrb[0].mxu0
      %v2738 = vadd.f32 0.0, %v2737
      %v2739 = vpop.f32.mrb[0].mxu0
      %v2740 = vpop.f32.mrb[0].mxu0
      %v2741 = vadd.f32 0.0, %v2740
      %v2742 = vpop.f32.mrb[0].mxu0
      %2743 = vmatprep.mubr.bf16.mxu0 0
      %2744 = vmatmul.mubr.bf16.gmra.mrb[0].mxu0 %v2654
      %v2745 = vpop.f32.mrb[0].mxu0
      %v2746 = vadd.f32 0.0, %v2745
      %v2747 = vpop.f32.mrb[0].mxu0
      %v2748 = vpop.f32.mrb[0].mxu0
      %v2749 = vadd.f32 0.0, %v2748
      %v2750 = vpop.f32.mrb[0].mxu0
      %2751 = vmatprep.mubr.bf16.mxu0 0
      %2752 = vmatmul.mubr.bf16.gmra.mrb[0].mxu0 %v2657
      %v2753 = vpop.f32.mrb[0].mxu0
      %v2754 = vadd.f32 0.0, %v2753
      %v2755 = vpop.f32.mrb[0].mxu0
      %v2756 = vpop.f32.mrb[0].mxu0
      %v2757 = vadd.f32 0.0, %v2756
      %v2758 = vpop.f32.mrb[0].mxu0
      %2759 = vmatprep.mubr.bf16.mxu0 0
      %2760 = vmatmul.mubr.bf16.gmra.mrb[0].mxu0 %v2660
      %v2761 = vpop.f32.mrb[0].mxu0
      %v2762 = vadd.f32 0.0, %v2761
      %v2763 = vpop.f32.mrb[0].mxu0
      %v2764 = vpop.f32.mrb[0].mxu0
      %v2765 = vadd.f32 0.0, %v2764
      %v2766 = vpop.f32.mrb[0].mxu0
      %2767 = vmatprep.mubr.bf16.mxu0 0
      %2768 = vmatmul.mubr.bf16.gmra.mrb[0].mxu0 %v2663
      %v2769 = vpop.f32.mrb[0].mxu0
      %v2770 = vadd.f32 0.0, %v2769
      %v2771 = vpop.f32.mrb[0].mxu0
      %v2772 = vpop.f32.mrb[0].mxu0
      %v2773 = vadd.f32 0.0, %v2772
      %v2774 = vpop.f32.mrb[0].mxu0
      %2775 = vmatprep.mubr.bf16.mxu0 0
      %2776 = vmatmul.mubr.bf16.gmra.mrb[0].mxu0 %v2666
      %v2777 = vpop.f32.mrb[0].mxu0
      %v2778 = vadd.f32 0.0, %v2777
      %v2779 = vpop.f32.mrb[0].mxu0
      %v2780 = vpop.f32.mrb[0].mxu0
      %v2781 = vadd.f32 0.0, %v2780
      %v2782 = vpop.f32.mrb[0].mxu0
      %2783 = vmatprep.mubr.bf16.mxu0 0
      %2784 = vmatmul.mubr.bf16.gmra.mrb[0].mxu0 %v2669
      %v2785 = vpop.f32.mrb[0].mxu0
      %v2786 = vadd.f32 0.0, %v2785
      %v2787 = vpop.f32.mrb[0].mxu0
      %v2788 = vpop.f32.mrb[0].mxu0
      %v2789 = vadd.f32 0.0, %v2788
      %v2790 = vpop.f32.mrb[0].mxu0
      %2791 = vmatprep.mubr.bf16.mxu0 0
      %2792 = vmatmul.mubr.bf16.gmra.mrb[0].mxu0 %v2672
      %v2793 = vpop.f32.mrb[0].mxu0
      %v2794 = vadd.f32 0.0, %v2793
      %v2795 = vpop.f32.mrb[0].mxu0
      %v2796 = vpop.f32.mrb[0].mxu0
      %v2797 = vadd.f32 0.0, %v2796
      %v2798 = vpop.f32.mrb[0].mxu0
      %2799 = vmatprep.mubr.bf16.mxu0 0
      %2800 = vmatmul.mubr.bf16.gmra.mrb[0].mxu0 %v2675
      %v2801 = vpop.f32.mrb[0].mxu0
      %v2802 = vadd.f32 0.0, %v2801
      %v2803 = vpop.f32.mrb[0].mxu0
      %v2804 = vpop.f32.mrb[0].mxu0
      %v2805 = vadd.f32 0.0, %v2804
      %v2806 = vpop.f32.mrb[0].mxu0
      %2807 = vmatprep.mubr.bf16.mxu0 0
      %2808 = vmatmul.mubr.bf16.gmra.mrb[0].mxu0 %v2678
      %v2809 = vpop.f32.mrb[0].mxu0
      %v2810 = vadd.f32 0.0, %v2809
      %v2811 = vpop.f32.mrb[0].mxu0
      %v2812 = vpop.f32.mrb[0].mxu0
      %v2813 = vadd.f32 0.0, %v2812
      %v2814 = vpop.f32.mrb[0].mxu0
      %2815 = vmatprep.mubr.bf16.mxu0 0
      %2816 = vmatmul.mubr.bf16.gmra.mrb[0].mxu0 %v2681
      %v2817 = vpop.f32.mrb[0].mxu0
      %v2818 = vadd.f32 0.0, %v2817
      %v2819 = vpop.f32.mrb[0].mxu0
      %v2820 = vpop.f32.mrb[0].mxu0
      %v2821 = vadd.f32 0.0, %v2820
      %v2822 = vpop.f32.mrb[0].mxu0
      %2823 = vmatprep.mubr.bf16.mxu0 0
      %2824 = vmatmul.mubr.bf16.gmra.mrb[0].mxu0 %v2684
      %v2825 = vpop.f32.mrb[0].mxu0
      %v2826 = vadd.f32 0.0, %v2825
      %v2827 = vpop.f32.mrb[0].mxu0
      %v2828 = vpop.f32.mrb[0].mxu0
      %v2829 = vadd.f32 0.0, %v2828
      %v2830 = vpop.f32.mrb[0].mxu0
      %2831 = vmatprep.mubr.bf16.mxu0 0
      %2832 = vmatmul.mubr.bf16.gmra.mrb[0].mxu0 %v2687
      %v2833 = vpop.f32.mrb[0].mxu0
      %v2834 = vadd.f32 0.0, %v2833
      %v2835 = vpop.f32.mrb[0].mxu0
      %v2836 = vpop.f32.mrb[0].mxu0
      %v2837 = vadd.f32 0.0, %v2836
      %v2838 = vpop.f32.mrb[0].mxu0
      %2839 = vmatprep.mubr.bf16.mxu0 0
      %2840 = vmatmul.mubr.bf16.gmra.mrb[0].mxu0 %v2690
      %v2841 = vpop.f32.mrb[0].mxu0
      %v2842 = vadd.f32 0.0, %v2841
      %v2843 = vpop.f32.mrb[0].mxu0
      %v2844 = vpop.f32.mrb[0].mxu0
      %v2845 = vadd.f32 0.0, %v2844
      %v2846 = vpop.f32.mrb[0].mxu0
      %2847 = vmatprep.mubr.bf16.mxu0 0
      %2848 = vmatmul.mubr.bf16.gmra.mrb[0].mxu0 %v2693
      %v2849 = vpop.f32.mrb[0].mxu0
      %v2850 = vadd.f32 0.0, %v2849
      %v2851 = vpop.f32.mrb[0].mxu0
      %v2852 = vpop.f32.mrb[0].mxu0
      %v2853 = vadd.f32 0.0, %v2852
      %v2854 = vpop.f32.mrb[0].mxu0
      %2855 = vdwg.mxu0
      %v2856 = vadd.f32 %v2494, %v2730
      %v2857 = vadd.f32 %v2495, %v2733
      %v2858 = vadd.f32 %v2496, %v2738
      %v2859 = vadd.f32 %v2497, %v2741
      %v2860 = vadd.f32 %v2498, %v2746
      %v2861 = vadd.f32 %v2499, %v2749
      %v2862 = vadd.f32 %v2500, %v2754
      %v2863 = vadd.f32 %v2501, %v2757
      %v2864 = vadd.f32 %v2502, %v2762
      %v2865 = vadd.f32 %v2503, %v2765
      %v2866 = vadd.f32 %v2504, %v2770
      %v2867 = vadd.f32 %v2505, %v2773
      %v2868 = vadd.f32 %v2506, %v2778
      %v2869 = vadd.f32 %v2507, %v2781
      %v2870 = vadd.f32 %v2508, %v2786
      %v2871 = vadd.f32 %v2509, %v2789
      %v2872 = vadd.f32 %v2510, %v2794
      %v2873 = vadd.f32 %v2511, %v2797
      %v2874 = vadd.f32 %v2512, %v2802
      %v2875 = vadd.f32 %v2513, %v2805
      %v2876 = vadd.f32 %v2514, %v2810
      %v2877 = vadd.f32 %v2515, %v2813
      %v2878 = vadd.f32 %v2516, %v2818
      %v2879 = vadd.f32 %v2517, %v2821
      %v2880 = vadd.f32 %v2518, %v2826
      %v2881 = vadd.f32 %v2519, %v2829
      %v2882 = vadd.f32 %v2520, %v2834
      %v2883 = vadd.f32 %v2521, %v2837
      %v2884 = vadd.f32 %v2522, %v2842
      %v2885 = vadd.f32 %v2523, %v2845
      %v2886 = vadd.f32 %v2524, %v2850
      %v2887 = vadd.f32 %v2525, %v2853
      %v2888 = vld [vmem:[%s951] sm:$0xf]
      %v2889 = vld [vmem:[%s951 + $0x4] sm:$0xf]
      %v2890 = vld [vmem:[%s951 + $0x8] sm:$0x1]
      %v2891 = vld [vmem:[%s951 + $0xc] sm:$0xf]
      %v2892 = vld [vmem:[%s951 + $0x10] sm:$0xf]
      %v2893 = vld [vmem:[%s951 + $0x14] sm:$0x1]
      %v2894 = vld [vmem:[%s951 + $0x18] sm:$0xf]
      %v2895 = vld [vmem:[%s951 + $0x1c] sm:$0xf]
      %v2896 = vld [vmem:[%s951 + $0x20] sm:$0x1]
      %v2897 = vld [vmem:[%s951 + $0x24] sm:$0xf]
      %v2898 = vld [vmem:[%s951 + $0x28] sm:$0xf]
      %v2899 = vld [vmem:[%s951 + $0x2c] sm:$0x1]
      %v2900 = vld [vmem:[%s951 + $0x30] sm:$0xf]
      %v2901 = vld [vmem:[%s951 + $0x34] sm:$0xf]
      %v2902 = vld [vmem:[%s951 + $0x38] sm:$0x1]
      %v2903 = vld [vmem:[%s951 + $0x3c] sm:$0xf]
      %v2904 = vld [vmem:[%s951 + $0x40] sm:$0xf]
      %v2905 = vld [vmem:[%s951 + $0x44] sm:$0x1]
      %v2906 = vld [vmem:[%s951 + $0x48] sm:$0xf]
      %v2907 = vld [vmem:[%s951 + $0x4c] sm:$0xf]
      %v2908 = vld [vmem:[%s951 + $0x50] sm:$0x1]
      %v2909 = vld [vmem:[%s951 + $0x54] sm:$0xf]
      %v2910 = vld [vmem:[%s951 + $0x58] sm:$0xf]
      %v2911 = vld [vmem:[%s951 + $0x5c] sm:$0x1]
      %v2912 = vld [vmem:[%s951 + $0x60] sm:$0xf]
      %v2913 = vld [vmem:[%s951 + $0x64] sm:$0xf]
      %v2914 = vld [vmem:[%s951 + $0x68] sm:$0x1]
      %v2915 = vld [vmem:[%s951 + $0x6c] sm:$0xf]
      %v2916 = vld [vmem:[%s951 + $0x70] sm:$0xf]
      %v2917 = vld [vmem:[%s951 + $0x74] sm:$0x1]
      %v2918 = vld [vmem:[%s951 + $0x78] sm:$0xf]
      %v2919 = vld [vmem:[%s951 + $0x7c] sm:$0xf]
      %v2920 = vld [vmem:[%s951 + $0x80] sm:$0x1]
      %v2921 = vld [vmem:[%s951 + $0x84] sm:$0xf]
      %v2922 = vld [vmem:[%s951 + $0x88] sm:$0xf]
      %v2923 = vld [vmem:[%s951 + $0x8c] sm:$0x1]
      %v2924 = vld [vmem:[%s951 + $0x90] sm:$0xf]
      %v2925 = vld [vmem:[%s951 + $0x94] sm:$0xf]
      %v2926 = vld [vmem:[%s951 + $0x98] sm:$0x1]
      %v2927 = vld [vmem:[%s951 + $0x9c] sm:$0xf]
      %v2928 = vld [vmem:[%s951 + $0xa0] sm:$0xf]
      %v2929 = vld [vmem:[%s951 + $0xa4] sm:$0x1]
      %v2930 = vld [vmem:[%s951 + $0xa8] sm:$0xf]
      %v2931 = vld [vmem:[%s951 + $0xac] sm:$0xf]
      %v2932 = vld [vmem:[%s951 + $0xb0] sm:$0x1]
      %v2933 = vld [vmem:[%s951 + $0xb4] sm:$0xf]
      %v2934 = vld [vmem:[%s951 + $0xb8] sm:$0xf]
      %v2935 = vld [vmem:[%s951 + $0xbc] sm:$0x1]
      %v2937 = vshrl.u32 %v2888, 16
      %v2939 = vrot.slane %v2937, 4
      %v2940 = vshll.u32 %v2888, 16
      %v2942 = vrot.slane %v2940, 5
      %v2943 = vor.u32 %v2939, %v2942
      %v2944 = vrot.slane %v2943, 4
      %v2946 = vshll.u32 %v2889, 16
      %v2948 = vrot.slane %v2946, 5
      %v2949 = vsel %vm1118, %v2944, %v2948
      %v2950 = vshrl.u32 %v2889, 16
      %v2952 = vrot.slane %v2950, 4
      %v2953 = vor.u32 %v2952, %v2948
      %v2954 = vrot.slane %v2953, 4
      %v2956 = vshll.u32 %v2890, 16
      %v2958 = vrot.slane %v2956, 5
      %v2959 = vsel %vm1118, %v2954, %v2958
      %v2961 = vshrl.u32 %v2891, 16
      %v2963 = vrot.slane %v2961, 4
      %v2964 = vshll.u32 %v2891, 16
      %v2966 = vrot.slane %v2964, 5
      %v2967 = vor.u32 %v2963, %v2966
      %v2968 = vrot.slane %v2967, 4
      %v2970 = vshll.u32 %v2892, 16
      %v2972 = vrot.slane %v2970, 5
      %v2973 = vsel %vm1118, %v2968, %v2972
      %v2974 = vshrl.u32 %v2892, 16
      %v2976 = vrot.slane %v2974, 4
      %v2977 = vor.u32 %v2976, %v2972
      %v2978 = vrot.slane %v2977, 4
      %v2980 = vshll.u32 %v2893, 16
      %v2982 = vrot.slane %v2980, 5
      %v2983 = vsel %vm1118, %v2978, %v2982
      %v2985 = vshrl.u32 %v2894, 16
      %v2987 = vrot.slane %v2985, 4
      %v2988 = vshll.u32 %v2894, 16
      %v2990 = vrot.slane %v2988, 5
      %v2991 = vor.u32 %v2987, %v2990
      %v2992 = vrot.slane %v2991, 4
      %v2994 = vshll.u32 %v2895, 16
      %v2996 = vrot.slane %v2994, 5
      %v2997 = vsel %vm1118, %v2992, %v2996
      %v2998 = vshrl.u32 %v2895, 16
      %v3000 = vrot.slane %v2998, 4
      %v3001 = vor.u32 %v3000, %v2996
      %v3002 = vrot.slane %v3001, 4
      %v3004 = vshll.u32 %v2896, 16
      %v3006 = vrot.slane %v3004, 5
      %v3007 = vsel %vm1118, %v3002, %v3006
      %v3009 = vshrl.u32 %v2897, 16
      %v3011 = vrot.slane %v3009, 4
      %v3012 = vshll.u32 %v2897, 16
      %v3014 = vrot.slane %v3012, 5
      %v3015 = vor.u32 %v3011, %v3014
      %v3016 = vrot.slane %v3015, 4
      %v3018 = vshll.u32 %v2898, 16
      %v3020 = vrot.slane %v3018, 5
      %v3021 = vsel %vm1118, %v3016, %v3020
      %v3022 = vshrl.u32 %v2898, 16
      %v3024 = vrot.slane %v3022, 4
      %v3025 = vor.u32 %v3024, %v3020
      %v3026 = vrot.slane %v3025, 4
      %v3028 = vshll.u32 %v2899, 16
      %v3030 = vrot.slane %v3028, 5
      %v3031 = vsel %vm1118, %v3026, %v3030
      %v3033 = vshrl.u32 %v2900, 16
      %v3035 = vrot.slane %v3033, 4
      %v3036 = vshll.u32 %v2900, 16
      %v3038 = vrot.slane %v3036, 5
      %v3039 = vor.u32 %v3035, %v3038
      %v3040 = vrot.slane %v3039, 4
      %v3042 = vshll.u32 %v2901, 16
      %v3044 = vrot.slane %v3042, 5
      %v3045 = vsel %vm1118, %v3040, %v3044
      %v3046 = vshrl.u32 %v2901, 16
      %v3048 = vrot.slane %v3046, 4
      %v3049 = vor.u32 %v3048, %v3044
      %v3050 = vrot.slane %v3049, 4
      %v3052 = vshll.u32 %v2902, 16
      %v3054 = vrot.slane %v3052, 5
      %v3055 = vsel %vm1118, %v3050, %v3054
      %v3057 = vshrl.u32 %v2903, 16
      %v3059 = vrot.slane %v3057, 4
      %v3060 = vshll.u32 %v2903, 16
      %v3062 = vrot.slane %v3060, 5
      %v3063 = vor.u32 %v3059, %v3062
      %v3064 = vrot.slane %v3063, 4
      %v3066 = vshll.u32 %v2904, 16
      %v3068 = vrot.slane %v3066, 5
      %v3069 = vsel %vm1118, %v3064, %v3068
      %v3070 = vshrl.u32 %v2904, 16
      %v3072 = vrot.slane %v3070, 4
      %v3073 = vor.u32 %v3072, %v3068
      %v3074 = vrot.slane %v3073, 4
      %v3076 = vshll.u32 %v2905, 16
      %v3078 = vrot.slane %v3076, 5
      %v3079 = vsel %vm1118, %v3074, %v3078
      %v3081 = vshrl.u32 %v2906, 16
      %v3083 = vrot.slane %v3081, 4
      %v3084 = vshll.u32 %v2906, 16
      %v3086 = vrot.slane %v3084, 5
      %v3087 = vor.u32 %v3083, %v3086
      %v3088 = vrot.slane %v3087, 4
      %v3090 = vshll.u32 %v2907, 16
      %v3092 = vrot.slane %v3090, 5
      %v3093 = vsel %vm1118, %v3088, %v3092
      %v3094 = vshrl.u32 %v2907, 16
      %v3096 = vrot.slane %v3094, 4
      %v3097 = vor.u32 %v3096, %v3092
      %v3098 = vrot.slane %v3097, 4
      %v3100 = vshll.u32 %v2908, 16
      %v3102 = vrot.slane %v3100, 5
      %v3103 = vsel %vm1118, %v3098, %v3102
      %v3105 = vshrl.u32 %v2909, 16
      %v3107 = vrot.slane %v3105, 4
      %v3108 = vshll.u32 %v2909, 16
      %v3110 = vrot.slane %v3108, 5
      %v3111 = vor.u32 %v3107, %v3110
      %v3112 = vrot.slane %v3111, 4
      %v3114 = vshll.u32 %v2910, 16
      %v3116 = vrot.slane %v3114, 5
      %v3117 = vsel %vm1118, %v3112, %v3116
      %v3118 = vshrl.u32 %v2910, 16
      %v3120 = vrot.slane %v3118, 4
      %v3121 = vor.u32 %v3120, %v3116
      %v3122 = vrot.slane %v3121, 4
      %v3124 = vshll.u32 %v2911, 16
      %v3126 = vrot.slane %v3124, 5
      %v3127 = vsel %vm1118, %v3122, %v3126
      %v3129 = vshrl.u32 %v2912, 16
      %v3131 = vrot.slane %v3129, 4
      %v3132 = vshll.u32 %v2912, 16
      %v3134 = vrot.slane %v3132, 5
      %v3135 = vor.u32 %v3131, %v3134
      %v3136 = vrot.slane %v3135, 4
      %v3138 = vshll.u32 %v2913, 16
      %v3140 = vrot.slane %v3138, 5
      %v3141 = vsel %vm1118, %v3136, %v3140
      %v3142 = vshrl.u32 %v2913, 16
      %v3144 = vrot.slane %v3142, 4
      %v3145 = vor.u32 %v3144, %v3140
      %v3146 = vrot.slane %v3145, 4
      %v3148 = vshll.u32 %v2914, 16
      %v3150 = vrot.slane %v3148, 5
      %v3151 = vsel %vm1118, %v3146, %v3150
      %v3153 = vshrl.u32 %v2915, 16
      %v3155 = vrot.slane %v3153, 4
      %v3156 = vshll.u32 %v2915, 16
      %v3158 = vrot.slane %v3156, 5
      %v3159 = vor.u32 %v3155, %v3158
      %v3160 = vrot.slane %v3159, 4
      %v3162 = vshll.u32 %v2916, 16
      %v3164 = vrot.slane %v3162, 5
      %v3165 = vsel %vm1118, %v3160, %v3164
      %v3166 = vshrl.u32 %v2916, 16
      %v3168 = vrot.slane %v3166, 4
      %v3169 = vor.u32 %v3168, %v3164
      %v3170 = vrot.slane %v3169, 4
      %v3172 = vshll.u32 %v2917, 16
      %v3174 = vrot.slane %v3172, 5
      %v3175 = vsel %vm1118, %v3170, %v3174
      %v3177 = vshrl.u32 %v2918, 16
      %v3179 = vrot.slane %v3177, 4
      %v3180 = vshll.u32 %v2918, 16
      %v3182 = vrot.slane %v3180, 5
      %v3183 = vor.u32 %v3179, %v3182
      %v3184 = vrot.slane %v3183, 4
      %v3186 = vshll.u32 %v2919, 16
      %v3188 = vrot.slane %v3186, 5
      %v3189 = vsel %vm1118, %v3184, %v3188
      %v3190 = vshrl.u32 %v2919, 16
      %v3192 = vrot.slane %v3190, 4
      %v3193 = vor.u32 %v3192, %v3188
      %v3194 = vrot.slane %v3193, 4
      %v3196 = vshll.u32 %v2920, 16
      %v3198 = vrot.slane %v3196, 5
      %v3199 = vsel %vm1118, %v3194, %v3198
      %v3201 = vshrl.u32 %v2921, 16
      %v3203 = vrot.slane %v3201, 4
      %v3204 = vshll.u32 %v2921, 16
      %v3206 = vrot.slane %v3204, 5
      %v3207 = vor.u32 %v3203, %v3206
      %v3208 = vrot.slane %v3207, 4
      %v3210 = vshll.u32 %v2922, 16
      %v3212 = vrot.slane %v3210, 5
      %v3213 = vsel %vm1118, %v3208, %v3212
      %v3214 = vshrl.u32 %v2922, 16
      %v3216 = vrot.slane %v3214, 4
      %v3217 = vor.u32 %v3216, %v3212
      %v3218 = vrot.slane %v3217, 4
      %v3220 = vshll.u32 %v2923, 16
      %v3222 = vrot.slane %v3220, 5
      %v3223 = vsel %vm1118, %v3218, %v3222
      %v3225 = vshrl.u32 %v2924, 16
      %v3227 = vrot.slane %v3225, 4
      %v3228 = vshll.u32 %v2924, 16
      %v3230 = vrot.slane %v3228, 5
      %v3231 = vor.u32 %v3227, %v3230
      %v3232 = vrot.slane %v3231, 4
      %v3234 = vshll.u32 %v2925, 16
      %v3236 = vrot.slane %v3234, 5
      %v3237 = vsel %vm1118, %v3232, %v3236
      %v3238 = vshrl.u32 %v2925, 16
      %v3240 = vrot.slane %v3238, 4
      %v3241 = vor.u32 %v3240, %v3236
      %v3242 = vrot.slane %v3241, 4
      %v3244 = vshll.u32 %v2926, 16
      %v3246 = vrot.slane %v3244, 5
      %v3247 = vsel %vm1118, %v3242, %v3246
      %v3249 = vshrl.u32 %v2927, 16
      %v3251 = vrot.slane %v3249, 4
      %v3252 = vshll.u32 %v2927, 16
      %v3254 = vrot.slane %v3252, 5
      %v3255 = vor.u32 %v3251, %v3254
      %v3256 = vrot.slane %v3255, 4
      %v3258 = vshll.u32 %v2928, 16
      %v3260 = vrot.slane %v3258, 5
      %v3261 = vsel %vm1118, %v3256, %v3260
      %v3262 = vshrl.u32 %v2928, 16
      %v3264 = vrot.slane %v3262, 4
      %v3265 = vor.u32 %v3264, %v3260
      %v3266 = vrot.slane %v3265, 4
      %v3268 = vshll.u32 %v2929, 16
      %v3270 = vrot.slane %v3268, 5
      %v3271 = vsel %vm1118, %v3266, %v3270
      %v3273 = vshrl.u32 %v2930, 16
      %v3275 = vrot.slane %v3273, 4
      %v3276 = vshll.u32 %v2930, 16
      %v3278 = vrot.slane %v3276, 5
      %v3279 = vor.u32 %v3275, %v3278
      %v3280 = vrot.slane %v3279, 4
      %v3282 = vshll.u32 %v2931, 16
      %v3284 = vrot.slane %v3282, 5
      %v3285 = vsel %vm1118, %v3280, %v3284
      %v3286 = vshrl.u32 %v2931, 16
      %v3288 = vrot.slane %v3286, 4
      %v3289 = vor.u32 %v3288, %v3284
      %v3290 = vrot.slane %v3289, 4
      %v3292 = vshll.u32 %v2932, 16
      %v3294 = vrot.slane %v3292, 5
      %v3295 = vsel %vm1118, %v3290, %v3294
      %v3297 = vshrl.u32 %v2933, 16
      %v3299 = vrot.slane %v3297, 4
      %v3300 = vshll.u32 %v2933, 16
      %v3302 = vrot.slane %v3300, 5
      %v3303 = vor.u32 %v3299, %v3302
      %v3304 = vrot.slane %v3303, 4
      %v3306 = vshll.u32 %v2934, 16
      %v3308 = vrot.slane %v3306, 5
      %v3309 = vsel %vm1118, %v3304, %v3308
      %v3310 = vshrl.u32 %v2934, 16
      %v3312 = vrot.slane %v3310, 4
      %v3313 = vor.u32 %v3312, %v3308
      %v3314 = vrot.slane %v3313, 4
      %v3316 = vshll.u32 %v2935, 16
      %v3318 = vrot.slane %v3316, 5
      %v3319 = vsel %vm1118, %v3314, %v3318
      %s3320 = scalar_lea.vmem %s3, 32
      %v3321 = vld [vmem:[%s3320] sm:$0xf]
      %v3322 = vld [vmem:[%s3320 + $0x4] sm:$0xf]
      %v3323 = vunpack.c.l.b16 %v2949
      %v3324 = vunpack.c.l.b16 %v2959
      %v3325 = vunpack.c.l.b16 %v2973
      %v3326 = vunpack.c.l.b16 %v2983
      %v3327 = vunpack.c.l.b16 %v2997
      %v3328 = vunpack.c.l.b16 %v3007
      %v3329 = vunpack.c.l.b16 %v3021
      %v3330 = vunpack.c.l.b16 %v3031
      %v3331 = vunpack.c.l.b16 %v3045
      %v3332 = vunpack.c.l.b16 %v3055
      %v3333 = vunpack.c.l.b16 %v3069
      %v3334 = vunpack.c.l.b16 %v3079
      %v3335 = vunpack.c.l.b16 %v3093
      %v3336 = vunpack.c.l.b16 %v3103
      %v3337 = vunpack.c.l.b16 %v3117
      %v3338 = vunpack.c.l.b16 %v3127
      %v3339 = vunpack.c.l.b16 %v3141
      %v3340 = vunpack.c.l.b16 %v3151
      %v3341 = vunpack.c.l.b16 %v3165
      %v3342 = vunpack.c.l.b16 %v3175
      %v3343 = vunpack.c.l.b16 %v3189
      %v3344 = vunpack.c.l.b16 %v3199
      %v3345 = vunpack.c.l.b16 %v3213
      %v3346 = vunpack.c.l.b16 %v3223
      %v3347 = vunpack.c.l.b16 %v3237
      %v3348 = vunpack.c.l.b16 %v3247
      %v3349 = vunpack.c.l.b16 %v3261
      %v3350 = vunpack.c.l.b16 %v3271
      %v3351 = vunpack.c.l.b16 %v3285
      %v3352 = vunpack.c.l.b16 %v3295
      %v3353 = vunpack.c.l.b16 %v3309
      %v3354 = vunpack.c.l.b16 %v3319
      %v3355 = vpack.c.b16 %v3324, %v3323
      %v3356 = vpack.c.b16 %v3326, %v3325
      %v3357 = vpack.c.b16 %v3328, %v3327
      %v3358 = vpack.c.b16 %v3330, %v3329
      %v3359 = vpack.c.b16 %v3332, %v3331
      %v3360 = vpack.c.b16 %v3334, %v3333
      %v3361 = vpack.c.b16 %v3336, %v3335
      %v3362 = vpack.c.b16 %v3338, %v3337
      %v3363 = vpack.c.b16 %v3340, %v3339
      %v3364 = vpack.c.b16 %v3342, %v3341
      %v3365 = vpack.c.b16 %v3344, %v3343
      %v3366 = vpack.c.b16 %v3346, %v3345
      %v3367 = vpack.c.b16 %v3348, %v3347
      %v3368 = vpack.c.b16 %v3350, %v3349
      %v3369 = vpack.c.b16 %v3352, %v3351
      %v3370 = vpack.c.b16 %v3354, %v3353
      %v3373 = vunpack.c.l.b16 %v3321
      %v3374 = vunpack.c.l.b16 %v3322
      %v3375 = vpack.c.b16 %v3374, %v3373
      %v3378 = vsel %vm1560, %v3355, 0
      %v3381 = vsel %vm1560, %v3356, 0
      %v3384 = vsel %vm1560, %v3357, 0
      %v3387 = vsel %vm1560, %v3358, 0
      %v3390 = vsel %vm1560, %v3359, 0
      %v3393 = vsel %vm1560, %v3360, 0
      %v3396 = vsel %vm1560, %v3361, 0
      %v3399 = vsel %vm1560, %v3362, 0
      %v3402 = vsel %vm1560, %v3363, 0
      %v3405 = vsel %vm1560, %v3364, 0
      %v3408 = vsel %vm1560, %v3365, 0
      %v3411 = vsel %vm1560, %v3366, 0
      %v3414 = vsel %vm1560, %v3367, 0
      %v3417 = vsel %vm1560, %v3368, 0
      %v3420 = vsel %vm1560, %v3369, 0
      %v3423 = vsel %vm1560, %v3370, 0
      %3425 = vmatprep.subr.bf16.mxu0 0
      %3426 = vmatpush1.bf16.msra.mxu0 %v3375
      %3427 = vmatprep.subr.bf16.mxu0 0
      %3428 = vmatpush1.bf16.msra.mxu0 0
      %3429 = vmatprep.subr.bf16.mxu0 0
      %3430 = vmatpush1.bf16.msra.mxu0 0
      %3431 = vmatprep.subr.bf16.mxu0 0
      %3432 = vmatpush1.bf16.msra.mxu0 0
      %3433 = vmatprep.subr.bf16.mxu0 0
      %3434 = vmatpush1.bf16.msra.mxu0 0
      %3435 = vmatprep.subr.bf16.mxu0 0
      %3436 = vmatpush1.bf16.msra.mxu0 0
      %3437 = vmatprep.subr.bf16.mxu0 0
      %3438 = vmatpush1.bf16.msra.mxu0 0
      %3439 = vmatprep.subr.bf16.mxu0 0
      %3440 = vmatpush1.bf16.msra.mxu0 0
      %3441 = vmatprep.subr.bf16.mxu0 0
      %3442 = vmatpush1.bf16.msra.mxu0 0
      %3443 = vmatprep.subr.bf16.mxu0 0
      %3444 = vmatpush1.bf16.msra.mxu0 0
      %3445 = vmatprep.subr.bf16.mxu0 0
      %3446 = vmatpush1.bf16.msra.mxu0 0
      %3447 = vmatprep.subr.bf16.mxu0 0
      %3448 = vmatpush1.bf16.msra.mxu0 0
      %3449 = vmatprep.subr.bf16.mxu0 0
      %3450 = vmatpush1.bf16.msra.mxu0 0
      %3451 = vmatprep.subr.bf16.mxu0 0
      %3452 = vmatpush1.bf16.msra.mxu0 0
      %3453 = vmatprep.subr.bf16.mxu0 0
      %3454 = vmatpush1.bf16.msra.mxu0 0
      %3455 = vmatprep.subr.bf16.mxu0 0
      %3456 = vmatpush1.bf16.msra.mxu0 0
      %3457 = vmatprep.mubr.bf16.mxu0 0
      %3458 = vmatmul.mubr.bf16.gmra.mrb[0].mxu0 %v3378
      %v3459 = vpop.f32.mrb[0].mxu0
      %v3460 = vadd.f32 0.0, %v3459
      %v3461 = vpop.f32.mrb[0].mxu0
      %v3462 = vpop.f32.mrb[0].mxu0
      %v3463 = vadd.f32 0.0, %v3462
      %v3464 = vpop.f32.mrb[0].mxu0
      %3465 = vmatprep.mubr.bf16.mxu0 0
      %3466 = vmatmul.mubr.bf16.gmra.mrb[0].mxu0 %v3381
      %v3467 = vpop.f32.mrb[0].mxu0
      %v3468 = vadd.f32 0.0, %v3467
      %v3469 = vpop.f32.mrb[0].mxu0
      %v3470 = vpop.f32.mrb[0].mxu0
      %v3471 = vadd.f32 0.0, %v3470
      %v3472 = vpop.f32.mrb[0].mxu0
      %3473 = vmatprep.mubr.bf16.mxu0 0
      %3474 = vmatmul.mubr.bf16.gmra.mrb[0].mxu0 %v3384
      %v3475 = vpop.f32.mrb[0].mxu0
      %v3476 = vadd.f32 0.0, %v3475
      %v3477 = vpop.f32.mrb[0].mxu0
      %v3478 = vpop.f32.mrb[0].mxu0
      %v3479 = vadd.f32 0.0, %v3478
      %v3480 = vpop.f32.mrb[0].mxu0
      %3481 = vmatprep.mubr.bf16.mxu0 0
      %3482 = vmatmul.mubr.bf16.gmra.mrb[0].mxu0 %v3387
      %v3483 = vpop.f32.mrb[0].mxu0
      %v3484 = vadd.f32 0.0, %v3483
      %v3485 = vpop.f32.mrb[0].mxu0
      %v3486 = vpop.f32.mrb[0].mxu0
      %v3487 = vadd.f32 0.0, %v3486
      %v3488 = vpop.f32.mrb[0].mxu0
      %3489 = vmatprep.mubr.bf16.mxu0 0
      %3490 = vmatmul.mubr.bf16.gmra.mrb[0].mxu0 %v3390
      %v3491 = vpop.f32.mrb[0].mxu0
      %v3492 = vadd.f32 0.0, %v3491
      %v3493 = vpop.f32.mrb[0].mxu0
      %v3494 = vpop.f32.mrb[0].mxu0
      %v3495 = vadd.f32 0.0, %v3494
      %v3496 = vpop.f32.mrb[0].mxu0
      %3497 = vmatprep.mubr.bf16.mxu0 0
      %3498 = vmatmul.mubr.bf16.gmra.mrb[0].mxu0 %v3393
      %v3499 = vpop.f32.mrb[0].mxu0
      %v3500 = vadd.f32 0.0, %v3499
      %v3501 = vpop.f32.mrb[0].mxu0
      %v3502 = vpop.f32.mrb[0].mxu0
      %v3503 = vadd.f32 0.0, %v3502
      %v3504 = vpop.f32.mrb[0].mxu0
      %3505 = vmatprep.mubr.bf16.mxu0 0
      %3506 = vmatmul.mubr.bf16.gmra.mrb[0].mxu0 %v3396
      %v3507 = vpop.f32.mrb[0].mxu0
      %v3508 = vadd.f32 0.0, %v3507
      %v3509 = vpop.f32.mrb[0].mxu0
      %v3510 = vpop.f32.mrb[0].mxu0
      %v3511 = vadd.f32 0.0, %v3510
      %v3512 = vpop.f32.mrb[0].mxu0
      %3513 = vmatprep.mubr.bf16.mxu0 0
      %3514 = vmatmul.mubr.bf16.gmra.mrb[0].mxu0 %v3399
      %v3515 = vpop.f32.mrb[0].mxu0
      %v3516 = vadd.f32 0.0, %v3515
      %v3517 = vpop.f32.mrb[0].mxu0
      %v3518 = vpop.f32.mrb[0].mxu0
      %v3519 = vadd.f32 0.0, %v3518
      %v3520 = vpop.f32.mrb[0].mxu0
      %3521 = vmatprep.mubr.bf16.mxu0 0
      %3522 = vmatmul.mubr.bf16.gmra.mrb[0].mxu0 %v3402
      %v3523 = vpop.f32.mrb[0].mxu0
      %v3524 = vadd.f32 0.0, %v3523
      %v3525 = vpop.f32.mrb[0].mxu0
      %v3526 = vpop.f32.mrb[0].mxu0
      %v3527 = vadd.f32 0.0, %v3526
      %v3528 = vpop.f32.mrb[0].mxu0
      %3529 = vmatprep.mubr.bf16.mxu0 0
      %3530 = vmatmul.mubr.bf16.gmra.mrb[0].mxu0 %v3405
      %v3531 = vpop.f32.mrb[0].mxu0
      %v3532 = vadd.f32 0.0, %v3531
      %v3533 = vpop.f32.mrb[0].mxu0
      %v3534 = vpop.f32.mrb[0].mxu0
      %v3535 = vadd.f32 0.0, %v3534
      %v3536 = vpop.f32.mrb[0].mxu0
      %3537 = vmatprep.mubr.bf16.mxu0 0
      %3538 = vmatmul.mubr.bf16.gmra.mrb[0].mxu0 %v3408
      %v3539 = vpop.f32.mrb[0].mxu0
      %v3540 = vadd.f32 0.0, %v3539
      %v3541 = vpop.f32.mrb[0].mxu0
      %v3542 = vpop.f32.mrb[0].mxu0
      %v3543 = vadd.f32 0.0, %v3542
      %v3544 = vpop.f32.mrb[0].mxu0
      %3545 = vmatprep.mubr.bf16.mxu0 0
      %3546 = vmatmul.mubr.bf16.gmra.mrb[0].mxu0 %v3411
      %v3547 = vpop.f32.mrb[0].mxu0
      %v3548 = vadd.f32 0.0, %v3547
      %v3549 = vpop.f32.mrb[0].mxu0
      %v3550 = vpop.f32.mrb[0].mxu0
      %v3551 = vadd.f32 0.0, %v3550
      %v3552 = vpop.f32.mrb[0].mxu0
      %3553 = vmatprep.mubr.bf16.mxu0 0
      %3554 = vmatmul.mubr.bf16.gmra.mrb[0].mxu0 %v3414
      %v3555 = vpop.f32.mrb[0].mxu0
      %v3556 = vadd.f32 0.0, %v3555
      %v3557 = vpop.f32.mrb[0].mxu0
      %v3558 = vpop.f32.mrb[0].mxu0
      %v3559 = vadd.f32 0.0, %v3558
      %v3560 = vpop.f32.mrb[0].mxu0
      %3561 = vmatprep.mubr.bf16.mxu0 0
      %3562 = vmatmul.mubr.bf16.gmra.mrb[0].mxu0 %v3417
      %v3563 = vpop.f32.mrb[0].mxu0
      %v3564 = vadd.f32 0.0, %v3563
      %v3565 = vpop.f32.mrb[0].mxu0
      %v3566 = vpop.f32.mrb[0].mxu0
      %v3567 = vadd.f32 0.0, %v3566
      %v3568 = vpop.f32.mrb[0].mxu0
      %3569 = vmatprep.mubr.bf16.mxu0 0
      %3570 = vmatmul.mubr.bf16.gmra.mrb[0].mxu0 %v3420
      %v3571 = vpop.f32.mrb[0].mxu0
      %v3572 = vadd.f32 0.0, %v3571
      %v3573 = vpop.f32.mrb[0].mxu0
      %v3574 = vpop.f32.mrb[0].mxu0
      %v3575 = vadd.f32 0.0, %v3574
      %v3576 = vpop.f32.mrb[0].mxu0
      %3577 = vmatprep.mubr.bf16.mxu0 0
      %3578 = vmatmul.mubr.bf16.gmra.mrb[0].mxu0 %v3423
      %v3579 = vpop.f32.mrb[0].mxu0
      %v3580 = vadd.f32 0.0, %v3579
      %v3581 = vpop.f32.mrb[0].mxu0
      %v3582 = vpop.f32.mrb[0].mxu0
      %v3583 = vadd.f32 0.0, %v3582
      %v3584 = vpop.f32.mrb[0].mxu0
      %3585 = vdwg.mxu0
      %v3586 = vadd.f32 %v2856, %v3460
      %v3587 = vadd.f32 %v2857, %v3463
      %v3588 = vadd.f32 %v2858, %v3468
      %v3589 = vadd.f32 %v2859, %v3471
      %v3590 = vadd.f32 %v2860, %v3476
      %v3591 = vadd.f32 %v2861, %v3479
      %v3592 = vadd.f32 %v2862, %v3484
      %v3593 = vadd.f32 %v2863, %v3487
      %v3594 = vadd.f32 %v2864, %v3492
      %v3595 = vadd.f32 %v2865, %v3495
      %v3596 = vadd.f32 %v2866, %v3500
      %v3597 = vadd.f32 %v2867, %v3503
      %v3598 = vadd.f32 %v2868, %v3508
      %v3599 = vadd.f32 %v2869, %v3511
      %v3600 = vadd.f32 %v2870, %v3516
      %v3601 = vadd.f32 %v2871, %v3519
      %v3602 = vadd.f32 %v2872, %v3524
      %v3603 = vadd.f32 %v2873, %v3527
      %v3604 = vadd.f32 %v2874, %v3532
      %v3605 = vadd.f32 %v2875, %v3535
      %v3606 = vadd.f32 %v2876, %v3540
      %v3607 = vadd.f32 %v2877, %v3543
      %v3608 = vadd.f32 %v2878, %v3548
      %v3609 = vadd.f32 %v2879, %v3551
      %v3610 = vadd.f32 %v2880, %v3556
      %v3611 = vadd.f32 %v2881, %v3559
      %v3612 = vadd.f32 %v2882, %v3564
      %v3613 = vadd.f32 %v2883, %v3567
      %v3614 = vadd.f32 %v2884, %v3572
      %v3615 = vadd.f32 %v2885, %v3575
      %v3616 = vadd.f32 %v2886, %v3580
      %v3617 = vadd.f32 %v2887, %v3583
      %v3618 = vld [vmem:[%s951] sm:$0xe]
      %v3619 = vld [vmem:[%s951 + $0xc] sm:$0xe]
      %v3620 = vld [vmem:[%s951 + $0x18] sm:$0xe]
      %v3621 = vld [vmem:[%s951 + $0x24] sm:$0xe]
      %v3622 = vld [vmem:[%s951 + $0x30] sm:$0xe]
      %v3623 = vld [vmem:[%s951 + $0x3c] sm:$0xe]
      %v3624 = vld [vmem:[%s951 + $0x48] sm:$0xe]
      %v3625 = vld [vmem:[%s951 + $0x54] sm:$0xe]
      %v3626 = vld [vmem:[%s951 + $0x60] sm:$0xe]
      %v3627 = vld [vmem:[%s951 + $0x6c] sm:$0xe]
      %v3628 = vld [vmem:[%s951 + $0x78] sm:$0xe]
      %v3629 = vld [vmem:[%s951 + $0x84] sm:$0xe]
      %v3630 = vld [vmem:[%s951 + $0x90] sm:$0xe]
      %v3631 = vld [vmem:[%s951 + $0x9c] sm:$0xe]
      %v3632 = vld [vmem:[%s951 + $0xa8] sm:$0xe]
      %v3633 = vld [vmem:[%s951 + $0xb4] sm:$0xe]
      %v3682 = vrot.slane %v3618, 5
      %v3683 = vrot.slane %v3682, 4
      %v3684 = vrot.slane %v2889, 5
      %v3685 = vsel %vm2115, %v3683, %v3684
      %v3686 = vrot.slane %v3684, 4
      %v3687 = vrot.slane %v2890, 5
      %v3688 = vsel %vm2115, %v3686, %v3687
      %v3689 = vrot.slane %v3619, 5
      %v3690 = vrot.slane %v3689, 4
      %v3691 = vrot.slane %v2892, 5
      %v3692 = vsel %vm2115, %v3690, %v3691
      %v3693 = vrot.slane %v3691, 4
      %v3694 = vrot.slane %v2893, 5
      %v3695 = vsel %vm2115, %v3693, %v3694
      %v3696 = vrot.slane %v3620, 5
      %v3697 = vrot.slane %v3696, 4
      %v3698 = vrot.slane %v2895, 5
      %v3699 = vsel %vm2115, %v3697, %v3698
      %v3700 = vrot.slane %v3698, 4
      %v3701 = vrot.slane %v2896, 5
      %v3702 = vsel %vm2115, %v3700, %v3701
      %v3703 = vrot.slane %v3621, 5
      %v3704 = vrot.slane %v3703, 4
      %v3705 = vrot.slane %v2898, 5
      %v3706 = vsel %vm2115, %v3704, %v3705
      %v3707 = vrot.slane %v3705, 4
      %v3708 = vrot.slane %v2899, 5
      %v3709 = vsel %vm2115, %v3707, %v3708
      %v3710 = vrot.slane %v3622, 5
      %v3711 = vrot.slane %v3710, 4
      %v3712 = vrot.slane %v2901, 5
      %v3713 = vsel %vm2115, %v3711, %v3712
      %v3714 = vrot.slane %v3712, 4
      %v3715 = vrot.slane %v2902, 5
      %v3716 = vsel %vm2115, %v3714, %v3715
      %v3717 = vrot.slane %v3623, 5
      %v3718 = vrot.slane %v3717, 4
      %v3719 = vrot.slane %v2904, 5
      %v3720 = vsel %vm2115, %v3718, %v3719
      %v3721 = vrot.slane %v3719, 4
      %v3722 = vrot.slane %v2905, 5
      %v3723 = vsel %vm2115, %v3721, %v3722
      %v3724 = vrot.slane %v3624, 5
      %v3725 = vrot.slane %v3724, 4
      %v3726 = vrot.slane %v2907, 5
      %v3727 = vsel %vm2115, %v3725, %v3726
      %v3728 = vrot.slane %v3726, 4
      %v3729 = vrot.slane %v2908, 5
      %v3730 = vsel %vm2115, %v3728, %v3729
      %v3731 = vrot.slane %v3625, 5
      %v3732 = vrot.slane %v3731, 4
      %v3733 = vrot.slane %v2910, 5
      %v3734 = vsel %vm2115, %v3732, %v3733
      %v3735 = vrot.slane %v3733, 4
      %v3736 = vrot.slane %v2911, 5
      %v3737 = vsel %vm2115, %v3735, %v3736
      %v3738 = vrot.slane %v3626, 5
      %v3739 = vrot.slane %v3738, 4
      %v3740 = vrot.slane %v2913, 5
      %v3741 = vsel %vm2115, %v3739, %v3740
      %v3742 = vrot.slane %v3740, 4
      %v3743 = vrot.slane %v2914, 5
      %v3744 = vsel %vm2115, %v3742, %v3743
      %v3745 = vrot.slane %v3627, 5
      %v3746 = vrot.slane %v3745, 4
      %v3747 = vrot.slane %v2916, 5
      %v3748 = vsel %vm2115, %v3746, %v3747
      %v3749 = vrot.slane %v3747, 4
      %v3750 = vrot.slane %v2917, 5
      %v3751 = vsel %vm2115, %v3749, %v3750
      %v3752 = vrot.slane %v3628, 5
      %v3753 = vrot.slane %v3752, 4
      %v3754 = vrot.slane %v2919, 5
      %v3755 = vsel %vm2115, %v3753, %v3754
      %v3756 = vrot.slane %v3754, 4
      %v3757 = vrot.slane %v2920, 5
      %v3758 = vsel %vm2115, %v3756, %v3757
      %v3759 = vrot.slane %v3629, 5
      %v3760 = vrot.slane %v3759, 4
      %v3761 = vrot.slane %v2922, 5
      %v3762 = vsel %vm2115, %v3760, %v3761
      %v3763 = vrot.slane %v3761, 4
      %v3764 = vrot.slane %v2923, 5
      %v3765 = vsel %vm2115, %v3763, %v3764
      %v3766 = vrot.slane %v3630, 5
      %v3767 = vrot.slane %v3766, 4
      %v3768 = vrot.slane %v2925, 5
      %v3769 = vsel %vm2115, %v3767, %v3768
      %v3770 = vrot.slane %v3768, 4
      %v3771 = vrot.slane %v2926, 5
      %v3772 = vsel %vm2115, %v3770, %v3771
      %v3773 = vrot.slane %v3631, 5
      %v3774 = vrot.slane %v3773, 4
      %v3775 = vrot.slane %v2928, 5
      %v3776 = vsel %vm2115, %v3774, %v3775
      %v3777 = vrot.slane %v3775, 4
      %v3778 = vrot.slane %v2929, 5
      %v3779 = vsel %vm2115, %v3777, %v3778
      %v3780 = vrot.slane %v3632, 5
      %v3781 = vrot.slane %v3780, 4
      %v3782 = vrot.slane %v2931, 5
      %v3783 = vsel %vm2115, %v3781, %v3782
      %v3784 = vrot.slane %v3782, 4
      %v3785 = vrot.slane %v2932, 5
      %v3786 = vsel %vm2115, %v3784, %v3785
      %v3787 = vrot.slane %v3633, 5
      %v3788 = vrot.slane %v3787, 4
      %v3789 = vrot.slane %v2934, 5
      %v3790 = vsel %vm2115, %v3788, %v3789
      %v3791 = vrot.slane %v3789, 4
      %v3792 = vrot.slane %v2935, 5
      %v3793 = vsel %vm2115, %v3791, %v3792
      %s3794 = scalar_lea.vmem %s3, 40
      %v3795 = vld [vmem:[%s3794] sm:$0xf]
      %v3796 = vld [vmem:[%s3794 + $0x4] sm:$0xf]
      %v3797 = vunpack.c.l.b16 %v3685
      %v3798 = vunpack.c.l.b16 %v3688
      %v3799 = vunpack.c.l.b16 %v3692
      %v3800 = vunpack.c.l.b16 %v3695
      %v3801 = vunpack.c.l.b16 %v3699
      %v3802 = vunpack.c.l.b16 %v3702
      %v3803 = vunpack.c.l.b16 %v3706
      %v3804 = vunpack.c.l.b16 %v3709
      %v3805 = vunpack.c.l.b16 %v3713
      %v3806 = vunpack.c.l.b16 %v3716
      %v3807 = vunpack.c.l.b16 %v3720
      %v3808 = vunpack.c.l.b16 %v3723
      %v3809 = vunpack.c.l.b16 %v3727
      %v3810 = vunpack.c.l.b16 %v3730
      %v3811 = vunpack.c.l.b16 %v3734
      %v3812 = vunpack.c.l.b16 %v3737
      %v3813 = vunpack.c.l.b16 %v3741
      %v3814 = vunpack.c.l.b16 %v3744
      %v3815 = vunpack.c.l.b16 %v3748
      %v3816 = vunpack.c.l.b16 %v3751
      %v3817 = vunpack.c.l.b16 %v3755
      %v3818 = vunpack.c.l.b16 %v3758
      %v3819 = vunpack.c.l.b16 %v3762
      %v3820 = vunpack.c.l.b16 %v3765
      %v3821 = vunpack.c.l.b16 %v3769
      %v3822 = vunpack.c.l.b16 %v3772
      %v3823 = vunpack.c.l.b16 %v3776
      %v3824 = vunpack.c.l.b16 %v3779
      %v3825 = vunpack.c.l.b16 %v3783
      %v3826 = vunpack.c.l.b16 %v3786
      %v3827 = vunpack.c.l.b16 %v3790
      %v3828 = vunpack.c.l.b16 %v3793
      %v3829 = vpack.c.b16 %v3798, %v3797
      %v3830 = vpack.c.b16 %v3800, %v3799
      %v3831 = vpack.c.b16 %v3802, %v3801
      %v3832 = vpack.c.b16 %v3804, %v3803
      %v3833 = vpack.c.b16 %v3806, %v3805
      %v3834 = vpack.c.b16 %v3808, %v3807
      %v3835 = vpack.c.b16 %v3810, %v3809
      %v3836 = vpack.c.b16 %v3812, %v3811
      %v3837 = vpack.c.b16 %v3814, %v3813
      %v3838 = vpack.c.b16 %v3816, %v3815
      %v3839 = vpack.c.b16 %v3818, %v3817
      %v3840 = vpack.c.b16 %v3820, %v3819
      %v3841 = vpack.c.b16 %v3822, %v3821
      %v3842 = vpack.c.b16 %v3824, %v3823
      %v3843 = vpack.c.b16 %v3826, %v3825
      %v3844 = vpack.c.b16 %v3828, %v3827
      %v3847 = vunpack.c.l.b16 %v3795
      %v3848 = vunpack.c.l.b16 %v3796
      %v3849 = vpack.c.b16 %v3848, %v3847
      %v3852 = vsel %vm1560, %v3829, 0
      %v3855 = vsel %vm1560, %v3830, 0
      %v3858 = vsel %vm1560, %v3831, 0
      %v3861 = vsel %vm1560, %v3832, 0
      %v3864 = vsel %vm1560, %v3833, 0
      %v3867 = vsel %vm1560, %v3834, 0
      %v3870 = vsel %vm1560, %v3835, 0
      %v3873 = vsel %vm1560, %v3836, 0
      %v3876 = vsel %vm1560, %v3837, 0
      %v3879 = vsel %vm1560, %v3838, 0
      %v3882 = vsel %vm1560, %v3839, 0
      %v3885 = vsel %vm1560, %v3840, 0
      %v3888 = vsel %vm1560, %v3841, 0
      %v3891 = vsel %vm1560, %v3842, 0
      %v3894 = vsel %vm1560, %v3843, 0
      %v3897 = vsel %vm1560, %v3844, 0
      %3899 = vmatprep.subr.bf16.mxu0 0
      %3900 = vmatpush1.bf16.msra.mxu0 %v3849
      %3901 = vmatprep.subr.bf16.mxu0 0
      %3902 = vmatpush1.bf16.msra.mxu0 0
      %3903 = vmatprep.subr.bf16.mxu0 0
      %3904 = vmatpush1.bf16.msra.mxu0 0
      %3905 = vmatprep.subr.bf16.mxu0 0
      %3906 = vmatpush1.bf16.msra.mxu0 0
      %3907 = vmatprep.subr.bf16.mxu0 0
      %3908 = vmatpush1.bf16.msra.mxu0 0
      %3909 = vmatprep.subr.bf16.mxu0 0
      %3910 = vmatpush1.bf16.msra.mxu0 0
      %3911 = vmatprep.subr.bf16.mxu0 0
      %3912 = vmatpush1.bf16.msra.mxu0 0
      %3913 = vmatprep.subr.bf16.mxu0 0
      %3914 = vmatpush1.bf16.msra.mxu0 0
      %3915 = vmatprep.subr.bf16.mxu0 0
      %3916 = vmatpush1.bf16.msra.mxu0 0
      %3917 = vmatprep.subr.bf16.mxu0 0
      %3918 = vmatpush1.bf16.msra.mxu0 0
      %3919 = vmatprep.subr.bf16.mxu0 0
      %3920 = vmatpush1.bf16.msra.mxu0 0
      %3921 = vmatprep.subr.bf16.mxu0 0
      %3922 = vmatpush1.bf16.msra.mxu0 0
      %3923 = vmatprep.subr.bf16.mxu0 0
      %3924 = vmatpush1.bf16.msra.mxu0 0
      %3925 = vmatprep.subr.bf16.mxu0 0
      %3926 = vmatpush1.bf16.msra.mxu0 0
      %3927 = vmatprep.subr.bf16.mxu0 0
      %3928 = vmatpush1.bf16.msra.mxu0 0
      %3929 = vmatprep.subr.bf16.mxu0 0
      %3930 = vmatpush1.bf16.msra.mxu0 0
      %3931 = vmatprep.mubr.bf16.mxu0 0
      %3932 = vmatmul.mubr.bf16.gmra.mrb[0].mxu0 %v3852
      %v3933 = vpop.f32.mrb[0].mxu0
      %v3934 = vadd.f32 0.0, %v3933
      %v3935 = vpop.f32.mrb[0].mxu0
      %v3936 = vpop.f32.mrb[0].mxu0
      %v3937 = vadd.f32 0.0, %v3936
      %v3938 = vpop.f32.mrb[0].mxu0
      %3939 = vmatprep.mubr.bf16.mxu0 0
      %3940 = vmatmul.mubr.bf16.gmra.mrb[0].mxu0 %v3855
      %v3941 = vpop.f32.mrb[0].mxu0
      %v3942 = vadd.f32 0.0, %v3941
      %v3943 = vpop.f32.mrb[0].mxu0
      %v3944 = vpop.f32.mrb[0].mxu0
      %v3945 = vadd.f32 0.0, %v3944
      %v3946 = vpop.f32.mrb[0].mxu0
      %3947 = vmatprep.mubr.bf16.mxu0 0
      %3948 = vmatmul.mubr.bf16.gmra.mrb[0].mxu0 %v3858
      %v3949 = vpop.f32.mrb[0].mxu0
      %v3950 = vadd.f32 0.0, %v3949
      %v3951 = vpop.f32.mrb[0].mxu0
      %v3952 = vpop.f32.mrb[0].mxu0
      %v3953 = vadd.f32 0.0, %v3952
      %v3954 = vpop.f32.mrb[0].mxu0
      %3955 = vmatprep.mubr.bf16.mxu0 0
      %3956 = vmatmul.mubr.bf16.gmra.mrb[0].mxu0 %v3861
      %v3957 = vpop.f32.mrb[0].mxu0
      %v3958 = vadd.f32 0.0, %v3957
      %v3959 = vpop.f32.mrb[0].mxu0
      %v3960 = vpop.f32.mrb[0].mxu0
      %v3961 = vadd.f32 0.0, %v3960
      %v3962 = vpop.f32.mrb[0].mxu0
      %3963 = vmatprep.mubr.bf16.mxu0 0
      %3964 = vmatmul.mubr.bf16.gmra.mrb[0].mxu0 %v3864
      %v3965 = vpop.f32.mrb[0].mxu0
      %v3966 = vadd.f32 0.0, %v3965
      %v3967 = vpop.f32.mrb[0].mxu0
      %v3968 = vpop.f32.mrb[0].mxu0
      %v3969 = vadd.f32 0.0, %v3968
      %v3970 = vpop.f32.mrb[0].mxu0
      %3971 = vmatprep.mubr.bf16.mxu0 0
      %3972 = vmatmul.mubr.bf16.gmra.mrb[0].mxu0 %v3867
      %v3973 = vpop.f32.mrb[0].mxu0
      %v3974 = vadd.f32 0.0, %v3973
      %v3975 = vpop.f32.mrb[0].mxu0
      %v3976 = vpop.f32.mrb[0].mxu0
      %v3977 = vadd.f32 0.0, %v3976
      %v3978 = vpop.f32.mrb[0].mxu0
      %3979 = vmatprep.mubr.bf16.mxu0 0
      %3980 = vmatmul.mubr.bf16.gmra.mrb[0].mxu0 %v3870
      %v3981 = vpop.f32.mrb[0].mxu0
      %v3982 = vadd.f32 0.0, %v3981
      %v3983 = vpop.f32.mrb[0].mxu0
      %v3984 = vpop.f32.mrb[0].mxu0
      %v3985 = vadd.f32 0.0, %v3984
      %v3986 = vpop.f32.mrb[0].mxu0
      %3987 = vmatprep.mubr.bf16.mxu0 0
      %3988 = vmatmul.mubr.bf16.gmra.mrb[0].mxu0 %v3873
      %v3989 = vpop.f32.mrb[0].mxu0
      %v3990 = vadd.f32 0.0, %v3989
      %v3991 = vpop.f32.mrb[0].mxu0
      %v3992 = vpop.f32.mrb[0].mxu0
      %v3993 = vadd.f32 0.0, %v3992
      %v3994 = vpop.f32.mrb[0].mxu0
      %3995 = vmatprep.mubr.bf16.mxu0 0
      %3996 = vmatmul.mubr.bf16.gmra.mrb[0].mxu0 %v3876
      %v3997 = vpop.f32.mrb[0].mxu0
      %v3998 = vadd.f32 0.0, %v3997
      %v3999 = vpop.f32.mrb[0].mxu0
      %v4000 = vpop.f32.mrb[0].mxu0
      %v4001 = vadd.f32 0.0, %v4000
      %v4002 = vpop.f32.mrb[0].mxu0
      %4003 = vmatprep.mubr.bf16.mxu0 0
      %4004 = vmatmul.mubr.bf16.gmra.mrb[0].mxu0 %v3879
      %v4005 = vpop.f32.mrb[0].mxu0
      %v4006 = vadd.f32 0.0, %v4005
      %v4007 = vpop.f32.mrb[0].mxu0
      %v4008 = vpop.f32.mrb[0].mxu0
      %v4009 = vadd.f32 0.0, %v4008
      %v4010 = vpop.f32.mrb[0].mxu0
      %4011 = vmatprep.mubr.bf16.mxu0 0
      %4012 = vmatmul.mubr.bf16.gmra.mrb[0].mxu0 %v3882
      %v4013 = vpop.f32.mrb[0].mxu0
      %v4014 = vadd.f32 0.0, %v4013
      %v4015 = vpop.f32.mrb[0].mxu0
      %v4016 = vpop.f32.mrb[0].mxu0
      %v4017 = vadd.f32 0.0, %v4016
      %v4018 = vpop.f32.mrb[0].mxu0
      %4019 = vmatprep.mubr.bf16.mxu0 0
      %4020 = vmatmul.mubr.bf16.gmra.mrb[0].mxu0 %v3885
      %v4021 = vpop.f32.mrb[0].mxu0
      %v4022 = vadd.f32 0.0, %v4021
      %v4023 = vpop.f32.mrb[0].mxu0
      %v4024 = vpop.f32.mrb[0].mxu0
      %v4025 = vadd.f32 0.0, %v4024
      %v4026 = vpop.f32.mrb[0].mxu0
      %4027 = vmatprep.mubr.bf16.mxu0 0
      %4028 = vmatmul.mubr.bf16.gmra.mrb[0].mxu0 %v3888
      %v4029 = vpop.f32.mrb[0].mxu0
      %v4030 = vadd.f32 0.0, %v4029
      %v4031 = vpop.f32.mrb[0].mxu0
      %v4032 = vpop.f32.mrb[0].mxu0
      %v4033 = vadd.f32 0.0, %v4032
      %v4034 = vpop.f32.mrb[0].mxu0
      %4035 = vmatprep.mubr.bf16.mxu0 0
      %4036 = vmatmul.mubr.bf16.gmra.mrb[0].mxu0 %v3891
      %v4037 = vpop.f32.mrb[0].mxu0
      %v4038 = vadd.f32 0.0, %v4037
      %v4039 = vpop.f32.mrb[0].mxu0
      %v4040 = vpop.f32.mrb[0].mxu0
      %v4041 = vadd.f32 0.0, %v4040
      %v4042 = vpop.f32.mrb[0].mxu0
      %4043 = vmatprep.mubr.bf16.mxu0 0
      %4044 = vmatmul.mubr.bf16.gmra.mrb[0].mxu0 %v3894
      %v4045 = vpop.f32.mrb[0].mxu0
      %v4046 = vadd.f32 0.0, %v4045
      %v4047 = vpop.f32.mrb[0].mxu0
      %v4048 = vpop.f32.mrb[0].mxu0
      %v4049 = vadd.f32 0.0, %v4048
      %v4050 = vpop.f32.mrb[0].mxu0
      %4051 = vmatprep.mubr.bf16.mxu0 0
      %4052 = vmatmul.mubr.bf16.gmra.mrb[0].mxu0 %v3897
      %v4053 = vpop.f32.mrb[0].mxu0
      %v4054 = vadd.f32 0.0, %v4053
      %v4055 = vpop.f32.mrb[0].mxu0
      %v4056 = vpop.f32.mrb[0].mxu0
      %v4057 = vadd.f32 0.0, %v4056
      %v4058 = vpop.f32.mrb[0].mxu0
      %4059 = vdwg.mxu0
      %v4060 = vadd.f32 %v3586, %v3934
      %v4061 = vadd.f32 %v3587, %v3937
      %v4062 = vadd.f32 %v3588, %v3942
      %v4063 = vadd.f32 %v3589, %v3945
      %v4064 = vadd.f32 %v3590, %v3950
      %v4065 = vadd.f32 %v3591, %v3953
      %v4066 = vadd.f32 %v3592, %v3958
      %v4067 = vadd.f32 %v3593, %v3961
      %v4068 = vadd.f32 %v3594, %v3966
      %v4069 = vadd.f32 %v3595, %v3969
      %v4070 = vadd.f32 %v3596, %v3974
      %v4071 = vadd.f32 %v3597, %v3977
      %v4072 = vadd.f32 %v3598, %v3982
      %v4073 = vadd.f32 %v3599, %v3985
      %v4074 = vadd.f32 %v3600, %v3990
      %v4075 = vadd.f32 %v3601, %v3993
      %v4076 = vadd.f32 %v3602, %v3998
      %v4077 = vadd.f32 %v3603, %v4001
      %v4078 = vadd.f32 %v3604, %v4006
      %v4079 = vadd.f32 %v3605, %v4009
      %v4080 = vadd.f32 %v3606, %v4014
      %v4081 = vadd.f32 %v3607, %v4017
      %v4082 = vadd.f32 %v3608, %v4022
      %v4083 = vadd.f32 %v3609, %v4025
      %v4084 = vadd.f32 %v3610, %v4030
      %v4085 = vadd.f32 %v3611, %v4033
      %v4086 = vadd.f32 %v3612, %v4038
      %v4087 = vadd.f32 %v3613, %v4041
      %v4088 = vadd.f32 %v3614, %v4046
      %v4089 = vadd.f32 %v3615, %v4049
      %v4090 = vadd.f32 %v3616, %v4054
      %v4091 = vadd.f32 %v3617, %v4057
      %s4092 = scalar_lea.vmem [#allocation2], 24
      %v4093 = vld [vmem:[%s4092] sm:$0xf]
      %v4094 = vld [vmem:[%s4092 + $0x4] sm:$0xf]
      %v4095 = vld [vmem:[%s4092 + $0xc] sm:$0xf]
      %v4096 = vld [vmem:[%s4092 + $0x10] sm:$0xf]
      %v4097 = vld [vmem:[%s4092 + $0x18] sm:$0xf]
      %v4098 = vld [vmem:[%s4092 + $0x1c] sm:$0xf]
      %v4099 = vld [vmem:[%s4092 + $0x24] sm:$0xf]
      %v4100 = vld [vmem:[%s4092 + $0x28] sm:$0xf]
      %v4101 = vld [vmem:[%s4092 + $0x30] sm:$0xf]
      %v4102 = vld [vmem:[%s4092 + $0x34] sm:$0xf]
      %v4103 = vld [vmem:[%s4092 + $0x3c] sm:$0xf]
      %v4104 = vld [vmem:[%s4092 + $0x40] sm:$0xf]
      %v4105 = vld [vmem:[%s4092 + $0x48] sm:$0xf]
      %v4106 = vld [vmem:[%s4092 + $0x4c] sm:$0xf]
      %v4107 = vld [vmem:[%s4092 + $0x54] sm:$0xf]
      %v4108 = vld [vmem:[%s4092 + $0x58] sm:$0xf]
      %v4109 = vld [vmem:[%s4092 + $0x60] sm:$0xf]
      %v4110 = vld [vmem:[%s4092 + $0x64] sm:$0xf]
      %v4111 = vld [vmem:[%s4092 + $0x6c] sm:$0xf]
      %v4112 = vld [vmem:[%s4092 + $0x70] sm:$0xf]
      %v4113 = vld [vmem:[%s4092 + $0x78] sm:$0xf]
      %v4114 = vld [vmem:[%s4092 + $0x7c] sm:$0xf]
      %v4115 = vld [vmem:[%s4092 + $0x84] sm:$0xf]
      %v4116 = vld [vmem:[%s4092 + $0x88] sm:$0xf]
      %v4117 = vld [vmem:[%s4092 + $0x90] sm:$0xf]
      %v4118 = vld [vmem:[%s4092 + $0x94] sm:$0xf]
      %v4119 = vld [vmem:[%s4092 + $0x9c] sm:$0xf]
      %v4120 = vld [vmem:[%s4092 + $0xa0] sm:$0xf]
      %v4121 = vld [vmem:[%s4092 + $0xa8] sm:$0xf]
      %v4122 = vld [vmem:[%s4092 + $0xac] sm:$0xf]
      %v4123 = vld [vmem:[%s4092 + $0xb4] sm:$0xf]
      %v4124 = vld [vmem:[%s4092 + $0xb8] sm:$0xf]
      %s4125 = scalar_lea.vmem %s3, 48
      %v4126 = vld [vmem:[%s4125] sm:$0xf]
      %v4127 = vld [vmem:[%s4125 + $0x4] sm:$0xf]
      %v4160 = vunpack.c.l.b16 %v4093
      %v4161 = vunpack.c.l.b16 %v4094
      %v4162 = vunpack.c.l.b16 %v4095
      %v4163 = vunpack.c.l.b16 %v4096
      %v4164 = vunpack.c.l.b16 %v4097
      %v4165 = vunpack.c.l.b16 %v4098
      %v4166 = vunpack.c.l.b16 %v4099
      %v4167 = vunpack.c.l.b16 %v4100
      %v4168 = vunpack.c.l.b16 %v4101
      %v4169 = vunpack.c.l.b16 %v4102
      %v4170 = vunpack.c.l.b16 %v4103
      %v4171 = vunpack.c.l.b16 %v4104
      %v4172 = vunpack.c.l.b16 %v4105
      %v4173 = vunpack.c.l.b16 %v4106
      %v4174 = vunpack.c.l.b16 %v4107
      %v4175 = vunpack.c.l.b16 %v4108
      %v4176 = vunpack.c.l.b16 %v4109
      %v4177 = vunpack.c.l.b16 %v4110
      %v4178 = vunpack.c.l.b16 %v4111
      %v4179 = vunpack.c.l.b16 %v4112
      %v4180 = vunpack.c.l.b16 %v4113
      %v4181 = vunpack.c.l.b16 %v4114
      %v4182 = vunpack.c.l.b16 %v4115
      %v4183 = vunpack.c.l.b16 %v4116
      %v4184 = vunpack.c.l.b16 %v4117
      %v4185 = vunpack.c.l.b16 %v4118
      %v4186 = vunpack.c.l.b16 %v4119
      %v4187 = vunpack.c.l.b16 %v4120
      %v4188 = vunpack.c.l.b16 %v4121
      %v4189 = vunpack.c.l.b16 %v4122
      %v4190 = vunpack.c.l.b16 %v4123
      %v4191 = vunpack.c.l.b16 %v4124
      %v4192 = vpack.c.b16 %v4161, %v4160
      %v4193 = vpack.c.b16 %v4163, %v4162
      %v4194 = vpack.c.b16 %v4165, %v4164
      %v4195 = vpack.c.b16 %v4167, %v4166
      %v4196 = vpack.c.b16 %v4169, %v4168
      %v4197 = vpack.c.b16 %v4171, %v4170
      %v4198 = vpack.c.b16 %v4173, %v4172
      %v4199 = vpack.c.b16 %v4175, %v4174
      %v4200 = vpack.c.b16 %v4177, %v4176
      %v4201 = vpack.c.b16 %v4179, %v4178
      %v4202 = vpack.c.b16 %v4181, %v4180
      %v4203 = vpack.c.b16 %v4183, %v4182
      %v4204 = vpack.c.b16 %v4185, %v4184
      %v4205 = vpack.c.b16 %v4187, %v4186
      %v4206 = vpack.c.b16 %v4189, %v4188
      %v4207 = vpack.c.b16 %v4191, %v4190
      %v4210 = vunpack.c.l.b16 %v4126
      %v4211 = vunpack.c.l.b16 %v4127
      %v4212 = vpack.c.b16 %v4211, %v4210
      %v4215 = vsel %vm1560, %v4192, 0
      %v4218 = vsel %vm1560, %v4193, 0
      %v4221 = vsel %vm1560, %v4194, 0
      %v4224 = vsel %vm1560, %v4195, 0
      %v4227 = vsel %vm1560, %v4196, 0
      %v4230 = vsel %vm1560, %v4197, 0
      %v4233 = vsel %vm1560, %v4198, 0
      %v4236 = vsel %vm1560, %v4199, 0
      %v4239 = vsel %vm1560, %v4200, 0
      %v4242 = vsel %vm1560, %v4201, 0
      %v4245 = vsel %vm1560, %v4202, 0
      %v4248 = vsel %vm1560, %v4203, 0
      %v4251 = vsel %vm1560, %v4204, 0
      %v4254 = vsel %vm1560, %v4205, 0
      %v4257 = vsel %vm1560, %v4206, 0
      %v4260 = vsel %vm1560, %v4207, 0
      %4262 = vmatprep.subr.bf16.mxu0 0
      %4263 = vmatpush1.bf16.msra.mxu0 %v4212
      %4264 = vmatprep.subr.bf16.mxu0 0
      %4265 = vmatpush1.bf16.msra.mxu0 0
      %4266 = vmatprep.subr.bf16.mxu0 0
      %4267 = vmatpush1.bf16.msra.mxu0 0
      %4268 = vmatprep.subr.bf16.mxu0 0
      %4269 = vmatpush1.bf16.msra.mxu0 0
      %4270 = vmatprep.subr.bf16.mxu0 0
      %4271 = vmatpush1.bf16.msra.mxu0 0
      %4272 = vmatprep.subr.bf16.mxu0 0
      %4273 = vmatpush1.bf16.msra.mxu0 0
      %4274 = vmatprep.subr.bf16.mxu0 0
      %4275 = vmatpush1.bf16.msra.mxu0 0
      %4276 = vmatprep.subr.bf16.mxu0 0
      %4277 = vmatpush1.bf16.msra.mxu0 0
      %4278 = vmatprep.subr.bf16.mxu0 0
      %4279 = vmatpush1.bf16.msra.mxu0 0
      %4280 = vmatprep.subr.bf16.mxu0 0
      %4281 = vmatpush1.bf16.msra.mxu0 0
      %4282 = vmatprep.subr.bf16.mxu0 0
      %4283 = vmatpush1.bf16.msra.mxu0 0
      %4284 = vmatprep.subr.bf16.mxu0 0
      %4285 = vmatpush1.bf16.msra.mxu0 0
      %4286 = vmatprep.subr.bf16.mxu0 0
      %4287 = vmatpush1.bf16.msra.mxu0 0
      %4288 = vmatprep.subr.bf16.mxu0 0
      %4289 = vmatpush1.bf16.msra.mxu0 0
      %4290 = vmatprep.subr.bf16.mxu0 0
      %4291 = vmatpush1.bf16.msra.mxu0 0
      %4292 = vmatprep.subr.bf16.mxu0 0
      %4293 = vmatpush1.bf16.msra.mxu0 0
      %4294 = vmatprep.mubr.bf16.mxu0 0
      %4295 = vmatmul.mubr.bf16.gmra.mrb[0].mxu0 %v4215
      %v4296 = vpop.f32.mrb[0].mxu0
      %v4297 = vadd.f32 0.0, %v4296
      %v4298 = vpop.f32.mrb[0].mxu0
      %v4299 = vpop.f32.mrb[0].mxu0
      %v4300 = vadd.f32 0.0, %v4299
      %v4301 = vpop.f32.mrb[0].mxu0
      %4302 = vmatprep.mubr.bf16.mxu0 0
      %4303 = vmatmul.mubr.bf16.gmra.mrb[0].mxu0 %v4218
      %v4304 = vpop.f32.mrb[0].mxu0
      %v4305 = vadd.f32 0.0, %v4304
      %v4306 = vpop.f32.mrb[0].mxu0
      %v4307 = vpop.f32.mrb[0].mxu0
      %v4308 = vadd.f32 0.0, %v4307
      %v4309 = vpop.f32.mrb[0].mxu0
      %4310 = vmatprep.mubr.bf16.mxu0 0
      %4311 = vmatmul.mubr.bf16.gmra.mrb[0].mxu0 %v4221
      %v4312 = vpop.f32.mrb[0].mxu0
      %v4313 = vadd.f32 0.0, %v4312
      %v4314 = vpop.f32.mrb[0].mxu0
      %v4315 = vpop.f32.mrb[0].mxu0
      %v4316 = vadd.f32 0.0, %v4315
      %v4317 = vpop.f32.mrb[0].mxu0
      %4318 = vmatprep.mubr.bf16.mxu0 0
      %4319 = vmatmul.mubr.bf16.gmra.mrb[0].mxu0 %v4224
      %v4320 = vpop.f32.mrb[0].mxu0
      %v4321 = vadd.f32 0.0, %v4320
      %v4322 = vpop.f32.mrb[0].mxu0
      %v4323 = vpop.f32.mrb[0].mxu0
      %v4324 = vadd.f32 0.0, %v4323
      %v4325 = vpop.f32.mrb[0].mxu0
      %4326 = vmatprep.mubr.bf16.mxu0 0
      %4327 = vmatmul.mubr.bf16.gmra.mrb[0].mxu0 %v4227
      %v4328 = vpop.f32.mrb[0].mxu0
      %v4329 = vadd.f32 0.0, %v4328
      %v4330 = vpop.f32.mrb[0].mxu0
      %v4331 = vpop.f32.mrb[0].mxu0
      %v4332 = vadd.f32 0.0, %v4331
      %v4333 = vpop.f32.mrb[0].mxu0
      %4334 = vmatprep.mubr.bf16.mxu0 0
      %4335 = vmatmul.mubr.bf16.gmra.mrb[0].mxu0 %v4230
      %v4336 = vpop.f32.mrb[0].mxu0
      %v4337 = vadd.f32 0.0, %v4336
      %v4338 = vpop.f32.mrb[0].mxu0
      %v4339 = vpop.f32.mrb[0].mxu0
      %v4340 = vadd.f32 0.0, %v4339
      %v4341 = vpop.f32.mrb[0].mxu0
      %4342 = vmatprep.mubr.bf16.mxu0 0
      %4343 = vmatmul.mubr.bf16.gmra.mrb[0].mxu0 %v4233
      %v4344 = vpop.f32.mrb[0].mxu0
      %v4345 = vadd.f32 0.0, %v4344
      %v4346 = vpop.f32.mrb[0].mxu0
      %v4347 = vpop.f32.mrb[0].mxu0
      %v4348 = vadd.f32 0.0, %v4347
      %v4349 = vpop.f32.mrb[0].mxu0
      %4350 = vmatprep.mubr.bf16.mxu0 0
      %4351 = vmatmul.mubr.bf16.gmra.mrb[0].mxu0 %v4236
      %v4352 = vpop.f32.mrb[0].mxu0
      %v4353 = vadd.f32 0.0, %v4352
      %v4354 = vpop.f32.mrb[0].mxu0
      %v4355 = vpop.f32.mrb[0].mxu0
      %v4356 = vadd.f32 0.0, %v4355
      %v4357 = vpop.f32.mrb[0].mxu0
      %4358 = vmatprep.mubr.bf16.mxu0 0
      %4359 = vmatmul.mubr.bf16.gmra.mrb[0].mxu0 %v4239
      %v4360 = vpop.f32.mrb[0].mxu0
      %v4361 = vadd.f32 0.0, %v4360
      %v4362 = vpop.f32.mrb[0].mxu0
      %v4363 = vpop.f32.mrb[0].mxu0
      %v4364 = vadd.f32 0.0, %v4363
      %v4365 = vpop.f32.mrb[0].mxu0
      %4366 = vmatprep.mubr.bf16.mxu0 0
      %4367 = vmatmul.mubr.bf16.gmra.mrb[0].mxu0 %v4242
      %v4368 = vpop.f32.mrb[0].mxu0
      %v4369 = vadd.f32 0.0, %v4368
      %v4370 = vpop.f32.mrb[0].mxu0
      %v4371 = vpop.f32.mrb[0].mxu0
      %v4372 = vadd.f32 0.0, %v4371
      %v4373 = vpop.f32.mrb[0].mxu0
      %4374 = vmatprep.mubr.bf16.mxu0 0
      %4375 = vmatmul.mubr.bf16.gmra.mrb[0].mxu0 %v4245
      %v4376 = vpop.f32.mrb[0].mxu0
      %v4377 = vadd.f32 0.0, %v4376
      %v4378 = vpop.f32.mrb[0].mxu0
      %v4379 = vpop.f32.mrb[0].mxu0
      %v4380 = vadd.f32 0.0, %v4379
      %v4381 = vpop.f32.mrb[0].mxu0
      %4382 = vmatprep.mubr.bf16.mxu0 0
      %4383 = vmatmul.mubr.bf16.gmra.mrb[0].mxu0 %v4248
      %v4384 = vpop.f32.mrb[0].mxu0
      %v4385 = vadd.f32 0.0, %v4384
      %v4386 = vpop.f32.mrb[0].mxu0
      %v4387 = vpop.f32.mrb[0].mxu0
      %v4388 = vadd.f32 0.0, %v4387
      %v4389 = vpop.f32.mrb[0].mxu0
      %4390 = vmatprep.mubr.bf16.mxu0 0
      %4391 = vmatmul.mubr.bf16.gmra.mrb[0].mxu0 %v4251
      %v4392 = vpop.f32.mrb[0].mxu0
      %v4393 = vadd.f32 0.0, %v4392
      %v4394 = vpop.f32.mrb[0].mxu0
      %v4395 = vpop.f32.mrb[0].mxu0
      %v4396 = vadd.f32 0.0, %v4395
      %v4397 = vpop.f32.mrb[0].mxu0
      %4398 = vmatprep.mubr.bf16.mxu0 0
      %4399 = vmatmul.mubr.bf16.gmra.mrb[0].mxu0 %v4254
      %v4400 = vpop.f32.mrb[0].mxu0
      %v4401 = vadd.f32 0.0, %v4400
      %v4402 = vpop.f32.mrb[0].mxu0
      %v4403 = vpop.f32.mrb[0].mxu0
      %v4404 = vadd.f32 0.0, %v4403
      %v4405 = vpop.f32.mrb[0].mxu0
      %4406 = vmatprep.mubr.bf16.mxu0 0
      %4407 = vmatmul.mubr.bf16.gmra.mrb[0].mxu0 %v4257
      %v4408 = vpop.f32.mrb[0].mxu0
      %v4409 = vadd.f32 0.0, %v4408
      %v4410 = vpop.f32.mrb[0].mxu0
      %v4411 = vpop.f32.mrb[0].mxu0
      %v4412 = vadd.f32 0.0, %v4411
      %v4413 = vpop.f32.mrb[0].mxu0
      %4414 = vmatprep.mubr.bf16.mxu0 0
      %4415 = vmatmul.mubr.bf16.gmra.mrb[0].mxu0 %v4260
      %v4416 = vpop.f32.mrb[0].mxu0
      %v4417 = vadd.f32 0.0, %v4416
      %v4418 = vpop.f32.mrb[0].mxu0
      %v4419 = vpop.f32.mrb[0].mxu0
      %v4420 = vadd.f32 0.0, %v4419
      %v4421 = vpop.f32.mrb[0].mxu0
      %4422 = vdwg.mxu0
      %v4423 = vadd.f32 %v4060, %v4297
      %v4424 = vadd.f32 %v4061, %v4300
      %v4425 = vadd.f32 %v4062, %v4305
      %v4426 = vadd.f32 %v4063, %v4308
      %v4427 = vadd.f32 %v4064, %v4313
      %v4428 = vadd.f32 %v4065, %v4316
      %v4429 = vadd.f32 %v4066, %v4321
      %v4430 = vadd.f32 %v4067, %v4324
      %v4431 = vadd.f32 %v4068, %v4329
      %v4432 = vadd.f32 %v4069, %v4332
      %v4433 = vadd.f32 %v4070, %v4337
      %v4434 = vadd.f32 %v4071, %v4340
      %v4435 = vadd.f32 %v4072, %v4345
      %v4436 = vadd.f32 %v4073, %v4348
      %v4437 = vadd.f32 %v4074, %v4353
      %v4438 = vadd.f32 %v4075, %v4356
      %v4439 = vadd.f32 %v4076, %v4361
      %v4440 = vadd.f32 %v4077, %v4364
      %v4441 = vadd.f32 %v4078, %v4369
      %v4442 = vadd.f32 %v4079, %v4372
      %v4443 = vadd.f32 %v4080, %v4377
      %v4444 = vadd.f32 %v4081, %v4380
      %v4445 = vadd.f32 %v4082, %v4385
      %v4446 = vadd.f32 %v4083, %v4388
      %v4447 = vadd.f32 %v4084, %v4393
      %v4448 = vadd.f32 %v4085, %v4396
      %v4449 = vadd.f32 %v4086, %v4401
      %v4450 = vadd.f32 %v4087, %v4404
      %v4451 = vadd.f32 %v4088, %v4409
      %v4452 = vadd.f32 %v4089, %v4412
      %v4453 = vadd.f32 %v4090, %v4417
      %v4454 = vadd.f32 %v4091, %v4420
      %v4455 = vld [vmem:[%s4092] sm:$0xf]
      %v4456 = vld [vmem:[%s4092 + $0x4] sm:$0xf]
      %v4457 = vld [vmem:[%s4092 + $0x8] sm:$0x1]
      %v4458 = vld [vmem:[%s4092 + $0xc] sm:$0xf]
      %v4459 = vld [vmem:[%s4092 + $0x10] sm:$0xf]
      %v4460 = vld [vmem:[%s4092 + $0x14] sm:$0x1]
      %v4461 = vld [vmem:[%s4092 + $0x18] sm:$0xf]
      %v4462 = vld [vmem:[%s4092 + $0x1c] sm:$0xf]
      %v4463 = vld [vmem:[%s4092 + $0x20] sm:$0x1]
      %v4464 = vld [vmem:[%s4092 + $0x24] sm:$0xf]
      %v4465 = vld [vmem:[%s4092 + $0x28] sm:$0xf]
      %v4466 = vld [vmem:[%s4092 + $0x2c] sm:$0x1]
      %v4467 = vld [vmem:[%s4092 + $0x30] sm:$0xf]
      %v4468 = vld [vmem:[%s4092 + $0x34] sm:$0xf]
      %v4469 = vld [vmem:[%s4092 + $0x38] sm:$0x1]
      %v4470 = vld [vmem:[%s4092 + $0x3c] sm:$0xf]
      %v4471 = vld [vmem:[%s4092 + $0x40] sm:$0xf]
      %v4472 = vld [vmem:[%s4092 + $0x44] sm:$0x1]
      %v4473 = vld [vmem:[%s4092 + $0x48] sm:$0xf]
      %v4474 = vld [vmem:[%s4092 + $0x4c] sm:$0xf]
      %v4475 = vld [vmem:[%s4092 + $0x50] sm:$0x1]
      %v4476 = vld [vmem:[%s4092 + $0x54] sm:$0xf]
      %v4477 = vld [vmem:[%s4092 + $0x58] sm:$0xf]
      %v4478 = vld [vmem:[%s4092 + $0x5c] sm:$0x1]
      %v4479 = vld [vmem:[%s4092 + $0x60] sm:$0xf]
      %v4480 = vld [vmem:[%s4092 + $0x64] sm:$0xf]
      %v4481 = vld [vmem:[%s4092 + $0x68] sm:$0x1]
      %v4482 = vld [vmem:[%s4092 + $0x6c] sm:$0xf]
      %v4483 = vld [vmem:[%s4092 + $0x70] sm:$0xf]
      %v4484 = vld [vmem:[%s4092 + $0x74] sm:$0x1]
      %v4485 = vld [vmem:[%s4092 + $0x78] sm:$0xf]
      %v4486 = vld [vmem:[%s4092 + $0x7c] sm:$0xf]
      %v4487 = vld [vmem:[%s4092 + $0x80] sm:$0x1]
      %v4488 = vld [vmem:[%s4092 + $0x84] sm:$0xf]
      %v4489 = vld [vmem:[%s4092 + $0x88] sm:$0xf]
      %v4490 = vld [vmem:[%s4092 + $0x8c] sm:$0x1]
      %v4491 = vld [vmem:[%s4092 + $0x90] sm:$0xf]
      %v4492 = vld [vmem:[%s4092 + $0x94] sm:$0xf]
      %v4493 = vld [vmem:[%s4092 + $0x98] sm:$0x1]
      %v4494 = vld [vmem:[%s4092 + $0x9c] sm:$0xf]
      %v4495 = vld [vmem:[%s4092 + $0xa0] sm:$0xf]
      %v4496 = vld [vmem:[%s4092 + $0xa4] sm:$0x1]
      %v4497 = vld [vmem:[%s4092 + $0xa8] sm:$0xf]
      %v4498 = vld [vmem:[%s4092 + $0xac] sm:$0xf]
      %v4499 = vld [vmem:[%s4092 + $0xb0] sm:$0x1]
      %v4500 = vld [vmem:[%s4092 + $0xb4] sm:$0xf]
      %v4501 = vld [vmem:[%s4092 + $0xb8] sm:$0xf]
      %v4502 = vld [vmem:[%s4092 + $0xbc] sm:$0x1]
      %v4504 = vshrl.u32 %v4455, 16
      %v4506 = vrot.slane %v4504, 4
      %v4507 = vshll.u32 %v4455, 16
      %v4509 = vrot.slane %v4507, 5
      %v4510 = vor.u32 %v4506, %v4509
      %v4511 = vrot.slane %v4510, 4
      %v4513 = vshll.u32 %v4456, 16
      %v4515 = vrot.slane %v4513, 5
      %v4516 = vsel %vm1118, %v4511, %v4515
      %v4517 = vshrl.u32 %v4456, 16
      %v4519 = vrot.slane %v4517, 4
      %v4520 = vor.u32 %v4519, %v4515
      %v4521 = vrot.slane %v4520, 4
      %v4523 = vshll.u32 %v4457, 16
      %v4525 = vrot.slane %v4523, 5
      %v4526 = vsel %vm1118, %v4521, %v4525
      %v4528 = vshrl.u32 %v4458, 16
      %v4530 = vrot.slane %v4528, 4
      %v4531 = vshll.u32 %v4458, 16
      %v4533 = vrot.slane %v4531, 5
      %v4534 = vor.u32 %v4530, %v4533
      %v4535 = vrot.slane %v4534, 4
      %v4537 = vshll.u32 %v4459, 16
      %v4539 = vrot.slane %v4537, 5
      %v4540 = vsel %vm1118, %v4535, %v4539
      %v4541 = vshrl.u32 %v4459, 16
      %v4543 = vrot.slane %v4541, 4
      %v4544 = vor.u32 %v4543, %v4539
      %v4545 = vrot.slane %v4544, 4
      %v4547 = vshll.u32 %v4460, 16
      %v4549 = vrot.slane %v4547, 5
      %v4550 = vsel %vm1118, %v4545, %v4549
      %v4552 = vshrl.u32 %v4461, 16
      %v4554 = vrot.slane %v4552, 4
      %v4555 = vshll.u32 %v4461, 16
      %v4557 = vrot.slane %v4555, 5
      %v4558 = vor.u32 %v4554, %v4557
      %v4559 = vrot.slane %v4558, 4
      %v4561 = vshll.u32 %v4462, 16
      %v4563 = vrot.slane %v4561, 5
      %v4564 = vsel %vm1118, %v4559, %v4563
      %v4565 = vshrl.u32 %v4462, 16
      %v4567 = vrot.slane %v4565, 4
      %v4568 = vor.u32 %v4567, %v4563
      %v4569 = vrot.slane %v4568, 4
      %v4571 = vshll.u32 %v4463, 16
      %v4573 = vrot.slane %v4571, 5
      %v4574 = vsel %vm1118, %v4569, %v4573
      %v4576 = vshrl.u32 %v4464, 16
      %v4578 = vrot.slane %v4576, 4
      %v4579 = vshll.u32 %v4464, 16
      %v4581 = vrot.slane %v4579, 5
      %v4582 = vor.u32 %v4578, %v4581
      %v4583 = vrot.slane %v4582, 4
      %v4585 = vshll.u32 %v4465, 16
      %v4587 = vrot.slane %v4585, 5
      %v4588 = vsel %vm1118, %v4583, %v4587
      %v4589 = vshrl.u32 %v4465, 16
      %v4591 = vrot.slane %v4589, 4
      %v4592 = vor.u32 %v4591, %v4587
      %v4593 = vrot.slane %v4592, 4
      %v4595 = vshll.u32 %v4466, 16
      %v4597 = vrot.slane %v4595, 5
      %v4598 = vsel %vm1118, %v4593, %v4597
      %v4600 = vshrl.u32 %v4467, 16
      %v4602 = vrot.slane %v4600, 4
      %v4603 = vshll.u32 %v4467, 16
      %v4605 = vrot.slane %v4603, 5
      %v4606 = vor.u32 %v4602, %v4605
      %v4607 = vrot.slane %v4606, 4
      %v4609 = vshll.u32 %v4468, 16
      %v4611 = vrot.slane %v4609, 5
      %v4612 = vsel %vm1118, %v4607, %v4611
      %v4613 = vshrl.u32 %v4468, 16
      %v4615 = vrot.slane %v4613, 4
      %v4616 = vor.u32 %v4615, %v4611
      %v4617 = vrot.slane %v4616, 4
      %v4619 = vshll.u32 %v4469, 16
      %v4621 = vrot.slane %v4619, 5
      %v4622 = vsel %vm1118, %v4617, %v4621
      %v4624 = vshrl.u32 %v4470, 16
      %v4626 = vrot.slane %v4624, 4
      %v4627 = vshll.u32 %v4470, 16
      %v4629 = vrot.slane %v4627, 5
      %v4630 = vor.u32 %v4626, %v4629
      %v4631 = vrot.slane %v4630, 4
      %v4633 = vshll.u32 %v4471, 16
      %v4635 = vrot.slane %v4633, 5
      %v4636 = vsel %vm1118, %v4631, %v4635
      %v4637 = vshrl.u32 %v4471, 16
      %v4639 = vrot.slane %v4637, 4
      %v4640 = vor.u32 %v4639, %v4635
      %v4641 = vrot.slane %v4640, 4
      %v4643 = vshll.u32 %v4472, 16
      %v4645 = vrot.slane %v4643, 5
      %v4646 = vsel %vm1118, %v4641, %v4645
      %v4648 = vshrl.u32 %v4473, 16
      %v4650 = vrot.slane %v4648, 4
      %v4651 = vshll.u32 %v4473, 16
      %v4653 = vrot.slane %v4651, 5
      %v4654 = vor.u32 %v4650, %v4653
      %v4655 = vrot.slane %v4654, 4
      %v4657 = vshll.u32 %v4474, 16
      %v4659 = vrot.slane %v4657, 5
      %v4660 = vsel %vm1118, %v4655, %v4659
      %v4661 = vshrl.u32 %v4474, 16
      %v4663 = vrot.slane %v4661, 4
      %v4664 = vor.u32 %v4663, %v4659
      %v4665 = vrot.slane %v4664, 4
      %v4667 = vshll.u32 %v4475, 16
      %v4669 = vrot.slane %v4667, 5
      %v4670 = vsel %vm1118, %v4665, %v4669
      %v4672 = vshrl.u32 %v4476, 16
      %v4674 = vrot.slane %v4672, 4
      %v4675 = vshll.u32 %v4476, 16
      %v4677 = vrot.slane %v4675, 5
      %v4678 = vor.u32 %v4674, %v4677
      %v4679 = vrot.slane %v4678, 4
      %v4681 = vshll.u32 %v4477, 16
      %v4683 = vrot.slane %v4681, 5
      %v4684 = vsel %vm1118, %v4679, %v4683
      %v4685 = vshrl.u32 %v4477, 16
      %v4687 = vrot.slane %v4685, 4
      %v4688 = vor.u32 %v4687, %v4683
      %v4689 = vrot.slane %v4688, 4
      %v4691 = vshll.u32 %v4478, 16
      %v4693 = vrot.slane %v4691, 5
      %v4694 = vsel %vm1118, %v4689, %v4693
      %v4696 = vshrl.u32 %v4479, 16
      %v4698 = vrot.slane %v4696, 4
      %v4699 = vshll.u32 %v4479, 16
      %v4701 = vrot.slane %v4699, 5
      %v4702 = vor.u32 %v4698, %v4701
      %v4703 = vrot.slane %v4702, 4
      %v4705 = vshll.u32 %v4480, 16
      %v4707 = vrot.slane %v4705, 5
      %v4708 = vsel %vm1118, %v4703, %v4707
      %v4709 = vshrl.u32 %v4480, 16
      %v4711 = vrot.slane %v4709, 4
      %v4712 = vor.u32 %v4711, %v4707
      %v4713 = vrot.slane %v4712, 4
      %v4715 = vshll.u32 %v4481, 16
      %v4717 = vrot.slane %v4715, 5
      %v4718 = vsel %vm1118, %v4713, %v4717
      %v4720 = vshrl.u32 %v4482, 16
      %v4722 = vrot.slane %v4720, 4
      %v4723 = vshll.u32 %v4482, 16
      %v4725 = vrot.slane %v4723, 5
      %v4726 = vor.u32 %v4722, %v4725
      %v4727 = vrot.slane %v4726, 4
      %v4729 = vshll.u32 %v4483, 16
      %v4731 = vrot.slane %v4729, 5
      %v4732 = vsel %vm1118, %v4727, %v4731
      %v4733 = vshrl.u32 %v4483, 16
      %v4735 = vrot.slane %v4733, 4
      %v4736 = vor.u32 %v4735, %v4731
      %v4737 = vrot.slane %v4736, 4
      %v4739 = vshll.u32 %v4484, 16
      %v4741 = vrot.slane %v4739, 5
      %v4742 = vsel %vm1118, %v4737, %v4741
      %v4744 = vshrl.u32 %v4485, 16
      %v4746 = vrot.slane %v4744, 4
      %v4747 = vshll.u32 %v4485, 16
      %v4749 = vrot.slane %v4747, 5
      %v4750 = vor.u32 %v4746, %v4749
      %v4751 = vrot.slane %v4750, 4
      %v4753 = vshll.u32 %v4486, 16
      %v4755 = vrot.slane %v4753, 5
      %v4756 = vsel %vm1118, %v4751, %v4755
      %v4757 = vshrl.u32 %v4486, 16
      %v4759 = vrot.slane %v4757, 4
      %v4760 = vor.u32 %v4759, %v4755
      %v4761 = vrot.slane %v4760, 4
      %v4763 = vshll.u32 %v4487, 16
      %v4765 = vrot.slane %v4763, 5
      %v4766 = vsel %vm1118, %v4761, %v4765
      %v4768 = vshrl.u32 %v4488, 16
      %v4770 = vrot.slane %v4768, 4
      %v4771 = vshll.u32 %v4488, 16
      %v4773 = vrot.slane %v4771, 5
      %v4774 = vor.u32 %v4770, %v4773
      %v4775 = vrot.slane %v4774, 4
      %v4777 = vshll.u32 %v4489, 16
      %v4779 = vrot.slane %v4777, 5
      %v4780 = vsel %vm1118, %v4775, %v4779
      %v4781 = vshrl.u32 %v4489, 16
      %v4783 = vrot.slane %v4781, 4
      %v4784 = vor.u32 %v4783, %v4779
      %v4785 = vrot.slane %v4784, 4
      %v4787 = vshll.u32 %v4490, 16
      %v4789 = vrot.slane %v4787, 5
      %v4790 = vsel %vm1118, %v4785, %v4789
      %v4792 = vshrl.u32 %v4491, 16
      %v4794 = vrot.slane %v4792, 4
      %v4795 = vshll.u32 %v4491, 16
      %v4797 = vrot.slane %v4795, 5
      %v4798 = vor.u32 %v4794, %v4797
      %v4799 = vrot.slane %v4798, 4
      %v4801 = vshll.u32 %v4492, 16
      %v4803 = vrot.slane %v4801, 5
      %v4804 = vsel %vm1118, %v4799, %v4803
      %v4805 = vshrl.u32 %v4492, 16
      %v4807 = vrot.slane %v4805, 4
      %v4808 = vor.u32 %v4807, %v4803
      %v4809 = vrot.slane %v4808, 4
      %v4811 = vshll.u32 %v4493, 16
      %v4813 = vrot.slane %v4811, 5
      %v4814 = vsel %vm1118, %v4809, %v4813
      %v4816 = vshrl.u32 %v4494, 16
      %v4818 = vrot.slane %v4816, 4
      %v4819 = vshll.u32 %v4494, 16
      %v4821 = vrot.slane %v4819, 5
      %v4822 = vor.u32 %v4818, %v4821
      %v4823 = vrot.slane %v4822, 4
      %v4825 = vshll.u32 %v4495, 16
      %v4827 = vrot.slane %v4825, 5
      %v4828 = vsel %vm1118, %v4823, %v4827
      %v4829 = vshrl.u32 %v4495, 16
      %v4831 = vrot.slane %v4829, 4
      %v4832 = vor.u32 %v4831, %v4827
      %v4833 = vrot.slane %v4832, 4
      %v4835 = vshll.u32 %v4496, 16
      %v4837 = vrot.slane %v4835, 5
      %v4838 = vsel %vm1118, %v4833, %v4837
      %v4840 = vshrl.u32 %v4497, 16
      %v4842 = vrot.slane %v4840, 4
      %v4843 = vshll.u32 %v4497, 16
      %v4845 = vrot.slane %v4843, 5
      %v4846 = vor.u32 %v4842, %v4845
      %v4847 = vrot.slane %v4846, 4
      %v4849 = vshll.u32 %v4498, 16
      %v4851 = vrot.slane %v4849, 5
      %v4852 = vsel %vm1118, %v4847, %v4851
      %v4853 = vshrl.u32 %v4498, 16
      %v4855 = vrot.slane %v4853, 4
      %v4856 = vor.u32 %v4855, %v4851
      %v4857 = vrot.slane %v4856, 4
      %v4859 = vshll.u32 %v4499, 16
      %v4861 = vrot.slane %v4859, 5
      %v4862 = vsel %vm1118, %v4857, %v4861
      %v4864 = vshrl.u32 %v4500, 16
      %v4866 = vrot.slane %v4864, 4
      %v4867 = vshll.u32 %v4500, 16
      %v4869 = vrot.slane %v4867, 5
      %v4870 = vor.u32 %v4866, %v4869
      %v4871 = vrot.slane %v4870, 4
      %v4873 = vshll.u32 %v4501, 16
      %v4875 = vrot.slane %v4873, 5
      %v4876 = vsel %vm1118, %v4871, %v4875
      %v4877 = vshrl.u32 %v4501, 16
      %v4879 = vrot.slane %v4877, 4
      %v4880 = vor.u32 %v4879, %v4875
      %v4881 = vrot.slane %v4880, 4
      %v4883 = vshll.u32 %v4502, 16
      %v4885 = vrot.slane %v4883, 5
      %v4886 = vsel %vm1118, %v4881, %v4885
      %s4887 = scalar_lea.vmem %s3, 56
      %v4888 = vld [vmem:[%s4887] sm:$0xf]
      %v4889 = vld [vmem:[%s4887 + $0x4] sm:$0xf]
      %v4890 = vunpack.c.l.b16 %v4516
      %v4891 = vunpack.c.l.b16 %v4526
      %v4892 = vunpack.c.l.b16 %v4540
      %v4893 = vunpack.c.l.b16 %v4550
      %v4894 = vunpack.c.l.b16 %v4564
      %v4895 = vunpack.c.l.b16 %v4574
      %v4896 = vunpack.c.l.b16 %v4588
      %v4897 = vunpack.c.l.b16 %v4598
      %v4898 = vunpack.c.l.b16 %v4612
      %v4899 = vunpack.c.l.b16 %v4622
      %v4900 = vunpack.c.l.b16 %v4636
      %v4901 = vunpack.c.l.b16 %v4646
      %v4902 = vunpack.c.l.b16 %v4660
      %v4903 = vunpack.c.l.b16 %v4670
      %v4904 = vunpack.c.l.b16 %v4684
      %v4905 = vunpack.c.l.b16 %v4694
      %v4906 = vunpack.c.l.b16 %v4708
      %v4907 = vunpack.c.l.b16 %v4718
      %v4908 = vunpack.c.l.b16 %v4732
      %v4909 = vunpack.c.l.b16 %v4742
      %v4910 = vunpack.c.l.b16 %v4756
      %v4911 = vunpack.c.l.b16 %v4766
      %v4912 = vunpack.c.l.b16 %v4780
      %v4913 = vunpack.c.l.b16 %v4790
      %v4914 = vunpack.c.l.b16 %v4804
      %v4915 = vunpack.c.l.b16 %v4814
      %v4916 = vunpack.c.l.b16 %v4828
      %v4917 = vunpack.c.l.b16 %v4838
      %v4918 = vunpack.c.l.b16 %v4852
      %v4919 = vunpack.c.l.b16 %v4862
      %v4920 = vunpack.c.l.b16 %v4876
      %v4921 = vunpack.c.l.b16 %v4886
      %v4922 = vpack.c.b16 %v4891, %v4890
      %v4923 = vpack.c.b16 %v4893, %v4892
      %v4924 = vpack.c.b16 %v4895, %v4894
      %v4925 = vpack.c.b16 %v4897, %v4896
      %v4926 = vpack.c.b16 %v4899, %v4898
      %v4927 = vpack.c.b16 %v4901, %v4900
      %v4928 = vpack.c.b16 %v4903, %v4902
      %v4929 = vpack.c.b16 %v4905, %v4904
      %v4930 = vpack.c.b16 %v4907, %v4906
      %v4931 = vpack.c.b16 %v4909, %v4908
      %v4932 = vpack.c.b16 %v4911, %v4910
      %v4933 = vpack.c.b16 %v4913, %v4912
      %v4934 = vpack.c.b16 %v4915, %v4914
      %v4935 = vpack.c.b16 %v4917, %v4916
      %v4936 = vpack.c.b16 %v4919, %v4918
      %v4937 = vpack.c.b16 %v4921, %v4920
      %v4940 = vunpack.c.l.b16 %v4888
      %v4941 = vunpack.c.l.b16 %v4889
      %v4942 = vpack.c.b16 %v4941, %v4940
      %v4945 = vsel %vm1560, %v4922, 0
      %v4948 = vsel %vm1560, %v4923, 0
      %v4951 = vsel %vm1560, %v4924, 0
      %v4954 = vsel %vm1560, %v4925, 0
      %v4957 = vsel %vm1560, %v4926, 0
      %v4960 = vsel %vm1560, %v4927, 0
      %v4963 = vsel %vm1560, %v4928, 0
      %v4966 = vsel %vm1560, %v4929, 0
      %v4969 = vsel %vm1560, %v4930, 0
      %v4972 = vsel %vm1560, %v4931, 0
      %v4975 = vsel %vm1560, %v4932, 0
      %v4978 = vsel %vm1560, %v4933, 0
      %v4981 = vsel %vm1560, %v4934, 0
      %v4984 = vsel %vm1560, %v4935, 0
      %v4987 = vsel %vm1560, %v4936, 0
      %v4990 = vsel %vm1560, %v4937, 0
      %4992 = vmatprep.subr.bf16.mxu0 0
      %4993 = vmatpush1.bf16.msra.mxu0 %v4942
      %4994 = vmatprep.subr.bf16.mxu0 0
      %4995 = vmatpush1.bf16.msra.mxu0 0
      %4996 = vmatprep.subr.bf16.mxu0 0
      %4997 = vmatpush1.bf16.msra.mxu0 0
      %4998 = vmatprep.subr.bf16.mxu0 0
      %4999 = vmatpush1.bf16.msra.mxu0 0
      %5000 = vmatprep.subr.bf16.mxu0 0
      %5001 = vmatpush1.bf16.msra.mxu0 0
      %5002 = vmatprep.subr.bf16.mxu0 0
      %5003 = vmatpush1.bf16.msra.mxu0 0
      %5004 = vmatprep.subr.bf16.mxu0 0
      %5005 = vmatpush1.bf16.msra.mxu0 0
      %5006 = vmatprep.subr.bf16.mxu0 0
      %5007 = vmatpush1.bf16.msra.mxu0 0
      %5008 = vmatprep.subr.bf16.mxu0 0
      %5009 = vmatpush1.bf16.msra.mxu0 0
      %5010 = vmatprep.subr.bf16.mxu0 0
      %5011 = vmatpush1.bf16.msra.mxu0 0
      %5012 = vmatprep.subr.bf16.mxu0 0
      %5013 = vmatpush1.bf16.msra.mxu0 0
      %5014 = vmatprep.subr.bf16.mxu0 0
      %5015 = vmatpush1.bf16.msra.mxu0 0
      %5016 = vmatprep.subr.bf16.mxu0 0
      %5017 = vmatpush1.bf16.msra.mxu0 0
      %5018 = vmatprep.subr.bf16.mxu0 0
      %5019 = vmatpush1.bf16.msra.mxu0 0
      %5020 = vmatprep.subr.bf16.mxu0 0
      %5021 = vmatpush1.bf16.msra.mxu0 0
      %5022 = vmatprep.subr.bf16.mxu0 0
      %5023 = vmatpush1.bf16.msra.mxu0 0
      %5024 = vmatprep.mubr.bf16.mxu0 0
      %5025 = vmatmul.mubr.bf16.gmra.mrb[0].mxu0 %v4945
      %v5026 = vpop.f32.mrb[0].mxu0
      %v5027 = vadd.f32 0.0, %v5026
      %v5028 = vpop.f32.mrb[0].mxu0
      %v5029 = vpop.f32.mrb[0].mxu0
      %v5030 = vadd.f32 0.0, %v5029
      %v5031 = vpop.f32.mrb[0].mxu0
      %5032 = vmatprep.mubr.bf16.mxu0 0
      %5033 = vmatmul.mubr.bf16.gmra.mrb[0].mxu0 %v4948
      %v5034 = vpop.f32.mrb[0].mxu0
      %v5035 = vadd.f32 0.0, %v5034
      %v5036 = vpop.f32.mrb[0].mxu0
      %v5037 = vpop.f32.mrb[0].mxu0
      %v5038 = vadd.f32 0.0, %v5037
      %v5039 = vpop.f32.mrb[0].mxu0
      %5040 = vmatprep.mubr.bf16.mxu0 0
      %5041 = vmatmul.mubr.bf16.gmra.mrb[0].mxu0 %v4951
      %v5042 = vpop.f32.mrb[0].mxu0
      %v5043 = vadd.f32 0.0, %v5042
      %v5044 = vpop.f32.mrb[0].mxu0
      %v5045 = vpop.f32.mrb[0].mxu0
      %v5046 = vadd.f32 0.0, %v5045
      %v5047 = vpop.f32.mrb[0].mxu0
      %5048 = vmatprep.mubr.bf16.mxu0 0
      %5049 = vmatmul.mubr.bf16.gmra.mrb[0].mxu0 %v4954
      %v5050 = vpop.f32.mrb[0].mxu0
      %v5051 = vadd.f32 0.0, %v5050
      %v5052 = vpop.f32.mrb[0].mxu0
      %v5053 = vpop.f32.mrb[0].mxu0
      %v5054 = vadd.f32 0.0, %v5053
      %v5055 = vpop.f32.mrb[0].mxu0
      %5056 = vmatprep.mubr.bf16.mxu0 0
      %5057 = vmatmul.mubr.bf16.gmra.mrb[0].mxu0 %v4957
      %v5058 = vpop.f32.mrb[0].mxu0
      %v5059 = vadd.f32 0.0, %v5058
      %v5060 = vpop.f32.mrb[0].mxu0
      %v5061 = vpop.f32.mrb[0].mxu0
      %v5062 = vadd.f32 0.0, %v5061
      %v5063 = vpop.f32.mrb[0].mxu0
      %5064 = vmatprep.mubr.bf16.mxu0 0
      %5065 = vmatmul.mubr.bf16.gmra.mrb[0].mxu0 %v4960
      %v5066 = vpop.f32.mrb[0].mxu0
      %v5067 = vadd.f32 0.0, %v5066
      %v5068 = vpop.f32.mrb[0].mxu0
      %v5069 = vpop.f32.mrb[0].mxu0
      %v5070 = vadd.f32 0.0, %v5069
      %v5071 = vpop.f32.mrb[0].mxu0
      %5072 = vmatprep.mubr.bf16.mxu0 0
      %5073 = vmatmul.mubr.bf16.gmra.mrb[0].mxu0 %v4963
      %v5074 = vpop.f32.mrb[0].mxu0
      %v5075 = vadd.f32 0.0, %v5074
      %v5076 = vpop.f32.mrb[0].mxu0
      %v5077 = vpop.f32.mrb[0].mxu0
      %v5078 = vadd.f32 0.0, %v5077
      %v5079 = vpop.f32.mrb[0].mxu0
      %5080 = vmatprep.mubr.bf16.mxu0 0
      %5081 = vmatmul.mubr.bf16.gmra.mrb[0].mxu0 %v4966
      %v5082 = vpop.f32.mrb[0].mxu0
      %v5083 = vadd.f32 0.0, %v5082
      %v5084 = vpop.f32.mrb[0].mxu0
      %v5085 = vpop.f32.mrb[0].mxu0
      %v5086 = vadd.f32 0.0, %v5085
      %v5087 = vpop.f32.mrb[0].mxu0
      %5088 = vmatprep.mubr.bf16.mxu0 0
      %5089 = vmatmul.mubr.bf16.gmra.mrb[0].mxu0 %v4969
      %v5090 = vpop.f32.mrb[0].mxu0
      %v5091 = vadd.f32 0.0, %v5090
      %v5092 = vpop.f32.mrb[0].mxu0
      %v5093 = vpop.f32.mrb[0].mxu0
      %v5094 = vadd.f32 0.0, %v5093
      %v5095 = vpop.f32.mrb[0].mxu0
      %5096 = vmatprep.mubr.bf16.mxu0 0
      %5097 = vmatmul.mubr.bf16.gmra.mrb[0].mxu0 %v4972
      %v5098 = vpop.f32.mrb[0].mxu0
      %v5099 = vadd.f32 0.0, %v5098
      %v5100 = vpop.f32.mrb[0].mxu0
      %v5101 = vpop.f32.mrb[0].mxu0
      %v5102 = vadd.f32 0.0, %v5101
      %v5103 = vpop.f32.mrb[0].mxu0
      %5104 = vmatprep.mubr.bf16.mxu0 0
      %5105 = vmatmul.mubr.bf16.gmra.mrb[0].mxu0 %v4975
      %v5106 = vpop.f32.mrb[0].mxu0
      %v5107 = vadd.f32 0.0, %v5106
      %v5108 = vpop.f32.mrb[0].mxu0
      %v5109 = vpop.f32.mrb[0].mxu0
      %v5110 = vadd.f32 0.0, %v5109
      %v5111 = vpop.f32.mrb[0].mxu0
      %5112 = vmatprep.mubr.bf16.mxu0 0
      %5113 = vmatmul.mubr.bf16.gmra.mrb[0].mxu0 %v4978
      %v5114 = vpop.f32.mrb[0].mxu0
      %v5115 = vadd.f32 0.0, %v5114
      %v5116 = vpop.f32.mrb[0].mxu0
      %v5117 = vpop.f32.mrb[0].mxu0
      %v5118 = vadd.f32 0.0, %v5117
      %v5119 = vpop.f32.mrb[0].mxu0
      %5120 = vmatprep.mubr.bf16.mxu0 0
      %5121 = vmatmul.mubr.bf16.gmra.mrb[0].mxu0 %v4981
      %v5122 = vpop.f32.mrb[0].mxu0
      %v5123 = vadd.f32 0.0, %v5122
      %v5124 = vpop.f32.mrb[0].mxu0
      %v5125 = vpop.f32.mrb[0].mxu0
      %v5126 = vadd.f32 0.0, %v5125
      %v5127 = vpop.f32.mrb[0].mxu0
      %5128 = vmatprep.mubr.bf16.mxu0 0
      %5129 = vmatmul.mubr.bf16.gmra.mrb[0].mxu0 %v4984
      %v5130 = vpop.f32.mrb[0].mxu0
      %v5131 = vadd.f32 0.0, %v5130
      %v5132 = vpop.f32.mrb[0].mxu0
      %v5133 = vpop.f32.mrb[0].mxu0
      %v5134 = vadd.f32 0.0, %v5133
      %v5135 = vpop.f32.mrb[0].mxu0
      %5136 = vmatprep.mubr.bf16.mxu0 0
      %5137 = vmatmul.mubr.bf16.gmra.mrb[0].mxu0 %v4987
      %v5138 = vpop.f32.mrb[0].mxu0
      %v5139 = vadd.f32 0.0, %v5138
      %v5140 = vpop.f32.mrb[0].mxu0
      %v5141 = vpop.f32.mrb[0].mxu0
      %v5142 = vadd.f32 0.0, %v5141
      %v5143 = vpop.f32.mrb[0].mxu0
      %5144 = vmatprep.mubr.bf16.mxu0 0
      %5145 = vmatmul.mubr.bf16.gmra.mrb[0].mxu0 %v4990
      %v5146 = vpop.f32.mrb[0].mxu0
      %v5147 = vadd.f32 0.0, %v5146
      %v5148 = vpop.f32.mrb[0].mxu0
      %v5149 = vpop.f32.mrb[0].mxu0
      %v5150 = vadd.f32 0.0, %v5149
      %v5151 = vpop.f32.mrb[0].mxu0
      %5152 = vdwg.mxu0
      %v5153 = vadd.f32 %v4423, %v5027
      %v5154 = vadd.f32 %v4424, %v5030
      %v5155 = vadd.f32 %v4425, %v5035
      %v5156 = vadd.f32 %v4426, %v5038
      %v5157 = vadd.f32 %v4427, %v5043
      %v5158 = vadd.f32 %v4428, %v5046
      %v5159 = vadd.f32 %v4429, %v5051
      %v5160 = vadd.f32 %v4430, %v5054
      %v5161 = vadd.f32 %v4431, %v5059
      %v5162 = vadd.f32 %v4432, %v5062
      %v5163 = vadd.f32 %v4433, %v5067
      %v5164 = vadd.f32 %v4434, %v5070
      %v5165 = vadd.f32 %v4435, %v5075
      %v5166 = vadd.f32 %v4436, %v5078
      %v5167 = vadd.f32 %v4437, %v5083
      %v5168 = vadd.f32 %v4438, %v5086
      %v5169 = vadd.f32 %v4439, %v5091
      %v5170 = vadd.f32 %v4440, %v5094
      %v5171 = vadd.f32 %v4441, %v5099
      %v5172 = vadd.f32 %v4442, %v5102
      %v5173 = vadd.f32 %v4443, %v5107
      %v5174 = vadd.f32 %v4444, %v5110
      %v5175 = vadd.f32 %v4445, %v5115
      %v5176 = vadd.f32 %v4446, %v5118
      %v5177 = vadd.f32 %v4447, %v5123
      %v5178 = vadd.f32 %v4448, %v5126
      %v5179 = vadd.f32 %v4449, %v5131
      %v5180 = vadd.f32 %v4450, %v5134
      %v5181 = vadd.f32 %v4451, %v5139
      %v5182 = vadd.f32 %v4452, %v5142
      %v5183 = vadd.f32 %v4453, %v5147
      %v5184 = vadd.f32 %v4454, %v5150
      %v5185 = vld [vmem:[%s4092] sm:$0xe]
      %v5186 = vld [vmem:[%s4092 + $0xc] sm:$0xe]
      %v5187 = vld [vmem:[%s4092 + $0x18] sm:$0xe]
      %v5188 = vld [vmem:[%s4092 + $0x24] sm:$0xe]
      %v5189 = vld [vmem:[%s4092 + $0x30] sm:$0xe]
      %v5190 = vld [vmem:[%s4092 + $0x3c] sm:$0xe]
      %v5191 = vld [vmem:[%s4092 + $0x48] sm:$0xe]
      %v5192 = vld [vmem:[%s4092 + $0x54] sm:$0xe]
      %v5193 = vld [vmem:[%s4092 + $0x60] sm:$0xe]
      %v5194 = vld [vmem:[%s4092 + $0x6c] sm:$0xe]
      %v5195 = vld [vmem:[%s4092 + $0x78] sm:$0xe]
      %v5196 = vld [vmem:[%s4092 + $0x84] sm:$0xe]
      %v5197 = vld [vmem:[%s4092 + $0x90] sm:$0xe]
      %v5198 = vld [vmem:[%s4092 + $0x9c] sm:$0xe]
      %v5199 = vld [vmem:[%s4092 + $0xa8] sm:$0xe]
      %v5200 = vld [vmem:[%s4092 + $0xb4] sm:$0xe]
      %v5249 = vrot.slane %v5185, 5
      %v5250 = vrot.slane %v5249, 4
      %v5251 = vrot.slane %v4456, 5
      %v5252 = vsel %vm2115, %v5250, %v5251
      %v5253 = vrot.slane %v5251, 4
      %v5254 = vrot.slane %v4457, 5
      %v5255 = vsel %vm2115, %v5253, %v5254
      %v5256 = vrot.slane %v5186, 5
      %v5257 = vrot.slane %v5256, 4
      %v5258 = vrot.slane %v4459, 5
      %v5259 = vsel %vm2115, %v5257, %v5258
      %v5260 = vrot.slane %v5258, 4
      %v5261 = vrot.slane %v4460, 5
      %v5262 = vsel %vm2115, %v5260, %v5261
      %v5263 = vrot.slane %v5187, 5
      %v5264 = vrot.slane %v5263, 4
      %v5265 = vrot.slane %v4462, 5
      %v5266 = vsel %vm2115, %v5264, %v5265
      %v5267 = vrot.slane %v5265, 4
      %v5268 = vrot.slane %v4463, 5
      %v5269 = vsel %vm2115, %v5267, %v5268
      %v5270 = vrot.slane %v5188, 5
      %v5271 = vrot.slane %v5270, 4
      %v5272 = vrot.slane %v4465, 5
      %v5273 = vsel %vm2115, %v5271, %v5272
      %v5274 = vrot.slane %v5272, 4
      %v5275 = vrot.slane %v4466, 5
      %v5276 = vsel %vm2115, %v5274, %v5275
      %v5277 = vrot.slane %v5189, 5
      %v5278 = vrot.slane %v5277, 4
      %v5279 = vrot.slane %v4468, 5
      %v5280 = vsel %vm2115, %v5278, %v5279
      %v5281 = vrot.slane %v5279, 4
      %v5282 = vrot.slane %v4469, 5
      %v5283 = vsel %vm2115, %v5281, %v5282
      %v5284 = vrot.slane %v5190, 5
      %v5285 = vrot.slane %v5284, 4
      %v5286 = vrot.slane %v4471, 5
      %v5287 = vsel %vm2115, %v5285, %v5286
      %v5288 = vrot.slane %v5286, 4
      %v5289 = vrot.slane %v4472, 5
      %v5290 = vsel %vm2115, %v5288, %v5289
      %v5291 = vrot.slane %v5191, 5
      %v5292 = vrot.slane %v5291, 4
      %v5293 = vrot.slane %v4474, 5
      %v5294 = vsel %vm2115, %v5292, %v5293
      %v5295 = vrot.slane %v5293, 4
      %v5296 = vrot.slane %v4475, 5
      %v5297 = vsel %vm2115, %v5295, %v5296
      %v5298 = vrot.slane %v5192, 5
      %v5299 = vrot.slane %v5298, 4
      %v5300 = vrot.slane %v4477, 5
      %v5301 = vsel %vm2115, %v5299, %v5300
      %v5302 = vrot.slane %v5300, 4
      %v5303 = vrot.slane %v4478, 5
      %v5304 = vsel %vm2115, %v5302, %v5303
      %v5305 = vrot.slane %v5193, 5
      %v5306 = vrot.slane %v5305, 4
      %v5307 = vrot.slane %v4480, 5
      %v5308 = vsel %vm2115, %v5306, %v5307
      %v5309 = vrot.slane %v5307, 4
      %v5310 = vrot.slane %v4481, 5
      %v5311 = vsel %vm2115, %v5309, %v5310
      %v5312 = vrot.slane %v5194, 5
      %v5313 = vrot.slane %v5312, 4
      %v5314 = vrot.slane %v4483, 5
      %v5315 = vsel %vm2115, %v5313, %v5314
      %v5316 = vrot.slane %v5314, 4
      %v5317 = vrot.slane %v4484, 5
      %v5318 = vsel %vm2115, %v5316, %v5317
      %v5319 = vrot.slane %v5195, 5
      %v5320 = vrot.slane %v5319, 4
      %v5321 = vrot.slane %v4486, 5
      %v5322 = vsel %vm2115, %v5320, %v5321
      %v5323 = vrot.slane %v5321, 4
      %v5324 = vrot.slane %v4487, 5
      %v5325 = vsel %vm2115, %v5323, %v5324
      %v5326 = vrot.slane %v5196, 5
      %v5327 = vrot.slane %v5326, 4
      %v5328 = vrot.slane %v4489, 5
      %v5329 = vsel %vm2115, %v5327, %v5328
      %v5330 = vrot.slane %v5328, 4
      %v5331 = vrot.slane %v4490, 5
      %v5332 = vsel %vm2115, %v5330, %v5331
      %v5333 = vrot.slane %v5197, 5
      %v5334 = vrot.slane %v5333, 4
      %v5335 = vrot.slane %v4492, 5
      %v5336 = vsel %vm2115, %v5334, %v5335
      %v5337 = vrot.slane %v5335, 4
      %v5338 = vrot.slane %v4493, 5
      %v5339 = vsel %vm2115, %v5337, %v5338
      %v5340 = vrot.slane %v5198, 5
      %v5341 = vrot.slane %v5340, 4
      %v5342 = vrot.slane %v4495, 5
      %v5343 = vsel %vm2115, %v5341, %v5342
      %v5344 = vrot.slane %v5342, 4
      %v5345 = vrot.slane %v4496, 5
      %v5346 = vsel %vm2115, %v5344, %v5345
      %v5347 = vrot.slane %v5199, 5
      %v5348 = vrot.slane %v5347, 4
      %v5349 = vrot.slane %v4498, 5
      %v5350 = vsel %vm2115, %v5348, %v5349
      %v5351 = vrot.slane %v5349, 4
      %v5352 = vrot.slane %v4499, 5
      %v5353 = vsel %vm2115, %v5351, %v5352
      %v5354 = vrot.slane %v5200, 5
      %v5355 = vrot.slane %v5354, 4
      %v5356 = vrot.slane %v4501, 5
      %v5357 = vsel %vm2115, %v5355, %v5356
      %v5358 = vrot.slane %v5356, 4
      %v5359 = vrot.slane %v4502, 5
      %v5360 = vsel %vm2115, %v5358, %v5359
      %s5361 = scalar_lea.vmem %s3, 64
      %v5362 = vld [vmem:[%s5361] sm:$0xf]
      %v5363 = vld [vmem:[%s5361 + $0x4] sm:$0xf]
      %v5364 = vunpack.c.l.b16 %v5252
      %v5365 = vunpack.c.l.b16 %v5255
      %v5366 = vunpack.c.l.b16 %v5259
      %v5367 = vunpack.c.l.b16 %v5262
      %v5368 = vunpack.c.l.b16 %v5266
      %v5369 = vunpack.c.l.b16 %v5269
      %v5370 = vunpack.c.l.b16 %v5273
      %v5371 = vunpack.c.l.b16 %v5276
      %v5372 = vunpack.c.l.b16 %v5280
      %v5373 = vunpack.c.l.b16 %v5283
      %v5374 = vunpack.c.l.b16 %v5287
      %v5375 = vunpack.c.l.b16 %v5290
      %v5376 = vunpack.c.l.b16 %v5294
      %v5377 = vunpack.c.l.b16 %v5297
      %v5378 = vunpack.c.l.b16 %v5301
      %v5379 = vunpack.c.l.b16 %v5304
      %v5380 = vunpack.c.l.b16 %v5308
      %v5381 = vunpack.c.l.b16 %v5311
      %v5382 = vunpack.c.l.b16 %v5315
      %v5383 = vunpack.c.l.b16 %v5318
      %v5384 = vunpack.c.l.b16 %v5322
      %v5385 = vunpack.c.l.b16 %v5325
      %v5386 = vunpack.c.l.b16 %v5329
      %v5387 = vunpack.c.l.b16 %v5332
      %v5388 = vunpack.c.l.b16 %v5336
      %v5389 = vunpack.c.l.b16 %v5339
      %v5390 = vunpack.c.l.b16 %v5343
      %v5391 = vunpack.c.l.b16 %v5346
      %v5392 = vunpack.c.l.b16 %v5350
      %v5393 = vunpack.c.l.b16 %v5353
      %v5394 = vunpack.c.l.b16 %v5357
      %v5395 = vunpack.c.l.b16 %v5360
      %v5396 = vpack.c.b16 %v5365, %v5364
      %v5397 = vpack.c.b16 %v5367, %v5366
      %v5398 = vpack.c.b16 %v5369, %v5368
      %v5399 = vpack.c.b16 %v5371, %v5370
      %v5400 = vpack.c.b16 %v5373, %v5372
      %v5401 = vpack.c.b16 %v5375, %v5374
      %v5402 = vpack.c.b16 %v5377, %v5376
      %v5403 = vpack.c.b16 %v5379, %v5378
      %v5404 = vpack.c.b16 %v5381, %v5380
      %v5405 = vpack.c.b16 %v5383, %v5382
      %v5406 = vpack.c.b16 %v5385, %v5384
      %v5407 = vpack.c.b16 %v5387, %v5386
      %v5408 = vpack.c.b16 %v5389, %v5388
      %v5409 = vpack.c.b16 %v5391, %v5390
      %v5410 = vpack.c.b16 %v5393, %v5392
      %v5411 = vpack.c.b16 %v5395, %v5394
      %v5414 = vunpack.c.l.b16 %v5362
      %v5415 = vunpack.c.l.b16 %v5363
      %v5416 = vpack.c.b16 %v5415, %v5414
      %v5419 = vsel %vm1560, %v5396, 0
      %v5422 = vsel %vm1560, %v5397, 0
      %v5425 = vsel %vm1560, %v5398, 0
      %v5428 = vsel %vm1560, %v5399, 0
      %v5431 = vsel %vm1560, %v5400, 0
      %v5434 = vsel %vm1560, %v5401, 0
      %v5437 = vsel %vm1560, %v5402, 0
      %v5440 = vsel %vm1560, %v5403, 0
      %v5443 = vsel %vm1560, %v5404, 0
      %v5446 = vsel %vm1560, %v5405, 0
      %v5449 = vsel %vm1560, %v5406, 0
      %v5452 = vsel %vm1560, %v5407, 0
      %v5455 = vsel %vm1560, %v5408, 0
      %v5458 = vsel %vm1560, %v5409, 0
      %v5461 = vsel %vm1560, %v5410, 0
      %v5464 = vsel %vm1560, %v5411, 0
      %5466 = vmatprep.subr.bf16.mxu0 0
      %5467 = vmatpush1.bf16.msra.mxu0 %v5416
      %5468 = vmatprep.subr.bf16.mxu0 0
      %5469 = vmatpush1.bf16.msra.mxu0 0
      %5470 = vmatprep.subr.bf16.mxu0 0
      %5471 = vmatpush1.bf16.msra.mxu0 0
      %5472 = vmatprep.subr.bf16.mxu0 0
      %5473 = vmatpush1.bf16.msra.mxu0 0
      %5474 = vmatprep.subr.bf16.mxu0 0
      %5475 = vmatpush1.bf16.msra.mxu0 0
      %5476 = vmatprep.subr.bf16.mxu0 0
      %5477 = vmatpush1.bf16.msra.mxu0 0
      %5478 = vmatprep.subr.bf16.mxu0 0
      %5479 = vmatpush1.bf16.msra.mxu0 0
      %5480 = vmatprep.subr.bf16.mxu0 0
      %5481 = vmatpush1.bf16.msra.mxu0 0
      %5482 = vmatprep.subr.bf16.mxu0 0
      %5483 = vmatpush1.bf16.msra.mxu0 0
      %5484 = vmatprep.subr.bf16.mxu0 0
      %5485 = vmatpush1.bf16.msra.mxu0 0
      %5486 = vmatprep.subr.bf16.mxu0 0
      %5487 = vmatpush1.bf16.msra.mxu0 0
      %5488 = vmatprep.subr.bf16.mxu0 0
      %5489 = vmatpush1.bf16.msra.mxu0 0
      %5490 = vmatprep.subr.bf16.mxu0 0
      %5491 = vmatpush1.bf16.msra.mxu0 0
      %5492 = vmatprep.subr.bf16.mxu0 0
      %5493 = vmatpush1.bf16.msra.mxu0 0
      %5494 = vmatprep.subr.bf16.mxu0 0
      %5495 = vmatpush1.bf16.msra.mxu0 0
      %5496 = vmatprep.subr.bf16.mxu0 0
      %5497 = vmatpush1.bf16.msra.mxu0 0
      %5498 = vmatprep.mubr.bf16.mxu0 0
      %5499 = vmatmul.mubr.bf16.gmra.mrb[0].mxu0 %v5419
      %v5500 = vpop.f32.mrb[0].mxu0
      %v5501 = vadd.f32 0.0, %v5500
      %v5502 = vpop.f32.mrb[0].mxu0
      %v5503 = vpop.f32.mrb[0].mxu0
      %v5504 = vadd.f32 0.0, %v5503
      %v5505 = vpop.f32.mrb[0].mxu0
      %5506 = vmatprep.mubr.bf16.mxu0 0
      %5507 = vmatmul.mubr.bf16.gmra.mrb[0].mxu0 %v5422
      %v5508 = vpop.f32.mrb[0].mxu0
      %v5509 = vadd.f32 0.0, %v5508
      %v5510 = vpop.f32.mrb[0].mxu0
      %v5511 = vpop.f32.mrb[0].mxu0
      %v5512 = vadd.f32 0.0, %v5511
      %v5513 = vpop.f32.mrb[0].mxu0
      %5514 = vmatprep.mubr.bf16.mxu0 0
      %5515 = vmatmul.mubr.bf16.gmra.mrb[0].mxu0 %v5425
      %v5516 = vpop.f32.mrb[0].mxu0
      %v5517 = vadd.f32 0.0, %v5516
      %v5518 = vpop.f32.mrb[0].mxu0
      %v5519 = vpop.f32.mrb[0].mxu0
      %v5520 = vadd.f32 0.0, %v5519
      %v5521 = vpop.f32.mrb[0].mxu0
      %5522 = vmatprep.mubr.bf16.mxu0 0
      %5523 = vmatmul.mubr.bf16.gmra.mrb[0].mxu0 %v5428
      %v5524 = vpop.f32.mrb[0].mxu0
      %v5525 = vadd.f32 0.0, %v5524
      %v5526 = vpop.f32.mrb[0].mxu0
      %v5527 = vpop.f32.mrb[0].mxu0
      %v5528 = vadd.f32 0.0, %v5527
      %v5529 = vpop.f32.mrb[0].mxu0
      %5530 = vmatprep.mubr.bf16.mxu0 0
      %5531 = vmatmul.mubr.bf16.gmra.mrb[0].mxu0 %v5431
      %v5532 = vpop.f32.mrb[0].mxu0
      %v5533 = vadd.f32 0.0, %v5532
      %v5534 = vpop.f32.mrb[0].mxu0
      %v5535 = vpop.f32.mrb[0].mxu0
      %v5536 = vadd.f32 0.0, %v5535
      %v5537 = vpop.f32.mrb[0].mxu0
      %5538 = vmatprep.mubr.bf16.mxu0 0
      %5539 = vmatmul.mubr.bf16.gmra.mrb[0].mxu0 %v5434
      %v5540 = vpop.f32.mrb[0].mxu0
      %v5541 = vadd.f32 0.0, %v5540
      %v5542 = vpop.f32.mrb[0].mxu0
      %v5543 = vpop.f32.mrb[0].mxu0
      %v5544 = vadd.f32 0.0, %v5543
      %v5545 = vpop.f32.mrb[0].mxu0
      %5546 = vmatprep.mubr.bf16.mxu0 0
      %5547 = vmatmul.mubr.bf16.gmra.mrb[0].mxu0 %v5437
      %v5548 = vpop.f32.mrb[0].mxu0
      %v5549 = vadd.f32 0.0, %v5548
      %v5550 = vpop.f32.mrb[0].mxu0
      %v5551 = vpop.f32.mrb[0].mxu0
      %v5552 = vadd.f32 0.0, %v5551
      %v5553 = vpop.f32.mrb[0].mxu0
      %5554 = vmatprep.mubr.bf16.mxu0 0
      %5555 = vmatmul.mubr.bf16.gmra.mrb[0].mxu0 %v5440
      %v5556 = vpop.f32.mrb[0].mxu0
      %v5557 = vadd.f32 0.0, %v5556
      %v5558 = vpop.f32.mrb[0].mxu0
      %v5559 = vpop.f32.mrb[0].mxu0
      %v5560 = vadd.f32 0.0, %v5559
      %v5561 = vpop.f32.mrb[0].mxu0
      %5562 = vmatprep.mubr.bf16.mxu0 0
      %5563 = vmatmul.mubr.bf16.gmra.mrb[0].mxu0 %v5443
      %v5564 = vpop.f32.mrb[0].mxu0
      %v5565 = vadd.f32 0.0, %v5564
      %v5566 = vpop.f32.mrb[0].mxu0
      %v5567 = vpop.f32.mrb[0].mxu0
      %v5568 = vadd.f32 0.0, %v5567
      %v5569 = vpop.f32.mrb[0].mxu0
      %5570 = vmatprep.mubr.bf16.mxu0 0
      %5571 = vmatmul.mubr.bf16.gmra.mrb[0].mxu0 %v5446
      %v5572 = vpop.f32.mrb[0].mxu0
      %v5573 = vadd.f32 0.0, %v5572
      %v5574 = vpop.f32.mrb[0].mxu0
      %v5575 = vpop.f32.mrb[0].mxu0
      %v5576 = vadd.f32 0.0, %v5575
      %v5577 = vpop.f32.mrb[0].mxu0
      %5578 = vmatprep.mubr.bf16.mxu0 0
      %5579 = vmatmul.mubr.bf16.gmra.mrb[0].mxu0 %v5449
      %v5580 = vpop.f32.mrb[0].mxu0
      %v5581 = vadd.f32 0.0, %v5580
      %v5582 = vpop.f32.mrb[0].mxu0
      %v5583 = vpop.f32.mrb[0].mxu0
      %v5584 = vadd.f32 0.0, %v5583
      %v5585 = vpop.f32.mrb[0].mxu0
      %5586 = vmatprep.mubr.bf16.mxu0 0
      %5587 = vmatmul.mubr.bf16.gmra.mrb[0].mxu0 %v5452
      %v5588 = vpop.f32.mrb[0].mxu0
      %v5589 = vadd.f32 0.0, %v5588
      %v5590 = vpop.f32.mrb[0].mxu0
      %v5591 = vpop.f32.mrb[0].mxu0
      %v5592 = vadd.f32 0.0, %v5591
      %v5593 = vpop.f32.mrb[0].mxu0
      %5594 = vmatprep.mubr.bf16.mxu0 0
      %5595 = vmatmul.mubr.bf16.gmra.mrb[0].mxu0 %v5455
      %v5596 = vpop.f32.mrb[0].mxu0
      %v5597 = vadd.f32 0.0, %v5596
      %v5598 = vpop.f32.mrb[0].mxu0
      %v5599 = vpop.f32.mrb[0].mxu0
      %v5600 = vadd.f32 0.0, %v5599
      %v5601 = vpop.f32.mrb[0].mxu0
      %5602 = vmatprep.mubr.bf16.mxu0 0
      %5603 = vmatmul.mubr.bf16.gmra.mrb[0].mxu0 %v5458
      %v5604 = vpop.f32.mrb[0].mxu0
      %v5605 = vadd.f32 0.0, %v5604
      %v5606 = vpop.f32.mrb[0].mxu0
      %v5607 = vpop.f32.mrb[0].mxu0
      %v5608 = vadd.f32 0.0, %v5607
      %v5609 = vpop.f32.mrb[0].mxu0
      %5610 = vmatprep.mubr.bf16.mxu0 0
      %5611 = vmatmul.mubr.bf16.gmra.mrb[0].mxu0 %v5461
      %v5612 = vpop.f32.mrb[0].mxu0
      %v5613 = vadd.f32 0.0, %v5612
      %v5614 = vpop.f32.mrb[0].mxu0
      %v5615 = vpop.f32.mrb[0].mxu0
      %v5616 = vadd.f32 0.0, %v5615
      %v5617 = vpop.f32.mrb[0].mxu0
      %5618 = vmatprep.mubr.bf16.mxu0 0
      %5619 = vmatmul.mubr.bf16.gmra.mrb[0].mxu0 %v5464
      %v5620 = vpop.f32.mrb[0].mxu0
      %v5621 = vadd.f32 0.0, %v5620
      %v5622 = vpop.f32.mrb[0].mxu0
      %v5623 = vpop.f32.mrb[0].mxu0
      %v5624 = vadd.f32 0.0, %v5623
      %v5625 = vpop.f32.mrb[0].mxu0
      %5626 = vdwg.mxu0
      %v5627 = vadd.f32 %v5153, %v5501
      %v5628 = vadd.f32 %v5154, %v5504
      %v5629 = vadd.f32 %v5155, %v5509
      %v5630 = vadd.f32 %v5156, %v5512
      %v5631 = vadd.f32 %v5157, %v5517
      %v5632 = vadd.f32 %v5158, %v5520
      %v5633 = vadd.f32 %v5159, %v5525
      %v5634 = vadd.f32 %v5160, %v5528
      %v5635 = vadd.f32 %v5161, %v5533
      %v5636 = vadd.f32 %v5162, %v5536
      %v5637 = vadd.f32 %v5163, %v5541
      %v5638 = vadd.f32 %v5164, %v5544
      %v5639 = vadd.f32 %v5165, %v5549
      %v5640 = vadd.f32 %v5166, %v5552
      %v5641 = vadd.f32 %v5167, %v5557
      %v5642 = vadd.f32 %v5168, %v5560
      %v5643 = vadd.f32 %v5169, %v5565
      %v5644 = vadd.f32 %v5170, %v5568
      %v5645 = vadd.f32 %v5171, %v5573
      %v5646 = vadd.f32 %v5172, %v5576
      %v5647 = vadd.f32 %v5173, %v5581
      %v5648 = vadd.f32 %v5174, %v5584
      %v5649 = vadd.f32 %v5175, %v5589
      %v5650 = vadd.f32 %v5176, %v5592
      %v5651 = vadd.f32 %v5177, %v5597
      %v5652 = vadd.f32 %v5178, %v5600
      %v5653 = vadd.f32 %v5179, %v5605
      %v5654 = vadd.f32 %v5180, %v5608
      %v5655 = vadd.f32 %v5181, %v5613
      %v5656 = vadd.f32 %v5182, %v5616
      %v5657 = vadd.f32 %v5183, %v5621
      %v5658 = vadd.f32 %v5184, %v5624
      %v5659 = vpack.c.bf16 %v5628, %v5627
      %v5660 = vpack.c.bf16 %v5630, %v5629
      %v5661 = vpack.c.bf16 %v5632, %v5631
      %v5662 = vpack.c.bf16 %v5634, %v5633
      %v5663 = vpack.c.bf16 %v5636, %v5635
      %v5664 = vpack.c.bf16 %v5638, %v5637
      %v5665 = vpack.c.bf16 %v5640, %v5639
      %v5666 = vpack.c.bf16 %v5642, %v5641
      %v5667 = vpack.c.bf16 %v5644, %v5643
      %v5668 = vpack.c.bf16 %v5646, %v5645
      %v5669 = vpack.c.bf16 %v5648, %v5647
      %v5670 = vpack.c.bf16 %v5650, %v5649
      %v5671 = vpack.c.bf16 %v5652, %v5651
      %v5672 = vpack.c.bf16 %v5654, %v5653
      %v5673 = vpack.c.bf16 %v5656, %v5655
      %v5674 = vpack.c.bf16 %v5658, %v5657
      %v5691 = vunpack.c.l.b16 %v5659
      %v5692 = vunpack.c.h.b16 %v5659
      %v5693 = vunpack.c.l.b16 %v5660
      %v5694 = vunpack.c.h.b16 %v5660
      %v5695 = vunpack.c.l.b16 %v5661
      %v5696 = vunpack.c.h.b16 %v5661
      %v5697 = vunpack.c.l.b16 %v5662
      %v5698 = vunpack.c.h.b16 %v5662
      %v5699 = vunpack.c.l.b16 %v5663
      %v5700 = vunpack.c.h.b16 %v5663
      %v5701 = vunpack.c.l.b16 %v5664
      %v5702 = vunpack.c.h.b16 %v5664
      %v5703 = vunpack.c.l.b16 %v5665
      %v5704 = vunpack.c.h.b16 %v5665
      %v5705 = vunpack.c.l.b16 %v5666
      %v5706 = vunpack.c.h.b16 %v5666
      %v5707 = vunpack.c.l.b16 %v5667
      %v5708 = vunpack.c.h.b16 %v5667
      %v5709 = vunpack.c.l.b16 %v5668
      %v5710 = vunpack.c.h.b16 %v5668
      %v5711 = vunpack.c.l.b16 %v5669
      %v5712 = vunpack.c.h.b16 %v5669
      %v5713 = vunpack.c.l.b16 %v5670
      %v5714 = vunpack.c.h.b16 %v5670
      %v5715 = vunpack.c.l.b16 %v5671
      %v5716 = vunpack.c.h.b16 %v5671
      %v5717 = vunpack.c.l.b16 %v5672
      %v5718 = vunpack.c.h.b16 %v5672
      %v5719 = vunpack.c.l.b16 %v5673
      %v5720 = vunpack.c.h.b16 %v5673
      %v5721 = vunpack.c.l.b16 %v5674
      %v5722 = vunpack.c.h.b16 %v5674
      %v5723 = vpack.c.b16 %v5691, %v5691
      %v5724 = vpack.c.b16 %v5692, %v5692
      %v5725 = vpack.c.b16 %v5693, %v5693
      %v5726 = vpack.c.b16 %v5694, %v5694
      %v5727 = vpack.c.b16 %v5695, %v5695
      %v5728 = vpack.c.b16 %v5696, %v5696
      %v5729 = vpack.c.b16 %v5697, %v5697
      %v5730 = vpack.c.b16 %v5698, %v5698
      %v5731 = vpack.c.b16 %v5699, %v5699
      %v5732 = vpack.c.b16 %v5700, %v5700
      %v5733 = vpack.c.b16 %v5701, %v5701
      %v5734 = vpack.c.b16 %v5702, %v5702
      %v5735 = vpack.c.b16 %v5703, %v5703
      %v5736 = vpack.c.b16 %v5704, %v5704
      %v5737 = vpack.c.b16 %v5705, %v5705
      %v5738 = vpack.c.b16 %v5706, %v5706
      %v5739 = vpack.c.b16 %v5707, %v5707
      %v5740 = vpack.c.b16 %v5708, %v5708
      %v5741 = vpack.c.b16 %v5709, %v5709
      %v5742 = vpack.c.b16 %v5710, %v5710
      %v5743 = vpack.c.b16 %v5711, %v5711
      %v5744 = vpack.c.b16 %v5712, %v5712
      %v5745 = vpack.c.b16 %v5713, %v5713
      %v5746 = vpack.c.b16 %v5714, %v5714
      %v5747 = vpack.c.b16 %v5715, %v5715
      %v5748 = vpack.c.b16 %v5716, %v5716
      %v5749 = vpack.c.b16 %v5717, %v5717
      %v5750 = vpack.c.b16 %v5718, %v5718
      %v5751 = vpack.c.b16 %v5719, %v5719
      %v5752 = vpack.c.b16 %v5720, %v5720
      %v5753 = vpack.c.b16 %v5721, %v5721
      %v5754 = vpack.c.b16 %v5722, %v5722
      %5787 = vst.msk [vmem:[%s231] sm:$0xf] %vm411, %v5723
      %5788 = vst.msk [vmem:[%s231 + $0x4] sm:$0xf] %vm411, %v5724
      %5789 = vst.msk [vmem:[%s231 + $0x8] sm:$0xf] %vm411, %v5725
      %5790 = vst.msk [vmem:[%s231 + $0xc] sm:$0xf] %vm411, %v5726
      %5791 = vst.msk [vmem:[%s231 + $0x10] sm:$0xf] %vm411, %v5727
      %5792 = vst.msk [vmem:[%s231 + $0x14] sm:$0xf] %vm411, %v5728
      %5793 = vst.msk [vmem:[%s231 + $0x18] sm:$0xf] %vm411, %v5729
      %5794 = vst.msk [vmem:[%s231 + $0x1c] sm:$0xf] %vm411, %v5730
      %5795 = vst.msk [vmem:[%s231 + $0x20] sm:$0xf] %vm411, %v5731
      %5796 = vst.msk [vmem:[%s231 + $0x24] sm:$0xf] %vm411, %v5732
      %5797 = vst.msk [vmem:[%s231 + $0x28] sm:$0xf] %vm411, %v5733
      %5798 = vst.msk [vmem:[%s231 + $0x2c] sm:$0xf] %vm411, %v5734
      %5799 = vst.msk [vmem:[%s231 + $0x30] sm:$0xf] %vm411, %v5735
      %5800 = vst.msk [vmem:[%s231 + $0x34] sm:$0xf] %vm411, %v5736
      %5801 = vst.msk [vmem:[%s231 + $0x38] sm:$0xf] %vm411, %v5737
      %5802 = vst.msk [vmem:[%s231 + $0x3c] sm:$0xf] %vm411, %v5738
      %5803 = vst.msk [vmem:[%s231 + $0x40] sm:$0xf] %vm411, %v5739
      %5804 = vst.msk [vmem:[%s231 + $0x44] sm:$0xf] %vm411, %v5740
      %5805 = vst.msk [vmem:[%s231 + $0x48] sm:$0xf] %vm411, %v5741
      %5806 = vst.msk [vmem:[%s231 + $0x4c] sm:$0xf] %vm411, %v5742
      %5807 = vst.msk [vmem:[%s231 + $0x50] sm:$0xf] %vm411, %v5743
      %5808 = vst.msk [vmem:[%s231 + $0x54] sm:$0xf] %vm411, %v5744
      %5809 = vst.msk [vmem:[%s231 + $0x58] sm:$0xf] %vm411, %v5745
      %5810 = vst.msk [vmem:[%s231 + $0x5c] sm:$0xf] %vm411, %v5746
      %5811 = vst.msk [vmem:[%s231 + $0x60] sm:$0xf] %vm411, %v5747
      %5812 = vst.msk [vmem:[%s231 + $0x64] sm:$0xf] %vm411, %v5748
      %5813 = vst.msk [vmem:[%s231 + $0x68] sm:$0xf] %vm411, %v5749
      %5814 = vst.msk [vmem:[%s231 + $0x6c] sm:$0xf] %vm411, %v5750
      %5815 = vst.msk [vmem:[%s231 + $0x70] sm:$0xf] %vm411, %v5751
      %5816 = vst.msk [vmem:[%s231 + $0x74] sm:$0xf] %vm411, %v5752
      %5817 = vst.msk [vmem:[%s231 + $0x78] sm:$0xf] %vm411, %v5753
      %5818 = vst.msk [vmem:[%s231 + $0x7c] sm:$0xf] %vm411, %v5754
      %v5819 = vunpack.c.l.bf16 %v5659
      %v5820 = vunpack.c.h.bf16 %v5659
      %v5821 = vunpack.c.l.bf16 %v5660
      %v5822 = vunpack.c.h.bf16 %v5660
      %v5823 = vunpack.c.l.bf16 %v5661
      %v5824 = vunpack.c.h.bf16 %v5661
      %v5825 = vunpack.c.l.bf16 %v5662
      %v5826 = vunpack.c.h.bf16 %v5662
      %v5827 = vunpack.c.l.bf16 %v5663
      %v5828 = vunpack.c.h.bf16 %v5663
      %v5829 = vunpack.c.l.bf16 %v5664
      %v5830 = vunpack.c.h.bf16 %v5664
      %v5831 = vunpack.c.l.bf16 %v5665
      %v5832 = vunpack.c.h.bf16 %v5665
      %v5833 = vunpack.c.l.bf16 %v5666
      %v5834 = vunpack.c.h.bf16 %v5666
      %v5835 = vunpack.c.l.bf16 %v5667
      %v5836 = vunpack.c.h.bf16 %v5667
      %v5837 = vunpack.c.l.bf16 %v5668
      %v5838 = vunpack.c.h.bf16 %v5668
      %v5839 = vunpack.c.l.bf16 %v5669
      %v5840 = vunpack.c.h.bf16 %v5669
      %v5841 = vunpack.c.l.bf16 %v5670
      %v5842 = vunpack.c.h.bf16 %v5670
      %v5843 = vunpack.c.l.bf16 %v5671
      %v5844 = vunpack.c.h.bf16 %v5671
      %v5845 = vunpack.c.l.bf16 %v5672
      %v5846 = vunpack.c.h.bf16 %v5672
      %v5847 = vunpack.c.l.bf16 %v5673
      %v5848 = vunpack.c.h.bf16 %v5673
      %v5849 = vunpack.c.l.bf16 %v5674
      %v5850 = vunpack.c.h.bf16 %v5674
      %v5851 = vsel %vm1560, %v5819, 0.0
      %v5852 = vsel %vm1560, %v5820, 0.0
      %v5853 = vadd.f32 %v5851, %v5852
      %v5854 = vsel %vm1560, %v5821, 0.0
      %v5855 = vadd.f32 %v5853, %v5854
      %v5856 = vsel %vm1560, %v5822, 0.0
      %v5857 = vadd.f32 %v5855, %v5856
      %v5858 = vsel %vm1560, %v5823, 0.0
      %v5859 = vadd.f32 %v5857, %v5858
      %v5860 = vsel %vm1560, %v5824, 0.0
      %v5861 = vadd.f32 %v5859, %v5860
      %v5862 = vsel %vm1560, %v5825, 0.0
      %v5863 = vadd.f32 %v5861, %v5862
      %v5864 = vsel %vm1560, %v5826, 0.0
      %v5865 = vadd.f32 %v5863, %v5864
      %v5866 = vsel %vm1560, %v5827, 0.0
      %v5867 = vadd.f32 %v5865, %v5866
      %v5868 = vsel %vm1560, %v5828, 0.0
      %v5869 = vadd.f32 %v5867, %v5868
      %v5870 = vsel %vm1560, %v5829, 0.0
      %v5871 = vadd.f32 %v5869, %v5870
      %v5872 = vsel %vm1560, %v5830, 0.0
      %v5873 = vadd.f32 %v5871, %v5872
      %v5874 = vsel %vm1560, %v5831, 0.0
      %v5875 = vadd.f32 %v5873, %v5874
      %v5876 = vsel %vm1560, %v5832, 0.0
      %v5877 = vadd.f32 %v5875, %v5876
      %v5878 = vsel %vm1560, %v5833, 0.0
      %v5879 = vadd.f32 %v5877, %v5878
      %v5880 = vsel %vm1560, %v5834, 0.0
      %v5881 = vadd.f32 %v5879, %v5880
      %v5882 = vsel %vm1560, %v5835, 0.0
      %v5883 = vadd.f32 %v5881, %v5882
      %v5884 = vsel %vm1560, %v5836, 0.0
      %v5885 = vadd.f32 %v5883, %v5884
      %v5886 = vsel %vm1560, %v5837, 0.0
      %v5887 = vadd.f32 %v5885, %v5886
      %v5888 = vsel %vm1560, %v5838, 0.0
      %v5889 = vadd.f32 %v5887, %v5888
      %v5890 = vsel %vm1560, %v5839, 0.0
      %v5891 = vadd.f32 %v5889, %v5890
      %v5892 = vsel %vm1560, %v5840, 0.0
      %v5893 = vadd.f32 %v5891, %v5892
      %v5894 = vsel %vm1560, %v5841, 0.0
      %v5895 = vadd.f32 %v5893, %v5894
      %v5896 = vsel %vm1560, %v5842, 0.0
      %v5897 = vadd.f32 %v5895, %v5896
      %v5898 = vsel %vm1560, %v5843, 0.0
      %v5899 = vadd.f32 %v5897, %v5898
      %v5900 = vsel %vm1560, %v5844, 0.0
      %v5901 = vadd.f32 %v5899, %v5900
      %v5902 = vsel %vm1560, %v5845, 0.0
      %v5903 = vadd.f32 %v5901, %v5902
      %v5904 = vsel %vm1560, %v5846, 0.0
      %v5905 = vadd.f32 %v5903, %v5904
      %v5906 = vsel %vm1560, %v5847, 0.0
      %v5907 = vadd.f32 %v5905, %v5906
      %v5908 = vsel %vm1560, %v5848, 0.0
      %v5909 = vadd.f32 %v5907, %v5908
      %v5910 = vsel %vm1560, %v5849, 0.0
      %v5911 = vadd.f32 %v5909, %v5910
      %v5912 = vsel %vm1560, %v5850, 0.0
      %v5913 = vadd.f32 %v5911, %v5912
      %v5914 = vrot.slane %v5913, 4
      %v5915 = vadd.f32 %v5913, %v5914
      %v5916 = vrot.slane %v5915, 2
      %v5917 = vadd.f32 %v5915, %v5916
      %v5918 = vrot.slane %v5917, 1
      %v5919 = vadd.f32 %v5917, %v5918
      %v5920 = vmul.f32 %v5819, %v5819
      %v5921 = vmul.f32 %v5820, %v5820
      %v5922 = vmul.f32 %v5821, %v5821
      %v5923 = vmul.f32 %v5822, %v5822
      %v5924 = vmul.f32 %v5823, %v5823
      %v5925 = vmul.f32 %v5824, %v5824
      %v5926 = vmul.f32 %v5825, %v5825
      %v5927 = vmul.f32 %v5826, %v5826
      %v5928 = vmul.f32 %v5827, %v5827
      %v5929 = vmul.f32 %v5828, %v5828
      %v5930 = vmul.f32 %v5829, %v5829
      %v5931 = vmul.f32 %v5830, %v5830
      %v5932 = vmul.f32 %v5831, %v5831
      %v5933 = vmul.f32 %v5832, %v5832
      %v5934 = vmul.f32 %v5833, %v5833
      %v5935 = vmul.f32 %v5834, %v5834
      %v5936 = vmul.f32 %v5835, %v5835
      %v5937 = vmul.f32 %v5836, %v5836
      %v5938 = vmul.f32 %v5837, %v5837
      %v5939 = vmul.f32 %v5838, %v5838
      %v5940 = vmul.f32 %v5839, %v5839
      %v5941 = vmul.f32 %v5840, %v5840
      %v5942 = vmul.f32 %v5841, %v5841
      %v5943 = vmul.f32 %v5842, %v5842
      %v5944 = vmul.f32 %v5843, %v5843
      %v5945 = vmul.f32 %v5844, %v5844
      %v5946 = vmul.f32 %v5845, %v5845
      %v5947 = vmul.f32 %v5846, %v5846
      %v5948 = vmul.f32 %v5847, %v5847
      %v5949 = vmul.f32 %v5848, %v5848
      %v5950 = vmul.f32 %v5849, %v5849
      %v5951 = vmul.f32 %v5850, %v5850
      %v5952 = vsel %vm1560, %v5920, 0.0
      %v5953 = vsel %vm1560, %v5921, 0.0
      %v5954 = vadd.f32 %v5952, %v5953
      %v5955 = vsel %vm1560, %v5922, 0.0
      %v5956 = vadd.f32 %v5954, %v5955
      %v5957 = vsel %vm1560, %v5923, 0.0
      %v5958 = vadd.f32 %v5956, %v5957
      %v5959 = vsel %vm1560, %v5924, 0.0
      %v5960 = vadd.f32 %v5958, %v5959
      %v5961 = vsel %vm1560, %v5925, 0.0
      %v5962 = vadd.f32 %v5960, %v5961
      %v5963 = vsel %vm1560, %v5926, 0.0
      %v5964 = vadd.f32 %v5962, %v5963
      %v5965 = vsel %vm1560, %v5927, 0.0
      %v5966 = vadd.f32 %v5964, %v5965
      %v5967 = vsel %vm1560, %v5928, 0.0
      %v5968 = vadd.f32 %v5966, %v5967
      %v5969 = vsel %vm1560, %v5929, 0.0
      %v5970 = vadd.f32 %v5968, %v5969
      %v5971 = vsel %vm1560, %v5930, 0.0
      %v5972 = vadd.f32 %v5970, %v5971
      %v5973 = vsel %vm1560, %v5931, 0.0
      %v5974 = vadd.f32 %v5972, %v5973
      %v5975 = vsel %vm1560, %v5932, 0.0
      %v5976 = vadd.f32 %v5974, %v5975
      %v5977 = vsel %vm1560, %v5933, 0.0
      %v5978 = vadd.f32 %v5976, %v5977
      %v5979 = vsel %vm1560, %v5934, 0.0
      %v5980 = vadd.f32 %v5978, %v5979
      %v5981 = vsel %vm1560, %v5935, 0.0
      %v5982 = vadd.f32 %v5980, %v5981
      %v5983 = vsel %vm1560, %v5936, 0.0
      %v5984 = vadd.f32 %v5982, %v5983
      %v5985 = vsel %vm1560, %v5937, 0.0
      %v5986 = vadd.f32 %v5984, %v5985
      %v5987 = vsel %vm1560, %v5938, 0.0
      %v5988 = vadd.f32 %v5986, %v5987
      %v5989 = vsel %vm1560, %v5939, 0.0
      %v5990 = vadd.f32 %v5988, %v5989
      %v5991 = vsel %vm1560, %v5940, 0.0
      %v5992 = vadd.f32 %v5990, %v5991
      %v5993 = vsel %vm1560, %v5941, 0.0
      %v5994 = vadd.f32 %v5992, %v5993
      %v5995 = vsel %vm1560, %v5942, 0.0
      %v5996 = vadd.f32 %v5994, %v5995
      %v5997 = vsel %vm1560, %v5943, 0.0
      %v5998 = vadd.f32 %v5996, %v5997
      %v5999 = vsel %vm1560, %v5944, 0.0
      %v6000 = vadd.f32 %v5998, %v5999
      %v6001 = vsel %vm1560, %v5945, 0.0
      %v6002 = vadd.f32 %v6000, %v6001
      %v6003 = vsel %vm1560, %v5946, 0.0
      %v6004 = vadd.f32 %v6002, %v6003
      %v6005 = vsel %vm1560, %v5947, 0.0
      %v6006 = vadd.f32 %v6004, %v6005
      %v6007 = vsel %vm1560, %v5948, 0.0
      %v6008 = vadd.f32 %v6006, %v6007
      %v6009 = vsel %vm1560, %v5949, 0.0
      %v6010 = vadd.f32 %v6008, %v6009
      %v6011 = vsel %vm1560, %v5950, 0.0
      %v6012 = vadd.f32 %v6010, %v6011
      %v6013 = vsel %vm1560, %v5951, 0.0
      %v6014 = vadd.f32 %v6012, %v6013
      %v6015 = vrot.slane %v6014, 4
      %v6016 = vadd.f32 %v6014, %v6015
      %v6017 = vrot.slane %v6016, 2
      %v6018 = vadd.f32 %v6016, %v6017
      %v6019 = vrot.slane %v6018, 1
      %v6020 = vadd.f32 %v6018, %v6019
      %vm6021 = vcmask 1040384
      %v6022 = vsel %vm6021, %v5919, %v6020
      %vm6023 = vcmask 123904
      %6024 = vst.msk [vmem:[%s235] sm:$0x3] %vm6023, %v6022
      %p6025 = scmp.lt.s32.totalorder %s17, 1
      %s6026 = scalar_select %p6025, %s17, 1
      %s6027 = smul.addr %s6026, 32
      %s6028 = smul.addr %s6027, 4
      %s6029 = scalar_lea.vmem %s4, %s6028
      %p6030 = scmp.lt.s32.totalorder %s17, 1
      %s6031 = scalar_select %p6030, %s17, 1
      %s6032 = smul.addr %s6031, 2
      %s6033 = scalar_lea.vmem %s5, %s6032
      // Predicated region
      $region37: #{_lambda_.5} parent=35 // pred_check
        %p6034 = pneg %p124
      $region38: #{_lambda_.5} parent=35 // pred_check_branch
        %6036 = sbr.rel (%p6034) target = $region40
      $region39: #{_lambda_.5} parent=35 // pred_region
        _
      $region40: #{_lambda_.5} parent=35 // pred_fallthru
        _
      // Predicated region
      $region41: #{_lambda_.5} parent=35 // pred_check
        %p6037 = pneg %p150
      $region42: #{_lambda_.5} parent=35 // pred_check_branch
        %6039 = sbr.rel (%p6037) target = $region44
      $region43: #{_lambda_.5} parent=35 // pred_region
        _
      $region44: #{_lambda_.5} parent=35 // pred_fallthru
        _
    $region36: #{_lambda_.5} parent=5 // pred_fallthru
      _
    %p6040 = scmp.le.s32.totalorder 2, %s12
    // Predicated region
    $region45: #{_lambda_.5} parent=5 // pred_check
      %p6041 = pneg %p6040
    $region46: #{_lambda_.5} parent=5 // pred_check_branch
      %6043 = sbr.rel (%p6041) target = $region48
    $region47: #{_lambda_.5} parent=5 // pred_region
      %s6044 = ssub.s32 %s12, 2
      // Predicated region
      $region49: #{_lambda_.5} parent=47 // pred_check
        %p6045 = pneg %p130
      $region50: #{_lambda_.5} parent=47 // pred_check_branch
        %6047 = sbr.rel (%p6045) target = $region52
      $region51: #{_lambda_.5} parent=47 // pred_region
        %p6048 = scmp.lt.s32.totalorder %s18, 1
        %s6049 = scalar_select %p6048, %s18, 1
        %s6050 = smul.addr %s6049, 32
        %s6051 = smul.addr %s6050, 4
        %s6052 = scalar_lea.vmem %s4, %s6051
      $region52: #{_lambda_.5} parent=47 // pred_fallthru
        _
      // Predicated region
      $region53: #{_lambda_.5} parent=47 // pred_check
        %p6053 = pneg %p156
      $region54: #{_lambda_.5} parent=47 // pred_check_branch
        %6055 = sbr.rel (%p6053) target = $region56
      $region55: #{_lambda_.5} parent=47 // pred_region
        %p6056 = scmp.lt.s32.totalorder %s18, 1
        %s6057 = scalar_select %p6056, %s18, 1
        %s6058 = smul.addr %s6057, 2
        %s6059 = scalar_lea.vmem %s5, %s6058
      $region56: #{_lambda_.5} parent=47 // pred_fallthru
        _
    $region48: #{_lambda_.5} parent=5 // pred_fallthru
      _
  $region6: #{_lambda_.5} parent=0 // loop_footer
    %s16 = sadd.s32 1, %s12
  $region7: #{_lambda_.5} parent=0 // loop_footer_branch
    %11 = sbr.rel target = $region3
  $region8: #{_lambda_.5} parent=0 // loop_exit
    _

</llo_original>
